<compile_context>
chip_gen: v7x
topology: tpu7x:2x2x1
jax: 0.10.0
libtpu: 0.0.40
codegen_flags: <defaults>
</compile_context>

<pallas_src>
import numpy as np
import jax
import jax.numpy as jnp
from jax.experimental import pallas as pl
from jax.experimental.pallas import tpu as pltpu

D = 256  # input_dim1 = input_dim2 = output_dim (fixed by the module)


# ----------------------------- parameter setup ------------------------------
def _generate_sketch_matrix(rand_h, rand_s, output_dim):
    input_dim = len(rand_h)
    m = np.zeros((input_dim, output_dim), dtype=np.float64)
    m[np.arange(input_dim), rand_h.astype(np.int64)] = rand_s.astype(np.float64)
    return m


def make_params():
    # Exactly the deterministic seeds used in the PyTorch __init__.
    np.random.seed(1); rand_h_1 = np.random.randint(D, size=D)
    np.random.seed(3); rand_s_1 = 2 * np.random.randint(2, size=D) - 1
    np.random.seed(5); rand_h_2 = np.random.randint(D, size=D)
    np.random.seed(7); rand_s_2 = 2 * np.random.randint(2, size=D) - 1
    m1 = _generate_sketch_matrix(rand_h_1, rand_s_1, D)
    m2 = _generate_sketch_matrix(rand_h_2, rand_s_2, D)

    # Dense DFT basis: C[j,k] = cos(2*pi*j*k/D), S[j,k] = sin(2*pi*j*k/D) (symmetric).
    jk = np.outer(np.arange(D), np.arange(D)).astype(np.float64)
    ang = 2.0 * np.pi * jk / D
    cos_m = np.cos(ang)
    sin_m = np.sin(ang)

    # Fold the count-sketch into the DFT, transpose for the channel-major kernel and
    # stack cos/sin halves:  W^T = [ (m @ C)^T ; (m @ S)^T ]  -> (2D, D).
    # For a channel-major pixel tile X (D, tile_p):
    #   A = W^T @ X,   Re(fft(sketch)) = A[:D],   Im(fft(sketch)) = -A[D:].
    w1t = np.concatenate([(m1 @ cos_m).T, (m1 @ sin_m).T], axis=0)
    w2t = np.concatenate([(m2 @ cos_m).T, (m2 @ sin_m).T], axis=0)

    # Folded inverse DFT (single finalize matmul):
    #   out = [p_re | p_im] @ ([C ; -S] / D)          (C, S symmetric)
    ifft_mat = np.concatenate([cos_m, -sin_m], axis=0) / D            # (2D, D)

    return (jnp.asarray(w1t, dtype=jnp.bfloat16),
            jnp.asarray(w2t, dtype=jnp.bfloat16),
            jnp.asarray(ifft_mat, dtype=jnp.float32),
            jnp.asarray(m1, dtype=jnp.float32),
            jnp.asarray(m2, dtype=jnp.float32))


# --------------------------------- kernel -----------------------------------
def _cbp_kernel(x1_ref, x2_ref, w1t_ref, w2t_ref, out_ref):
    t = pl.program_id(2)

    # Output is the accumulator (block index constant along the tile axis): zero it
    # on the first pixel tile of each (split, batch) slot.
    @pl.when(t == 0)
    def _():
        out_ref[...] = jnp.zeros_like(out_ref)

    # Channel-major pixel tiles.  If the inputs arrive as bf16 the cast is a no-op;
    # f32 inputs are cast in-kernel (cheap VPU) so the MXU runs at bf16 rate.
    x1 = x1_ref[0].astype(jnp.bfloat16)          # (D, tile_p)
    x2 = x2_ref[0].astype(jnp.bfloat16)          # (D, tile_p)

    # Fused count-sketch + forward DFT: one wide matmul per input.
    a = jnp.dot(w1t_ref[...], x1, preferred_element_type=jnp.float32)   # (2D, tile_p)
    b = jnp.dot(w2t_ref[...], x2, preferred_element_type=jnp.float32)   # (2D, tile_p)

    a_c, a_s = a[:D, :], a[D:, :]   # F1 = a_c - i*a_s  (per pixel column)
    b_c, b_s = b[:D, :], b[D:, :]   # F2 = b_c - i*b_s

    # Complex product in the frequency domain (f32).
    p_re = a_c * b_c - a_s * b_s
    p_im = -(a_c * b_s + a_s * b_c)

    # Spatial sum-pool over this tile's pixels (lane-axis reduce -> XLU, idle here).
    # IFFT is linear, so summing spectra then IFFT-ing once in the wrapper is exact.
    out_ref[0, 0, :D] += jnp.sum(p_re, axis=-1, keepdims=True)
    out_ref[0, 0, D:] += jnp.sum(p_im, axis=-1, keepdims=True)


# -------------------------------- wrapper ------------------------------------
def _auto_tile_p(P):
    # Largest multiple of 256 dividing P, capped at 1024 (per-step VMEM working set
    # ~12-13 MB at 1024: safe on v5e/v6e/v7x once the limit is passed explicitly).
    for cand in (1024, 768, 512, 256):
        if P % cand == 0:
            return cand
    return P  # fallback: full pixel row (legal since it equals the array extent)


def compact_bilinear_fusion(x1, x2, w1t, w2t, ifft_mat, *,
                            tile_p=None, num_pixel_splits=None):
    """x1, x2: (B, 256, H, W) float32 or bfloat16 NCHW.  Returns (B, 256) float32."""
    B, Cin, H, W = x1.shape
    assert x2.shape == x1.shape
    assert Cin == D
    P = H * W

    if tile_p is None:
        tile_p = _auto_tile_p(P)
    tile_p = min(tile_p, P)
    assert P % tile_p == 0, "H*W must be a multiple of tile_p"
    # Multiples of 256 are preferred on v6e/v7x (256-wide MXU); 128 is the legal floor.
    assert tile_p == P or tile_p % 128 == 0, "tile_p must be a multiple of 128"
    n_tiles = P // tile_p

    # Leading "parallel" axis that splits the pixel range so both v7x TensorCores get
    # work when B == 1.  Exact: the halves are partial spectrum sums, added below.
    if num_pixel_splits is None:
        num_pixel_splits = 2 if (B == 1 and n_tiles >= 2 and n_tiles % 2 == 0) else 1
    n_split = num_pixel_splits
    assert n_tiles % n_split == 0
    tpb = n_tiles // n_split        # tiles per split

    # Free reshape of contiguous NCHW -> (B, D, P).  dtype is passed through: feeding
    # bf16 inputs halves the HBM read (memory-bound on v6e/v7x); no wrapper astype.
    x1r = x1.reshape(B, Cin, P)
    x2r = x2.reshape(B, Cin, P)

    # ---- explicit VMEM budget (per grid step), with headroom ----
    in_bytes   = 2 * D * tile_p * (x1r.dtype.itemsize + x2r.dtype.itemsize)  # inputs, 2-deep
    spec_bytes = 2 * (2 * D) * tile_p * 4                                    # a, b spectra (f32)
    prod_bytes = 3 * D * tile_p * 4                                          # product temporaries
    cast_bytes = 2 * D * tile_p * 2                                          # bf16 copies of x
    w_bytes    = 2 * (2 * D) * D * 2                                         # weights (1-deep)
    vmem_est = in_bytes + spec_bytes + prod_bytes + cast_bytes + w_bytes
    vmem_limit = int(min(max(2.5 * vmem_est, 24 * 1024 * 1024), 56 * 1024 * 1024))

    # ---- cost estimate for XLA scheduling around the custom call ----
    flops = B * P * (8 * D * D + 8 * D)   # 2 matmuls (2*2D*D per pixel) + elementwise
    bytes_accessed = (x1r.size * x1r.dtype.itemsize + x2r.size * x2r.dtype.itemsize
                      + 2 * (2 * D) * D * 2 + n_split * B * 2 * D * 4)
    cost = pl.CostEstimate(flops=flops, transcendentals=0,
                           bytes_accessed=bytes_accessed)

    out = pl.pallas_call(
        _cbp_kernel,
        out_shape=jax.ShapeDtypeStruct((n_split, B, 2 * D, 1), jnp.float32),
        grid_spec=pltpu.PrefetchScalarGridSpec(
            num_scalar_prefetch=0,
            grid=(n_split, B, tpb),
            in_specs=[
                pl.BlockSpec((1, D, tile_p), lambda s, b, t: (b, 0, s * tpb + t)),
                pl.BlockSpec((1, D, tile_p), lambda s, b, t: (b, 0, s * tpb + t)),
                # Resident weights: constant index map + single buffer (no wasted 2x).
                pl.BlockSpec((2 * D, D), lambda s, b, t: (0, 0),
                             pipeline_mode=pl.Buffered(1)),
                pl.BlockSpec((2 * D, D), lambda s, b, t: (0, 0),
                             pipeline_mode=pl.Buffered(1)),
            ],
            out_specs=pl.BlockSpec((1, 1, 2 * D, 1), lambda s, b, t: (s, b, 0, 0)),
        ),
        compiler_params=pltpu.CompilerParams(
            dimension_semantics=("parallel", "parallel", "arbitrary"),
            vmem_limit_bytes=vmem_limit),
        cost_estimate=cost,
    )(x1r, x2r, w1t, w2t)

    # Add pixel-split partial spectra (exact) and apply the folded inverse DFT once.
    p_vec = out.sum(axis=0)[..., 0]          # (B, 2D): [p_re | p_im]
    return p_vec @ ifft_mat                  # (B, D) float32


# ----------------------------- pure-JAX reference ----------------------------
def reference(x1, x2, m1, m2):
    B, Cin, H, W = x1.shape
    f1 = jnp.transpose(x1, (0, 2, 3, 1)).reshape(-1, Cin).astype(jnp.float32) @ m1
    f2 = jnp.transpose(x2, (0, 2, 3, 1)).reshape(-1, Cin).astype(jnp.float32) @ m2
    prod = jnp.fft.fft(f1, axis=-1) * jnp.fft.fft(f2, axis=-1)
    cbp = jnp.real(jnp.fft.ifft(prod, axis=-1))
    return cbp.reshape(B, H, W, D).sum(axis=(1, 2)).astype(jnp.float32)


if __name__ == "__main__":
    w1t, w2t, ifft_mat, m1, m2 = make_params()

    B, H, W = 2, 32, 32   # channels fixed at 256 by the module; P = 1024
    key = jax.random.PRNGKey(0)
    k1, k2 = jax.random.split(key)
    x1 = jax.random.normal(k1, (B, D, H, W), dtype=jnp.float32)
    x2 = jax.random.normal(k2, (B, D, H, W), dtype=jnp.float32)

    ref = jax.block_until_ready(reference(x1, x2, m1, m2))
    ref_scale = float(jnp.max(jnp.abs(ref))) + 1e-6

    # 1) Default tiling: tile_p = 1024 -> one grid step per batch element.
    out = jax.block_until_ready(compact_bilinear_fusion(x1, x2, w1t, w2t, ifft_mat))
    assert out.shape == (B, D) and out.dtype == jnp.float32
    err = float(jnp.max(jnp.abs(out - ref))) / ref_scale
    assert err < 5e-2, f"default tiling: relative error too high: {err}"

    # 2) tile_p = 256 -> 4 pixel tiles per batch element (exercises accumulation).
    out_t = jax.block_until_ready(
        compact_bilinear_fusion(x1, x2, w1t, w2t, ifft_mat, tile_p=256))
    err_t = float(jnp.max(jnp.abs(out_t - ref))) / ref_scale
    assert err_t < 5e-2, f"tile_p=256: relative error too high: {err_t}"

    # 3) B = 1 with bf16 inputs -> pixel axis split over two parallel grid slots
    #    (keeps both v7x TensorCores busy) and half the input HBM bytes.
    x1b = x1[:1].astype(jnp.bfloat16)
    x2b = x2[:1].astype(jnp.bfloat16)
    ref_b = jax.block_until_ready(
        reference(x1b.astype(jnp.float32), x2b.astype(jnp.float32), m1, m2))
    out_b = jax.block_until_ready(
        compact_bilinear_fusion(x1b, x2b, w1t, w2t, ifft_mat, tile_p=256))
    assert out_b.shape == (1, D) and out_b.dtype == jnp.float32
    err_b = float(jnp.max(jnp.abs(out_b - ref_b))) / (float(jnp.max(jnp.abs(ref_b))) + 1e-6)
    assert err_b < 5e-2, f"bf16/pixel-split: relative error too high: {err_b}"

    print("KERNEL_OK")
</pallas_src>

<mosaic_0001>
module attributes {stable_mosaic.version = 11 : i64} {
  func.func @_cbp_kernel(%arg0: i32, %arg1: i32, %arg2: i32, %arg3: memref<1x256x1024xf32, #tpu.memory_space<vmem>>, %arg4: memref<1x256x1024xf32, #tpu.memory_space<vmem>>, %arg5: memref<512x256xbf16, #tpu.memory_space<vmem>>, %arg6: memref<512x256xbf16, #tpu.memory_space<vmem>>, %arg7: memref<1x1x512x1xf32, #tpu.memory_space<vmem>>) attributes {dimension_semantics = [#tpu.dimension_semantics<parallel>, #tpu.dimension_semantics<parallel>, #tpu.dimension_semantics<arbitrary>], iteration_bounds = array<i64: 1, 2, 1>, scalar_prefetch = 0 : i64, scratch_operands = 0 : i64, tpu.core_type = #tpu.core_type<tc>, window_params = [{transform_indices = @transform_0, window_bounds = array<i64: 1, 256, 1024>}, {transform_indices = @transform_1, window_bounds = array<i64: 1, 256, 1024>}, {pipeline_mode = #tpu.pipeline_mode<synchronous>, transform_indices = @transform_2, window_bounds = array<i64: 512, 256>}, {pipeline_mode = #tpu.pipeline_mode<synchronous>, transform_indices = @transform_3, window_bounds = array<i64: 512, 256>}, {transform_indices = @transform_4, window_bounds = array<i64: 1, 1, 512, 1>}]} {
    %c0_i32 = arith.constant 0 : i32
    %0 = arith.cmpi eq, %arg2, %c0_i32 : i32
    %1 = arith.extui %0 : i1 to i32
    %c0_i32_0 = arith.constant 0 : i32
    %2 = arith.cmpi ne, %1, %c0_i32_0 : i32
    scf.if %2 {
      %cst_29 = arith.constant 0.000000e+00 : f32
      %41 = vector.broadcast %cst_29 : f32 to vector<1x1x512x1xf32>
      %c0_30 = arith.constant 0 : index
      %c0_31 = arith.constant 0 : index
      %c0_32 = arith.constant 0 : index
      %c0_33 = arith.constant 0 : index
      %42 = vector.load %arg7[%c0_30, %c0_31, %c0_32, %c0_33] : memref<1x1x512x1xf32, #tpu.memory_space<vmem>>, vector<1x1x512x1xf32>
      tpu.vector_store %arg7[%c0_30, %c0_31, %c0_32, %c0_33], %41 {strides = array<i32>} : memref<1x1x512x1xf32, #tpu.memory_space<vmem>>, vector<1x1x512x1xf32>,
    } else {
    }
    %c0 = arith.constant 0 : index
    %c0_1 = arith.constant 0 : index
    %c0_2 = arith.constant 0 : index
    %3 = vector.load %arg3[%c0, %c0_1, %c0_2] : memref<1x256x1024xf32, #tpu.memory_space<vmem>>, vector<1x256x1024xf32>
    %4 = vector.shape_cast %3 : vector<1x256x1024xf32> to vector<256x1024xf32>
    %5 = arith.truncf %4 : vector<256x1024xf32> to vector<256x1024xbf16>
    %c0_3 = arith.constant 0 : index
    %c0_4 = arith.constant 0 : index
    %c0_5 = arith.constant 0 : index
    %6 = vector.load %arg4[%c0_3, %c0_4, %c0_5] : memref<1x256x1024xf32, #tpu.memory_space<vmem>>, vector<1x256x1024xf32>
    %7 = vector.shape_cast %6 : vector<1x256x1024xf32> to vector<256x1024xf32>
    %8 = arith.truncf %7 : vector<256x1024xf32> to vector<256x1024xbf16>
    %c0_6 = arith.constant 0 : index
    %c0_7 = arith.constant 0 : index
    %9 = vector.load %arg5[%c0_6, %c0_7] : memref<512x256xbf16, #tpu.memory_space<vmem>>, vector<512x256xbf16>
    %cst = arith.constant dense<0.000000e+00> : vector<512x1024xf32>
    %10 = tpu.matmul %9, %5, %cst {dimension_numbers = #tpu.dot_dimension_numbers<[1], [0], [0], [1], [0, 0, 1, 1], [], []>} : vector<512x256xbf16>, vector<256x1024xbf16>, vector<512x1024xf32> -> vector<512x1024xf32>
    %c0_8 = arith.constant 0 : index
    %c0_9 = arith.constant 0 : index
    %11 = vector.load %arg6[%c0_8, %c0_9] : memref<512x256xbf16, #tpu.memory_space<vmem>>, vector<512x256xbf16>
    %cst_10 = arith.constant dense<0.000000e+00> : vector<512x1024xf32>
    %12 = tpu.matmul %11, %8, %cst_10 {dimension_numbers = #tpu.dot_dimension_numbers<[1], [0], [0], [1], [0, 0, 1, 1], [], []>} : vector<512x256xbf16>, vector<256x1024xbf16>, vector<512x1024xf32> -> vector<512x1024xf32>
    %13 = vector.extract_strided_slice %10 {offsets = [0, 0], sizes = [256, 1024], strides = [1, 1]} : vector<512x1024xf32> to vector<256x1024xf32>
    %14 = vector.extract_strided_slice %10 {offsets = [256, 0], sizes = [256, 1024], strides = [1, 1]} : vector<512x1024xf32> to vector<256x1024xf32>
    %15 = vector.extract_strided_slice %12 {offsets = [0, 0], sizes = [256, 1024], strides = [1, 1]} : vector<512x1024xf32> to vector<256x1024xf32>
    %16 = vector.extract_strided_slice %12 {offsets = [256, 0], sizes = [256, 1024], strides = [1, 1]} : vector<512x1024xf32> to vector<256x1024xf32>
    %17 = arith.mulf %13, %15 : vector<256x1024xf32>
    %18 = arith.mulf %14, %16 : vector<256x1024xf32>
    %19 = arith.subf %17, %18 : vector<256x1024xf32>
    %20 = arith.mulf %13, %16 : vector<256x1024xf32>
    %21 = arith.mulf %14, %15 : vector<256x1024xf32>
    %22 = arith.addf %20, %21 : vector<256x1024xf32>
    %cst_11 = arith.constant 0.000000e+00 : f32
    %23 = vector.broadcast %cst_11 : f32 to vector<256x1024xf32>
    %24 = arith.subf %23, %22 : vector<256x1024xf32>
    %c0_12 = arith.constant 0 : index
    %c0_13 = arith.constant 0 : index
    %c0_14 = arith.constant 0 : index
    %c0_15 = arith.constant 0 : index
    %25 = vector.load %arg7[%c0_12, %c0_13, %c0_14, %c0_15] : memref<1x1x512x1xf32, #tpu.memory_space<vmem>>, vector<1x1x256x1xf32>
    %26 = vector.shape_cast %25 : vector<1x1x256x1xf32> to vector<256x1xf32>
    %cst_16 = arith.constant dense<0.000000e+00> : vector<256xf32>
    %27 = vector.multi_reduction <add>, %19, %cst_16 [1] : vector<256x1024xf32> to vector<256xf32>
    %28 = vector.shape_cast %27 : vector<256xf32> to vector<256x1xf32>
    %29 = arith.addf %26, %28 : vector<256x1xf32>
    %c0_17 = arith.constant 0 : index
    %c0_18 = arith.constant 0 : index
    %c0_19 = arith.constant 0 : index
    %c0_20 = arith.constant 0 : index
    %30 = vector.load %arg7[%c0_17, %c0_18, %c0_19, %c0_20] : memref<1x1x512x1xf32, #tpu.memory_space<vmem>>, vector<1x1x256x1xf32>
    %31 = vector.shape_cast %30 : vector<1x1x256x1xf32> to vector<256x1xf32>
    %32 = vector.shape_cast %29 : vector<256x1xf32> to vector<1x1x256x1xf32>
    tpu.vector_store %arg7[%c0_17, %c0_18, %c0_19, %c0_20], %32 {strides = array<i32>} : memref<1x1x512x1xf32, #tpu.memory_space<vmem>>, vector<1x1x256x1xf32>,
    %c0_21 = arith.constant 0 : index
    %c0_22 = arith.constant 0 : index
    %c256 = arith.constant 256 : index
    %c0_23 = arith.constant 0 : index
    %33 = vector.load %arg7[%c0_21, %c0_22, %c256, %c0_23] : memref<1x1x512x1xf32, #tpu.memory_space<vmem>>, vector<1x1x256x1xf32>
    %34 = vector.shape_cast %33 : vector<1x1x256x1xf32> to vector<256x1xf32>
    %cst_24 = arith.constant dense<0.000000e+00> : vector<256xf32>
    %35 = vector.multi_reduction <add>, %24, %cst_24 [1] : vector<256x1024xf32> to vector<256xf32>
    %36 = vector.shape_cast %35 : vector<256xf32> to vector<256x1xf32>
    %37 = arith.addf %34, %36 : vector<256x1xf32>
    %c0_25 = arith.constant 0 : index
    %c0_26 = arith.constant 0 : index
    %c256_27 = arith.constant 256 : index
    %c0_28 = arith.constant 0 : index
    %38 = vector.load %arg7[%c0_25, %c0_26, %c256_27, %c0_28] : memref<1x1x512x1xf32, #tpu.memory_space<vmem>>, vector<1x1x256x1xf32>
    %39 = vector.shape_cast %38 : vector<1x1x256x1xf32> to vector<256x1xf32>
    %40 = vector.shape_cast %37 : vector<256x1xf32> to vector<1x1x256x1xf32>
    tpu.vector_store %arg7[%c0_25, %c0_26, %c256_27, %c0_28], %40 {strides = array<i32>} : memref<1x1x512x1xf32, #tpu.memory_space<vmem>>, vector<1x1x256x1xf32>,
    return
  }
  func.func @transform_0(%arg0: i32, %arg1: i32, %arg2: i32) -> (i32, i32, i32) {
    %c1_i32 = arith.constant 1 : i32
    %0 = arith.muli %arg0, %c1_i32 : i32
    %1 = arith.addi %0, %arg2 : i32
    %c0_i32 = arith.constant 0 : i32
    %c0_i32_0 = arith.constant 0 : i32
    return %arg1, %c0_i32, %1 : i32, i32, i32
  }
  func.func @transform_1(%arg0: i32, %arg1: i32, %arg2: i32) -> (i32, i32, i32) {
    %c1_i32 = arith.constant 1 : i32
    %0 = arith.muli %arg0, %c1_i32 : i32
    %1 = arith.addi %0, %arg2 : i32
    %c0_i32 = arith.constant 0 : i32
    %c0_i32_0 = arith.constant 0 : i32
    return %arg1, %c0_i32, %1 : i32, i32, i32
  }
  func.func @transform_2(%arg0: i32, %arg1: i32, %arg2: i32) -> (i32, i32) {
    %c0_i32 = arith.constant 0 : i32
    %c0_i32_0 = arith.constant 0 : i32
    %c0_i32_1 = arith.constant 0 : i32
    return %c0_i32, %c0_i32_0 : i32, i32
  }
  func.func @transform_3(%arg0: i32, %arg1: i32, %arg2: i32) -> (i32, i32) {
    %c0_i32 = arith.constant 0 : i32
    %c0_i32_0 = arith.constant 0 : i32
    %c0_i32_1 = arith.constant 0 : i32
    return %c0_i32, %c0_i32_0 : i32, i32
  }
  func.func @transform_4(%arg0: i32, %arg1: i32, %arg2: i32) -> (i32, i32, i32, i32) {
    %c0_i32 = arith.constant 0 : i32
    %c0_i32_0 = arith.constant 0 : i32
    %c0_i32_1 = arith.constant 0 : i32
    return %arg0, %arg1, %c0_i32, %c0_i32_0 : i32, i32, i32, i32
  }
}

</mosaic_0001>

<llo_original>
// kernel: tpu_custom_call.1
$region0: #{tpu_custom_call.1}
  #allocation0 [shape = 'u32[]', space=smem, size = 0x4, offset = 0x4, fixed_abs, tag = 'smem constant byte address 0x4 - core index']
  #allocation1 [shape = 'u32[144,128]{1,0:T(1,128)}', space=vmem, size = 0x12000, scoped, tag = 'internal scratch']
  %s0 = inlined_call_operand.hbm [shape: f32[2,256,1024], index: 0, kind: input, shape index: {}]
  %s1 = inlined_call_operand.hbm [shape: f32[2,256,1024], index: 1, kind: input, shape index: {}]
  %s2 = inlined_call_operand.hbm [shape: bf16[512,256], index: 2, kind: input, shape index: {}]
  %s3 = inlined_call_operand.hbm [shape: bf16[512,256], index: 3, kind: input, shape index: {}]
  %s4 = inlined_call_operand.vmem [shape: f32[1,2,512,1], index: 4, kind: output, shape index: {}]
  %s5 = sld [smem:[#allocation0]]
  $region69: #{tpu_custom_call.1} parent=0
    _
  %s7 = ssub.s32 1, %s5
  %s8 = scalar_select 0, %s7, %s5
  $region1: #{tpu_custom_call.1} parent=0
    #allocation2 [shape = 'u8[2097152]{0}', space=vmem, size = 0x200000, scoped, tag = 'input window, operand 0']
    #allocation3 [shape = 's32[2]{0}', space=sflag, size = 0x8, scoped, tag = 'scoped memory for tpu_custom_call.1']
    #allocation4 [shape = 'u8[2097152]{0}', space=vmem, size = 0x200000, scoped, tag = 'input window, operand 1']
    #allocation5 [shape = 's32[2]{0}', space=sflag, size = 0x8, scoped, tag = 'scoped memory for tpu_custom_call.1']
    #allocation6 [shape = 'u8[262144]{0}', space=vmem, size = 0x40000, scoped, tag = 'input window, operand 2, single buffered']
    #allocation7 [shape = 'u8[262144]{0}', space=vmem, size = 0x40000, scoped, tag = 'input window, operand 3, single buffered']
    #allocation8 [shape = 's32[1]{0}', space=sflag, size = 0x4, scoped, tag = 'scoped memory for tpu_custom_call.1']
    %9 = vsyncpa [#allocation3], 0
    %s10 = scalar_lea.sflag [#allocation3], 1
    %11 = vsyncpa %s10, 0
    %12 = vsyncpa [#allocation5], 0
    %s13 = scalar_lea.sflag [#allocation5], 1
    %14 = vsyncpa %s13, 0
    %15 = vsyncpa [#allocation8], 0
    loop: start=0, step=1, limit=4
    $region2: #{tpu_custom_call.1} parent=1 // loop_pre_header
      _
    $region3: #{tpu_custom_call.1} parent=1 // loop_header
      %s17 = sphi 0, %s21
      %p18 = scmp.ge.s32.totalorder %s17, 4
      %s24 = sphi 0, %s43
      %s25 = sphi 0, %s39
      %s26 = sphi 0, %s35
      %s27 = sphi 0, %s24
      %s28 = sphi 0, %s25
      %s29 = sphi 0, %s26
      %s30 = sphi 0, %s27
      %s31 = sphi 0, %s28
      %s32 = sphi 0, %s29
      %s50 = sphi 0, %s52
      %s53 = sphi 0, %s50
      %s54 = sphi 0, %s53
      %s70 = sphi 0, %s54
      %s80 = sphi 0, %s82
      %s83 = sphi 0, %s80
      %s84 = sphi 0, %s83
      %s100 = sphi 0, %s84
      %s104 = sphi 0, %s104
      %s106 = sphi 0, %s104
      %s107 = sphi 0, %s106
      %s121 = sphi 0, %s107
      %s125 = sphi 0, %s125
      %s127 = sphi 0, %s125
      %s128 = sphi 0, %s127
      %s142 = sphi 0, %s128
      %s150 = sphi 0, %s152
      %s153 = sphi 0, %s150
      %s154 = sphi 0, %s153
      %s170 = sphi 0, %s154
    $region4: #{tpu_custom_call.1} parent=1 // loop_header_branch
      %20 = sbr.rel (%p18) target = $region8
    $region5: #{tpu_custom_call.1} parent=1 // loop_body
      %s22 = ssub.s32 %s17, 1
      %s23 = ssub.s32 %s17, 2
      %s33 = sadd.s32 1, %s26
      %p34 = scmp.ge.s32.totalorder %s33, 1
      %s35 = scalar_select %p34, 0, %s33
      %s36 = sadd.s32 1, %s25
      %s37 = scalar_select %p34, %s36, %s25
      %p38 = scmp.ge.s32.totalorder %s37, 2
      %s39 = scalar_select %p38, 0, %s37
      %s40 = sadd.s32 1, %s24
      %s41 = scalar_select %p38, %s40, %s24
      %p42 = scmp.ge.s32.totalorder %s41, 1
      %s43 = scalar_select %p42, 0, %s41
      %s44 = sadd.s32 %s24, %s26
      %s45 = sadd.s32 %s43, %s35
      %s46 = ssub.s32 %s25, %s39
      %s47 = ssub.s32 %s44, %s45
      %s48 = sor.u32 %s46, %s47
      %p49 = scmp.eq.s32.totalorder %s48, 0
      %s51 = sadd.s32 %s50, 1
      %s52 = scalar_select %p49, %s50, %s51
      %p55 = pneg %p49
      %p56 = scmp.eq.s32.totalorder %s17, 1
      %p57 = por %p55, %p56
      %p58 = scmp.ne.s32.totalorder %s50, %s53
      %p59 = scmp.eq.s32.totalorder %s17, 0
      %p60 = por %p58, %p59
      %p61 = scmp.ne.s32.totalorder %s50, %s53
      %p62 = scmp.eq.s32.totalorder %s22, 1
      %p63 = por %p61, %p62
      %p64 = scmp.ne.s32.totalorder %s53, %s54
      %p65 = scmp.eq.s32.totalorder %s22, 0
      %p66 = por %p64, %p65
      %p67 = scmp.ne.s32.totalorder %s53, %s54
      %p68 = scmp.eq.s32.totalorder %s23, 1
      %p69 = por %p67, %p68
      %p71 = scmp.ne.s32.totalorder %s54, %s70
      %p72 = scmp.eq.s32.totalorder %s23, 0
      %p73 = por %p71, %p72
      %s74 = sadd.s32 %s24, %s26
      %s75 = sadd.s32 %s43, %s35
      %s76 = ssub.s32 %s25, %s39
      %s77 = ssub.s32 %s74, %s75
      %s78 = sor.u32 %s76, %s77
      %p79 = scmp.eq.s32.totalorder %s78, 0
      %s81 = sadd.s32 %s80, 1
      %s82 = scalar_select %p79, %s80, %s81
      %p85 = pneg %p79
      %p86 = scmp.eq.s32.totalorder %s17, 1
      %p87 = por %p85, %p86
      %p88 = scmp.ne.s32.totalorder %s80, %s83
      %p89 = scmp.eq.s32.totalorder %s17, 0
      %p90 = por %p88, %p89
      %p91 = scmp.ne.s32.totalorder %s80, %s83
      %p92 = scmp.eq.s32.totalorder %s22, 1
      %p93 = por %p91, %p92
      %p94 = scmp.ne.s32.totalorder %s83, %s84
      %p95 = scmp.eq.s32.totalorder %s22, 0
      %p96 = por %p94, %p95
      %p97 = scmp.ne.s32.totalorder %s83, %s84
      %p98 = scmp.eq.s32.totalorder %s23, 1
      %p99 = por %p97, %p98
      %p101 = scmp.ne.s32.totalorder %s84, %s100
      %p102 = scmp.eq.s32.totalorder %s23, 0
      %p103 = por %p101, %p102
      %s105 = sadd.s32 %s104, 1
      %p108 = scmp.eq.s32.totalorder %s17, 1
      %p109 = scmp.ne.s32.totalorder %s104, %s106
      %p110 = scmp.eq.s32.totalorder %s17, 0
      %p111 = por %p109, %p110
      %p112 = scmp.ne.s32.totalorder %s104, %s106
      %p113 = scmp.eq.s32.totalorder %s22, 1
      %p114 = por %p112, %p113
      %p115 = scmp.ne.s32.totalorder %s106, %s107
      %p116 = scmp.eq.s32.totalorder %s22, 0
      %p117 = por %p115, %p116
      %p118 = scmp.ne.s32.totalorder %s106, %s107
      %p119 = scmp.eq.s32.totalorder %s23, 1
      %p120 = por %p118, %p119
      %p122 = scmp.ne.s32.totalorder %s107, %s121
      %p123 = scmp.eq.s32.totalorder %s23, 0
      %p124 = por %p122, %p123
      %s126 = sadd.s32 %s125, 1
      %p129 = scmp.eq.s32.totalorder %s17, 1
      %p130 = scmp.ne.s32.totalorder %s125, %s127
      %p131 = scmp.eq.s32.totalorder %s17, 0
      %p132 = por %p130, %p131
      %p133 = scmp.ne.s32.totalorder %s125, %s127
      %p134 = scmp.eq.s32.totalorder %s22, 1
      %p135 = por %p133, %p134
      %p136 = scmp.ne.s32.totalorder %s127, %s128
      %p137 = scmp.eq.s32.totalorder %s22, 0
      %p138 = por %p136, %p137
      %p139 = scmp.ne.s32.totalorder %s127, %s128
      %p140 = scmp.eq.s32.totalorder %s23, 1
      %p141 = por %p139, %p140
      %p143 = scmp.ne.s32.totalorder %s128, %s142
      %p144 = scmp.eq.s32.totalorder %s23, 0
      %p145 = por %p143, %p144
      %s146 = ssub.s32 %s24, %s43
      %s147 = ssub.s32 %s25, %s39
      %s148 = sor.u32 %s146, %s147
      %p149 = scmp.eq.s32.totalorder %s148, 0
      %s151 = sadd.s32 %s150, 1
      %s152 = scalar_select %p149, %s150, %s151
      %p155 = pneg %p149
      %p156 = scmp.eq.s32.totalorder %s17, 1
      %p157 = por %p155, %p156
      %p158 = scmp.ne.s32.totalorder %s150, %s153
      %p159 = scmp.eq.s32.totalorder %s17, 0
      %p160 = por %p158, %p159
      %p161 = scmp.ne.s32.totalorder %s150, %s153
      %p162 = scmp.eq.s32.totalorder %s22, 1
      %p163 = por %p161, %p162
      %p164 = scmp.ne.s32.totalorder %s153, %s154
      %p165 = scmp.eq.s32.totalorder %s22, 0
      %p166 = por %p164, %p165
      %p167 = scmp.ne.s32.totalorder %s153, %s154
      %p168 = scmp.eq.s32.totalorder %s23, 1
      %p169 = por %p167, %p168
      %p171 = scmp.ne.s32.totalorder %s154, %s170
      %p172 = scmp.eq.s32.totalorder %s23, 0
      %p173 = por %p171, %p172
      %p174 = scmp.le.s32.totalorder 1, %s17
      %p175 = scmp.lt.s32.totalorder %s17, 3
      %p176 = pnand %p174, %p175
      %p177 = pneg %p176
      // Predicated region
      $region9: #{tpu_custom_call.1} parent=5 // pred_check
        _
      $region10: #{tpu_custom_call.1} parent=5 // pred_check_branch
        %179 = sbr.rel (%p176) target = $region12
      $region11: #{tpu_custom_call.1} parent=5 // pred_region
        %s180 = ssub.s32 %s17, 1
        // Predicated region
        $region13: #{tpu_custom_call.1} parent=11 // pred_check
          %p181 = pneg %p117
        $region14: #{tpu_custom_call.1} parent=11 // pred_check_branch
          %183 = sbr.rel (%p181) target = $region16
        $region15: #{tpu_custom_call.1} parent=11 // pred_region
          %s185 = ssub.s32 8192, 8192
          %186 = vsyncadd [#allocation5], %s185
          %s187 = sshll.u32 [#allocation6], 4
          %s188 = int_to_ptr.vmem [resolvable:$true] %s187
          %193 = dma.hbm_to_vmem [thread:$0]  %s2, 8192, %s188, [#allocation5], 128, 128, 8
        $region16: #{tpu_custom_call.1} parent=11 // pred_fallthru
          _
        // Predicated region
        $region17: #{tpu_custom_call.1} parent=11 // pred_check
          %p194 = pneg %p138
        $region18: #{tpu_custom_call.1} parent=11 // pred_check_branch
          %196 = sbr.rel (%p194) target = $region20
        $region19: #{tpu_custom_call.1} parent=11 // pred_region
          %s198 = ssub.s32 8192, 8192
          %199 = vsyncadd [#allocation8], %s198
          %s200 = sshll.u32 [#allocation7], 4
          %s201 = int_to_ptr.vmem [resolvable:$true] %s200
          %206 = dma.hbm_to_vmem [thread:$0]  %s3, 8192, %s201, [#allocation8], 128, 128, 8
        $region20: #{tpu_custom_call.1} parent=11 // pred_fallthru
          _
      $region12: #{tpu_custom_call.1} parent=5 // pred_fallthru
        _
      %p207 = scmp.lt.s32.totalorder %s17, 2
      // Predicated region
      $region21: #{tpu_custom_call.1} parent=5 // pred_check
        %p208 = pneg %p207
      $region22: #{tpu_custom_call.1} parent=5 // pred_check_branch
        %210 = sbr.rel (%p208) target = $region24
      $region23: #{tpu_custom_call.1} parent=5 // pred_region
        // Predicated region
        $region25: #{tpu_custom_call.1} parent=23 // pred_check
          %p211 = pneg %p60
        $region26: #{tpu_custom_call.1} parent=23 // pred_check_branch
          %213 = sbr.rel (%p211) target = $region28
        $region27: #{tpu_custom_call.1} parent=23 // pred_region
          %s214 = sand.u32 %s50, 1
          %s215 = scalar_lea.sflag [#allocation3], %s214
          %s216 = sand.u32 %s50, 1
          %s217 = smul.addr %s216, 2048
          %s218 = scalar_lea.vmem [#allocation2], %s217
          %s219 = sadd.s32 %s24, %s26
          %s220 = smul.u32 8, %s219
          %s222 = ssub.s32 32768, 32768
          %223 = vsyncadd %s215, %s222
          %s224 = smul.addr %s25, 256
          %s225 = sadd.s32 %s220, %s224
          %s226 = smul.addr %s225, 128
          %s227 = scalar_lea.hbm %s0, %s226
          %s228 = sshll.u32 %s218, 4
          %s229 = int_to_ptr.vmem [resolvable:$true] %s228
          %234 = dma.hbm_to_vmem [thread:$0]  %s227, 32768, %s229, %s215, 1024, 1024, 64
        $region28: #{tpu_custom_call.1} parent=23 // pred_fallthru
          _
        // Predicated region
        $region29: #{tpu_custom_call.1} parent=23 // pred_check
          %p235 = pneg %p90
        $region30: #{tpu_custom_call.1} parent=23 // pred_check_branch
          %237 = sbr.rel (%p235) target = $region32
        $region31: #{tpu_custom_call.1} parent=23 // pred_region
          %s238 = sand.u32 %s17, 1
          %s239 = scalar_lea.sflag [#allocation5], %s238
          %s240 = sand.u32 %s80, 1
          %s241 = smul.addr %s240, 2048
          %s242 = scalar_lea.vmem [#allocation4], %s241
          %s243 = sadd.s32 %s24, %s26
          %s244 = smul.u32 8, %s243
          %s246 = ssub.s32 32768, 32768
          %247 = vsyncadd %s239, %s246
          %s248 = smul.addr %s25, 256
          %s249 = sadd.s32 %s244, %s248
          %s250 = smul.addr %s249, 128
          %s251 = scalar_lea.hbm %s1, %s250
          %s252 = sshll.u32 %s242, 4
          %s253 = int_to_ptr.vmem [resolvable:$true] %s252
          %258 = dma.hbm_to_vmem [thread:$0]  %s251, 32768, %s253, %s239, 1024, 1024, 64
        $region32: #{tpu_custom_call.1} parent=23 // pred_fallthru
          _
      $region24: #{tpu_custom_call.1} parent=5 // pred_fallthru
        _
      %p259 = scmp.le.s32.totalorder 1, %s17
      %p260 = scmp.lt.s32.totalorder %s17, 3
      %p261 = pnand %p259, %p260
      %p262 = pneg %p261
      // Predicated region
      $region33: #{tpu_custom_call.1} parent=5 // pred_check
        _
      $region34: #{tpu_custom_call.1} parent=5 // pred_check_branch
        %264 = sbr.rel (%p261) target = $region36
      $region35: #{tpu_custom_call.1} parent=5 // pred_region
        %s265 = ssub.s32 %s17, 1
        %s266 = sand.u32 %s53, 1
        %s267 = scalar_lea.sflag [#allocation3], %s266
        %s268 = sand.u32 %s53, 1
        %s269 = smul.addr %s268, 2048
        %s270 = scalar_lea.vmem [#allocation2], %s269
        // Predicated region
        $region37: #{tpu_custom_call.1} parent=35 // pred_check
          %p271 = pneg %p66
        $region38: #{tpu_custom_call.1} parent=35 // pred_check_branch
          %273 = sbr.rel (%p271) target = $region40
        $region39: #{tpu_custom_call.1} parent=35 // pred_region
          %274 = dma.done %s267, 32768
        $region40: #{tpu_custom_call.1} parent=35 // pred_fallthru
          _
        %s275 = sand.u32 %s22, 1
        %s276 = scalar_lea.sflag [#allocation5], %s275
        %s277 = sand.u32 %s83, 1
        %s278 = smul.addr %s277, 2048
        %s279 = scalar_lea.vmem [#allocation4], %s278
        // Predicated region
        $region41: #{tpu_custom_call.1} parent=35 // pred_check
          %p280 = pneg %p96
        $region42: #{tpu_custom_call.1} parent=35 // pred_check_branch
          %282 = sbr.rel (%p280) target = $region44
        $region43: #{tpu_custom_call.1} parent=35 // pred_region
          %283 = dma.done %s276, 32768
        $region44: #{tpu_custom_call.1} parent=35 // pred_fallthru
          _
        // Predicated region
        $region45: #{tpu_custom_call.1} parent=35 // pred_check
          %p284 = pneg %p117
        $region46: #{tpu_custom_call.1} parent=35 // pred_check_branch
          %286 = sbr.rel (%p284) target = $region48
        $region47: #{tpu_custom_call.1} parent=35 // pred_region
          %287 = dma.done [#allocation5], 8192
        $region48: #{tpu_custom_call.1} parent=35 // pred_fallthru
          _
        // Predicated region
        $region49: #{tpu_custom_call.1} parent=35 // pred_check
          %p288 = pneg %p138
        $region50: #{tpu_custom_call.1} parent=35 // pred_check_branch
          %290 = sbr.rel (%p288) target = $region52
        $region51: #{tpu_custom_call.1} parent=35 // pred_region
          %291 = dma.done [#allocation8], 8192
        $region52: #{tpu_custom_call.1} parent=35 // pred_fallthru
          _
        %s292 = sand.u32 %s53, 1
        %s293 = scalar_lea.sflag [#allocation3], %s292
        %s294 = sand.u32 %s53, 1
        %s295 = smul.addr %s294, 2048
        %s296 = scalar_lea.vmem [#allocation2], %s295
        %p297 = pneg %p66
        %p298 = pneg %p63
        %s299 = sand.u32 %s22, 1
        %s300 = scalar_lea.sflag [#allocation5], %s299
        %s301 = sand.u32 %s83, 1
        %s302 = smul.addr %s301, 2048
        %s303 = scalar_lea.vmem [#allocation4], %s302
        %p304 = pneg %p96
        %p305 = pneg %p93
        %p306 = pneg %p117
        %p307 = pneg %p114
        %p308 = pneg %p138
        %p309 = pneg %p135
        %p310 = pneg %p166
        %p311 = pneg %p163
        %p312 = scmp.lt.s32.totalorder %s27, 0
        %s313 = scalar_select %p312, %s27, 0
        %p314 = scmp.lt.s32.totalorder %s28, 1
        %s315 = scalar_select %p314, %s28, 1
        %s316 = smul.addr %s315, 64
        %s317 = smul.addr %s313, 128
        %s318 = sadd.s32 %s316, %s317
        %s319 = smul.addr %s318, 8
        %s320 = scalar_lea.vmem %s4, %s319
        %s321 = sadd.s32 %s27, %s29
        %s322 = smul.u32 8, %s321
        %s323 = sadd.s32 %s27, %s29
        %s324 = smul.u32 8, %s323
        %p325 = scmp.lt.s32.totalorder %s27, 0
        %s326 = scalar_select %p325, %s27, 0
        %p327 = scmp.lt.s32.totalorder %s28, 1
        %s328 = scalar_select %p327, %s28, 1
        %s329 = smul.addr %s328, 64
        %s330 = smul.addr %s326, 128
        %s331 = sadd.s32 %s329, %s330
        %s332 = smul.addr %s331, 8
        %s333 = scalar_lea.vmem %s4, %s332
        %p334 = scmp.eq.s32.totalorder %s29, 0
        // Predicated region
        $region53: #{tpu_custom_call.1} parent=35 // pred_check
          %p335 = pneg %p334
        $region54: #{tpu_custom_call.1} parent=35 // pred_check_branch
          %337 = sbr.rel (%p335) target = $region56
        $region55: #{tpu_custom_call.1} parent=35 // pred_region
          %vm338 = vcmask 7168
          %339 = vst.msk [vmem:[%s333] sm:$0xff] %vm338, 0.0
          %340 = vst.msk [vmem:[%s333 + $0x8] sm:$0xff] %vm338, 0.0
          %341 = vst.msk [vmem:[%s333 + $0x10] sm:$0xff] %vm338, 0.0
          %342 = vst.msk [vmem:[%s333 + $0x18] sm:$0xff] %vm338, 0.0
          %343 = vst.msk [vmem:[%s333 + $0x20] sm:$0xff] %vm338, 0.0
          %344 = vst.msk [vmem:[%s333 + $0x28] sm:$0xff] %vm338, 0.0
          %345 = vst.msk [vmem:[%s333 + $0x30] sm:$0xff] %vm338, 0.0
          %346 = vst.msk [vmem:[%s333 + $0x38] sm:$0xff] %vm338, 0.0
          %347 = vst.msk [vmem:[%s333 + $0x40] sm:$0xff] %vm338, 0.0
          %348 = vst.msk [vmem:[%s333 + $0x48] sm:$0xff] %vm338, 0.0
          %349 = vst.msk [vmem:[%s333 + $0x50] sm:$0xff] %vm338, 0.0
          %350 = vst.msk [vmem:[%s333 + $0x58] sm:$0xff] %vm338, 0.0
          %351 = vst.msk [vmem:[%s333 + $0x60] sm:$0xff] %vm338, 0.0
          %352 = vst.msk [vmem:[%s333 + $0x68] sm:$0xff] %vm338, 0.0
          %353 = vst.msk [vmem:[%s333 + $0x70] sm:$0xff] %vm338, 0.0
          %354 = vst.msk [vmem:[%s333 + $0x78] sm:$0xff] %vm338, 0.0
          %355 = vst.msk [vmem:[%s333 + $0x80] sm:$0xff] %vm338, 0.0
          %356 = vst.msk [vmem:[%s333 + $0x88] sm:$0xff] %vm338, 0.0
          %357 = vst.msk [vmem:[%s333 + $0x90] sm:$0xff] %vm338, 0.0
          %358 = vst.msk [vmem:[%s333 + $0x98] sm:$0xff] %vm338, 0.0
          %359 = vst.msk [vmem:[%s333 + $0xa0] sm:$0xff] %vm338, 0.0
          %360 = vst.msk [vmem:[%s333 + $0xa8] sm:$0xff] %vm338, 0.0
          %361 = vst.msk [vmem:[%s333 + $0xb0] sm:$0xff] %vm338, 0.0
          %362 = vst.msk [vmem:[%s333 + $0xb8] sm:$0xff] %vm338, 0.0
          %363 = vst.msk [vmem:[%s333 + $0xc0] sm:$0xff] %vm338, 0.0
          %364 = vst.msk [vmem:[%s333 + $0xc8] sm:$0xff] %vm338, 0.0
          %365 = vst.msk [vmem:[%s333 + $0xd0] sm:$0xff] %vm338, 0.0
          %366 = vst.msk [vmem:[%s333 + $0xd8] sm:$0xff] %vm338, 0.0
          %367 = vst.msk [vmem:[%s333 + $0xe0] sm:$0xff] %vm338, 0.0
          %368 = vst.msk [vmem:[%s333 + $0xe8] sm:$0xff] %vm338, 0.0
          %369 = vst.msk [vmem:[%s333 + $0xf0] sm:$0xff] %vm338, 0.0
          %370 = vst.msk [vmem:[%s333 + $0xf8] sm:$0xff] %vm338, 0.0
          %371 = vst.msk [vmem:[%s333 + $0x100] sm:$0xff] %vm338, 0.0
          %372 = vst.msk [vmem:[%s333 + $0x108] sm:$0xff] %vm338, 0.0
          %373 = vst.msk [vmem:[%s333 + $0x110] sm:$0xff] %vm338, 0.0
          %374 = vst.msk [vmem:[%s333 + $0x118] sm:$0xff] %vm338, 0.0
          %375 = vst.msk [vmem:[%s333 + $0x120] sm:$0xff] %vm338, 0.0
          %376 = vst.msk [vmem:[%s333 + $0x128] sm:$0xff] %vm338, 0.0
          %377 = vst.msk [vmem:[%s333 + $0x130] sm:$0xff] %vm338, 0.0
          %378 = vst.msk [vmem:[%s333 + $0x138] sm:$0xff] %vm338, 0.0
          %379 = vst.msk [vmem:[%s333 + $0x140] sm:$0xff] %vm338, 0.0
          %380 = vst.msk [vmem:[%s333 + $0x148] sm:$0xff] %vm338, 0.0
          %381 = vst.msk [vmem:[%s333 + $0x150] sm:$0xff] %vm338, 0.0
          %382 = vst.msk [vmem:[%s333 + $0x158] sm:$0xff] %vm338, 0.0
          %383 = vst.msk [vmem:[%s333 + $0x160] sm:$0xff] %vm338, 0.0
          %384 = vst.msk [vmem:[%s333 + $0x168] sm:$0xff] %vm338, 0.0
          %385 = vst.msk [vmem:[%s333 + $0x170] sm:$0xff] %vm338, 0.0
          %386 = vst.msk [vmem:[%s333 + $0x178] sm:$0xff] %vm338, 0.0
          %387 = vst.msk [vmem:[%s333 + $0x180] sm:$0xff] %vm338, 0.0
          %388 = vst.msk [vmem:[%s333 + $0x188] sm:$0xff] %vm338, 0.0
          %389 = vst.msk [vmem:[%s333 + $0x190] sm:$0xff] %vm338, 0.0
          %390 = vst.msk [vmem:[%s333 + $0x198] sm:$0xff] %vm338, 0.0
          %391 = vst.msk [vmem:[%s333 + $0x1a0] sm:$0xff] %vm338, 0.0
          %392 = vst.msk [vmem:[%s333 + $0x1a8] sm:$0xff] %vm338, 0.0
          %393 = vst.msk [vmem:[%s333 + $0x1b0] sm:$0xff] %vm338, 0.0
          %394 = vst.msk [vmem:[%s333 + $0x1b8] sm:$0xff] %vm338, 0.0
          %395 = vst.msk [vmem:[%s333 + $0x1c0] sm:$0xff] %vm338, 0.0
          %396 = vst.msk [vmem:[%s333 + $0x1c8] sm:$0xff] %vm338, 0.0
          %397 = vst.msk [vmem:[%s333 + $0x1d0] sm:$0xff] %vm338, 0.0
          %398 = vst.msk [vmem:[%s333 + $0x1d8] sm:$0xff] %vm338, 0.0
          %399 = vst.msk [vmem:[%s333 + $0x1e0] sm:$0xff] %vm338, 0.0
          %400 = vst.msk [vmem:[%s333 + $0x1e8] sm:$0xff] %vm338, 0.0
          %401 = vst.msk [vmem:[%s333 + $0x1f0] sm:$0xff] %vm338, 0.0
          %402 = vst.msk [vmem:[%s333 + $0x1f8] sm:$0xff] %vm338, 0.0
        $region56: #{tpu_custom_call.1} parent=35 // pred_fallthru
          _
        %v403 = vld [vmem:[%s270] sm:$0xff]
        %v404 = vld [vmem:[%s270 + $0x8] sm:$0xff]
        %v405 = vld [vmem:[%s270 + $0x10] sm:$0xff]
        %v406 = vld [vmem:[%s270 + $0x18] sm:$0xff]
        %v407 = vld [vmem:[%s270 + $0x20] sm:$0xff]
        %v408 = vld [vmem:[%s270 + $0x28] sm:$0xff]
        %v409 = vld [vmem:[%s270 + $0x30] sm:$0xff]
        %v410 = vld [vmem:[%s270 + $0x38] sm:$0xff]
        %v411 = vld [vmem:[%s270 + $0x40] sm:$0xff]
        %v412 = vld [vmem:[%s270 + $0x48] sm:$0xff]
        %v413 = vld [vmem:[%s270 + $0x50] sm:$0xff]
        %v414 = vld [vmem:[%s270 + $0x58] sm:$0xff]
        %v415 = vld [vmem:[%s270 + $0x60] sm:$0xff]
        %v416 = vld [vmem:[%s270 + $0x68] sm:$0xff]
        %v417 = vld [vmem:[%s270 + $0x70] sm:$0xff]
        %v418 = vld [vmem:[%s270 + $0x78] sm:$0xff]
        %v419 = vld [vmem:[%s270 + $0x80] sm:$0xff]
        %v420 = vld [vmem:[%s270 + $0x88] sm:$0xff]
        %v421 = vld [vmem:[%s270 + $0x90] sm:$0xff]
        %v422 = vld [vmem:[%s270 + $0x98] sm:$0xff]
        %v423 = vld [vmem:[%s270 + $0xa0] sm:$0xff]
        %v424 = vld [vmem:[%s270 + $0xa8] sm:$0xff]
        %v425 = vld [vmem:[%s270 + $0xb0] sm:$0xff]
        %v426 = vld [vmem:[%s270 + $0xb8] sm:$0xff]
        %v427 = vld [vmem:[%s270 + $0xc0] sm:$0xff]
        %v428 = vld [vmem:[%s270 + $0xc8] sm:$0xff]
        %v429 = vld [vmem:[%s270 + $0xd0] sm:$0xff]
        %v430 = vld [vmem:[%s270 + $0xd8] sm:$0xff]
        %v431 = vld [vmem:[%s270 + $0xe0] sm:$0xff]
        %v432 = vld [vmem:[%s270 + $0xe8] sm:$0xff]
        %v433 = vld [vmem:[%s270 + $0xf0] sm:$0xff]
        %v434 = vld [vmem:[%s270 + $0xf8] sm:$0xff]
        %v435 = vld [vmem:[%s270 + $0x100] sm:$0xff]
        %v436 = vld [vmem:[%s270 + $0x108] sm:$0xff]
        %v437 = vld [vmem:[%s270 + $0x110] sm:$0xff]
        %v438 = vld [vmem:[%s270 + $0x118] sm:$0xff]
        %v439 = vld [vmem:[%s270 + $0x120] sm:$0xff]
        %v440 = vld [vmem:[%s270 + $0x128] sm:$0xff]
        %v441 = vld [vmem:[%s270 + $0x130] sm:$0xff]
        %v442 = vld [vmem:[%s270 + $0x138] sm:$0xff]
        %v443 = vld [vmem:[%s270 + $0x140] sm:$0xff]
        %v444 = vld [vmem:[%s270 + $0x148] sm:$0xff]
        %v445 = vld [vmem:[%s270 + $0x150] sm:$0xff]
        %v446 = vld [vmem:[%s270 + $0x158] sm:$0xff]
        %v447 = vld [vmem:[%s270 + $0x160] sm:$0xff]
        %v448 = vld [vmem:[%s270 + $0x168] sm:$0xff]
        %v449 = vld [vmem:[%s270 + $0x170] sm:$0xff]
        %v450 = vld [vmem:[%s270 + $0x178] sm:$0xff]
        %v451 = vld [vmem:[%s270 + $0x180] sm:$0xff]
        %v452 = vld [vmem:[%s270 + $0x188] sm:$0xff]
        %v453 = vld [vmem:[%s270 + $0x190] sm:$0xff]
        %v454 = vld [vmem:[%s270 + $0x198] sm:$0xff]
        %v455 = vld [vmem:[%s270 + $0x1a0] sm:$0xff]
        %v456 = vld [vmem:[%s270 + $0x1a8] sm:$0xff]
        %v457 = vld [vmem:[%s270 + $0x1b0] sm:$0xff]
        %v458 = vld [vmem:[%s270 + $0x1b8] sm:$0xff]
        %v459 = vld [vmem:[%s270 + $0x1c0] sm:$0xff]
        %v460 = vld [vmem:[%s270 + $0x1c8] sm:$0xff]
        %v461 = vld [vmem:[%s270 + $0x1d0] sm:$0xff]
        %v462 = vld [vmem:[%s270 + $0x1d8] sm:$0xff]
        %v463 = vld [vmem:[%s270 + $0x1e0] sm:$0xff]
        %v464 = vld [vmem:[%s270 + $0x1e8] sm:$0xff]
        %v465 = vld [vmem:[%s270 + $0x1f0] sm:$0xff]
        %v466 = vld [vmem:[%s270 + $0x1f8] sm:$0xff]
        %v467 = vld [vmem:[%s270 + $0x200] sm:$0xff]
        %v468 = vld [vmem:[%s270 + $0x208] sm:$0xff]
        %v469 = vld [vmem:[%s270 + $0x210] sm:$0xff]
        %v470 = vld [vmem:[%s270 + $0x218] sm:$0xff]
        %v471 = vld [vmem:[%s270 + $0x220] sm:$0xff]
        %v472 = vld [vmem:[%s270 + $0x228] sm:$0xff]
        %v473 = vld [vmem:[%s270 + $0x230] sm:$0xff]
        %v474 = vld [vmem:[%s270 + $0x238] sm:$0xff]
        %v475 = vld [vmem:[%s270 + $0x240] sm:$0xff]
        %v476 = vld [vmem:[%s270 + $0x248] sm:$0xff]
        %v477 = vld [vmem:[%s270 + $0x250] sm:$0xff]
        %v478 = vld [vmem:[%s270 + $0x258] sm:$0xff]
        %v479 = vld [vmem:[%s270 + $0x260] sm:$0xff]
        %v480 = vld [vmem:[%s270 + $0x268] sm:$0xff]
        %v481 = vld [vmem:[%s270 + $0x270] sm:$0xff]
        %v482 = vld [vmem:[%s270 + $0x278] sm:$0xff]
        %v483 = vld [vmem:[%s270 + $0x280] sm:$0xff]
        %v484 = vld [vmem:[%s270 + $0x288] sm:$0xff]
        %v485 = vld [vmem:[%s270 + $0x290] sm:$0xff]
        %v486 = vld [vmem:[%s270 + $0x298] sm:$0xff]
        %v487 = vld [vmem:[%s270 + $0x2a0] sm:$0xff]
        %v488 = vld [vmem:[%s270 + $0x2a8] sm:$0xff]
        %v489 = vld [vmem:[%s270 + $0x2b0] sm:$0xff]
        %v490 = vld [vmem:[%s270 + $0x2b8] sm:$0xff]
        %v491 = vld [vmem:[%s270 + $0x2c0] sm:$0xff]
        %v492 = vld [vmem:[%s270 + $0x2c8] sm:$0xff]
        %v493 = vld [vmem:[%s270 + $0x2d0] sm:$0xff]
        %v494 = vld [vmem:[%s270 + $0x2d8] sm:$0xff]
        %v495 = vld [vmem:[%s270 + $0x2e0] sm:$0xff]
        %v496 = vld [vmem:[%s270 + $0x2e8] sm:$0xff]
        %v497 = vld [vmem:[%s270 + $0x2f0] sm:$0xff]
        %v498 = vld [vmem:[%s270 + $0x2f8] sm:$0xff]
        %v499 = vld [vmem:[%s270 + $0x300] sm:$0xff]
        %v500 = vld [vmem:[%s270 + $0x308] sm:$0xff]
        %v501 = vld [vmem:[%s270 + $0x310] sm:$0xff]
        %v502 = vld [vmem:[%s270 + $0x318] sm:$0xff]
        %v503 = vld [vmem:[%s270 + $0x320] sm:$0xff]
        %v504 = vld [vmem:[%s270 + $0x328] sm:$0xff]
        %v505 = vld [vmem:[%s270 + $0x330] sm:$0xff]
        %v506 = vld [vmem:[%s270 + $0x338] sm:$0xff]
        %v507 = vld [vmem:[%s270 + $0x340] sm:$0xff]
        %v508 = vld [vmem:[%s270 + $0x348] sm:$0xff]
        %v509 = vld [vmem:[%s270 + $0x350] sm:$0xff]
        %v510 = vld [vmem:[%s270 + $0x358] sm:$0xff]
        %v511 = vld [vmem:[%s270 + $0x360] sm:$0xff]
        %v512 = vld [vmem:[%s270 + $0x368] sm:$0xff]
        %v513 = vld [vmem:[%s270 + $0x370] sm:$0xff]
        %v514 = vld [vmem:[%s270 + $0x378] sm:$0xff]
        %v515 = vld [vmem:[%s270 + $0x380] sm:$0xff]
        %v516 = vld [vmem:[%s270 + $0x388] sm:$0xff]
        %v517 = vld [vmem:[%s270 + $0x390] sm:$0xff]
        %v518 = vld [vmem:[%s270 + $0x398] sm:$0xff]
        %v519 = vld [vmem:[%s270 + $0x3a0] sm:$0xff]
        %v520 = vld [vmem:[%s270 + $0x3a8] sm:$0xff]
        %v521 = vld [vmem:[%s270 + $0x3b0] sm:$0xff]
        %v522 = vld [vmem:[%s270 + $0x3b8] sm:$0xff]
        %v523 = vld [vmem:[%s270 + $0x3c0] sm:$0xff]
        %v524 = vld [vmem:[%s270 + $0x3c8] sm:$0xff]
        %v525 = vld [vmem:[%s270 + $0x3d0] sm:$0xff]
        %v526 = vld [vmem:[%s270 + $0x3d8] sm:$0xff]
        %v527 = vld [vmem:[%s270 + $0x3e0] sm:$0xff]
        %v528 = vld [vmem:[%s270 + $0x3e8] sm:$0xff]
        %v529 = vld [vmem:[%s270 + $0x3f0] sm:$0xff]
        %v530 = vld [vmem:[%s270 + $0x3f8] sm:$0xff]
        %v531 = vld [vmem:[%s270 + $0x400] sm:$0xff]
        %v532 = vld [vmem:[%s270 + $0x408] sm:$0xff]
        %v533 = vld [vmem:[%s270 + $0x410] sm:$0xff]
        %v534 = vld [vmem:[%s270 + $0x418] sm:$0xff]
        %v535 = vld [vmem:[%s270 + $0x420] sm:$0xff]
        %v536 = vld [vmem:[%s270 + $0x428] sm:$0xff]
        %v537 = vld [vmem:[%s270 + $0x430] sm:$0xff]
        %v538 = vld [vmem:[%s270 + $0x438] sm:$0xff]
        %v539 = vld [vmem:[%s270 + $0x440] sm:$0xff]
        %v540 = vld [vmem:[%s270 + $0x448] sm:$0xff]
        %v541 = vld [vmem:[%s270 + $0x450] sm:$0xff]
        %v542 = vld [vmem:[%s270 + $0x458] sm:$0xff]
        %v543 = vld [vmem:[%s270 + $0x460] sm:$0xff]
        %v544 = vld [vmem:[%s270 + $0x468] sm:$0xff]
        %v545 = vld [vmem:[%s270 + $0x470] sm:$0xff]
        %v546 = vld [vmem:[%s270 + $0x478] sm:$0xff]
        %v547 = vld [vmem:[%s270 + $0x480] sm:$0xff]
        %v548 = vld [vmem:[%s270 + $0x488] sm:$0xff]
        %v549 = vld [vmem:[%s270 + $0x490] sm:$0xff]
        %v550 = vld [vmem:[%s270 + $0x498] sm:$0xff]
        %v551 = vld [vmem:[%s270 + $0x4a0] sm:$0xff]
        %v552 = vld [vmem:[%s270 + $0x4a8] sm:$0xff]
        %v553 = vld [vmem:[%s270 + $0x4b0] sm:$0xff]
        %v554 = vld [vmem:[%s270 + $0x4b8] sm:$0xff]
        %v555 = vld [vmem:[%s270 + $0x4c0] sm:$0xff]
        %v556 = vld [vmem:[%s270 + $0x4c8] sm:$0xff]
        %v557 = vld [vmem:[%s270 + $0x4d0] sm:$0xff]
        %v558 = vld [vmem:[%s270 + $0x4d8] sm:$0xff]
        %v559 = vld [vmem:[%s270 + $0x4e0] sm:$0xff]
        %v560 = vld [vmem:[%s270 + $0x4e8] sm:$0xff]
        %v561 = vld [vmem:[%s270 + $0x4f0] sm:$0xff]
        %v562 = vld [vmem:[%s270 + $0x4f8] sm:$0xff]
        %v563 = vld [vmem:[%s270 + $0x500] sm:$0xff]
        %v564 = vld [vmem:[%s270 + $0x508] sm:$0xff]
        %v565 = vld [vmem:[%s270 + $0x510] sm:$0xff]
        %v566 = vld [vmem:[%s270 + $0x518] sm:$0xff]
        %v567 = vld [vmem:[%s270 + $0x520] sm:$0xff]
        %v568 = vld [vmem:[%s270 + $0x528] sm:$0xff]
        %v569 = vld [vmem:[%s270 + $0x530] sm:$0xff]
        %v570 = vld [vmem:[%s270 + $0x538] sm:$0xff]
        %v571 = vld [vmem:[%s270 + $0x540] sm:$0xff]
        %v572 = vld [vmem:[%s270 + $0x548] sm:$0xff]
        %v573 = vld [vmem:[%s270 + $0x550] sm:$0xff]
        %v574 = vld [vmem:[%s270 + $0x558] sm:$0xff]
        %v575 = vld [vmem:[%s270 + $0x560] sm:$0xff]
        %v576 = vld [vmem:[%s270 + $0x568] sm:$0xff]
        %v577 = vld [vmem:[%s270 + $0x570] sm:$0xff]
        %v578 = vld [vmem:[%s270 + $0x578] sm:$0xff]
        %v579 = vld [vmem:[%s270 + $0x580] sm:$0xff]
        %v580 = vld [vmem:[%s270 + $0x588] sm:$0xff]
        %v581 = vld [vmem:[%s270 + $0x590] sm:$0xff]
        %v582 = vld [vmem:[%s270 + $0x598] sm:$0xff]
        %v583 = vld [vmem:[%s270 + $0x5a0] sm:$0xff]
        %v584 = vld [vmem:[%s270 + $0x5a8] sm:$0xff]
        %v585 = vld [vmem:[%s270 + $0x5b0] sm:$0xff]
        %v586 = vld [vmem:[%s270 + $0x5b8] sm:$0xff]
        %v587 = vld [vmem:[%s270 + $0x5c0] sm:$0xff]
        %v588 = vld [vmem:[%s270 + $0x5c8] sm:$0xff]
        %v589 = vld [vmem:[%s270 + $0x5d0] sm:$0xff]
        %v590 = vld [vmem:[%s270 + $0x5d8] sm:$0xff]
        %v591 = vld [vmem:[%s270 + $0x5e0] sm:$0xff]
        %v592 = vld [vmem:[%s270 + $0x5e8] sm:$0xff]
        %v593 = vld [vmem:[%s270 + $0x5f0] sm:$0xff]
        %v594 = vld [vmem:[%s270 + $0x5f8] sm:$0xff]
        %v595 = vld [vmem:[%s270 + $0x600] sm:$0xff]
        %v596 = vld [vmem:[%s270 + $0x608] sm:$0xff]
        %v597 = vld [vmem:[%s270 + $0x610] sm:$0xff]
        %v598 = vld [vmem:[%s270 + $0x618] sm:$0xff]
        %v599 = vld [vmem:[%s270 + $0x620] sm:$0xff]
        %v600 = vld [vmem:[%s270 + $0x628] sm:$0xff]
        %v601 = vld [vmem:[%s270 + $0x630] sm:$0xff]
        %v602 = vld [vmem:[%s270 + $0x638] sm:$0xff]
        %v603 = vld [vmem:[%s270 + $0x640] sm:$0xff]
        %v604 = vld [vmem:[%s270 + $0x648] sm:$0xff]
        %v605 = vld [vmem:[%s270 + $0x650] sm:$0xff]
        %v606 = vld [vmem:[%s270 + $0x658] sm:$0xff]
        %v607 = vld [vmem:[%s270 + $0x660] sm:$0xff]
        %v608 = vld [vmem:[%s270 + $0x668] sm:$0xff]
        %v609 = vld [vmem:[%s270 + $0x670] sm:$0xff]
        %v610 = vld [vmem:[%s270 + $0x678] sm:$0xff]
        %v611 = vld [vmem:[%s270 + $0x680] sm:$0xff]
        %v612 = vld [vmem:[%s270 + $0x688] sm:$0xff]
        %v613 = vld [vmem:[%s270 + $0x690] sm:$0xff]
        %v614 = vld [vmem:[%s270 + $0x698] sm:$0xff]
        %v615 = vld [vmem:[%s270 + $0x6a0] sm:$0xff]
        %v616 = vld [vmem:[%s270 + $0x6a8] sm:$0xff]
        %v617 = vld [vmem:[%s270 + $0x6b0] sm:$0xff]
        %v618 = vld [vmem:[%s270 + $0x6b8] sm:$0xff]
        %v619 = vld [vmem:[%s270 + $0x6c0] sm:$0xff]
        %v620 = vld [vmem:[%s270 + $0x6c8] sm:$0xff]
        %v621 = vld [vmem:[%s270 + $0x6d0] sm:$0xff]
        %v622 = vld [vmem:[%s270 + $0x6d8] sm:$0xff]
        %v623 = vld [vmem:[%s270 + $0x6e0] sm:$0xff]
        %v624 = vld [vmem:[%s270 + $0x6e8] sm:$0xff]
        %v625 = vld [vmem:[%s270 + $0x6f0] sm:$0xff]
        %v626 = vld [vmem:[%s270 + $0x6f8] sm:$0xff]
        %v627 = vld [vmem:[%s270 + $0x700] sm:$0xff]
        %v628 = vld [vmem:[%s270 + $0x708] sm:$0xff]
        %v629 = vld [vmem:[%s270 + $0x710] sm:$0xff]
        %v630 = vld [vmem:[%s270 + $0x718] sm:$0xff]
        %v631 = vld [vmem:[%s270 + $0x720] sm:$0xff]
        %v632 = vld [vmem:[%s270 + $0x728] sm:$0xff]
        %v633 = vld [vmem:[%s270 + $0x730] sm:$0xff]
        %v634 = vld [vmem:[%s270 + $0x738] sm:$0xff]
        %v635 = vld [vmem:[%s270 + $0x740] sm:$0xff]
        %v636 = vld [vmem:[%s270 + $0x748] sm:$0xff]
        %v637 = vld [vmem:[%s270 + $0x750] sm:$0xff]
        %v638 = vld [vmem:[%s270 + $0x758] sm:$0xff]
        %v639 = vld [vmem:[%s270 + $0x760] sm:$0xff]
        %v640 = vld [vmem:[%s270 + $0x768] sm:$0xff]
        %v641 = vld [vmem:[%s270 + $0x770] sm:$0xff]
        %v642 = vld [vmem:[%s270 + $0x778] sm:$0xff]
        %v643 = vld [vmem:[%s270 + $0x780] sm:$0xff]
        %v644 = vld [vmem:[%s270 + $0x788] sm:$0xff]
        %v645 = vld [vmem:[%s270 + $0x790] sm:$0xff]
        %v646 = vld [vmem:[%s270 + $0x798] sm:$0xff]
        %v647 = vld [vmem:[%s270 + $0x7a0] sm:$0xff]
        %v648 = vld [vmem:[%s270 + $0x7a8] sm:$0xff]
        %v649 = vld [vmem:[%s270 + $0x7b0] sm:$0xff]
        %v650 = vld [vmem:[%s270 + $0x7b8] sm:$0xff]
        %v651 = vld [vmem:[%s270 + $0x7c0] sm:$0xff]
        %v652 = vld [vmem:[%s270 + $0x7c8] sm:$0xff]
        %v653 = vld [vmem:[%s270 + $0x7d0] sm:$0xff]
        %v654 = vld [vmem:[%s270 + $0x7d8] sm:$0xff]
        %v655 = vld [vmem:[%s270 + $0x7e0] sm:$0xff]
        %v656 = vld [vmem:[%s270 + $0x7e8] sm:$0xff]
        %v657 = vld [vmem:[%s270 + $0x7f0] sm:$0xff]
        %v658 = vld [vmem:[%s270 + $0x7f8] sm:$0xff]
        %v659 = vpack.c.bf16 %v411, %v403
        %v660 = vpack.c.bf16 %v412, %v404
        %v661 = vpack.c.bf16 %v413, %v405
        %v662 = vpack.c.bf16 %v414, %v406
        %v663 = vpack.c.bf16 %v415, %v407
        %v664 = vpack.c.bf16 %v416, %v408
        %v665 = vpack.c.bf16 %v417, %v409
        %v666 = vpack.c.bf16 %v418, %v410
        %v667 = vpack.c.bf16 %v427, %v419
        %v668 = vpack.c.bf16 %v428, %v420
        %v669 = vpack.c.bf16 %v429, %v421
        %v670 = vpack.c.bf16 %v430, %v422
        %v671 = vpack.c.bf16 %v431, %v423
        %v672 = vpack.c.bf16 %v432, %v424
        %v673 = vpack.c.bf16 %v433, %v425
        %v674 = vpack.c.bf16 %v434, %v426
        %v675 = vpack.c.bf16 %v443, %v435
        %v676 = vpack.c.bf16 %v444, %v436
        %v677 = vpack.c.bf16 %v445, %v437
        %v678 = vpack.c.bf16 %v446, %v438
        %v679 = vpack.c.bf16 %v447, %v439
        %v680 = vpack.c.bf16 %v448, %v440
        %v681 = vpack.c.bf16 %v449, %v441
        %v682 = vpack.c.bf16 %v450, %v442
        %v683 = vpack.c.bf16 %v459, %v451
        %v684 = vpack.c.bf16 %v460, %v452
        %v685 = vpack.c.bf16 %v461, %v453
        %v686 = vpack.c.bf16 %v462, %v454
        %v687 = vpack.c.bf16 %v463, %v455
        %v688 = vpack.c.bf16 %v464, %v456
        %v689 = vpack.c.bf16 %v465, %v457
        %v690 = vpack.c.bf16 %v466, %v458
        %v691 = vpack.c.bf16 %v475, %v467
        %v692 = vpack.c.bf16 %v476, %v468
        %v693 = vpack.c.bf16 %v477, %v469
        %v694 = vpack.c.bf16 %v478, %v470
        %v695 = vpack.c.bf16 %v479, %v471
        %v696 = vpack.c.bf16 %v480, %v472
        %v697 = vpack.c.bf16 %v481, %v473
        %v698 = vpack.c.bf16 %v482, %v474
        %v699 = vpack.c.bf16 %v491, %v483
        %v700 = vpack.c.bf16 %v492, %v484
        %v701 = vpack.c.bf16 %v493, %v485
        %v702 = vpack.c.bf16 %v494, %v486
        %v703 = vpack.c.bf16 %v495, %v487
        %v704 = vpack.c.bf16 %v496, %v488
        %v705 = vpack.c.bf16 %v497, %v489
        %v706 = vpack.c.bf16 %v498, %v490
        %v707 = vpack.c.bf16 %v507, %v499
        %v708 = vpack.c.bf16 %v508, %v500
        %v709 = vpack.c.bf16 %v509, %v501
        %v710 = vpack.c.bf16 %v510, %v502
        %v711 = vpack.c.bf16 %v511, %v503
        %v712 = vpack.c.bf16 %v512, %v504
        %v713 = vpack.c.bf16 %v513, %v505
        %v714 = vpack.c.bf16 %v514, %v506
        %v715 = vpack.c.bf16 %v523, %v515
        %v716 = vpack.c.bf16 %v524, %v516
        %v717 = vpack.c.bf16 %v525, %v517
        %v718 = vpack.c.bf16 %v526, %v518
        %v719 = vpack.c.bf16 %v527, %v519
        %v720 = vpack.c.bf16 %v528, %v520
        %v721 = vpack.c.bf16 %v529, %v521
        %v722 = vpack.c.bf16 %v530, %v522
        %v723 = vpack.c.bf16 %v539, %v531
        %v724 = vpack.c.bf16 %v540, %v532
        %v725 = vpack.c.bf16 %v541, %v533
        %v726 = vpack.c.bf16 %v542, %v534
        %v727 = vpack.c.bf16 %v543, %v535
        %v728 = vpack.c.bf16 %v544, %v536
        %v729 = vpack.c.bf16 %v545, %v537
        %v730 = vpack.c.bf16 %v546, %v538
        %v731 = vpack.c.bf16 %v555, %v547
        %v732 = vpack.c.bf16 %v556, %v548
        %v733 = vpack.c.bf16 %v557, %v549
        %v734 = vpack.c.bf16 %v558, %v550
        %v735 = vpack.c.bf16 %v559, %v551
        %v736 = vpack.c.bf16 %v560, %v552
        %v737 = vpack.c.bf16 %v561, %v553
        %v738 = vpack.c.bf16 %v562, %v554
        %v739 = vpack.c.bf16 %v571, %v563
        %v740 = vpack.c.bf16 %v572, %v564
        %v741 = vpack.c.bf16 %v573, %v565
        %v742 = vpack.c.bf16 %v574, %v566
        %v743 = vpack.c.bf16 %v575, %v567
        %v744 = vpack.c.bf16 %v576, %v568
        %v745 = vpack.c.bf16 %v577, %v569
        %v746 = vpack.c.bf16 %v578, %v570
        %v747 = vpack.c.bf16 %v587, %v579
        %v748 = vpack.c.bf16 %v588, %v580
        %v749 = vpack.c.bf16 %v589, %v581
        %v750 = vpack.c.bf16 %v590, %v582
        %v751 = vpack.c.bf16 %v591, %v583
        %v752 = vpack.c.bf16 %v592, %v584
        %v753 = vpack.c.bf16 %v593, %v585
        %v754 = vpack.c.bf16 %v594, %v586
        %v755 = vpack.c.bf16 %v603, %v595
        %v756 = vpack.c.bf16 %v604, %v596
        %v757 = vpack.c.bf16 %v605, %v597
        %v758 = vpack.c.bf16 %v606, %v598
        %v759 = vpack.c.bf16 %v607, %v599
        %v760 = vpack.c.bf16 %v608, %v600
        %v761 = vpack.c.bf16 %v609, %v601
        %v762 = vpack.c.bf16 %v610, %v602
        %v763 = vpack.c.bf16 %v619, %v611
        %v764 = vpack.c.bf16 %v620, %v612
        %v765 = vpack.c.bf16 %v621, %v613
        %v766 = vpack.c.bf16 %v622, %v614
        %v767 = vpack.c.bf16 %v623, %v615
        %v768 = vpack.c.bf16 %v624, %v616
        %v769 = vpack.c.bf16 %v625, %v617
        %v770 = vpack.c.bf16 %v626, %v618
        %v771 = vpack.c.bf16 %v635, %v627
        %v772 = vpack.c.bf16 %v636, %v628
        %v773 = vpack.c.bf16 %v637, %v629
        %v774 = vpack.c.bf16 %v638, %v630
        %v775 = vpack.c.bf16 %v639, %v631
        %v776 = vpack.c.bf16 %v640, %v632
        %v777 = vpack.c.bf16 %v641, %v633
        %v778 = vpack.c.bf16 %v642, %v634
        %v779 = vpack.c.bf16 %v651, %v643
        %v780 = vpack.c.bf16 %v652, %v644
        %v781 = vpack.c.bf16 %v653, %v645
        %v782 = vpack.c.bf16 %v654, %v646
        %v783 = vpack.c.bf16 %v655, %v647
        %v784 = vpack.c.bf16 %v656, %v648
        %v785 = vpack.c.bf16 %v657, %v649
        %v786 = vpack.c.bf16 %v658, %v650
        %v787 = vld [vmem:[%s279] sm:$0xff]
        %v788 = vld [vmem:[%s279 + $0x8] sm:$0xff]
        %v789 = vld [vmem:[%s279 + $0x10] sm:$0xff]
        %v790 = vld [vmem:[%s279 + $0x18] sm:$0xff]
        %v791 = vld [vmem:[%s279 + $0x20] sm:$0xff]
        %v792 = vld [vmem:[%s279 + $0x28] sm:$0xff]
        %v793 = vld [vmem:[%s279 + $0x30] sm:$0xff]
        %v794 = vld [vmem:[%s279 + $0x38] sm:$0xff]
        %v795 = vld [vmem:[%s279 + $0x40] sm:$0xff]
        %v796 = vld [vmem:[%s279 + $0x48] sm:$0xff]
        %v797 = vld [vmem:[%s279 + $0x50] sm:$0xff]
        %v798 = vld [vmem:[%s279 + $0x58] sm:$0xff]
        %v799 = vld [vmem:[%s279 + $0x60] sm:$0xff]
        %v800 = vld [vmem:[%s279 + $0x68] sm:$0xff]
        %v801 = vld [vmem:[%s279 + $0x70] sm:$0xff]
        %v802 = vld [vmem:[%s279 + $0x78] sm:$0xff]
        %v803 = vld [vmem:[%s279 + $0x80] sm:$0xff]
        %v804 = vld [vmem:[%s279 + $0x88] sm:$0xff]
        %v805 = vld [vmem:[%s279 + $0x90] sm:$0xff]
        %v806 = vld [vmem:[%s279 + $0x98] sm:$0xff]
        %v807 = vld [vmem:[%s279 + $0xa0] sm:$0xff]
        %v808 = vld [vmem:[%s279 + $0xa8] sm:$0xff]
        %v809 = vld [vmem:[%s279 + $0xb0] sm:$0xff]
        %v810 = vld [vmem:[%s279 + $0xb8] sm:$0xff]
        %v811 = vld [vmem:[%s279 + $0xc0] sm:$0xff]
        %v812 = vld [vmem:[%s279 + $0xc8] sm:$0xff]
        %v813 = vld [vmem:[%s279 + $0xd0] sm:$0xff]
        %v814 = vld [vmem:[%s279 + $0xd8] sm:$0xff]
        %v815 = vld [vmem:[%s279 + $0xe0] sm:$0xff]
        %v816 = vld [vmem:[%s279 + $0xe8] sm:$0xff]
        %v817 = vld [vmem:[%s279 + $0xf0] sm:$0xff]
        %v818 = vld [vmem:[%s279 + $0xf8] sm:$0xff]
        %v819 = vld [vmem:[%s279 + $0x100] sm:$0xff]
        %v820 = vld [vmem:[%s279 + $0x108] sm:$0xff]
        %v821 = vld [vmem:[%s279 + $0x110] sm:$0xff]
        %v822 = vld [vmem:[%s279 + $0x118] sm:$0xff]
        %v823 = vld [vmem:[%s279 + $0x120] sm:$0xff]
        %v824 = vld [vmem:[%s279 + $0x128] sm:$0xff]
        %v825 = vld [vmem:[%s279 + $0x130] sm:$0xff]
        %v826 = vld [vmem:[%s279 + $0x138] sm:$0xff]
        %v827 = vld [vmem:[%s279 + $0x140] sm:$0xff]
        %v828 = vld [vmem:[%s279 + $0x148] sm:$0xff]
        %v829 = vld [vmem:[%s279 + $0x150] sm:$0xff]
        %v830 = vld [vmem:[%s279 + $0x158] sm:$0xff]
        %v831 = vld [vmem:[%s279 + $0x160] sm:$0xff]
        %v832 = vld [vmem:[%s279 + $0x168] sm:$0xff]
        %v833 = vld [vmem:[%s279 + $0x170] sm:$0xff]
        %v834 = vld [vmem:[%s279 + $0x178] sm:$0xff]
        %v835 = vld [vmem:[%s279 + $0x180] sm:$0xff]
        %v836 = vld [vmem:[%s279 + $0x188] sm:$0xff]
        %v837 = vld [vmem:[%s279 + $0x190] sm:$0xff]
        %v838 = vld [vmem:[%s279 + $0x198] sm:$0xff]
        %v839 = vld [vmem:[%s279 + $0x1a0] sm:$0xff]
        %v840 = vld [vmem:[%s279 + $0x1a8] sm:$0xff]
        %v841 = vld [vmem:[%s279 + $0x1b0] sm:$0xff]
        %v842 = vld [vmem:[%s279 + $0x1b8] sm:$0xff]
        %v843 = vld [vmem:[%s279 + $0x1c0] sm:$0xff]
        %v844 = vld [vmem:[%s279 + $0x1c8] sm:$0xff]
        %v845 = vld [vmem:[%s279 + $0x1d0] sm:$0xff]
        %v846 = vld [vmem:[%s279 + $0x1d8] sm:$0xff]
        %v847 = vld [vmem:[%s279 + $0x1e0] sm:$0xff]
        %v848 = vld [vmem:[%s279 + $0x1e8] sm:$0xff]
        %v849 = vld [vmem:[%s279 + $0x1f0] sm:$0xff]
        %v850 = vld [vmem:[%s279 + $0x1f8] sm:$0xff]
        %v851 = vld [vmem:[%s279 + $0x200] sm:$0xff]
        %v852 = vld [vmem:[%s279 + $0x208] sm:$0xff]
        %v853 = vld [vmem:[%s279 + $0x210] sm:$0xff]
        %v854 = vld [vmem:[%s279 + $0x218] sm:$0xff]
        %v855 = vld [vmem:[%s279 + $0x220] sm:$0xff]
        %v856 = vld [vmem:[%s279 + $0x228] sm:$0xff]
        %v857 = vld [vmem:[%s279 + $0x230] sm:$0xff]
        %v858 = vld [vmem:[%s279 + $0x238] sm:$0xff]
        %v859 = vld [vmem:[%s279 + $0x240] sm:$0xff]
        %v860 = vld [vmem:[%s279 + $0x248] sm:$0xff]
        %v861 = vld [vmem:[%s279 + $0x250] sm:$0xff]
        %v862 = vld [vmem:[%s279 + $0x258] sm:$0xff]
        %v863 = vld [vmem:[%s279 + $0x260] sm:$0xff]
        %v864 = vld [vmem:[%s279 + $0x268] sm:$0xff]
        %v865 = vld [vmem:[%s279 + $0x270] sm:$0xff]
        %v866 = vld [vmem:[%s279 + $0x278] sm:$0xff]
        %v867 = vld [vmem:[%s279 + $0x280] sm:$0xff]
        %v868 = vld [vmem:[%s279 + $0x288] sm:$0xff]
        %v869 = vld [vmem:[%s279 + $0x290] sm:$0xff]
        %v870 = vld [vmem:[%s279 + $0x298] sm:$0xff]
        %v871 = vld [vmem:[%s279 + $0x2a0] sm:$0xff]
        %v872 = vld [vmem:[%s279 + $0x2a8] sm:$0xff]
        %v873 = vld [vmem:[%s279 + $0x2b0] sm:$0xff]
        %v874 = vld [vmem:[%s279 + $0x2b8] sm:$0xff]
        %v875 = vld [vmem:[%s279 + $0x2c0] sm:$0xff]
        %v876 = vld [vmem:[%s279 + $0x2c8] sm:$0xff]
        %v877 = vld [vmem:[%s279 + $0x2d0] sm:$0xff]
        %v878 = vld [vmem:[%s279 + $0x2d8] sm:$0xff]
        %v879 = vld [vmem:[%s279 + $0x2e0] sm:$0xff]
        %v880 = vld [vmem:[%s279 + $0x2e8] sm:$0xff]
        %v881 = vld [vmem:[%s279 + $0x2f0] sm:$0xff]
        %v882 = vld [vmem:[%s279 + $0x2f8] sm:$0xff]
        %v883 = vld [vmem:[%s279 + $0x300] sm:$0xff]
        %v884 = vld [vmem:[%s279 + $0x308] sm:$0xff]
        %v885 = vld [vmem:[%s279 + $0x310] sm:$0xff]
        %v886 = vld [vmem:[%s279 + $0x318] sm:$0xff]
        %v887 = vld [vmem:[%s279 + $0x320] sm:$0xff]
        %v888 = vld [vmem:[%s279 + $0x328] sm:$0xff]
        %v889 = vld [vmem:[%s279 + $0x330] sm:$0xff]
        %v890 = vld [vmem:[%s279 + $0x338] sm:$0xff]
        %v891 = vld [vmem:[%s279 + $0x340] sm:$0xff]
        %v892 = vld [vmem:[%s279 + $0x348] sm:$0xff]
        %v893 = vld [vmem:[%s279 + $0x350] sm:$0xff]
        %v894 = vld [vmem:[%s279 + $0x358] sm:$0xff]
        %v895 = vld [vmem:[%s279 + $0x360] sm:$0xff]
        %v896 = vld [vmem:[%s279 + $0x368] sm:$0xff]
        %v897 = vld [vmem:[%s279 + $0x370] sm:$0xff]
        %v898 = vld [vmem:[%s279 + $0x378] sm:$0xff]
        %v899 = vld [vmem:[%s279 + $0x380] sm:$0xff]
        %v900 = vld [vmem:[%s279 + $0x388] sm:$0xff]
        %v901 = vld [vmem:[%s279 + $0x390] sm:$0xff]
        %v902 = vld [vmem:[%s279 + $0x398] sm:$0xff]
        %v903 = vld [vmem:[%s279 + $0x3a0] sm:$0xff]
        %v904 = vld [vmem:[%s279 + $0x3a8] sm:$0xff]
        %v905 = vld [vmem:[%s279 + $0x3b0] sm:$0xff]
        %v906 = vld [vmem:[%s279 + $0x3b8] sm:$0xff]
        %v907 = vld [vmem:[%s279 + $0x3c0] sm:$0xff]
        %v908 = vld [vmem:[%s279 + $0x3c8] sm:$0xff]
        %v909 = vld [vmem:[%s279 + $0x3d0] sm:$0xff]
        %v910 = vld [vmem:[%s279 + $0x3d8] sm:$0xff]
        %v911 = vld [vmem:[%s279 + $0x3e0] sm:$0xff]
        %v912 = vld [vmem:[%s279 + $0x3e8] sm:$0xff]
        %v913 = vld [vmem:[%s279 + $0x3f0] sm:$0xff]
        %v914 = vld [vmem:[%s279 + $0x3f8] sm:$0xff]
        %v915 = vld [vmem:[%s279 + $0x400] sm:$0xff]
        %v916 = vld [vmem:[%s279 + $0x408] sm:$0xff]
        %v917 = vld [vmem:[%s279 + $0x410] sm:$0xff]
        %v918 = vld [vmem:[%s279 + $0x418] sm:$0xff]
        %v919 = vld [vmem:[%s279 + $0x420] sm:$0xff]
        %v920 = vld [vmem:[%s279 + $0x428] sm:$0xff]
        %v921 = vld [vmem:[%s279 + $0x430] sm:$0xff]
        %v922 = vld [vmem:[%s279 + $0x438] sm:$0xff]
        %v923 = vld [vmem:[%s279 + $0x440] sm:$0xff]
        %v924 = vld [vmem:[%s279 + $0x448] sm:$0xff]
        %v925 = vld [vmem:[%s279 + $0x450] sm:$0xff]
        %v926 = vld [vmem:[%s279 + $0x458] sm:$0xff]
        %v927 = vld [vmem:[%s279 + $0x460] sm:$0xff]
        %v928 = vld [vmem:[%s279 + $0x468] sm:$0xff]
        %v929 = vld [vmem:[%s279 + $0x470] sm:$0xff]
        %v930 = vld [vmem:[%s279 + $0x478] sm:$0xff]
        %v931 = vld [vmem:[%s279 + $0x480] sm:$0xff]
        %v932 = vld [vmem:[%s279 + $0x488] sm:$0xff]
        %v933 = vld [vmem:[%s279 + $0x490] sm:$0xff]
        %v934 = vld [vmem:[%s279 + $0x498] sm:$0xff]
        %v935 = vld [vmem:[%s279 + $0x4a0] sm:$0xff]
        %v936 = vld [vmem:[%s279 + $0x4a8] sm:$0xff]
        %v937 = vld [vmem:[%s279 + $0x4b0] sm:$0xff]
        %v938 = vld [vmem:[%s279 + $0x4b8] sm:$0xff]
        %v939 = vld [vmem:[%s279 + $0x4c0] sm:$0xff]
        %v940 = vld [vmem:[%s279 + $0x4c8] sm:$0xff]
        %v941 = vld [vmem:[%s279 + $0x4d0] sm:$0xff]
        %v942 = vld [vmem:[%s279 + $0x4d8] sm:$0xff]
        %v943 = vld [vmem:[%s279 + $0x4e0] sm:$0xff]
        %v944 = vld [vmem:[%s279 + $0x4e8] sm:$0xff]
        %v945 = vld [vmem:[%s279 + $0x4f0] sm:$0xff]
        %v946 = vld [vmem:[%s279 + $0x4f8] sm:$0xff]
        %v947 = vld [vmem:[%s279 + $0x500] sm:$0xff]
        %v948 = vld [vmem:[%s279 + $0x508] sm:$0xff]
        %v949 = vld [vmem:[%s279 + $0x510] sm:$0xff]
        %v950 = vld [vmem:[%s279 + $0x518] sm:$0xff]
        %v951 = vld [vmem:[%s279 + $0x520] sm:$0xff]
        %v952 = vld [vmem:[%s279 + $0x528] sm:$0xff]
        %v953 = vld [vmem:[%s279 + $0x530] sm:$0xff]
        %v954 = vld [vmem:[%s279 + $0x538] sm:$0xff]
        %v955 = vld [vmem:[%s279 + $0x540] sm:$0xff]
        %v956 = vld [vmem:[%s279 + $0x548] sm:$0xff]
        %v957 = vld [vmem:[%s279 + $0x550] sm:$0xff]
        %v958 = vld [vmem:[%s279 + $0x558] sm:$0xff]
        %v959 = vld [vmem:[%s279 + $0x560] sm:$0xff]
        %v960 = vld [vmem:[%s279 + $0x568] sm:$0xff]
        %v961 = vld [vmem:[%s279 + $0x570] sm:$0xff]
        %v962 = vld [vmem:[%s279 + $0x578] sm:$0xff]
        %v963 = vld [vmem:[%s279 + $0x580] sm:$0xff]
        %v964 = vld [vmem:[%s279 + $0x588] sm:$0xff]
        %v965 = vld [vmem:[%s279 + $0x590] sm:$0xff]
        %v966 = vld [vmem:[%s279 + $0x598] sm:$0xff]
        %v967 = vld [vmem:[%s279 + $0x5a0] sm:$0xff]
        %v968 = vld [vmem:[%s279 + $0x5a8] sm:$0xff]
        %v969 = vld [vmem:[%s279 + $0x5b0] sm:$0xff]
        %v970 = vld [vmem:[%s279 + $0x5b8] sm:$0xff]
        %v971 = vld [vmem:[%s279 + $0x5c0] sm:$0xff]
        %v972 = vld [vmem:[%s279 + $0x5c8] sm:$0xff]
        %v973 = vld [vmem:[%s279 + $0x5d0] sm:$0xff]
        %v974 = vld [vmem:[%s279 + $0x5d8] sm:$0xff]
        %v975 = vld [vmem:[%s279 + $0x5e0] sm:$0xff]
        %v976 = vld [vmem:[%s279 + $0x5e8] sm:$0xff]
        %v977 = vld [vmem:[%s279 + $0x5f0] sm:$0xff]
        %v978 = vld [vmem:[%s279 + $0x5f8] sm:$0xff]
        %v979 = vld [vmem:[%s279 + $0x600] sm:$0xff]
        %v980 = vld [vmem:[%s279 + $0x608] sm:$0xff]
        %v981 = vld [vmem:[%s279 + $0x610] sm:$0xff]
        %v982 = vld [vmem:[%s279 + $0x618] sm:$0xff]
        %v983 = vld [vmem:[%s279 + $0x620] sm:$0xff]
        %v984 = vld [vmem:[%s279 + $0x628] sm:$0xff]
        %v985 = vld [vmem:[%s279 + $0x630] sm:$0xff]
        %v986 = vld [vmem:[%s279 + $0x638] sm:$0xff]
        %v987 = vld [vmem:[%s279 + $0x640] sm:$0xff]
        %v988 = vld [vmem:[%s279 + $0x648] sm:$0xff]
        %v989 = vld [vmem:[%s279 + $0x650] sm:$0xff]
        %v990 = vld [vmem:[%s279 + $0x658] sm:$0xff]
        %v991 = vld [vmem:[%s279 + $0x660] sm:$0xff]
        %v992 = vld [vmem:[%s279 + $0x668] sm:$0xff]
        %v993 = vld [vmem:[%s279 + $0x670] sm:$0xff]
        %v994 = vld [vmem:[%s279 + $0x678] sm:$0xff]
        %v995 = vld [vmem:[%s279 + $0x680] sm:$0xff]
        %v996 = vld [vmem:[%s279 + $0x688] sm:$0xff]
        %v997 = vld [vmem:[%s279 + $0x690] sm:$0xff]
        %v998 = vld [vmem:[%s279 + $0x698] sm:$0xff]
        %v999 = vld [vmem:[%s279 + $0x6a0] sm:$0xff]
        %v1000 = vld [vmem:[%s279 + $0x6a8] sm:$0xff]
        %v1001 = vld [vmem:[%s279 + $0x6b0] sm:$0xff]
        %v1002 = vld [vmem:[%s279 + $0x6b8] sm:$0xff]
        %v1003 = vld [vmem:[%s279 + $0x6c0] sm:$0xff]
        %v1004 = vld [vmem:[%s279 + $0x6c8] sm:$0xff]
        %v1005 = vld [vmem:[%s279 + $0x6d0] sm:$0xff]
        %v1006 = vld [vmem:[%s279 + $0x6d8] sm:$0xff]
        %v1007 = vld [vmem:[%s279 + $0x6e0] sm:$0xff]
        %v1008 = vld [vmem:[%s279 + $0x6e8] sm:$0xff]
        %v1009 = vld [vmem:[%s279 + $0x6f0] sm:$0xff]
        %v1010 = vld [vmem:[%s279 + $0x6f8] sm:$0xff]
        %v1011 = vld [vmem:[%s279 + $0x700] sm:$0xff]
        %v1012 = vld [vmem:[%s279 + $0x708] sm:$0xff]
        %v1013 = vld [vmem:[%s279 + $0x710] sm:$0xff]
        %v1014 = vld [vmem:[%s279 + $0x718] sm:$0xff]
        %v1015 = vld [vmem:[%s279 + $0x720] sm:$0xff]
        %v1016 = vld [vmem:[%s279 + $0x728] sm:$0xff]
        %v1017 = vld [vmem:[%s279 + $0x730] sm:$0xff]
        %v1018 = vld [vmem:[%s279 + $0x738] sm:$0xff]
        %v1019 = vld [vmem:[%s279 + $0x740] sm:$0xff]
        %v1020 = vld [vmem:[%s279 + $0x748] sm:$0xff]
        %v1021 = vld [vmem:[%s279 + $0x750] sm:$0xff]
        %v1022 = vld [vmem:[%s279 + $0x758] sm:$0xff]
        %v1023 = vld [vmem:[%s279 + $0x760] sm:$0xff]
        %v1024 = vld [vmem:[%s279 + $0x768] sm:$0xff]
        %v1025 = vld [vmem:[%s279 + $0x770] sm:$0xff]
        %v1026 = vld [vmem:[%s279 + $0x778] sm:$0xff]
        %v1027 = vld [vmem:[%s279 + $0x780] sm:$0xff]
        %v1028 = vld [vmem:[%s279 + $0x788] sm:$0xff]
        %v1029 = vld [vmem:[%s279 + $0x790] sm:$0xff]
        %v1030 = vld [vmem:[%s279 + $0x798] sm:$0xff]
        %v1031 = vld [vmem:[%s279 + $0x7a0] sm:$0xff]
        %v1032 = vld [vmem:[%s279 + $0x7a8] sm:$0xff]
        %v1033 = vld [vmem:[%s279 + $0x7b0] sm:$0xff]
        %v1034 = vld [vmem:[%s279 + $0x7b8] sm:$0xff]
        %v1035 = vld [vmem:[%s279 + $0x7c0] sm:$0xff]
        %v1036 = vld [vmem:[%s279 + $0x7c8] sm:$0xff]
        %v1037 = vld [vmem:[%s279 + $0x7d0] sm:$0xff]
        %v1038 = vld [vmem:[%s279 + $0x7d8] sm:$0xff]
        %v1039 = vld [vmem:[%s279 + $0x7e0] sm:$0xff]
        %v1040 = vld [vmem:[%s279 + $0x7e8] sm:$0xff]
        %v1041 = vld [vmem:[%s279 + $0x7f0] sm:$0xff]
        %v1042 = vld [vmem:[%s279 + $0x7f8] sm:$0xff]
        %v1043 = vpack.c.bf16 %v795, %v787
        %v1044 = vpack.c.bf16 %v796, %v788
        %v1045 = vpack.c.bf16 %v797, %v789
        %v1046 = vpack.c.bf16 %v798, %v790
        %v1047 = vpack.c.bf16 %v799, %v791
        %v1048 = vpack.c.bf16 %v800, %v792
        %v1049 = vpack.c.bf16 %v801, %v793
        %v1050 = vpack.c.bf16 %v802, %v794
        %v1051 = vpack.c.bf16 %v811, %v803
        %v1052 = vpack.c.bf16 %v812, %v804
        %v1053 = vpack.c.bf16 %v813, %v805
        %v1054 = vpack.c.bf16 %v814, %v806
        %v1055 = vpack.c.bf16 %v815, %v807
        %v1056 = vpack.c.bf16 %v816, %v808
        %v1057 = vpack.c.bf16 %v817, %v809
        %v1058 = vpack.c.bf16 %v818, %v810
        %v1059 = vpack.c.bf16 %v827, %v819
        %v1060 = vpack.c.bf16 %v828, %v820
        %v1061 = vpack.c.bf16 %v829, %v821
        %v1062 = vpack.c.bf16 %v830, %v822
        %v1063 = vpack.c.bf16 %v831, %v823
        %v1064 = vpack.c.bf16 %v832, %v824
        %v1065 = vpack.c.bf16 %v833, %v825
        %v1066 = vpack.c.bf16 %v834, %v826
        %v1067 = vpack.c.bf16 %v843, %v835
        %v1068 = vpack.c.bf16 %v844, %v836
        %v1069 = vpack.c.bf16 %v845, %v837
        %v1070 = vpack.c.bf16 %v846, %v838
        %v1071 = vpack.c.bf16 %v847, %v839
        %v1072 = vpack.c.bf16 %v848, %v840
        %v1073 = vpack.c.bf16 %v849, %v841
        %v1074 = vpack.c.bf16 %v850, %v842
        %v1075 = vpack.c.bf16 %v859, %v851
        %v1076 = vpack.c.bf16 %v860, %v852
        %v1077 = vpack.c.bf16 %v861, %v853
        %v1078 = vpack.c.bf16 %v862, %v854
        %v1079 = vpack.c.bf16 %v863, %v855
        %v1080 = vpack.c.bf16 %v864, %v856
        %v1081 = vpack.c.bf16 %v865, %v857
        %v1082 = vpack.c.bf16 %v866, %v858
        %v1083 = vpack.c.bf16 %v875, %v867
        %v1084 = vpack.c.bf16 %v876, %v868
        %v1085 = vpack.c.bf16 %v877, %v869
        %v1086 = vpack.c.bf16 %v878, %v870
        %v1087 = vpack.c.bf16 %v879, %v871
        %v1088 = vpack.c.bf16 %v880, %v872
        %v1089 = vpack.c.bf16 %v881, %v873
        %v1090 = vpack.c.bf16 %v882, %v874
        %v1091 = vpack.c.bf16 %v891, %v883
        %v1092 = vpack.c.bf16 %v892, %v884
        %v1093 = vpack.c.bf16 %v893, %v885
        %v1094 = vpack.c.bf16 %v894, %v886
        %v1095 = vpack.c.bf16 %v895, %v887
        %v1096 = vpack.c.bf16 %v896, %v888
        %v1097 = vpack.c.bf16 %v897, %v889
        %v1098 = vpack.c.bf16 %v898, %v890
        %v1099 = vpack.c.bf16 %v907, %v899
        %v1100 = vpack.c.bf16 %v908, %v900
        %v1101 = vpack.c.bf16 %v909, %v901
        %v1102 = vpack.c.bf16 %v910, %v902
        %v1103 = vpack.c.bf16 %v911, %v903
        %v1104 = vpack.c.bf16 %v912, %v904
        %v1105 = vpack.c.bf16 %v913, %v905
        %v1106 = vpack.c.bf16 %v914, %v906
        %v1107 = vpack.c.bf16 %v923, %v915
        %v1108 = vpack.c.bf16 %v924, %v916
        %v1109 = vpack.c.bf16 %v925, %v917
        %v1110 = vpack.c.bf16 %v926, %v918
        %v1111 = vpack.c.bf16 %v927, %v919
        %v1112 = vpack.c.bf16 %v928, %v920
        %v1113 = vpack.c.bf16 %v929, %v921
        %v1114 = vpack.c.bf16 %v930, %v922
        %v1115 = vpack.c.bf16 %v939, %v931
        %v1116 = vpack.c.bf16 %v940, %v932
        %v1117 = vpack.c.bf16 %v941, %v933
        %v1118 = vpack.c.bf16 %v942, %v934
        %v1119 = vpack.c.bf16 %v943, %v935
        %v1120 = vpack.c.bf16 %v944, %v936
        %v1121 = vpack.c.bf16 %v945, %v937
        %v1122 = vpack.c.bf16 %v946, %v938
        %v1123 = vpack.c.bf16 %v955, %v947
        %v1124 = vpack.c.bf16 %v956, %v948
        %v1125 = vpack.c.bf16 %v957, %v949
        %v1126 = vpack.c.bf16 %v958, %v950
        %v1127 = vpack.c.bf16 %v959, %v951
        %v1128 = vpack.c.bf16 %v960, %v952
        %v1129 = vpack.c.bf16 %v961, %v953
        %v1130 = vpack.c.bf16 %v962, %v954
        %v1131 = vpack.c.bf16 %v971, %v963
        %v1132 = vpack.c.bf16 %v972, %v964
        %v1133 = vpack.c.bf16 %v973, %v965
        %v1134 = vpack.c.bf16 %v974, %v966
        %v1135 = vpack.c.bf16 %v975, %v967
        %v1136 = vpack.c.bf16 %v976, %v968
        %v1137 = vpack.c.bf16 %v977, %v969
        %v1138 = vpack.c.bf16 %v978, %v970
        %v1139 = vpack.c.bf16 %v987, %v979
        %v1140 = vpack.c.bf16 %v988, %v980
        %v1141 = vpack.c.bf16 %v989, %v981
        %v1142 = vpack.c.bf16 %v990, %v982
        %v1143 = vpack.c.bf16 %v991, %v983
        %v1144 = vpack.c.bf16 %v992, %v984
        %v1145 = vpack.c.bf16 %v993, %v985
        %v1146 = vpack.c.bf16 %v994, %v986
        %v1147 = vpack.c.bf16 %v1003, %v995
        %v1148 = vpack.c.bf16 %v1004, %v996
        %v1149 = vpack.c.bf16 %v1005, %v997
        %v1150 = vpack.c.bf16 %v1006, %v998
        %v1151 = vpack.c.bf16 %v1007, %v999
        %v1152 = vpack.c.bf16 %v1008, %v1000
        %v1153 = vpack.c.bf16 %v1009, %v1001
        %v1154 = vpack.c.bf16 %v1010, %v1002
        %v1155 = vpack.c.bf16 %v1019, %v1011
        %v1156 = vpack.c.bf16 %v1020, %v1012
        %v1157 = vpack.c.bf16 %v1021, %v1013
        %v1158 = vpack.c.bf16 %v1022, %v1014
        %v1159 = vpack.c.bf16 %v1023, %v1015
        %v1160 = vpack.c.bf16 %v1024, %v1016
        %v1161 = vpack.c.bf16 %v1025, %v1017
        %v1162 = vpack.c.bf16 %v1026, %v1018
        %v1163 = vpack.c.bf16 %v1035, %v1027
        %v1164 = vpack.c.bf16 %v1036, %v1028
        %v1165 = vpack.c.bf16 %v1037, %v1029
        %v1166 = vpack.c.bf16 %v1038, %v1030
        %v1167 = vpack.c.bf16 %v1039, %v1031
        %v1168 = vpack.c.bf16 %v1040, %v1032
        %v1169 = vpack.c.bf16 %v1041, %v1033
        %v1170 = vpack.c.bf16 %v1042, %v1034
        %v1171 = vld [vmem:[#allocation6] sm:$0xff]
        %v1172 = vld [vmem:[#allocation6 + $0x8] sm:$0xff]
        %v1173 = vld [vmem:[#allocation6 + $0x10] sm:$0xff]
        %v1174 = vld [vmem:[#allocation6 + $0x18] sm:$0xff]
        %v1175 = vld [vmem:[#allocation6 + $0x20] sm:$0xff]
        %v1176 = vld [vmem:[#allocation6 + $0x28] sm:$0xff]
        %v1177 = vld [vmem:[#allocation6 + $0x30] sm:$0xff]
        %v1178 = vld [vmem:[#allocation6 + $0x38] sm:$0xff]
        %v1179 = vld [vmem:[#allocation6 + $0x40] sm:$0xff]
        %v1180 = vld [vmem:[#allocation6 + $0x48] sm:$0xff]
        %v1181 = vld [vmem:[#allocation6 + $0x50] sm:$0xff]
        %v1182 = vld [vmem:[#allocation6 + $0x58] sm:$0xff]
        %v1183 = vld [vmem:[#allocation6 + $0x60] sm:$0xff]
        %v1184 = vld [vmem:[#allocation6 + $0x68] sm:$0xff]
        %v1185 = vld [vmem:[#allocation6 + $0x70] sm:$0xff]
        %v1186 = vld [vmem:[#allocation6 + $0x78] sm:$0xff]
        %v1187 = vld [vmem:[#allocation6 + $0x80] sm:$0xff]
        %v1188 = vld [vmem:[#allocation6 + $0x88] sm:$0xff]
        %v1189 = vld [vmem:[#allocation6 + $0x90] sm:$0xff]
        %v1190 = vld [vmem:[#allocation6 + $0x98] sm:$0xff]
        %v1191 = vld [vmem:[#allocation6 + $0xa0] sm:$0xff]
        %v1192 = vld [vmem:[#allocation6 + $0xa8] sm:$0xff]
        %v1193 = vld [vmem:[#allocation6 + $0xb0] sm:$0xff]
        %v1194 = vld [vmem:[#allocation6 + $0xb8] sm:$0xff]
        %v1195 = vld [vmem:[#allocation6 + $0xc0] sm:$0xff]
        %v1196 = vld [vmem:[#allocation6 + $0xc8] sm:$0xff]
        %v1197 = vld [vmem:[#allocation6 + $0xd0] sm:$0xff]
        %v1198 = vld [vmem:[#allocation6 + $0xd8] sm:$0xff]
        %v1199 = vld [vmem:[#allocation6 + $0xe0] sm:$0xff]
        %v1200 = vld [vmem:[#allocation6 + $0xe8] sm:$0xff]
        %v1201 = vld [vmem:[#allocation6 + $0xf0] sm:$0xff]
        %v1202 = vld [vmem:[#allocation6 + $0xf8] sm:$0xff]
        %v1203 = vld [vmem:[#allocation6 + $0x100] sm:$0xff]
        %v1204 = vld [vmem:[#allocation6 + $0x108] sm:$0xff]
        %v1205 = vld [vmem:[#allocation6 + $0x110] sm:$0xff]
        %v1206 = vld [vmem:[#allocation6 + $0x118] sm:$0xff]
        %v1207 = vld [vmem:[#allocation6 + $0x120] sm:$0xff]
        %v1208 = vld [vmem:[#allocation6 + $0x128] sm:$0xff]
        %v1209 = vld [vmem:[#allocation6 + $0x130] sm:$0xff]
        %v1210 = vld [vmem:[#allocation6 + $0x138] sm:$0xff]
        %v1211 = vld [vmem:[#allocation6 + $0x140] sm:$0xff]
        %v1212 = vld [vmem:[#allocation6 + $0x148] sm:$0xff]
        %v1213 = vld [vmem:[#allocation6 + $0x150] sm:$0xff]
        %v1214 = vld [vmem:[#allocation6 + $0x158] sm:$0xff]
        %v1215 = vld [vmem:[#allocation6 + $0x160] sm:$0xff]
        %v1216 = vld [vmem:[#allocation6 + $0x168] sm:$0xff]
        %v1217 = vld [vmem:[#allocation6 + $0x170] sm:$0xff]
        %v1218 = vld [vmem:[#allocation6 + $0x178] sm:$0xff]
        %v1219 = vld [vmem:[#allocation6 + $0x180] sm:$0xff]
        %v1220 = vld [vmem:[#allocation6 + $0x188] sm:$0xff]
        %v1221 = vld [vmem:[#allocation6 + $0x190] sm:$0xff]
        %v1222 = vld [vmem:[#allocation6 + $0x198] sm:$0xff]
        %v1223 = vld [vmem:[#allocation6 + $0x1a0] sm:$0xff]
        %v1224 = vld [vmem:[#allocation6 + $0x1a8] sm:$0xff]
        %v1225 = vld [vmem:[#allocation6 + $0x1b0] sm:$0xff]
        %v1226 = vld [vmem:[#allocation6 + $0x1b8] sm:$0xff]
        %v1227 = vld [vmem:[#allocation6 + $0x1c0] sm:$0xff]
        %v1228 = vld [vmem:[#allocation6 + $0x1c8] sm:$0xff]
        %v1229 = vld [vmem:[#allocation6 + $0x1d0] sm:$0xff]
        %v1230 = vld [vmem:[#allocation6 + $0x1d8] sm:$0xff]
        %v1231 = vld [vmem:[#allocation6 + $0x1e0] sm:$0xff]
        %v1232 = vld [vmem:[#allocation6 + $0x1e8] sm:$0xff]
        %v1233 = vld [vmem:[#allocation6 + $0x1f0] sm:$0xff]
        %v1234 = vld [vmem:[#allocation6 + $0x1f8] sm:$0xff]
        %v1299 = vunpack.c.l.b16 %v1171
        %v1300 = vunpack.c.h.b16 %v1171
        %v1301 = vunpack.c.l.b16 %v1172
        %v1302 = vunpack.c.h.b16 %v1172
        %v1303 = vunpack.c.l.b16 %v1173
        %v1304 = vunpack.c.h.b16 %v1173
        %v1305 = vunpack.c.l.b16 %v1174
        %v1306 = vunpack.c.h.b16 %v1174
        %v1307 = vunpack.c.l.b16 %v1175
        %v1308 = vunpack.c.h.b16 %v1175
        %v1309 = vunpack.c.l.b16 %v1176
        %v1310 = vunpack.c.h.b16 %v1176
        %v1311 = vunpack.c.l.b16 %v1177
        %v1312 = vunpack.c.h.b16 %v1177
        %v1313 = vunpack.c.l.b16 %v1178
        %v1314 = vunpack.c.h.b16 %v1178
        %v1315 = vunpack.c.l.b16 %v1179
        %v1316 = vunpack.c.h.b16 %v1179
        %v1317 = vunpack.c.l.b16 %v1180
        %v1318 = vunpack.c.h.b16 %v1180
        %v1319 = vunpack.c.l.b16 %v1181
        %v1320 = vunpack.c.h.b16 %v1181
        %v1321 = vunpack.c.l.b16 %v1182
        %v1322 = vunpack.c.h.b16 %v1182
        %v1323 = vunpack.c.l.b16 %v1183
        %v1324 = vunpack.c.h.b16 %v1183
        %v1325 = vunpack.c.l.b16 %v1184
        %v1326 = vunpack.c.h.b16 %v1184
        %v1327 = vunpack.c.l.b16 %v1185
        %v1328 = vunpack.c.h.b16 %v1185
        %v1329 = vunpack.c.l.b16 %v1186
        %v1330 = vunpack.c.h.b16 %v1186
        %v1331 = vunpack.c.l.b16 %v1187
        %v1332 = vunpack.c.h.b16 %v1187
        %v1333 = vunpack.c.l.b16 %v1188
        %v1334 = vunpack.c.h.b16 %v1188
        %v1335 = vunpack.c.l.b16 %v1189
        %v1336 = vunpack.c.h.b16 %v1189
        %v1337 = vunpack.c.l.b16 %v1190
        %v1338 = vunpack.c.h.b16 %v1190
        %v1339 = vunpack.c.l.b16 %v1191
        %v1340 = vunpack.c.h.b16 %v1191
        %v1341 = vunpack.c.l.b16 %v1192
        %v1342 = vunpack.c.h.b16 %v1192
        %v1343 = vunpack.c.l.b16 %v1193
        %v1344 = vunpack.c.h.b16 %v1193
        %v1345 = vunpack.c.l.b16 %v1194
        %v1346 = vunpack.c.h.b16 %v1194
        %v1347 = vunpack.c.l.b16 %v1195
        %v1348 = vunpack.c.h.b16 %v1195
        %v1349 = vunpack.c.l.b16 %v1196
        %v1350 = vunpack.c.h.b16 %v1196
        %v1351 = vunpack.c.l.b16 %v1197
        %v1352 = vunpack.c.h.b16 %v1197
        %v1353 = vunpack.c.l.b16 %v1198
        %v1354 = vunpack.c.h.b16 %v1198
        %v1355 = vunpack.c.l.b16 %v1199
        %v1356 = vunpack.c.h.b16 %v1199
        %v1357 = vunpack.c.l.b16 %v1200
        %v1358 = vunpack.c.h.b16 %v1200
        %v1359 = vunpack.c.l.b16 %v1201
        %v1360 = vunpack.c.h.b16 %v1201
        %v1361 = vunpack.c.l.b16 %v1202
        %v1362 = vunpack.c.h.b16 %v1202
        %v1363 = vunpack.c.l.b16 %v1203
        %v1364 = vunpack.c.h.b16 %v1203
        %v1365 = vunpack.c.l.b16 %v1204
        %v1366 = vunpack.c.h.b16 %v1204
        %v1367 = vunpack.c.l.b16 %v1205
        %v1368 = vunpack.c.h.b16 %v1205
        %v1369 = vunpack.c.l.b16 %v1206
        %v1370 = vunpack.c.h.b16 %v1206
        %v1371 = vunpack.c.l.b16 %v1207
        %v1372 = vunpack.c.h.b16 %v1207
        %v1373 = vunpack.c.l.b16 %v1208
        %v1374 = vunpack.c.h.b16 %v1208
        %v1375 = vunpack.c.l.b16 %v1209
        %v1376 = vunpack.c.h.b16 %v1209
        %v1377 = vunpack.c.l.b16 %v1210
        %v1378 = vunpack.c.h.b16 %v1210
        %v1379 = vunpack.c.l.b16 %v1211
        %v1380 = vunpack.c.h.b16 %v1211
        %v1381 = vunpack.c.l.b16 %v1212
        %v1382 = vunpack.c.h.b16 %v1212
        %v1383 = vunpack.c.l.b16 %v1213
        %v1384 = vunpack.c.h.b16 %v1213
        %v1385 = vunpack.c.l.b16 %v1214
        %v1386 = vunpack.c.h.b16 %v1214
        %v1387 = vunpack.c.l.b16 %v1215
        %v1388 = vunpack.c.h.b16 %v1215
        %v1389 = vunpack.c.l.b16 %v1216
        %v1390 = vunpack.c.h.b16 %v1216
        %v1391 = vunpack.c.l.b16 %v1217
        %v1392 = vunpack.c.h.b16 %v1217
        %v1393 = vunpack.c.l.b16 %v1218
        %v1394 = vunpack.c.h.b16 %v1218
        %v1395 = vunpack.c.l.b16 %v1219
        %v1396 = vunpack.c.h.b16 %v1219
        %v1397 = vunpack.c.l.b16 %v1220
        %v1398 = vunpack.c.h.b16 %v1220
        %v1399 = vunpack.c.l.b16 %v1221
        %v1400 = vunpack.c.h.b16 %v1221
        %v1401 = vunpack.c.l.b16 %v1222
        %v1402 = vunpack.c.h.b16 %v1222
        %v1403 = vunpack.c.l.b16 %v1223
        %v1404 = vunpack.c.h.b16 %v1223
        %v1405 = vunpack.c.l.b16 %v1224
        %v1406 = vunpack.c.h.b16 %v1224
        %v1407 = vunpack.c.l.b16 %v1225
        %v1408 = vunpack.c.h.b16 %v1225
        %v1409 = vunpack.c.l.b16 %v1226
        %v1410 = vunpack.c.h.b16 %v1226
        %v1411 = vunpack.c.l.b16 %v1227
        %v1412 = vunpack.c.h.b16 %v1227
        %v1413 = vunpack.c.l.b16 %v1228
        %v1414 = vunpack.c.h.b16 %v1228
        %v1415 = vunpack.c.l.b16 %v1229
        %v1416 = vunpack.c.h.b16 %v1229
        %v1417 = vunpack.c.l.b16 %v1230
        %v1418 = vunpack.c.h.b16 %v1230
        %v1419 = vunpack.c.l.b16 %v1231
        %v1420 = vunpack.c.h.b16 %v1231
        %v1421 = vunpack.c.l.b16 %v1232
        %v1422 = vunpack.c.h.b16 %v1232
        %v1423 = vunpack.c.l.b16 %v1233
        %v1424 = vunpack.c.h.b16 %v1233
        %v1425 = vunpack.c.l.b16 %v1234
        %v1426 = vunpack.c.h.b16 %v1234
        %v1427 = vpack.c.b16 %v1301, %v1299
        %v1428 = vpack.c.b16 %v1302, %v1300
        %v1429 = vpack.c.b16 %v1305, %v1303
        %v1430 = vpack.c.b16 %v1306, %v1304
        %v1431 = vpack.c.b16 %v1309, %v1307
        %v1432 = vpack.c.b16 %v1310, %v1308
        %v1433 = vpack.c.b16 %v1313, %v1311
        %v1434 = vpack.c.b16 %v1314, %v1312
        %v1435 = vpack.c.b16 %v1317, %v1315
        %v1436 = vpack.c.b16 %v1318, %v1316
        %v1437 = vpack.c.b16 %v1321, %v1319
        %v1438 = vpack.c.b16 %v1322, %v1320
        %v1439 = vpack.c.b16 %v1325, %v1323
        %v1440 = vpack.c.b16 %v1326, %v1324
        %v1441 = vpack.c.b16 %v1329, %v1327
        %v1442 = vpack.c.b16 %v1330, %v1328
        %v1443 = vpack.c.b16 %v1333, %v1331
        %v1444 = vpack.c.b16 %v1334, %v1332
        %v1445 = vpack.c.b16 %v1337, %v1335
        %v1446 = vpack.c.b16 %v1338, %v1336
        %v1447 = vpack.c.b16 %v1341, %v1339
        %v1448 = vpack.c.b16 %v1342, %v1340
        %v1449 = vpack.c.b16 %v1345, %v1343
        %v1450 = vpack.c.b16 %v1346, %v1344
        %v1451 = vpack.c.b16 %v1349, %v1347
        %v1452 = vpack.c.b16 %v1350, %v1348
        %v1453 = vpack.c.b16 %v1353, %v1351
        %v1454 = vpack.c.b16 %v1354, %v1352
        %v1455 = vpack.c.b16 %v1357, %v1355
        %v1456 = vpack.c.b16 %v1358, %v1356
        %v1457 = vpack.c.b16 %v1361, %v1359
        %v1458 = vpack.c.b16 %v1362, %v1360
        %v1459 = vpack.c.b16 %v1365, %v1363
        %v1460 = vpack.c.b16 %v1366, %v1364
        %v1461 = vpack.c.b16 %v1369, %v1367
        %v1462 = vpack.c.b16 %v1370, %v1368
        %v1463 = vpack.c.b16 %v1373, %v1371
        %v1464 = vpack.c.b16 %v1374, %v1372
        %v1465 = vpack.c.b16 %v1377, %v1375
        %v1466 = vpack.c.b16 %v1378, %v1376
        %v1467 = vpack.c.b16 %v1381, %v1379
        %v1468 = vpack.c.b16 %v1382, %v1380
        %v1469 = vpack.c.b16 %v1385, %v1383
        %v1470 = vpack.c.b16 %v1386, %v1384
        %v1471 = vpack.c.b16 %v1389, %v1387
        %v1472 = vpack.c.b16 %v1390, %v1388
        %v1473 = vpack.c.b16 %v1393, %v1391
        %v1474 = vpack.c.b16 %v1394, %v1392
        %v1475 = vpack.c.b16 %v1397, %v1395
        %v1476 = vpack.c.b16 %v1398, %v1396
        %v1477 = vpack.c.b16 %v1401, %v1399
        %v1478 = vpack.c.b16 %v1402, %v1400
        %v1479 = vpack.c.b16 %v1405, %v1403
        %v1480 = vpack.c.b16 %v1406, %v1404
        %v1481 = vpack.c.b16 %v1409, %v1407
        %v1482 = vpack.c.b16 %v1410, %v1408
        %v1483 = vpack.c.b16 %v1413, %v1411
        %v1484 = vpack.c.b16 %v1414, %v1412
        %v1485 = vpack.c.b16 %v1417, %v1415
        %v1486 = vpack.c.b16 %v1418, %v1416
        %v1487 = vpack.c.b16 %v1421, %v1419
        %v1488 = vpack.c.b16 %v1422, %v1420
        %v1489 = vpack.c.b16 %v1425, %v1423
        %v1490 = vpack.c.b16 %v1426, %v1424
        %1555 = vmatprep.subr.bf16.mxu0 %v660
        %1556 = vmatpush1.bf16.msra.mxu0 %v659
        %1557 = vmatprep.subr.bf16.mxu0 %v668
        %1558 = vmatpush1.bf16.msra.mxu0 %v667
        %1559 = vmatprep.subr.bf16.mxu0 %v676
        %1560 = vmatpush1.bf16.msra.mxu0 %v675
        %1561 = vmatprep.subr.bf16.mxu0 %v684
        %1562 = vmatpush1.bf16.msra.mxu0 %v683
        %1563 = vmatprep.subr.bf16.mxu0 %v692
        %1564 = vmatpush1.bf16.msra.mxu0 %v691
        %1565 = vmatprep.subr.bf16.mxu0 %v700
        %1566 = vmatpush1.bf16.msra.mxu0 %v699
        %1567 = vmatprep.subr.bf16.mxu0 %v708
        %1568 = vmatpush1.bf16.msra.mxu0 %v707
        %1569 = vmatprep.subr.bf16.mxu0 %v716
        %1570 = vmatpush1.bf16.msra.mxu0 %v715
        %1571 = vmatprep.subr.bf16.mxu0 %v724
        %1572 = vmatpush1.bf16.msra.mxu0 %v723
        %1573 = vmatprep.subr.bf16.mxu0 %v732
        %1574 = vmatpush1.bf16.msra.mxu0 %v731
        %1575 = vmatprep.subr.bf16.mxu0 %v740
        %1576 = vmatpush1.bf16.msra.mxu0 %v739
        %1577 = vmatprep.subr.bf16.mxu0 %v748
        %1578 = vmatpush1.bf16.msra.mxu0 %v747
        %1579 = vmatprep.subr.bf16.mxu0 %v756
        %1580 = vmatpush1.bf16.msra.mxu0 %v755
        %1581 = vmatprep.subr.bf16.mxu0 %v764
        %1582 = vmatpush1.bf16.msra.mxu0 %v763
        %1583 = vmatprep.subr.bf16.mxu0 %v772
        %1584 = vmatpush1.bf16.msra.mxu0 %v771
        %1585 = vmatprep.subr.bf16.mxu0 %v780
        %1586 = vmatpush1.bf16.msra.mxu0 %v779
        %1587 = vmatprep.mubr.bf16.mxu0 %v1428
        %1588 = vmatmul.mubr.bf16.gmra.mrb[0].mxu0 %v1427
        %v1589 = vpop.f32.mrb[0].mxu0
        %v1590 = vadd.f32 0.0, %v1589
        %v1591 = vpop.f32.mrb[0].mxu0
        %v1592 = vadd.f32 0.0, %v1591
        %v1593 = vpop.f32.mrb[0].mxu0
        %v1594 = vadd.f32 0.0, %v1593
        %v1595 = vpop.f32.mrb[0].mxu0
        %v1596 = vadd.f32 0.0, %v1595
        %1597 = vmatprep.mubr.bf16.mxu0 %v1430
        %1598 = vmatmul.mubr.bf16.gmra.mrb[0].mxu0 %v1429
        %v1599 = vpop.f32.mrb[0].mxu0
        %v1600 = vadd.f32 0.0, %v1599
        %v1601 = vpop.f32.mrb[0].mxu0
        %v1602 = vadd.f32 0.0, %v1601
        %v1603 = vpop.f32.mrb[0].mxu0
        %v1604 = vadd.f32 0.0, %v1603
        %v1605 = vpop.f32.mrb[0].mxu0
        %v1606 = vadd.f32 0.0, %v1605
        %1607 = vmatprep.mubr.bf16.mxu0 %v1432
        %1608 = vmatmul.mubr.bf16.gmra.mrb[0].mxu0 %v1431
        %v1609 = vpop.f32.mrb[0].mxu0
        %v1610 = vadd.f32 0.0, %v1609
        %v1611 = vpop.f32.mrb[0].mxu0
        %v1612 = vadd.f32 0.0, %v1611
        %v1613 = vpop.f32.mrb[0].mxu0
        %v1614 = vadd.f32 0.0, %v1613
        %v1615 = vpop.f32.mrb[0].mxu0
        %v1616 = vadd.f32 0.0, %v1615
        %1617 = vmatprep.mubr.bf16.mxu0 %v1434
        %1618 = vmatmul.mubr.bf16.gmra.mrb[0].mxu0 %v1433
        %v1619 = vpop.f32.mrb[0].mxu0
        %v1620 = vadd.f32 0.0, %v1619
        %v1621 = vpop.f32.mrb[0].mxu0
        %v1622 = vadd.f32 0.0, %v1621
        %v1623 = vpop.f32.mrb[0].mxu0
        %v1624 = vadd.f32 0.0, %v1623
        %v1625 = vpop.f32.mrb[0].mxu0
        %v1626 = vadd.f32 0.0, %v1625
        %1627 = vmatprep.mubr.bf16.mxu0 %v1436
        %1628 = vmatmul.mubr.bf16.gmra.mrb[0].mxu0 %v1435
        %v1629 = vpop.f32.mrb[0].mxu0
        %v1630 = vadd.f32 0.0, %v1629
        %v1631 = vpop.f32.mrb[0].mxu0
        %v1632 = vadd.f32 0.0, %v1631
        %v1633 = vpop.f32.mrb[0].mxu0
        %v1634 = vadd.f32 0.0, %v1633
        %v1635 = vpop.f32.mrb[0].mxu0
        %v1636 = vadd.f32 0.0, %v1635
        %1637 = vmatprep.mubr.bf16.mxu0 %v1438
        %1638 = vmatmul.mubr.bf16.gmra.mrb[0].mxu0 %v1437
        %v1639 = vpop.f32.mrb[0].mxu0
        %v1640 = vadd.f32 0.0, %v1639
        %v1641 = vpop.f32.mrb[0].mxu0
        %v1642 = vadd.f32 0.0, %v1641
        %v1643 = vpop.f32.mrb[0].mxu0
        %v1644 = vadd.f32 0.0, %v1643
        %v1645 = vpop.f32.mrb[0].mxu0
        %v1646 = vadd.f32 0.0, %v1645
        %1647 = vmatprep.mubr.bf16.mxu0 %v1440
        %1648 = vmatmul.mubr.bf16.gmra.mrb[0].mxu0 %v1439
        %v1649 = vpop.f32.mrb[0].mxu0
        %v1650 = vadd.f32 0.0, %v1649
        %v1651 = vpop.f32.mrb[0].mxu0
        %v1652 = vadd.f32 0.0, %v1651
        %v1653 = vpop.f32.mrb[0].mxu0
        %v1654 = vadd.f32 0.0, %v1653
        %v1655 = vpop.f32.mrb[0].mxu0
        %v1656 = vadd.f32 0.0, %v1655
        %1657 = vmatprep.mubr.bf16.mxu0 %v1442
        %1658 = vmatmul.mubr.bf16.gmra.mrb[0].mxu0 %v1441
        %v1659 = vpop.f32.mrb[0].mxu0
        %v1660 = vadd.f32 0.0, %v1659
        %v1661 = vpop.f32.mrb[0].mxu0
        %v1662 = vadd.f32 0.0, %v1661
        %v1663 = vpop.f32.mrb[0].mxu0
        %v1664 = vadd.f32 0.0, %v1663
        %v1665 = vpop.f32.mrb[0].mxu0
        %v1666 = vadd.f32 0.0, %v1665
        %1667 = vmatprep.mubr.bf16.mxu0 %v1444
        %1668 = vmatmul.mubr.bf16.gmra.mrb[0].mxu0 %v1443
        %v1669 = vpop.f32.mrb[0].mxu0
        %v1670 = vadd.f32 0.0, %v1669
        %v1671 = vpop.f32.mrb[0].mxu0
        %v1672 = vadd.f32 0.0, %v1671
        %v1673 = vpop.f32.mrb[0].mxu0
        %v1674 = vadd.f32 0.0, %v1673
        %v1675 = vpop.f32.mrb[0].mxu0
        %v1676 = vadd.f32 0.0, %v1675
        %1677 = vmatprep.mubr.bf16.mxu0 %v1446
        %1678 = vmatmul.mubr.bf16.gmra.mrb[0].mxu0 %v1445
        %v1679 = vpop.f32.mrb[0].mxu0
        %v1680 = vadd.f32 0.0, %v1679
        %v1681 = vpop.f32.mrb[0].mxu0
        %v1682 = vadd.f32 0.0, %v1681
        %v1683 = vpop.f32.mrb[0].mxu0
        %v1684 = vadd.f32 0.0, %v1683
        %v1685 = vpop.f32.mrb[0].mxu0
        %v1686 = vadd.f32 0.0, %v1685
        %1687 = vmatprep.mubr.bf16.mxu0 %v1448
        %1688 = vmatmul.mubr.bf16.gmra.mrb[0].mxu0 %v1447
        %v1689 = vpop.f32.mrb[0].mxu0
        %v1690 = vadd.f32 0.0, %v1689
        %v1691 = vpop.f32.mrb[0].mxu0
        %v1692 = vadd.f32 0.0, %v1691
        %v1693 = vpop.f32.mrb[0].mxu0
        %v1694 = vadd.f32 0.0, %v1693
        %v1695 = vpop.f32.mrb[0].mxu0
        %v1696 = vadd.f32 0.0, %v1695
        %1697 = vmatprep.mubr.bf16.mxu0 %v1450
        %1698 = vmatmul.mubr.bf16.gmra.mrb[0].mxu0 %v1449
        %v1699 = vpop.f32.mrb[0].mxu0
        %v1700 = vadd.f32 0.0, %v1699
        %v1701 = vpop.f32.mrb[0].mxu0
        %v1702 = vadd.f32 0.0, %v1701
        %v1703 = vpop.f32.mrb[0].mxu0
        %v1704 = vadd.f32 0.0, %v1703
        %v1705 = vpop.f32.mrb[0].mxu0
        %v1706 = vadd.f32 0.0, %v1705
        %1707 = vmatprep.mubr.bf16.mxu0 %v1452
        %1708 = vmatmul.mubr.bf16.gmra.mrb[0].mxu0 %v1451
        %v1709 = vpop.f32.mrb[0].mxu0
        %v1710 = vadd.f32 0.0, %v1709
        %v1711 = vpop.f32.mrb[0].mxu0
        %v1712 = vadd.f32 0.0, %v1711
        %v1713 = vpop.f32.mrb[0].mxu0
        %v1714 = vadd.f32 0.0, %v1713
        %v1715 = vpop.f32.mrb[0].mxu0
        %v1716 = vadd.f32 0.0, %v1715
        %1717 = vmatprep.mubr.bf16.mxu0 %v1454
        %1718 = vmatmul.mubr.bf16.gmra.mrb[0].mxu0 %v1453
        %v1719 = vpop.f32.mrb[0].mxu0
        %v1720 = vadd.f32 0.0, %v1719
        %v1721 = vpop.f32.mrb[0].mxu0
        %v1722 = vadd.f32 0.0, %v1721
        %v1723 = vpop.f32.mrb[0].mxu0
        %v1724 = vadd.f32 0.0, %v1723
        %v1725 = vpop.f32.mrb[0].mxu0
        %v1726 = vadd.f32 0.0, %v1725
        %1727 = vmatprep.mubr.bf16.mxu0 %v1456
        %1728 = vmatmul.mubr.bf16.gmra.mrb[0].mxu0 %v1455
        %v1729 = vpop.f32.mrb[0].mxu0
        %v1730 = vadd.f32 0.0, %v1729
        %v1731 = vpop.f32.mrb[0].mxu0
        %v1732 = vadd.f32 0.0, %v1731
        %v1733 = vpop.f32.mrb[0].mxu0
        %v1734 = vadd.f32 0.0, %v1733
        %v1735 = vpop.f32.mrb[0].mxu0
        %v1736 = vadd.f32 0.0, %v1735
        %1737 = vmatprep.mubr.bf16.mxu0 %v1458
        %1738 = vmatmul.mubr.bf16.gmra.mrb[0].mxu0 %v1457
        %v1739 = vpop.f32.mrb[0].mxu0
        %v1740 = vadd.f32 0.0, %v1739
        %v1741 = vpop.f32.mrb[0].mxu0
        %v1742 = vadd.f32 0.0, %v1741
        %v1743 = vpop.f32.mrb[0].mxu0
        %v1744 = vadd.f32 0.0, %v1743
        %v1745 = vpop.f32.mrb[0].mxu0
        %v1746 = vadd.f32 0.0, %v1745
        %1747 = vmatprep.mubr.bf16.mxu0 %v1460
        %1748 = vmatmul.mubr.bf16.gmra.mrb[0].mxu0 %v1459
        %v1749 = vpop.f32.mrb[0].mxu0
        %v1750 = vadd.f32 0.0, %v1749
        %v1751 = vpop.f32.mrb[0].mxu0
        %v1752 = vadd.f32 0.0, %v1751
        %v1753 = vpop.f32.mrb[0].mxu0
        %v1754 = vadd.f32 0.0, %v1753
        %v1755 = vpop.f32.mrb[0].mxu0
        %v1756 = vadd.f32 0.0, %v1755
        %1757 = vmatprep.mubr.bf16.mxu0 %v1462
        %1758 = vmatmul.mubr.bf16.gmra.mrb[0].mxu0 %v1461
        %v1759 = vpop.f32.mrb[0].mxu0
        %v1760 = vadd.f32 0.0, %v1759
        %v1761 = vpop.f32.mrb[0].mxu0
        %v1762 = vadd.f32 0.0, %v1761
        %v1763 = vpop.f32.mrb[0].mxu0
        %v1764 = vadd.f32 0.0, %v1763
        %v1765 = vpop.f32.mrb[0].mxu0
        %v1766 = vadd.f32 0.0, %v1765
        %1767 = vmatprep.mubr.bf16.mxu0 %v1464
        %1768 = vmatmul.mubr.bf16.gmra.mrb[0].mxu0 %v1463
        %v1769 = vpop.f32.mrb[0].mxu0
        %v1770 = vadd.f32 0.0, %v1769
        %v1771 = vpop.f32.mrb[0].mxu0
        %v1772 = vadd.f32 0.0, %v1771
        %v1773 = vpop.f32.mrb[0].mxu0
        %v1774 = vadd.f32 0.0, %v1773
        %v1775 = vpop.f32.mrb[0].mxu0
        %v1776 = vadd.f32 0.0, %v1775
        %1777 = vmatprep.mubr.bf16.mxu0 %v1466
        %1778 = vmatmul.mubr.bf16.gmra.mrb[0].mxu0 %v1465
        %v1779 = vpop.f32.mrb[0].mxu0
        %v1780 = vadd.f32 0.0, %v1779
        %v1781 = vpop.f32.mrb[0].mxu0
        %v1782 = vadd.f32 0.0, %v1781
        %v1783 = vpop.f32.mrb[0].mxu0
        %v1784 = vadd.f32 0.0, %v1783
        %v1785 = vpop.f32.mrb[0].mxu0
        %v1786 = vadd.f32 0.0, %v1785
        %1787 = vmatprep.mubr.bf16.mxu0 %v1468
        %1788 = vmatmul.mubr.bf16.gmra.mrb[0].mxu0 %v1467
        %v1789 = vpop.f32.mrb[0].mxu0
        %v1790 = vadd.f32 0.0, %v1789
        %v1791 = vpop.f32.mrb[0].mxu0
        %v1792 = vadd.f32 0.0, %v1791
        %v1793 = vpop.f32.mrb[0].mxu0
        %v1794 = vadd.f32 0.0, %v1793
        %v1795 = vpop.f32.mrb[0].mxu0
        %v1796 = vadd.f32 0.0, %v1795
        %1797 = vmatprep.mubr.bf16.mxu0 %v1470
        %1798 = vmatmul.mubr.bf16.gmra.mrb[0].mxu0 %v1469
        %v1799 = vpop.f32.mrb[0].mxu0
        %v1800 = vadd.f32 0.0, %v1799
        %v1801 = vpop.f32.mrb[0].mxu0
        %v1802 = vadd.f32 0.0, %v1801
        %v1803 = vpop.f32.mrb[0].mxu0
        %v1804 = vadd.f32 0.0, %v1803
        %v1805 = vpop.f32.mrb[0].mxu0
        %v1806 = vadd.f32 0.0, %v1805
        %1807 = vmatprep.mubr.bf16.mxu0 %v1472
        %1808 = vmatmul.mubr.bf16.gmra.mrb[0].mxu0 %v1471
        %v1809 = vpop.f32.mrb[0].mxu0
        %v1810 = vadd.f32 0.0, %v1809
        %v1811 = vpop.f32.mrb[0].mxu0
        %v1812 = vadd.f32 0.0, %v1811
        %v1813 = vpop.f32.mrb[0].mxu0
        %v1814 = vadd.f32 0.0, %v1813
        %v1815 = vpop.f32.mrb[0].mxu0
        %v1816 = vadd.f32 0.0, %v1815
        %1817 = vmatprep.mubr.bf16.mxu0 %v1474
        %1818 = vmatmul.mubr.bf16.gmra.mrb[0].mxu0 %v1473
        %v1819 = vpop.f32.mrb[0].mxu0
        %v1820 = vadd.f32 0.0, %v1819
        %v1821 = vpop.f32.mrb[0].mxu0
        %v1822 = vadd.f32 0.0, %v1821
        %v1823 = vpop.f32.mrb[0].mxu0
        %v1824 = vadd.f32 0.0, %v1823
        %v1825 = vpop.f32.mrb[0].mxu0
        %v1826 = vadd.f32 0.0, %v1825
        %1827 = vmatprep.mubr.bf16.mxu0 %v1476
        %1828 = vmatmul.mubr.bf16.gmra.mrb[0].mxu0 %v1475
        %v1829 = vpop.f32.mrb[0].mxu0
        %v1830 = vadd.f32 0.0, %v1829
        %v1831 = vpop.f32.mrb[0].mxu0
        %v1832 = vadd.f32 0.0, %v1831
        %v1833 = vpop.f32.mrb[0].mxu0
        %v1834 = vadd.f32 0.0, %v1833
        %v1835 = vpop.f32.mrb[0].mxu0
        %v1836 = vadd.f32 0.0, %v1835
        %1837 = vmatprep.mubr.bf16.mxu0 %v1478
        %1838 = vmatmul.mubr.bf16.gmra.mrb[0].mxu0 %v1477
        %v1839 = vpop.f32.mrb[0].mxu0
        %v1840 = vadd.f32 0.0, %v1839
        %v1841 = vpop.f32.mrb[0].mxu0
        %v1842 = vadd.f32 0.0, %v1841
        %v1843 = vpop.f32.mrb[0].mxu0
        %v1844 = vadd.f32 0.0, %v1843
        %v1845 = vpop.f32.mrb[0].mxu0
        %v1846 = vadd.f32 0.0, %v1845
        %1847 = vmatprep.mubr.bf16.mxu0 %v1480
        %1848 = vmatmul.mubr.bf16.gmra.mrb[0].mxu0 %v1479
        %v1849 = vpop.f32.mrb[0].mxu0
        %v1850 = vadd.f32 0.0, %v1849
        %v1851 = vpop.f32.mrb[0].mxu0
        %v1852 = vadd.f32 0.0, %v1851
        %v1853 = vpop.f32.mrb[0].mxu0
        %v1854 = vadd.f32 0.0, %v1853
        %v1855 = vpop.f32.mrb[0].mxu0
        %v1856 = vadd.f32 0.0, %v1855
        %1857 = vmatprep.mubr.bf16.mxu0 %v1482
        %1858 = vmatmul.mubr.bf16.gmra.mrb[0].mxu0 %v1481
        %v1859 = vpop.f32.mrb[0].mxu0
        %v1860 = vadd.f32 0.0, %v1859
        %v1861 = vpop.f32.mrb[0].mxu0
        %v1862 = vadd.f32 0.0, %v1861
        %v1863 = vpop.f32.mrb[0].mxu0
        %v1864 = vadd.f32 0.0, %v1863
        %v1865 = vpop.f32.mrb[0].mxu0
        %v1866 = vadd.f32 0.0, %v1865
        %1867 = vmatprep.mubr.bf16.mxu0 %v1484
        %1868 = vmatmul.mubr.bf16.gmra.mrb[0].mxu0 %v1483
        %v1869 = vpop.f32.mrb[0].mxu0
        %v1870 = vadd.f32 0.0, %v1869
        %v1871 = vpop.f32.mrb[0].mxu0
        %v1872 = vadd.f32 0.0, %v1871
        %v1873 = vpop.f32.mrb[0].mxu0
        %v1874 = vadd.f32 0.0, %v1873
        %v1875 = vpop.f32.mrb[0].mxu0
        %v1876 = vadd.f32 0.0, %v1875
        %1877 = vmatprep.mubr.bf16.mxu0 %v1486
        %1878 = vmatmul.mubr.bf16.gmra.mrb[0].mxu0 %v1485
        %v1879 = vpop.f32.mrb[0].mxu0
        %v1880 = vadd.f32 0.0, %v1879
        %v1881 = vpop.f32.mrb[0].mxu0
        %v1882 = vadd.f32 0.0, %v1881
        %v1883 = vpop.f32.mrb[0].mxu0
        %v1884 = vadd.f32 0.0, %v1883
        %v1885 = vpop.f32.mrb[0].mxu0
        %v1886 = vadd.f32 0.0, %v1885
        %1887 = vmatprep.mubr.bf16.mxu0 %v1488
        %1888 = vmatmul.mubr.bf16.gmra.mrb[0].mxu0 %v1487
        %v1889 = vpop.f32.mrb[0].mxu0
        %v1890 = vadd.f32 0.0, %v1889
        %v1891 = vpop.f32.mrb[0].mxu0
        %v1892 = vadd.f32 0.0, %v1891
        %v1893 = vpop.f32.mrb[0].mxu0
        %v1894 = vadd.f32 0.0, %v1893
        %v1895 = vpop.f32.mrb[0].mxu0
        %v1896 = vadd.f32 0.0, %v1895
        %1897 = vmatprep.mubr.bf16.mxu0 %v1490
        %1898 = vmatmul.mubr.bf16.gmra.mrb[0].mxu0 %v1489
        %v1899 = vpop.f32.mrb[0].mxu0
        %v1900 = vadd.f32 0.0, %v1899
        %v1901 = vpop.f32.mrb[0].mxu0
        %v1902 = vadd.f32 0.0, %v1901
        %v1903 = vpop.f32.mrb[0].mxu0
        %v1904 = vadd.f32 0.0, %v1903
        %v1905 = vpop.f32.mrb[0].mxu0
        %v1906 = vadd.f32 0.0, %v1905
        %1907 = vdwg.mxu0
        %1908 = vmatprep.subr.bf16.mxu0 %v662
        %1909 = vmatpush1.bf16.msra.mxu0 %v661
        %1910 = vmatprep.subr.bf16.mxu0 %v670
        %1911 = vmatpush1.bf16.msra.mxu0 %v669
        %1912 = vmatprep.subr.bf16.mxu0 %v678
        %1913 = vmatpush1.bf16.msra.mxu0 %v677
        %1914 = vmatprep.subr.bf16.mxu0 %v686
        %1915 = vmatpush1.bf16.msra.mxu0 %v685
        %1916 = vmatprep.subr.bf16.mxu0 %v694
        %1917 = vmatpush1.bf16.msra.mxu0 %v693
        %1918 = vmatprep.subr.bf16.mxu0 %v702
        %1919 = vmatpush1.bf16.msra.mxu0 %v701
        %1920 = vmatprep.subr.bf16.mxu0 %v710
        %1921 = vmatpush1.bf16.msra.mxu0 %v709
        %1922 = vmatprep.subr.bf16.mxu0 %v718
        %1923 = vmatpush1.bf16.msra.mxu0 %v717
        %1924 = vmatprep.subr.bf16.mxu0 %v726
        %1925 = vmatpush1.bf16.msra.mxu0 %v725
        %1926 = vmatprep.subr.bf16.mxu0 %v734
        %1927 = vmatpush1.bf16.msra.mxu0 %v733
        %1928 = vmatprep.subr.bf16.mxu0 %v742
        %1929 = vmatpush1.bf16.msra.mxu0 %v741
        %1930 = vmatprep.subr.bf16.mxu0 %v750
        %1931 = vmatpush1.bf16.msra.mxu0 %v749
        %1932 = vmatprep.subr.bf16.mxu0 %v758
        %1933 = vmatpush1.bf16.msra.mxu0 %v757
        %1934 = vmatprep.subr.bf16.mxu0 %v766
        %1935 = vmatpush1.bf16.msra.mxu0 %v765
        %1936 = vmatprep.subr.bf16.mxu0 %v774
        %1937 = vmatpush1.bf16.msra.mxu0 %v773
        %1938 = vmatprep.subr.bf16.mxu0 %v782
        %1939 = vmatpush1.bf16.msra.mxu0 %v781
        %1940 = vmatprep.mubr.bf16.mxu0 %v1428
        %1941 = vmatmul.mubr.bf16.gmra.mrb[0].mxu0 %v1427
        %v1942 = vpop.f32.mrb[0].mxu0
        %v1943 = vadd.f32 0.0, %v1942
        %v1944 = vpop.f32.mrb[0].mxu0
        %v1945 = vadd.f32 0.0, %v1944
        %v1946 = vpop.f32.mrb[0].mxu0
        %v1947 = vadd.f32 0.0, %v1946
        %v1948 = vpop.f32.mrb[0].mxu0
        %v1949 = vadd.f32 0.0, %v1948
        %1950 = vmatprep.mubr.bf16.mxu0 %v1430
        %1951 = vmatmul.mubr.bf16.gmra.mrb[0].mxu0 %v1429
        %v1952 = vpop.f32.mrb[0].mxu0
        %v1953 = vadd.f32 0.0, %v1952
        %v1954 = vpop.f32.mrb[0].mxu0
        %v1955 = vadd.f32 0.0, %v1954
        %v1956 = vpop.f32.mrb[0].mxu0
        %v1957 = vadd.f32 0.0, %v1956
        %v1958 = vpop.f32.mrb[0].mxu0
        %v1959 = vadd.f32 0.0, %v1958
        %1960 = vmatprep.mubr.bf16.mxu0 %v1432
        %1961 = vmatmul.mubr.bf16.gmra.mrb[0].mxu0 %v1431
        %v1962 = vpop.f32.mrb[0].mxu0
        %v1963 = vadd.f32 0.0, %v1962
        %v1964 = vpop.f32.mrb[0].mxu0
        %v1965 = vadd.f32 0.0, %v1964
        %v1966 = vpop.f32.mrb[0].mxu0
        %v1967 = vadd.f32 0.0, %v1966
        %v1968 = vpop.f32.mrb[0].mxu0
        %v1969 = vadd.f32 0.0, %v1968
        %1970 = vmatprep.mubr.bf16.mxu0 %v1434
        %1971 = vmatmul.mubr.bf16.gmra.mrb[0].mxu0 %v1433
        %v1972 = vpop.f32.mrb[0].mxu0
        %v1973 = vadd.f32 0.0, %v1972
        %v1974 = vpop.f32.mrb[0].mxu0
        %v1975 = vadd.f32 0.0, %v1974
        %v1976 = vpop.f32.mrb[0].mxu0
        %v1977 = vadd.f32 0.0, %v1976
        %v1978 = vpop.f32.mrb[0].mxu0
        %v1979 = vadd.f32 0.0, %v1978
        %1980 = vmatprep.mubr.bf16.mxu0 %v1436
        %1981 = vmatmul.mubr.bf16.gmra.mrb[0].mxu0 %v1435
        %v1982 = vpop.f32.mrb[0].mxu0
        %v1983 = vadd.f32 0.0, %v1982
        %v1984 = vpop.f32.mrb[0].mxu0
        %v1985 = vadd.f32 0.0, %v1984
        %v1986 = vpop.f32.mrb[0].mxu0
        %v1987 = vadd.f32 0.0, %v1986
        %v1988 = vpop.f32.mrb[0].mxu0
        %v1989 = vadd.f32 0.0, %v1988
        %1990 = vmatprep.mubr.bf16.mxu0 %v1438
        %1991 = vmatmul.mubr.bf16.gmra.mrb[0].mxu0 %v1437
        %v1992 = vpop.f32.mrb[0].mxu0
        %v1993 = vadd.f32 0.0, %v1992
        %v1994 = vpop.f32.mrb[0].mxu0
        %v1995 = vadd.f32 0.0, %v1994
        %v1996 = vpop.f32.mrb[0].mxu0
        %v1997 = vadd.f32 0.0, %v1996
        %v1998 = vpop.f32.mrb[0].mxu0
        %v1999 = vadd.f32 0.0, %v1998
        %2000 = vmatprep.mubr.bf16.mxu0 %v1440
        %2001 = vmatmul.mubr.bf16.gmra.mrb[0].mxu0 %v1439
        %v2002 = vpop.f32.mrb[0].mxu0
        %v2003 = vadd.f32 0.0, %v2002
        %v2004 = vpop.f32.mrb[0].mxu0
        %v2005 = vadd.f32 0.0, %v2004
        %v2006 = vpop.f32.mrb[0].mxu0
        %v2007 = vadd.f32 0.0, %v2006
        %v2008 = vpop.f32.mrb[0].mxu0
        %v2009 = vadd.f32 0.0, %v2008
        %2010 = vmatprep.mubr.bf16.mxu0 %v1442
        %2011 = vmatmul.mubr.bf16.gmra.mrb[0].mxu0 %v1441
        %v2012 = vpop.f32.mrb[0].mxu0
        %v2013 = vadd.f32 0.0, %v2012
        %v2014 = vpop.f32.mrb[0].mxu0
        %v2015 = vadd.f32 0.0, %v2014
        %v2016 = vpop.f32.mrb[0].mxu0
        %v2017 = vadd.f32 0.0, %v2016
        %v2018 = vpop.f32.mrb[0].mxu0
        %v2019 = vadd.f32 0.0, %v2018
        %2020 = vmatprep.mubr.bf16.mxu0 %v1444
        %2021 = vmatmul.mubr.bf16.gmra.mrb[0].mxu0 %v1443
        %v2022 = vpop.f32.mrb[0].mxu0
        %v2023 = vadd.f32 0.0, %v2022
        %v2024 = vpop.f32.mrb[0].mxu0
        %v2025 = vadd.f32 0.0, %v2024
        %v2026 = vpop.f32.mrb[0].mxu0
        %v2027 = vadd.f32 0.0, %v2026
        %v2028 = vpop.f32.mrb[0].mxu0
        %v2029 = vadd.f32 0.0, %v2028
        %2030 = vmatprep.mubr.bf16.mxu0 %v1446
        %2031 = vmatmul.mubr.bf16.gmra.mrb[0].mxu0 %v1445
        %v2032 = vpop.f32.mrb[0].mxu0
        %v2033 = vadd.f32 0.0, %v2032
        %v2034 = vpop.f32.mrb[0].mxu0
        %v2035 = vadd.f32 0.0, %v2034
        %v2036 = vpop.f32.mrb[0].mxu0
        %v2037 = vadd.f32 0.0, %v2036
        %v2038 = vpop.f32.mrb[0].mxu0
        %v2039 = vadd.f32 0.0, %v2038
        %2040 = vmatprep.mubr.bf16.mxu0 %v1448
        %2041 = vmatmul.mubr.bf16.gmra.mrb[0].mxu0 %v1447
        %v2042 = vpop.f32.mrb[0].mxu0
        %v2043 = vadd.f32 0.0, %v2042
        %v2044 = vpop.f32.mrb[0].mxu0
        %v2045 = vadd.f32 0.0, %v2044
        %v2046 = vpop.f32.mrb[0].mxu0
        %v2047 = vadd.f32 0.0, %v2046
        %v2048 = vpop.f32.mrb[0].mxu0
        %v2049 = vadd.f32 0.0, %v2048
        %2050 = vmatprep.mubr.bf16.mxu0 %v1450
        %2051 = vmatmul.mubr.bf16.gmra.mrb[0].mxu0 %v1449
        %v2052 = vpop.f32.mrb[0].mxu0
        %v2053 = vadd.f32 0.0, %v2052
        %v2054 = vpop.f32.mrb[0].mxu0
        %v2055 = vadd.f32 0.0, %v2054
        %v2056 = vpop.f32.mrb[0].mxu0
        %v2057 = vadd.f32 0.0, %v2056
        %v2058 = vpop.f32.mrb[0].mxu0
        %v2059 = vadd.f32 0.0, %v2058
        %2060 = vmatprep.mubr.bf16.mxu0 %v1452
        %2061 = vmatmul.mubr.bf16.gmra.mrb[0].mxu0 %v1451
        %v2062 = vpop.f32.mrb[0].mxu0
        %v2063 = vadd.f32 0.0, %v2062
        %v2064 = vpop.f32.mrb[0].mxu0
        %v2065 = vadd.f32 0.0, %v2064
        %v2066 = vpop.f32.mrb[0].mxu0
        %v2067 = vadd.f32 0.0, %v2066
        %v2068 = vpop.f32.mrb[0].mxu0
        %v2069 = vadd.f32 0.0, %v2068
        %2070 = vmatprep.mubr.bf16.mxu0 %v1454
        %2071 = vmatmul.mubr.bf16.gmra.mrb[0].mxu0 %v1453
        %v2072 = vpop.f32.mrb[0].mxu0
        %v2073 = vadd.f32 0.0, %v2072
        %v2074 = vpop.f32.mrb[0].mxu0
        %v2075 = vadd.f32 0.0, %v2074
        %v2076 = vpop.f32.mrb[0].mxu0
        %v2077 = vadd.f32 0.0, %v2076
        %v2078 = vpop.f32.mrb[0].mxu0
        %v2079 = vadd.f32 0.0, %v2078
        %2080 = vmatprep.mubr.bf16.mxu0 %v1456
        %2081 = vmatmul.mubr.bf16.gmra.mrb[0].mxu0 %v1455
        %v2082 = vpop.f32.mrb[0].mxu0
        %v2083 = vadd.f32 0.0, %v2082
        %v2084 = vpop.f32.mrb[0].mxu0
        %v2085 = vadd.f32 0.0, %v2084
        %v2086 = vpop.f32.mrb[0].mxu0
        %v2087 = vadd.f32 0.0, %v2086
        %v2088 = vpop.f32.mrb[0].mxu0
        %v2089 = vadd.f32 0.0, %v2088
        %2090 = vmatprep.mubr.bf16.mxu0 %v1458
        %2091 = vmatmul.mubr.bf16.gmra.mrb[0].mxu0 %v1457
        %v2092 = vpop.f32.mrb[0].mxu0
        %v2093 = vadd.f32 0.0, %v2092
        %v2094 = vpop.f32.mrb[0].mxu0
        %v2095 = vadd.f32 0.0, %v2094
        %v2096 = vpop.f32.mrb[0].mxu0
        %v2097 = vadd.f32 0.0, %v2096
        %v2098 = vpop.f32.mrb[0].mxu0
        %v2099 = vadd.f32 0.0, %v2098
        %2100 = vmatprep.mubr.bf16.mxu0 %v1460
        %2101 = vmatmul.mubr.bf16.gmra.mrb[0].mxu0 %v1459
        %v2102 = vpop.f32.mrb[0].mxu0
        %v2103 = vadd.f32 0.0, %v2102
        %v2104 = vpop.f32.mrb[0].mxu0
        %v2105 = vadd.f32 0.0, %v2104
        %v2106 = vpop.f32.mrb[0].mxu0
        %v2107 = vadd.f32 0.0, %v2106
        %v2108 = vpop.f32.mrb[0].mxu0
        %v2109 = vadd.f32 0.0, %v2108
        %2110 = vmatprep.mubr.bf16.mxu0 %v1462
        %2111 = vmatmul.mubr.bf16.gmra.mrb[0].mxu0 %v1461
        %v2112 = vpop.f32.mrb[0].mxu0
        %v2113 = vadd.f32 0.0, %v2112
        %v2114 = vpop.f32.mrb[0].mxu0
        %v2115 = vadd.f32 0.0, %v2114
        %v2116 = vpop.f32.mrb[0].mxu0
        %v2117 = vadd.f32 0.0, %v2116
        %v2118 = vpop.f32.mrb[0].mxu0
        %v2119 = vadd.f32 0.0, %v2118
        %2120 = vmatprep.mubr.bf16.mxu0 %v1464
        %2121 = vmatmul.mubr.bf16.gmra.mrb[0].mxu0 %v1463
        %v2122 = vpop.f32.mrb[0].mxu0
        %v2123 = vadd.f32 0.0, %v2122
        %v2124 = vpop.f32.mrb[0].mxu0
        %v2125 = vadd.f32 0.0, %v2124
        %v2126 = vpop.f32.mrb[0].mxu0
        %v2127 = vadd.f32 0.0, %v2126
        %v2128 = vpop.f32.mrb[0].mxu0
        %v2129 = vadd.f32 0.0, %v2128
        %2130 = vmatprep.mubr.bf16.mxu0 %v1466
        %2131 = vmatmul.mubr.bf16.gmra.mrb[0].mxu0 %v1465
        %v2132 = vpop.f32.mrb[0].mxu0
        %v2133 = vadd.f32 0.0, %v2132
        %v2134 = vpop.f32.mrb[0].mxu0
        %v2135 = vadd.f32 0.0, %v2134
        %v2136 = vpop.f32.mrb[0].mxu0
        %v2137 = vadd.f32 0.0, %v2136
        %v2138 = vpop.f32.mrb[0].mxu0
        %v2139 = vadd.f32 0.0, %v2138
        %2140 = vmatprep.mubr.bf16.mxu0 %v1468
        %2141 = vmatmul.mubr.bf16.gmra.mrb[0].mxu0 %v1467
        %v2142 = vpop.f32.mrb[0].mxu0
        %v2143 = vadd.f32 0.0, %v2142
        %v2144 = vpop.f32.mrb[0].mxu0
        %v2145 = vadd.f32 0.0, %v2144
        %v2146 = vpop.f32.mrb[0].mxu0
        %v2147 = vadd.f32 0.0, %v2146
        %v2148 = vpop.f32.mrb[0].mxu0
        %v2149 = vadd.f32 0.0, %v2148
        %2150 = vmatprep.mubr.bf16.mxu0 %v1470
        %2151 = vmatmul.mubr.bf16.gmra.mrb[0].mxu0 %v1469
        %v2152 = vpop.f32.mrb[0].mxu0
        %v2153 = vadd.f32 0.0, %v2152
        %v2154 = vpop.f32.mrb[0].mxu0
        %v2155 = vadd.f32 0.0, %v2154
        %v2156 = vpop.f32.mrb[0].mxu0
        %v2157 = vadd.f32 0.0, %v2156
        %v2158 = vpop.f32.mrb[0].mxu0
        %v2159 = vadd.f32 0.0, %v2158
        %2160 = vmatprep.mubr.bf16.mxu0 %v1472
        %2161 = vmatmul.mubr.bf16.gmra.mrb[0].mxu0 %v1471
        %v2162 = vpop.f32.mrb[0].mxu0
        %v2163 = vadd.f32 0.0, %v2162
        %v2164 = vpop.f32.mrb[0].mxu0
        %v2165 = vadd.f32 0.0, %v2164
        %v2166 = vpop.f32.mrb[0].mxu0
        %v2167 = vadd.f32 0.0, %v2166
        %v2168 = vpop.f32.mrb[0].mxu0
        %v2169 = vadd.f32 0.0, %v2168
        %2170 = vmatprep.mubr.bf16.mxu0 %v1474
        %2171 = vmatmul.mubr.bf16.gmra.mrb[0].mxu0 %v1473
        %v2172 = vpop.f32.mrb[0].mxu0
        %v2173 = vadd.f32 0.0, %v2172
        %v2174 = vpop.f32.mrb[0].mxu0
        %v2175 = vadd.f32 0.0, %v2174
        %v2176 = vpop.f32.mrb[0].mxu0
        %v2177 = vadd.f32 0.0, %v2176
        %v2178 = vpop.f32.mrb[0].mxu0
        %v2179 = vadd.f32 0.0, %v2178
        %2180 = vmatprep.mubr.bf16.mxu0 %v1476
        %2181 = vmatmul.mubr.bf16.gmra.mrb[0].mxu0 %v1475
        %v2182 = vpop.f32.mrb[0].mxu0
        %v2183 = vadd.f32 0.0, %v2182
        %v2184 = vpop.f32.mrb[0].mxu0
        %v2185 = vadd.f32 0.0, %v2184
        %v2186 = vpop.f32.mrb[0].mxu0
        %v2187 = vadd.f32 0.0, %v2186
        %v2188 = vpop.f32.mrb[0].mxu0
        %v2189 = vadd.f32 0.0, %v2188
        %2190 = vmatprep.mubr.bf16.mxu0 %v1478
        %2191 = vmatmul.mubr.bf16.gmra.mrb[0].mxu0 %v1477
        %v2192 = vpop.f32.mrb[0].mxu0
        %v2193 = vadd.f32 0.0, %v2192
        %v2194 = vpop.f32.mrb[0].mxu0
        %v2195 = vadd.f32 0.0, %v2194
        %v2196 = vpop.f32.mrb[0].mxu0
        %v2197 = vadd.f32 0.0, %v2196
        %v2198 = vpop.f32.mrb[0].mxu0
        %v2199 = vadd.f32 0.0, %v2198
        %2200 = vmatprep.mubr.bf16.mxu0 %v1480
        %2201 = vmatmul.mubr.bf16.gmra.mrb[0].mxu0 %v1479
        %v2202 = vpop.f32.mrb[0].mxu0
        %v2203 = vadd.f32 0.0, %v2202
        %v2204 = vpop.f32.mrb[0].mxu0
        %v2205 = vadd.f32 0.0, %v2204
        %v2206 = vpop.f32.mrb[0].mxu0
        %v2207 = vadd.f32 0.0, %v2206
        %v2208 = vpop.f32.mrb[0].mxu0
        %v2209 = vadd.f32 0.0, %v2208
        %2210 = vmatprep.mubr.bf16.mxu0 %v1482
        %2211 = vmatmul.mubr.bf16.gmra.mrb[0].mxu0 %v1481
        %v2212 = vpop.f32.mrb[0].mxu0
        %v2213 = vadd.f32 0.0, %v2212
        %v2214 = vpop.f32.mrb[0].mxu0
        %v2215 = vadd.f32 0.0, %v2214
        %v2216 = vpop.f32.mrb[0].mxu0
        %v2217 = vadd.f32 0.0, %v2216
        %v2218 = vpop.f32.mrb[0].mxu0
        %v2219 = vadd.f32 0.0, %v2218
        %2220 = vmatprep.mubr.bf16.mxu0 %v1484
        %2221 = vmatmul.mubr.bf16.gmra.mrb[0].mxu0 %v1483
        %v2222 = vpop.f32.mrb[0].mxu0
        %v2223 = vadd.f32 0.0, %v2222
        %v2224 = vpop.f32.mrb[0].mxu0
        %v2225 = vadd.f32 0.0, %v2224
        %v2226 = vpop.f32.mrb[0].mxu0
        %v2227 = vadd.f32 0.0, %v2226
        %v2228 = vpop.f32.mrb[0].mxu0
        %v2229 = vadd.f32 0.0, %v2228
        %2230 = vmatprep.mubr.bf16.mxu0 %v1486
        %2231 = vmatmul.mubr.bf16.gmra.mrb[0].mxu0 %v1485
        %v2232 = vpop.f32.mrb[0].mxu0
        %v2233 = vadd.f32 0.0, %v2232
        %v2234 = vpop.f32.mrb[0].mxu0
        %v2235 = vadd.f32 0.0, %v2234
        %v2236 = vpop.f32.mrb[0].mxu0
        %v2237 = vadd.f32 0.0, %v2236
        %v2238 = vpop.f32.mrb[0].mxu0
        %v2239 = vadd.f32 0.0, %v2238
        %2240 = vmatprep.mubr.bf16.mxu0 %v1488
        %2241 = vmatmul.mubr.bf16.gmra.mrb[0].mxu0 %v1487
        %v2242 = vpop.f32.mrb[0].mxu0
        %v2243 = vadd.f32 0.0, %v2242
        %v2244 = vpop.f32.mrb[0].mxu0
        %v2245 = vadd.f32 0.0, %v2244
        %v2246 = vpop.f32.mrb[0].mxu0
        %v2247 = vadd.f32 0.0, %v2246
        %v2248 = vpop.f32.mrb[0].mxu0
        %v2249 = vadd.f32 0.0, %v2248
        %2250 = vmatprep.mubr.bf16.mxu0 %v1490
        %2251 = vmatmul.mubr.bf16.gmra.mrb[0].mxu0 %v1489
        %v2252 = vpop.f32.mrb[0].mxu0
        %v2253 = vadd.f32 0.0, %v2252
        %v2254 = vpop.f32.mrb[0].mxu0
        %v2255 = vadd.f32 0.0, %v2254
        %v2256 = vpop.f32.mrb[0].mxu0
        %v2257 = vadd.f32 0.0, %v2256
        %v2258 = vpop.f32.mrb[0].mxu0
        %v2259 = vadd.f32 0.0, %v2258
        %2260 = vdwg.mxu0
        %2261 = vmatprep.subr.bf16.mxu0 %v664
        %2262 = vmatpush1.bf16.msra.mxu0 %v663
        %2263 = vmatprep.subr.bf16.mxu0 %v672
        %2264 = vmatpush1.bf16.msra.mxu0 %v671
        %2265 = vmatprep.subr.bf16.mxu0 %v680
        %2266 = vmatpush1.bf16.msra.mxu0 %v679
        %2267 = vmatprep.subr.bf16.mxu0 %v688
        %2268 = vmatpush1.bf16.msra.mxu0 %v687
        %2269 = vmatprep.subr.bf16.mxu0 %v696
        %2270 = vmatpush1.bf16.msra.mxu0 %v695
        %2271 = vmatprep.subr.bf16.mxu0 %v704
        %2272 = vmatpush1.bf16.msra.mxu0 %v703
        %2273 = vmatprep.subr.bf16.mxu0 %v712
        %2274 = vmatpush1.bf16.msra.mxu0 %v711
        %2275 = vmatprep.subr.bf16.mxu0 %v720
        %2276 = vmatpush1.bf16.msra.mxu0 %v719
        %2277 = vmatprep.subr.bf16.mxu0 %v728
        %2278 = vmatpush1.bf16.msra.mxu0 %v727
        %2279 = vmatprep.subr.bf16.mxu0 %v736
        %2280 = vmatpush1.bf16.msra.mxu0 %v735
        %2281 = vmatprep.subr.bf16.mxu0 %v744
        %2282 = vmatpush1.bf16.msra.mxu0 %v743
        %2283 = vmatprep.subr.bf16.mxu0 %v752
        %2284 = vmatpush1.bf16.msra.mxu0 %v751
        %2285 = vmatprep.subr.bf16.mxu0 %v760
        %2286 = vmatpush1.bf16.msra.mxu0 %v759
        %2287 = vmatprep.subr.bf16.mxu0 %v768
        %2288 = vmatpush1.bf16.msra.mxu0 %v767
        %2289 = vmatprep.subr.bf16.mxu0 %v776
        %2290 = vmatpush1.bf16.msra.mxu0 %v775
        %2291 = vmatprep.subr.bf16.mxu0 %v784
        %2292 = vmatpush1.bf16.msra.mxu0 %v783
        %2293 = vmatprep.mubr.bf16.mxu0 %v1428
        %2294 = vmatmul.mubr.bf16.gmra.mrb[0].mxu0 %v1427
        %v2295 = vpop.f32.mrb[0].mxu0
        %v2296 = vadd.f32 0.0, %v2295
        %v2297 = vpop.f32.mrb[0].mxu0
        %v2298 = vadd.f32 0.0, %v2297
        %v2299 = vpop.f32.mrb[0].mxu0
        %v2300 = vadd.f32 0.0, %v2299
        %v2301 = vpop.f32.mrb[0].mxu0
        %v2302 = vadd.f32 0.0, %v2301
        %2303 = vmatprep.mubr.bf16.mxu0 %v1430
        %2304 = vmatmul.mubr.bf16.gmra.mrb[0].mxu0 %v1429
        %v2305 = vpop.f32.mrb[0].mxu0
        %v2306 = vadd.f32 0.0, %v2305
        %v2307 = vpop.f32.mrb[0].mxu0
        %v2308 = vadd.f32 0.0, %v2307
        %v2309 = vpop.f32.mrb[0].mxu0
        %v2310 = vadd.f32 0.0, %v2309
        %v2311 = vpop.f32.mrb[0].mxu0
        %v2312 = vadd.f32 0.0, %v2311
        %2313 = vmatprep.mubr.bf16.mxu0 %v1432
        %2314 = vmatmul.mubr.bf16.gmra.mrb[0].mxu0 %v1431
        %v2315 = vpop.f32.mrb[0].mxu0
        %v2316 = vadd.f32 0.0, %v2315
        %v2317 = vpop.f32.mrb[0].mxu0
        %v2318 = vadd.f32 0.0, %v2317
        %v2319 = vpop.f32.mrb[0].mxu0
        %v2320 = vadd.f32 0.0, %v2319
        %v2321 = vpop.f32.mrb[0].mxu0
        %v2322 = vadd.f32 0.0, %v2321
        %2323 = vmatprep.mubr.bf16.mxu0 %v1434
        %2324 = vmatmul.mubr.bf16.gmra.mrb[0].mxu0 %v1433
        %v2325 = vpop.f32.mrb[0].mxu0
        %v2326 = vadd.f32 0.0, %v2325
        %v2327 = vpop.f32.mrb[0].mxu0
        %v2328 = vadd.f32 0.0, %v2327
        %v2329 = vpop.f32.mrb[0].mxu0
        %v2330 = vadd.f32 0.0, %v2329
        %v2331 = vpop.f32.mrb[0].mxu0
        %v2332 = vadd.f32 0.0, %v2331
        %2333 = vmatprep.mubr.bf16.mxu0 %v1436
        %2334 = vmatmul.mubr.bf16.gmra.mrb[0].mxu0 %v1435
        %v2335 = vpop.f32.mrb[0].mxu0
        %v2336 = vadd.f32 0.0, %v2335
        %v2337 = vpop.f32.mrb[0].mxu0
        %v2338 = vadd.f32 0.0, %v2337
        %v2339 = vpop.f32.mrb[0].mxu0
        %v2340 = vadd.f32 0.0, %v2339
        %v2341 = vpop.f32.mrb[0].mxu0
        %v2342 = vadd.f32 0.0, %v2341
        %2343 = vmatprep.mubr.bf16.mxu0 %v1438
        %2344 = vmatmul.mubr.bf16.gmra.mrb[0].mxu0 %v1437
        %v2345 = vpop.f32.mrb[0].mxu0
        %v2346 = vadd.f32 0.0, %v2345
        %v2347 = vpop.f32.mrb[0].mxu0
        %v2348 = vadd.f32 0.0, %v2347
        %v2349 = vpop.f32.mrb[0].mxu0
        %v2350 = vadd.f32 0.0, %v2349
        %v2351 = vpop.f32.mrb[0].mxu0
        %v2352 = vadd.f32 0.0, %v2351
        %2353 = vmatprep.mubr.bf16.mxu0 %v1440
        %2354 = vmatmul.mubr.bf16.gmra.mrb[0].mxu0 %v1439
        %v2355 = vpop.f32.mrb[0].mxu0
        %v2356 = vadd.f32 0.0, %v2355
        %v2357 = vpop.f32.mrb[0].mxu0
        %v2358 = vadd.f32 0.0, %v2357
        %v2359 = vpop.f32.mrb[0].mxu0
        %v2360 = vadd.f32 0.0, %v2359
        %v2361 = vpop.f32.mrb[0].mxu0
        %v2362 = vadd.f32 0.0, %v2361
        %2363 = vmatprep.mubr.bf16.mxu0 %v1442
        %2364 = vmatmul.mubr.bf16.gmra.mrb[0].mxu0 %v1441
        %v2365 = vpop.f32.mrb[0].mxu0
        %v2366 = vadd.f32 0.0, %v2365
        %v2367 = vpop.f32.mrb[0].mxu0
        %v2368 = vadd.f32 0.0, %v2367
        %v2369 = vpop.f32.mrb[0].mxu0
        %v2370 = vadd.f32 0.0, %v2369
        %v2371 = vpop.f32.mrb[0].mxu0
        %v2372 = vadd.f32 0.0, %v2371
        %2373 = vmatprep.mubr.bf16.mxu0 %v1444
        %2374 = vmatmul.mubr.bf16.gmra.mrb[0].mxu0 %v1443
        %v2375 = vpop.f32.mrb[0].mxu0
        %v2376 = vadd.f32 0.0, %v2375
        %v2377 = vpop.f32.mrb[0].mxu0
        %v2378 = vadd.f32 0.0, %v2377
        %v2379 = vpop.f32.mrb[0].mxu0
        %v2380 = vadd.f32 0.0, %v2379
        %v2381 = vpop.f32.mrb[0].mxu0
        %v2382 = vadd.f32 0.0, %v2381
        %2383 = vmatprep.mubr.bf16.mxu0 %v1446
        %2384 = vmatmul.mubr.bf16.gmra.mrb[0].mxu0 %v1445
        %v2385 = vpop.f32.mrb[0].mxu0
        %v2386 = vadd.f32 0.0, %v2385
        %v2387 = vpop.f32.mrb[0].mxu0
        %v2388 = vadd.f32 0.0, %v2387
        %v2389 = vpop.f32.mrb[0].mxu0
        %v2390 = vadd.f32 0.0, %v2389
        %v2391 = vpop.f32.mrb[0].mxu0
        %v2392 = vadd.f32 0.0, %v2391
        %2393 = vmatprep.mubr.bf16.mxu0 %v1448
        %2394 = vmatmul.mubr.bf16.gmra.mrb[0].mxu0 %v1447
        %v2395 = vpop.f32.mrb[0].mxu0
        %v2396 = vadd.f32 0.0, %v2395
        %v2397 = vpop.f32.mrb[0].mxu0
        %v2398 = vadd.f32 0.0, %v2397
        %v2399 = vpop.f32.mrb[0].mxu0
        %v2400 = vadd.f32 0.0, %v2399
        %v2401 = vpop.f32.mrb[0].mxu0
        %v2402 = vadd.f32 0.0, %v2401
        %2403 = vmatprep.mubr.bf16.mxu0 %v1450
        %2404 = vmatmul.mubr.bf16.gmra.mrb[0].mxu0 %v1449
        %v2405 = vpop.f32.mrb[0].mxu0
        %v2406 = vadd.f32 0.0, %v2405
        %v2407 = vpop.f32.mrb[0].mxu0
        %v2408 = vadd.f32 0.0, %v2407
        %v2409 = vpop.f32.mrb[0].mxu0
        %v2410 = vadd.f32 0.0, %v2409
        %v2411 = vpop.f32.mrb[0].mxu0
        %v2412 = vadd.f32 0.0, %v2411
        %2413 = vmatprep.mubr.bf16.mxu0 %v1452
        %2414 = vmatmul.mubr.bf16.gmra.mrb[0].mxu0 %v1451
        %v2415 = vpop.f32.mrb[0].mxu0
        %v2416 = vadd.f32 0.0, %v2415
        %v2417 = vpop.f32.mrb[0].mxu0
        %v2418 = vadd.f32 0.0, %v2417
        %v2419 = vpop.f32.mrb[0].mxu0
        %v2420 = vadd.f32 0.0, %v2419
        %v2421 = vpop.f32.mrb[0].mxu0
        %v2422 = vadd.f32 0.0, %v2421
        %2423 = vmatprep.mubr.bf16.mxu0 %v1454
        %2424 = vmatmul.mubr.bf16.gmra.mrb[0].mxu0 %v1453
        %v2425 = vpop.f32.mrb[0].mxu0
        %v2426 = vadd.f32 0.0, %v2425
        %v2427 = vpop.f32.mrb[0].mxu0
        %v2428 = vadd.f32 0.0, %v2427
        %v2429 = vpop.f32.mrb[0].mxu0
        %v2430 = vadd.f32 0.0, %v2429
        %v2431 = vpop.f32.mrb[0].mxu0
        %v2432 = vadd.f32 0.0, %v2431
        %2433 = vmatprep.mubr.bf16.mxu0 %v1456
        %2434 = vmatmul.mubr.bf16.gmra.mrb[0].mxu0 %v1455
        %v2435 = vpop.f32.mrb[0].mxu0
        %v2436 = vadd.f32 0.0, %v2435
        %v2437 = vpop.f32.mrb[0].mxu0
        %v2438 = vadd.f32 0.0, %v2437
        %v2439 = vpop.f32.mrb[0].mxu0
        %v2440 = vadd.f32 0.0, %v2439
        %v2441 = vpop.f32.mrb[0].mxu0
        %v2442 = vadd.f32 0.0, %v2441
        %2443 = vmatprep.mubr.bf16.mxu0 %v1458
        %2444 = vmatmul.mubr.bf16.gmra.mrb[0].mxu0 %v1457
        %v2445 = vpop.f32.mrb[0].mxu0
        %v2446 = vadd.f32 0.0, %v2445
        %v2447 = vpop.f32.mrb[0].mxu0
        %v2448 = vadd.f32 0.0, %v2447
        %v2449 = vpop.f32.mrb[0].mxu0
        %v2450 = vadd.f32 0.0, %v2449
        %v2451 = vpop.f32.mrb[0].mxu0
        %v2452 = vadd.f32 0.0, %v2451
        %2453 = vmatprep.mubr.bf16.mxu0 %v1460
        %2454 = vmatmul.mubr.bf16.gmra.mrb[0].mxu0 %v1459
        %v2455 = vpop.f32.mrb[0].mxu0
        %v2456 = vadd.f32 0.0, %v2455
        %v2457 = vpop.f32.mrb[0].mxu0
        %v2458 = vadd.f32 0.0, %v2457
        %v2459 = vpop.f32.mrb[0].mxu0
        %v2460 = vadd.f32 0.0, %v2459
        %v2461 = vpop.f32.mrb[0].mxu0
        %v2462 = vadd.f32 0.0, %v2461
        %2463 = vmatprep.mubr.bf16.mxu0 %v1462
        %2464 = vmatmul.mubr.bf16.gmra.mrb[0].mxu0 %v1461
        %v2465 = vpop.f32.mrb[0].mxu0
        %v2466 = vadd.f32 0.0, %v2465
        %v2467 = vpop.f32.mrb[0].mxu0
        %v2468 = vadd.f32 0.0, %v2467
        %v2469 = vpop.f32.mrb[0].mxu0
        %v2470 = vadd.f32 0.0, %v2469
        %v2471 = vpop.f32.mrb[0].mxu0
        %v2472 = vadd.f32 0.0, %v2471
        %2473 = vmatprep.mubr.bf16.mxu0 %v1464
        %2474 = vmatmul.mubr.bf16.gmra.mrb[0].mxu0 %v1463
        %v2475 = vpop.f32.mrb[0].mxu0
        %v2476 = vadd.f32 0.0, %v2475
        %v2477 = vpop.f32.mrb[0].mxu0
        %v2478 = vadd.f32 0.0, %v2477
        %v2479 = vpop.f32.mrb[0].mxu0
        %v2480 = vadd.f32 0.0, %v2479
        %v2481 = vpop.f32.mrb[0].mxu0
        %v2482 = vadd.f32 0.0, %v2481
        %2483 = vmatprep.mubr.bf16.mxu0 %v1466
        %2484 = vmatmul.mubr.bf16.gmra.mrb[0].mxu0 %v1465
        %v2485 = vpop.f32.mrb[0].mxu0
        %v2486 = vadd.f32 0.0, %v2485
        %v2487 = vpop.f32.mrb[0].mxu0
        %v2488 = vadd.f32 0.0, %v2487
        %v2489 = vpop.f32.mrb[0].mxu0
        %v2490 = vadd.f32 0.0, %v2489
        %v2491 = vpop.f32.mrb[0].mxu0
        %v2492 = vadd.f32 0.0, %v2491
        %2493 = vmatprep.mubr.bf16.mxu0 %v1468
        %2494 = vmatmul.mubr.bf16.gmra.mrb[0].mxu0 %v1467
        %v2495 = vpop.f32.mrb[0].mxu0
        %v2496 = vadd.f32 0.0, %v2495
        %v2497 = vpop.f32.mrb[0].mxu0
        %v2498 = vadd.f32 0.0, %v2497
        %v2499 = vpop.f32.mrb[0].mxu0
        %v2500 = vadd.f32 0.0, %v2499
        %v2501 = vpop.f32.mrb[0].mxu0
        %v2502 = vadd.f32 0.0, %v2501
        %2503 = vmatprep.mubr.bf16.mxu0 %v1470
        %2504 = vmatmul.mubr.bf16.gmra.mrb[0].mxu0 %v1469
        %v2505 = vpop.f32.mrb[0].mxu0
        %v2506 = vadd.f32 0.0, %v2505
        %v2507 = vpop.f32.mrb[0].mxu0
        %v2508 = vadd.f32 0.0, %v2507
        %v2509 = vpop.f32.mrb[0].mxu0
        %v2510 = vadd.f32 0.0, %v2509
        %v2511 = vpop.f32.mrb[0].mxu0
        %v2512 = vadd.f32 0.0, %v2511
        %2513 = vmatprep.mubr.bf16.mxu0 %v1472
        %2514 = vmatmul.mubr.bf16.gmra.mrb[0].mxu0 %v1471
        %v2515 = vpop.f32.mrb[0].mxu0
        %v2516 = vadd.f32 0.0, %v2515
        %v2517 = vpop.f32.mrb[0].mxu0
        %v2518 = vadd.f32 0.0, %v2517
        %v2519 = vpop.f32.mrb[0].mxu0
        %v2520 = vadd.f32 0.0, %v2519
        %v2521 = vpop.f32.mrb[0].mxu0
        %v2522 = vadd.f32 0.0, %v2521
        %2523 = vmatprep.mubr.bf16.mxu0 %v1474
        %2524 = vmatmul.mubr.bf16.gmra.mrb[0].mxu0 %v1473
        %v2525 = vpop.f32.mrb[0].mxu0
        %v2526 = vadd.f32 0.0, %v2525
        %v2527 = vpop.f32.mrb[0].mxu0
        %v2528 = vadd.f32 0.0, %v2527
        %v2529 = vpop.f32.mrb[0].mxu0
        %v2530 = vadd.f32 0.0, %v2529
        %v2531 = vpop.f32.mrb[0].mxu0
        %v2532 = vadd.f32 0.0, %v2531
        %2533 = vmatprep.mubr.bf16.mxu0 %v1476
        %2534 = vmatmul.mubr.bf16.gmra.mrb[0].mxu0 %v1475
        %v2535 = vpop.f32.mrb[0].mxu0
        %v2536 = vadd.f32 0.0, %v2535
        %v2537 = vpop.f32.mrb[0].mxu0
        %v2538 = vadd.f32 0.0, %v2537
        %v2539 = vpop.f32.mrb[0].mxu0
        %v2540 = vadd.f32 0.0, %v2539
        %v2541 = vpop.f32.mrb[0].mxu0
        %v2542 = vadd.f32 0.0, %v2541
        %2543 = vmatprep.mubr.bf16.mxu0 %v1478
        %2544 = vmatmul.mubr.bf16.gmra.mrb[0].mxu0 %v1477
        %v2545 = vpop.f32.mrb[0].mxu0
        %v2546 = vadd.f32 0.0, %v2545
        %v2547 = vpop.f32.mrb[0].mxu0
        %v2548 = vadd.f32 0.0, %v2547
        %v2549 = vpop.f32.mrb[0].mxu0
        %v2550 = vadd.f32 0.0, %v2549
        %v2551 = vpop.f32.mrb[0].mxu0
        %v2552 = vadd.f32 0.0, %v2551
        %2553 = vmatprep.mubr.bf16.mxu0 %v1480
        %2554 = vmatmul.mubr.bf16.gmra.mrb[0].mxu0 %v1479
        %v2555 = vpop.f32.mrb[0].mxu0
        %v2556 = vadd.f32 0.0, %v2555
        %v2557 = vpop.f32.mrb[0].mxu0
        %v2558 = vadd.f32 0.0, %v2557
        %v2559 = vpop.f32.mrb[0].mxu0
        %v2560 = vadd.f32 0.0, %v2559
        %v2561 = vpop.f32.mrb[0].mxu0
        %v2562 = vadd.f32 0.0, %v2561
        %2563 = vmatprep.mubr.bf16.mxu0 %v1482
        %2564 = vmatmul.mubr.bf16.gmra.mrb[0].mxu0 %v1481
        %v2565 = vpop.f32.mrb[0].mxu0
        %v2566 = vadd.f32 0.0, %v2565
        %v2567 = vpop.f32.mrb[0].mxu0
        %v2568 = vadd.f32 0.0, %v2567
        %v2569 = vpop.f32.mrb[0].mxu0
        %v2570 = vadd.f32 0.0, %v2569
        %v2571 = vpop.f32.mrb[0].mxu0
        %v2572 = vadd.f32 0.0, %v2571
        %2573 = vmatprep.mubr.bf16.mxu0 %v1484
        %2574 = vmatmul.mubr.bf16.gmra.mrb[0].mxu0 %v1483
        %v2575 = vpop.f32.mrb[0].mxu0
        %v2576 = vadd.f32 0.0, %v2575
        %v2577 = vpop.f32.mrb[0].mxu0
        %v2578 = vadd.f32 0.0, %v2577
        %v2579 = vpop.f32.mrb[0].mxu0
        %v2580 = vadd.f32 0.0, %v2579
        %v2581 = vpop.f32.mrb[0].mxu0
        %v2582 = vadd.f32 0.0, %v2581
        %2583 = vmatprep.mubr.bf16.mxu0 %v1486
        %2584 = vmatmul.mubr.bf16.gmra.mrb[0].mxu0 %v1485
        %v2585 = vpop.f32.mrb[0].mxu0
        %v2586 = vadd.f32 0.0, %v2585
        %v2587 = vpop.f32.mrb[0].mxu0
        %v2588 = vadd.f32 0.0, %v2587
        %v2589 = vpop.f32.mrb[0].mxu0
        %v2590 = vadd.f32 0.0, %v2589
        %v2591 = vpop.f32.mrb[0].mxu0
        %v2592 = vadd.f32 0.0, %v2591
        %2593 = vmatprep.mubr.bf16.mxu0 %v1488
        %2594 = vmatmul.mubr.bf16.gmra.mrb[0].mxu0 %v1487
        %v2595 = vpop.f32.mrb[0].mxu0
        %v2596 = vadd.f32 0.0, %v2595
        %v2597 = vpop.f32.mrb[0].mxu0
        %v2598 = vadd.f32 0.0, %v2597
        %v2599 = vpop.f32.mrb[0].mxu0
        %v2600 = vadd.f32 0.0, %v2599
        %v2601 = vpop.f32.mrb[0].mxu0
        %v2602 = vadd.f32 0.0, %v2601
        %2603 = vmatprep.mubr.bf16.mxu0 %v1490
        %2604 = vmatmul.mubr.bf16.gmra.mrb[0].mxu0 %v1489
        %v2605 = vpop.f32.mrb[0].mxu0
        %v2606 = vadd.f32 0.0, %v2605
        %v2607 = vpop.f32.mrb[0].mxu0
        %v2608 = vadd.f32 0.0, %v2607
        %v2609 = vpop.f32.mrb[0].mxu0
        %v2610 = vadd.f32 0.0, %v2609
        %v2611 = vpop.f32.mrb[0].mxu0
        %v2612 = vadd.f32 0.0, %v2611
        %2613 = vdwg.mxu0
        %2614 = vmatprep.subr.bf16.mxu0 %v666
        %2615 = vmatpush1.bf16.msra.mxu0 %v665
        %2616 = vmatprep.subr.bf16.mxu0 %v674
        %2617 = vmatpush1.bf16.msra.mxu0 %v673
        %2618 = vmatprep.subr.bf16.mxu0 %v682
        %2619 = vmatpush1.bf16.msra.mxu0 %v681
        %2620 = vmatprep.subr.bf16.mxu0 %v690
        %2621 = vmatpush1.bf16.msra.mxu0 %v689
        %2622 = vmatprep.subr.bf16.mxu0 %v698
        %2623 = vmatpush1.bf16.msra.mxu0 %v697
        %2624 = vmatprep.subr.bf16.mxu0 %v706
        %2625 = vmatpush1.bf16.msra.mxu0 %v705
        %2626 = vmatprep.subr.bf16.mxu0 %v714
        %2627 = vmatpush1.bf16.msra.mxu0 %v713
        %2628 = vmatprep.subr.bf16.mxu0 %v722
        %2629 = vmatpush1.bf16.msra.mxu0 %v721
        %2630 = vmatprep.subr.bf16.mxu0 %v730
        %2631 = vmatpush1.bf16.msra.mxu0 %v729
        %2632 = vmatprep.subr.bf16.mxu0 %v738
        %2633 = vmatpush1.bf16.msra.mxu0 %v737
        %2634 = vmatprep.subr.bf16.mxu0 %v746
        %2635 = vmatpush1.bf16.msra.mxu0 %v745
        %2636 = vmatprep.subr.bf16.mxu0 %v754
        %2637 = vmatpush1.bf16.msra.mxu0 %v753
        %2638 = vmatprep.subr.bf16.mxu0 %v762
        %2639 = vmatpush1.bf16.msra.mxu0 %v761
        %2640 = vmatprep.subr.bf16.mxu0 %v770
        %2641 = vmatpush1.bf16.msra.mxu0 %v769
        %2642 = vmatprep.subr.bf16.mxu0 %v778
        %2643 = vmatpush1.bf16.msra.mxu0 %v777
        %2644 = vmatprep.subr.bf16.mxu0 %v786
        %2645 = vmatpush1.bf16.msra.mxu0 %v785
        %2646 = vmatprep.mubr.bf16.mxu0 %v1428
        %2647 = vmatmul.mubr.bf16.gmra.mrb[0].mxu0 %v1427
        %v2648 = vpop.f32.mrb[0].mxu0
        %v2649 = vadd.f32 0.0, %v2648
        %v2650 = vpop.f32.mrb[0].mxu0
        %v2651 = vadd.f32 0.0, %v2650
        %v2652 = vpop.f32.mrb[0].mxu0
        %v2653 = vadd.f32 0.0, %v2652
        %v2654 = vpop.f32.mrb[0].mxu0
        %v2655 = vadd.f32 0.0, %v2654
        %2656 = vmatprep.mubr.bf16.mxu0 %v1430
        %2657 = vmatmul.mubr.bf16.gmra.mrb[0].mxu0 %v1429
        %v2658 = vpop.f32.mrb[0].mxu0
        %v2659 = vadd.f32 0.0, %v2658
        %v2660 = vpop.f32.mrb[0].mxu0
        %v2661 = vadd.f32 0.0, %v2660
        %v2662 = vpop.f32.mrb[0].mxu0
        %v2663 = vadd.f32 0.0, %v2662
        %v2664 = vpop.f32.mrb[0].mxu0
        %v2665 = vadd.f32 0.0, %v2664
        %2666 = vmatprep.mubr.bf16.mxu0 %v1432
        %2667 = vmatmul.mubr.bf16.gmra.mrb[0].mxu0 %v1431
        %v2668 = vpop.f32.mrb[0].mxu0
        %v2669 = vadd.f32 0.0, %v2668
        %v2670 = vpop.f32.mrb[0].mxu0
        %v2671 = vadd.f32 0.0, %v2670
        %v2672 = vpop.f32.mrb[0].mxu0
        %v2673 = vadd.f32 0.0, %v2672
        %v2674 = vpop.f32.mrb[0].mxu0
        %v2675 = vadd.f32 0.0, %v2674
        %2676 = vmatprep.mubr.bf16.mxu0 %v1434
        %2677 = vmatmul.mubr.bf16.gmra.mrb[0].mxu0 %v1433
        %v2678 = vpop.f32.mrb[0].mxu0
        %v2679 = vadd.f32 0.0, %v2678
        %v2680 = vpop.f32.mrb[0].mxu0
        %v2681 = vadd.f32 0.0, %v2680
        %v2682 = vpop.f32.mrb[0].mxu0
        %v2683 = vadd.f32 0.0, %v2682
        %v2684 = vpop.f32.mrb[0].mxu0
        %v2685 = vadd.f32 0.0, %v2684
        %2686 = vmatprep.mubr.bf16.mxu0 %v1436
        %2687 = vmatmul.mubr.bf16.gmra.mrb[0].mxu0 %v1435
        %v2688 = vpop.f32.mrb[0].mxu0
        %v2689 = vadd.f32 0.0, %v2688
        %v2690 = vpop.f32.mrb[0].mxu0
        %v2691 = vadd.f32 0.0, %v2690
        %v2692 = vpop.f32.mrb[0].mxu0
        %v2693 = vadd.f32 0.0, %v2692
        %v2694 = vpop.f32.mrb[0].mxu0
        %v2695 = vadd.f32 0.0, %v2694
        %2696 = vmatprep.mubr.bf16.mxu0 %v1438
        %2697 = vmatmul.mubr.bf16.gmra.mrb[0].mxu0 %v1437
        %v2698 = vpop.f32.mrb[0].mxu0
        %v2699 = vadd.f32 0.0, %v2698
        %v2700 = vpop.f32.mrb[0].mxu0
        %v2701 = vadd.f32 0.0, %v2700
        %v2702 = vpop.f32.mrb[0].mxu0
        %v2703 = vadd.f32 0.0, %v2702
        %v2704 = vpop.f32.mrb[0].mxu0
        %v2705 = vadd.f32 0.0, %v2704
        %2706 = vmatprep.mubr.bf16.mxu0 %v1440
        %2707 = vmatmul.mubr.bf16.gmra.mrb[0].mxu0 %v1439
        %v2708 = vpop.f32.mrb[0].mxu0
        %v2709 = vadd.f32 0.0, %v2708
        %v2710 = vpop.f32.mrb[0].mxu0
        %v2711 = vadd.f32 0.0, %v2710
        %v2712 = vpop.f32.mrb[0].mxu0
        %v2713 = vadd.f32 0.0, %v2712
        %v2714 = vpop.f32.mrb[0].mxu0
        %v2715 = vadd.f32 0.0, %v2714
        %2716 = vmatprep.mubr.bf16.mxu0 %v1442
        %2717 = vmatmul.mubr.bf16.gmra.mrb[0].mxu0 %v1441
        %v2718 = vpop.f32.mrb[0].mxu0
        %v2719 = vadd.f32 0.0, %v2718
        %v2720 = vpop.f32.mrb[0].mxu0
        %v2721 = vadd.f32 0.0, %v2720
        %v2722 = vpop.f32.mrb[0].mxu0
        %v2723 = vadd.f32 0.0, %v2722
        %v2724 = vpop.f32.mrb[0].mxu0
        %v2725 = vadd.f32 0.0, %v2724
        %2726 = vmatprep.mubr.bf16.mxu0 %v1444
        %2727 = vmatmul.mubr.bf16.gmra.mrb[0].mxu0 %v1443
        %v2728 = vpop.f32.mrb[0].mxu0
        %v2729 = vadd.f32 0.0, %v2728
        %v2730 = vpop.f32.mrb[0].mxu0
        %v2731 = vadd.f32 0.0, %v2730
        %v2732 = vpop.f32.mrb[0].mxu0
        %v2733 = vadd.f32 0.0, %v2732
        %v2734 = vpop.f32.mrb[0].mxu0
        %v2735 = vadd.f32 0.0, %v2734
        %2736 = vmatprep.mubr.bf16.mxu0 %v1446
        %2737 = vmatmul.mubr.bf16.gmra.mrb[0].mxu0 %v1445
        %v2738 = vpop.f32.mrb[0].mxu0
        %v2739 = vadd.f32 0.0, %v2738
        %v2740 = vpop.f32.mrb[0].mxu0
        %v2741 = vadd.f32 0.0, %v2740
        %v2742 = vpop.f32.mrb[0].mxu0
        %v2743 = vadd.f32 0.0, %v2742
        %v2744 = vpop.f32.mrb[0].mxu0
        %v2745 = vadd.f32 0.0, %v2744
        %2746 = vmatprep.mubr.bf16.mxu0 %v1448
        %2747 = vmatmul.mubr.bf16.gmra.mrb[0].mxu0 %v1447
        %v2748 = vpop.f32.mrb[0].mxu0
        %v2749 = vadd.f32 0.0, %v2748
        %v2750 = vpop.f32.mrb[0].mxu0
        %v2751 = vadd.f32 0.0, %v2750
        %v2752 = vpop.f32.mrb[0].mxu0
        %v2753 = vadd.f32 0.0, %v2752
        %v2754 = vpop.f32.mrb[0].mxu0
        %v2755 = vadd.f32 0.0, %v2754
        %2756 = vmatprep.mubr.bf16.mxu0 %v1450
        %2757 = vmatmul.mubr.bf16.gmra.mrb[0].mxu0 %v1449
        %v2758 = vpop.f32.mrb[0].mxu0
        %v2759 = vadd.f32 0.0, %v2758
        %v2760 = vpop.f32.mrb[0].mxu0
        %v2761 = vadd.f32 0.0, %v2760
        %v2762 = vpop.f32.mrb[0].mxu0
        %v2763 = vadd.f32 0.0, %v2762
        %v2764 = vpop.f32.mrb[0].mxu0
        %v2765 = vadd.f32 0.0, %v2764
        %2766 = vmatprep.mubr.bf16.mxu0 %v1452
        %2767 = vmatmul.mubr.bf16.gmra.mrb[0].mxu0 %v1451
        %v2768 = vpop.f32.mrb[0].mxu0
        %v2769 = vadd.f32 0.0, %v2768
        %v2770 = vpop.f32.mrb[0].mxu0
        %v2771 = vadd.f32 0.0, %v2770
        %v2772 = vpop.f32.mrb[0].mxu0
        %v2773 = vadd.f32 0.0, %v2772
        %v2774 = vpop.f32.mrb[0].mxu0
        %v2775 = vadd.f32 0.0, %v2774
        %2776 = vmatprep.mubr.bf16.mxu0 %v1454
        %2777 = vmatmul.mubr.bf16.gmra.mrb[0].mxu0 %v1453
        %v2778 = vpop.f32.mrb[0].mxu0
        %v2779 = vadd.f32 0.0, %v2778
        %v2780 = vpop.f32.mrb[0].mxu0
        %v2781 = vadd.f32 0.0, %v2780
        %v2782 = vpop.f32.mrb[0].mxu0
        %v2783 = vadd.f32 0.0, %v2782
        %v2784 = vpop.f32.mrb[0].mxu0
        %v2785 = vadd.f32 0.0, %v2784
        %2786 = vmatprep.mubr.bf16.mxu0 %v1456
        %2787 = vmatmul.mubr.bf16.gmra.mrb[0].mxu0 %v1455
        %v2788 = vpop.f32.mrb[0].mxu0
        %v2789 = vadd.f32 0.0, %v2788
        %v2790 = vpop.f32.mrb[0].mxu0
        %v2791 = vadd.f32 0.0, %v2790
        %v2792 = vpop.f32.mrb[0].mxu0
        %v2793 = vadd.f32 0.0, %v2792
        %v2794 = vpop.f32.mrb[0].mxu0
        %v2795 = vadd.f32 0.0, %v2794
        %2796 = vmatprep.mubr.bf16.mxu0 %v1458
        %2797 = vmatmul.mubr.bf16.gmra.mrb[0].mxu0 %v1457
        %v2798 = vpop.f32.mrb[0].mxu0
        %v2799 = vadd.f32 0.0, %v2798
        %v2800 = vpop.f32.mrb[0].mxu0
        %v2801 = vadd.f32 0.0, %v2800
        %v2802 = vpop.f32.mrb[0].mxu0
        %v2803 = vadd.f32 0.0, %v2802
        %v2804 = vpop.f32.mrb[0].mxu0
        %v2805 = vadd.f32 0.0, %v2804
        %2806 = vmatprep.mubr.bf16.mxu0 %v1460
        %2807 = vmatmul.mubr.bf16.gmra.mrb[0].mxu0 %v1459
        %v2808 = vpop.f32.mrb[0].mxu0
        %v2809 = vadd.f32 0.0, %v2808
        %v2810 = vpop.f32.mrb[0].mxu0
        %v2811 = vadd.f32 0.0, %v2810
        %v2812 = vpop.f32.mrb[0].mxu0
        %v2813 = vadd.f32 0.0, %v2812
        %v2814 = vpop.f32.mrb[0].mxu0
        %v2815 = vadd.f32 0.0, %v2814
        %2816 = vmatprep.mubr.bf16.mxu0 %v1462
        %2817 = vmatmul.mubr.bf16.gmra.mrb[0].mxu0 %v1461
        %v2818 = vpop.f32.mrb[0].mxu0
        %v2819 = vadd.f32 0.0, %v2818
        %v2820 = vpop.f32.mrb[0].mxu0
        %v2821 = vadd.f32 0.0, %v2820
        %v2822 = vpop.f32.mrb[0].mxu0
        %v2823 = vadd.f32 0.0, %v2822
        %v2824 = vpop.f32.mrb[0].mxu0
        %v2825 = vadd.f32 0.0, %v2824
        %2826 = vmatprep.mubr.bf16.mxu0 %v1464
        %2827 = vmatmul.mubr.bf16.gmra.mrb[0].mxu0 %v1463
        %v2828 = vpop.f32.mrb[0].mxu0
        %v2829 = vadd.f32 0.0, %v2828
        %v2830 = vpop.f32.mrb[0].mxu0
        %v2831 = vadd.f32 0.0, %v2830
        %v2832 = vpop.f32.mrb[0].mxu0
        %v2833 = vadd.f32 0.0, %v2832
        %v2834 = vpop.f32.mrb[0].mxu0
        %v2835 = vadd.f32 0.0, %v2834
        %2836 = vmatprep.mubr.bf16.mxu0 %v1466
        %2837 = vmatmul.mubr.bf16.gmra.mrb[0].mxu0 %v1465
        %v2838 = vpop.f32.mrb[0].mxu0
        %v2839 = vadd.f32 0.0, %v2838
        %v2840 = vpop.f32.mrb[0].mxu0
        %v2841 = vadd.f32 0.0, %v2840
        %v2842 = vpop.f32.mrb[0].mxu0
        %v2843 = vadd.f32 0.0, %v2842
        %v2844 = vpop.f32.mrb[0].mxu0
        %v2845 = vadd.f32 0.0, %v2844
        %2846 = vmatprep.mubr.bf16.mxu0 %v1468
        %2847 = vmatmul.mubr.bf16.gmra.mrb[0].mxu0 %v1467
        %v2848 = vpop.f32.mrb[0].mxu0
        %v2849 = vadd.f32 0.0, %v2848
        %v2850 = vpop.f32.mrb[0].mxu0
        %v2851 = vadd.f32 0.0, %v2850
        %v2852 = vpop.f32.mrb[0].mxu0
        %v2853 = vadd.f32 0.0, %v2852
        %v2854 = vpop.f32.mrb[0].mxu0
        %v2855 = vadd.f32 0.0, %v2854
        %2856 = vmatprep.mubr.bf16.mxu0 %v1470
        %2857 = vmatmul.mubr.bf16.gmra.mrb[0].mxu0 %v1469
        %v2858 = vpop.f32.mrb[0].mxu0
        %v2859 = vadd.f32 0.0, %v2858
        %v2860 = vpop.f32.mrb[0].mxu0
        %v2861 = vadd.f32 0.0, %v2860
        %v2862 = vpop.f32.mrb[0].mxu0
        %v2863 = vadd.f32 0.0, %v2862
        %v2864 = vpop.f32.mrb[0].mxu0
        %v2865 = vadd.f32 0.0, %v2864
        %2866 = vmatprep.mubr.bf16.mxu0 %v1472
        %2867 = vmatmul.mubr.bf16.gmra.mrb[0].mxu0 %v1471
        %v2868 = vpop.f32.mrb[0].mxu0
        %v2869 = vadd.f32 0.0, %v2868
        %v2870 = vpop.f32.mrb[0].mxu0
        %v2871 = vadd.f32 0.0, %v2870
        %v2872 = vpop.f32.mrb[0].mxu0
        %v2873 = vadd.f32 0.0, %v2872
        %v2874 = vpop.f32.mrb[0].mxu0
        %v2875 = vadd.f32 0.0, %v2874
        %2876 = vmatprep.mubr.bf16.mxu0 %v1474
        %2877 = vmatmul.mubr.bf16.gmra.mrb[0].mxu0 %v1473
        %v2878 = vpop.f32.mrb[0].mxu0
        %v2879 = vadd.f32 0.0, %v2878
        %v2880 = vpop.f32.mrb[0].mxu0
        %v2881 = vadd.f32 0.0, %v2880
        %v2882 = vpop.f32.mrb[0].mxu0
        %v2883 = vadd.f32 0.0, %v2882
        %v2884 = vpop.f32.mrb[0].mxu0
        %v2885 = vadd.f32 0.0, %v2884
        %2886 = vmatprep.mubr.bf16.mxu0 %v1476
        %2887 = vmatmul.mubr.bf16.gmra.mrb[0].mxu0 %v1475
        %v2888 = vpop.f32.mrb[0].mxu0
        %v2889 = vadd.f32 0.0, %v2888
        %v2890 = vpop.f32.mrb[0].mxu0
        %v2891 = vadd.f32 0.0, %v2890
        %v2892 = vpop.f32.mrb[0].mxu0
        %v2893 = vadd.f32 0.0, %v2892
        %v2894 = vpop.f32.mrb[0].mxu0
        %v2895 = vadd.f32 0.0, %v2894
        %2896 = vmatprep.mubr.bf16.mxu0 %v1478
        %2897 = vmatmul.mubr.bf16.gmra.mrb[0].mxu0 %v1477
        %v2898 = vpop.f32.mrb[0].mxu0
        %v2899 = vadd.f32 0.0, %v2898
        %v2900 = vpop.f32.mrb[0].mxu0
        %v2901 = vadd.f32 0.0, %v2900
        %v2902 = vpop.f32.mrb[0].mxu0
        %v2903 = vadd.f32 0.0, %v2902
        %v2904 = vpop.f32.mrb[0].mxu0
        %v2905 = vadd.f32 0.0, %v2904
        %2906 = vmatprep.mubr.bf16.mxu0 %v1480
        %2907 = vmatmul.mubr.bf16.gmra.mrb[0].mxu0 %v1479
        %v2908 = vpop.f32.mrb[0].mxu0
        %v2909 = vadd.f32 0.0, %v2908
        %v2910 = vpop.f32.mrb[0].mxu0
        %v2911 = vadd.f32 0.0, %v2910
        %v2912 = vpop.f32.mrb[0].mxu0
        %v2913 = vadd.f32 0.0, %v2912
        %v2914 = vpop.f32.mrb[0].mxu0
        %v2915 = vadd.f32 0.0, %v2914
        %2916 = vmatprep.mubr.bf16.mxu0 %v1482
        %2917 = vmatmul.mubr.bf16.gmra.mrb[0].mxu0 %v1481
        %v2918 = vpop.f32.mrb[0].mxu0
        %v2919 = vadd.f32 0.0, %v2918
        %v2920 = vpop.f32.mrb[0].mxu0
        %v2921 = vadd.f32 0.0, %v2920
        %v2922 = vpop.f32.mrb[0].mxu0
        %v2923 = vadd.f32 0.0, %v2922
        %v2924 = vpop.f32.mrb[0].mxu0
        %v2925 = vadd.f32 0.0, %v2924
        %2926 = vmatprep.mubr.bf16.mxu0 %v1484
        %2927 = vmatmul.mubr.bf16.gmra.mrb[0].mxu0 %v1483
        %v2928 = vpop.f32.mrb[0].mxu0
        %v2929 = vadd.f32 0.0, %v2928
        %v2930 = vpop.f32.mrb[0].mxu0
        %v2931 = vadd.f32 0.0, %v2930
        %v2932 = vpop.f32.mrb[0].mxu0
        %v2933 = vadd.f32 0.0, %v2932
        %v2934 = vpop.f32.mrb[0].mxu0
        %v2935 = vadd.f32 0.0, %v2934
        %2936 = vmatprep.mubr.bf16.mxu0 %v1486
        %2937 = vmatmul.mubr.bf16.gmra.mrb[0].mxu0 %v1485
        %v2938 = vpop.f32.mrb[0].mxu0
        %v2939 = vadd.f32 0.0, %v2938
        %v2940 = vpop.f32.mrb[0].mxu0
        %v2941 = vadd.f32 0.0, %v2940
        %v2942 = vpop.f32.mrb[0].mxu0
        %v2943 = vadd.f32 0.0, %v2942
        %v2944 = vpop.f32.mrb[0].mxu0
        %v2945 = vadd.f32 0.0, %v2944
        %2946 = vmatprep.mubr.bf16.mxu0 %v1488
        %2947 = vmatmul.mubr.bf16.gmra.mrb[0].mxu0 %v1487
        %v2948 = vpop.f32.mrb[0].mxu0
        %v2949 = vadd.f32 0.0, %v2948
        %v2950 = vpop.f32.mrb[0].mxu0
        %v2951 = vadd.f32 0.0, %v2950
        %v2952 = vpop.f32.mrb[0].mxu0
        %v2953 = vadd.f32 0.0, %v2952
        %v2954 = vpop.f32.mrb[0].mxu0
        %v2955 = vadd.f32 0.0, %v2954
        %2956 = vmatprep.mubr.bf16.mxu0 %v1490
        %2957 = vmatmul.mubr.bf16.gmra.mrb[0].mxu0 %v1489
        %v2958 = vpop.f32.mrb[0].mxu0
        %v2959 = vadd.f32 0.0, %v2958
        %v2960 = vpop.f32.mrb[0].mxu0
        %v2961 = vadd.f32 0.0, %v2960
        %v2962 = vpop.f32.mrb[0].mxu0
        %v2963 = vadd.f32 0.0, %v2962
        %v2964 = vpop.f32.mrb[0].mxu0
        %v2965 = vadd.f32 0.0, %v2964
        %2966 = vdwg.mxu0
        %v2967 = vld [vmem:[#allocation7] sm:$0xff]
        %v2968 = vld [vmem:[#allocation7 + $0x8] sm:$0xff]
        %v2969 = vld [vmem:[#allocation7 + $0x10] sm:$0xff]
        %v2970 = vld [vmem:[#allocation7 + $0x18] sm:$0xff]
        %v2971 = vld [vmem:[#allocation7 + $0x20] sm:$0xff]
        %v2972 = vld [vmem:[#allocation7 + $0x28] sm:$0xff]
        %v2973 = vld [vmem:[#allocation7 + $0x30] sm:$0xff]
        %v2974 = vld [vmem:[#allocation7 + $0x38] sm:$0xff]
        %v2975 = vld [vmem:[#allocation7 + $0x40] sm:$0xff]
        %v2976 = vld [vmem:[#allocation7 + $0x48] sm:$0xff]
        %v2977 = vld [vmem:[#allocation7 + $0x50] sm:$0xff]
        %v2978 = vld [vmem:[#allocation7 + $0x58] sm:$0xff]
        %v2979 = vld [vmem:[#allocation7 + $0x60] sm:$0xff]
        %v2980 = vld [vmem:[#allocation7 + $0x68] sm:$0xff]
        %v2981 = vld [vmem:[#allocation7 + $0x70] sm:$0xff]
        %v2982 = vld [vmem:[#allocation7 + $0x78] sm:$0xff]
        %v2983 = vld [vmem:[#allocation7 + $0x80] sm:$0xff]
        %v2984 = vld [vmem:[#allocation7 + $0x88] sm:$0xff]
        %v2985 = vld [vmem:[#allocation7 + $0x90] sm:$0xff]
        %v2986 = vld [vmem:[#allocation7 + $0x98] sm:$0xff]
        %v2987 = vld [vmem:[#allocation7 + $0xa0] sm:$0xff]
        %v2988 = vld [vmem:[#allocation7 + $0xa8] sm:$0xff]
        %v2989 = vld [vmem:[#allocation7 + $0xb0] sm:$0xff]
        %v2990 = vld [vmem:[#allocation7 + $0xb8] sm:$0xff]
        %v2991 = vld [vmem:[#allocation7 + $0xc0] sm:$0xff]
        %v2992 = vld [vmem:[#allocation7 + $0xc8] sm:$0xff]
        %v2993 = vld [vmem:[#allocation7 + $0xd0] sm:$0xff]
        %v2994 = vld [vmem:[#allocation7 + $0xd8] sm:$0xff]
        %v2995 = vld [vmem:[#allocation7 + $0xe0] sm:$0xff]
        %v2996 = vld [vmem:[#allocation7 + $0xe8] sm:$0xff]
        %v2997 = vld [vmem:[#allocation7 + $0xf0] sm:$0xff]
        %v2998 = vld [vmem:[#allocation7 + $0xf8] sm:$0xff]
        %v2999 = vld [vmem:[#allocation7 + $0x100] sm:$0xff]
        %v3000 = vld [vmem:[#allocation7 + $0x108] sm:$0xff]
        %v3001 = vld [vmem:[#allocation7 + $0x110] sm:$0xff]
        %v3002 = vld [vmem:[#allocation7 + $0x118] sm:$0xff]
        %v3003 = vld [vmem:[#allocation7 + $0x120] sm:$0xff]
        %v3004 = vld [vmem:[#allocation7 + $0x128] sm:$0xff]
        %v3005 = vld [vmem:[#allocation7 + $0x130] sm:$0xff]
        %v3006 = vld [vmem:[#allocation7 + $0x138] sm:$0xff]
        %v3007 = vld [vmem:[#allocation7 + $0x140] sm:$0xff]
        %v3008 = vld [vmem:[#allocation7 + $0x148] sm:$0xff]
        %v3009 = vld [vmem:[#allocation7 + $0x150] sm:$0xff]
        %v3010 = vld [vmem:[#allocation7 + $0x158] sm:$0xff]
        %v3011 = vld [vmem:[#allocation7 + $0x160] sm:$0xff]
        %v3012 = vld [vmem:[#allocation7 + $0x168] sm:$0xff]
        %v3013 = vld [vmem:[#allocation7 + $0x170] sm:$0xff]
        %v3014 = vld [vmem:[#allocation7 + $0x178] sm:$0xff]
        %v3015 = vld [vmem:[#allocation7 + $0x180] sm:$0xff]
        %v3016 = vld [vmem:[#allocation7 + $0x188] sm:$0xff]
        %v3017 = vld [vmem:[#allocation7 + $0x190] sm:$0xff]
        %v3018 = vld [vmem:[#allocation7 + $0x198] sm:$0xff]
        %v3019 = vld [vmem:[#allocation7 + $0x1a0] sm:$0xff]
        %v3020 = vld [vmem:[#allocation7 + $0x1a8] sm:$0xff]
        %v3021 = vld [vmem:[#allocation7 + $0x1b0] sm:$0xff]
        %v3022 = vld [vmem:[#allocation7 + $0x1b8] sm:$0xff]
        %v3023 = vld [vmem:[#allocation7 + $0x1c0] sm:$0xff]
        %v3024 = vld [vmem:[#allocation7 + $0x1c8] sm:$0xff]
        %v3025 = vld [vmem:[#allocation7 + $0x1d0] sm:$0xff]
        %v3026 = vld [vmem:[#allocation7 + $0x1d8] sm:$0xff]
        %v3027 = vld [vmem:[#allocation7 + $0x1e0] sm:$0xff]
        %v3028 = vld [vmem:[#allocation7 + $0x1e8] sm:$0xff]
        %v3029 = vld [vmem:[#allocation7 + $0x1f0] sm:$0xff]
        %v3030 = vld [vmem:[#allocation7 + $0x1f8] sm:$0xff]
        %v3095 = vunpack.c.l.b16 %v2967
        %v3096 = vunpack.c.h.b16 %v2967
        %v3097 = vunpack.c.l.b16 %v2968
        %v3098 = vunpack.c.h.b16 %v2968
        %v3099 = vunpack.c.l.b16 %v2969
        %v3100 = vunpack.c.h.b16 %v2969
        %v3101 = vunpack.c.l.b16 %v2970
        %v3102 = vunpack.c.h.b16 %v2970
        %v3103 = vunpack.c.l.b16 %v2971
        %v3104 = vunpack.c.h.b16 %v2971
        %v3105 = vunpack.c.l.b16 %v2972
        %v3106 = vunpack.c.h.b16 %v2972
        %v3107 = vunpack.c.l.b16 %v2973
        %v3108 = vunpack.c.h.b16 %v2973
        %v3109 = vunpack.c.l.b16 %v2974
        %v3110 = vunpack.c.h.b16 %v2974
        %v3111 = vunpack.c.l.b16 %v2975
        %v3112 = vunpack.c.h.b16 %v2975
        %v3113 = vunpack.c.l.b16 %v2976
        %v3114 = vunpack.c.h.b16 %v2976
        %v3115 = vunpack.c.l.b16 %v2977
        %v3116 = vunpack.c.h.b16 %v2977
        %v3117 = vunpack.c.l.b16 %v2978
        %v3118 = vunpack.c.h.b16 %v2978
        %v3119 = vunpack.c.l.b16 %v2979
        %v3120 = vunpack.c.h.b16 %v2979
        %v3121 = vunpack.c.l.b16 %v2980
        %v3122 = vunpack.c.h.b16 %v2980
        %v3123 = vunpack.c.l.b16 %v2981
        %v3124 = vunpack.c.h.b16 %v2981
        %v3125 = vunpack.c.l.b16 %v2982
        %v3126 = vunpack.c.h.b16 %v2982
        %v3127 = vunpack.c.l.b16 %v2983
        %v3128 = vunpack.c.h.b16 %v2983
        %v3129 = vunpack.c.l.b16 %v2984
        %v3130 = vunpack.c.h.b16 %v2984
        %v3131 = vunpack.c.l.b16 %v2985
        %v3132 = vunpack.c.h.b16 %v2985
        %v3133 = vunpack.c.l.b16 %v2986
        %v3134 = vunpack.c.h.b16 %v2986
        %v3135 = vunpack.c.l.b16 %v2987
        %v3136 = vunpack.c.h.b16 %v2987
        %v3137 = vunpack.c.l.b16 %v2988
        %v3138 = vunpack.c.h.b16 %v2988
        %v3139 = vunpack.c.l.b16 %v2989
        %v3140 = vunpack.c.h.b16 %v2989
        %v3141 = vunpack.c.l.b16 %v2990
        %v3142 = vunpack.c.h.b16 %v2990
        %v3143 = vunpack.c.l.b16 %v2991
        %v3144 = vunpack.c.h.b16 %v2991
        %v3145 = vunpack.c.l.b16 %v2992
        %v3146 = vunpack.c.h.b16 %v2992
        %v3147 = vunpack.c.l.b16 %v2993
        %v3148 = vunpack.c.h.b16 %v2993
        %v3149 = vunpack.c.l.b16 %v2994
        %v3150 = vunpack.c.h.b16 %v2994
        %v3151 = vunpack.c.l.b16 %v2995
        %v3152 = vunpack.c.h.b16 %v2995
        %v3153 = vunpack.c.l.b16 %v2996
        %v3154 = vunpack.c.h.b16 %v2996
        %v3155 = vunpack.c.l.b16 %v2997
        %v3156 = vunpack.c.h.b16 %v2997
        %v3157 = vunpack.c.l.b16 %v2998
        %v3158 = vunpack.c.h.b16 %v2998
        %v3159 = vunpack.c.l.b16 %v2999
        %v3160 = vunpack.c.h.b16 %v2999
        %v3161 = vunpack.c.l.b16 %v3000
        %v3162 = vunpack.c.h.b16 %v3000
        %v3163 = vunpack.c.l.b16 %v3001
        %v3164 = vunpack.c.h.b16 %v3001
        %v3165 = vunpack.c.l.b16 %v3002
        %v3166 = vunpack.c.h.b16 %v3002
        %v3167 = vunpack.c.l.b16 %v3003
        %v3168 = vunpack.c.h.b16 %v3003
        %v3169 = vunpack.c.l.b16 %v3004
        %v3170 = vunpack.c.h.b16 %v3004
        %v3171 = vunpack.c.l.b16 %v3005
        %v3172 = vunpack.c.h.b16 %v3005
        %v3173 = vunpack.c.l.b16 %v3006
        %v3174 = vunpack.c.h.b16 %v3006
        %v3175 = vunpack.c.l.b16 %v3007
        %v3176 = vunpack.c.h.b16 %v3007
        %v3177 = vunpack.c.l.b16 %v3008
        %v3178 = vunpack.c.h.b16 %v3008
        %v3179 = vunpack.c.l.b16 %v3009
        %v3180 = vunpack.c.h.b16 %v3009
        %v3181 = vunpack.c.l.b16 %v3010
        %v3182 = vunpack.c.h.b16 %v3010
        %v3183 = vunpack.c.l.b16 %v3011
        %v3184 = vunpack.c.h.b16 %v3011
        %v3185 = vunpack.c.l.b16 %v3012
        %v3186 = vunpack.c.h.b16 %v3012
        %v3187 = vunpack.c.l.b16 %v3013
        %v3188 = vunpack.c.h.b16 %v3013
        %v3189 = vunpack.c.l.b16 %v3014
        %v3190 = vunpack.c.h.b16 %v3014
        %v3191 = vunpack.c.l.b16 %v3015
        %v3192 = vunpack.c.h.b16 %v3015
        %v3193 = vunpack.c.l.b16 %v3016
        %v3194 = vunpack.c.h.b16 %v3016
        %v3195 = vunpack.c.l.b16 %v3017
        %v3196 = vunpack.c.h.b16 %v3017
        %v3197 = vunpack.c.l.b16 %v3018
        %v3198 = vunpack.c.h.b16 %v3018
        %v3199 = vunpack.c.l.b16 %v3019
        %v3200 = vunpack.c.h.b16 %v3019
        %v3201 = vunpack.c.l.b16 %v3020
        %v3202 = vunpack.c.h.b16 %v3020
        %v3203 = vunpack.c.l.b16 %v3021
        %v3204 = vunpack.c.h.b16 %v3021
        %v3205 = vunpack.c.l.b16 %v3022
        %v3206 = vunpack.c.h.b16 %v3022
        %v3207 = vunpack.c.l.b16 %v3023
        %v3208 = vunpack.c.h.b16 %v3023
        %v3209 = vunpack.c.l.b16 %v3024
        %v3210 = vunpack.c.h.b16 %v3024
        %v3211 = vunpack.c.l.b16 %v3025
        %v3212 = vunpack.c.h.b16 %v3025
        %v3213 = vunpack.c.l.b16 %v3026
        %v3214 = vunpack.c.h.b16 %v3026
        %v3215 = vunpack.c.l.b16 %v3027
        %v3216 = vunpack.c.h.b16 %v3027
        %v3217 = vunpack.c.l.b16 %v3028
        %v3218 = vunpack.c.h.b16 %v3028
        %v3219 = vunpack.c.l.b16 %v3029
        %v3220 = vunpack.c.h.b16 %v3029
        %v3221 = vunpack.c.l.b16 %v3030
        %v3222 = vunpack.c.h.b16 %v3030
        %v3223 = vpack.c.b16 %v3097, %v3095
        %v3224 = vpack.c.b16 %v3098, %v3096
        %v3225 = vpack.c.b16 %v3101, %v3099
        %v3226 = vpack.c.b16 %v3102, %v3100
        %v3227 = vpack.c.b16 %v3105, %v3103
        %v3228 = vpack.c.b16 %v3106, %v3104
        %v3229 = vpack.c.b16 %v3109, %v3107
        %v3230 = vpack.c.b16 %v3110, %v3108
        %v3231 = vpack.c.b16 %v3113, %v3111
        %v3232 = vpack.c.b16 %v3114, %v3112
        %v3233 = vpack.c.b16 %v3117, %v3115
        %v3234 = vpack.c.b16 %v3118, %v3116
        %v3235 = vpack.c.b16 %v3121, %v3119
        %v3236 = vpack.c.b16 %v3122, %v3120
        %v3237 = vpack.c.b16 %v3125, %v3123
        %v3238 = vpack.c.b16 %v3126, %v3124
        %v3239 = vpack.c.b16 %v3129, %v3127
        %v3240 = vpack.c.b16 %v3130, %v3128
        %v3241 = vpack.c.b16 %v3133, %v3131
        %v3242 = vpack.c.b16 %v3134, %v3132
        %v3243 = vpack.c.b16 %v3137, %v3135
        %v3244 = vpack.c.b16 %v3138, %v3136
        %v3245 = vpack.c.b16 %v3141, %v3139
        %v3246 = vpack.c.b16 %v3142, %v3140
        %v3247 = vpack.c.b16 %v3145, %v3143
        %v3248 = vpack.c.b16 %v3146, %v3144
        %v3249 = vpack.c.b16 %v3149, %v3147
        %v3250 = vpack.c.b16 %v3150, %v3148
        %v3251 = vpack.c.b16 %v3153, %v3151
        %v3252 = vpack.c.b16 %v3154, %v3152
        %v3253 = vpack.c.b16 %v3157, %v3155
        %v3254 = vpack.c.b16 %v3158, %v3156
        %v3255 = vpack.c.b16 %v3161, %v3159
        %v3256 = vpack.c.b16 %v3162, %v3160
        %v3257 = vpack.c.b16 %v3165, %v3163
        %v3258 = vpack.c.b16 %v3166, %v3164
        %v3259 = vpack.c.b16 %v3169, %v3167
        %v3260 = vpack.c.b16 %v3170, %v3168
        %v3261 = vpack.c.b16 %v3173, %v3171
        %v3262 = vpack.c.b16 %v3174, %v3172
        %v3263 = vpack.c.b16 %v3177, %v3175
        %v3264 = vpack.c.b16 %v3178, %v3176
        %v3265 = vpack.c.b16 %v3181, %v3179
        %v3266 = vpack.c.b16 %v3182, %v3180
        %v3267 = vpack.c.b16 %v3185, %v3183
        %v3268 = vpack.c.b16 %v3186, %v3184
        %v3269 = vpack.c.b16 %v3189, %v3187
        %v3270 = vpack.c.b16 %v3190, %v3188
        %v3271 = vpack.c.b16 %v3193, %v3191
        %v3272 = vpack.c.b16 %v3194, %v3192
        %v3273 = vpack.c.b16 %v3197, %v3195
        %v3274 = vpack.c.b16 %v3198, %v3196
        %v3275 = vpack.c.b16 %v3201, %v3199
        %v3276 = vpack.c.b16 %v3202, %v3200
        %v3277 = vpack.c.b16 %v3205, %v3203
        %v3278 = vpack.c.b16 %v3206, %v3204
        %v3279 = vpack.c.b16 %v3209, %v3207
        %v3280 = vpack.c.b16 %v3210, %v3208
        %v3281 = vpack.c.b16 %v3213, %v3211
        %v3282 = vpack.c.b16 %v3214, %v3212
        %v3283 = vpack.c.b16 %v3217, %v3215
        %v3284 = vpack.c.b16 %v3218, %v3216
        %v3285 = vpack.c.b16 %v3221, %v3219
        %v3286 = vpack.c.b16 %v3222, %v3220
        %3351 = vmatprep.subr.bf16.mxu0 %v1044
        %3352 = vmatpush1.bf16.msra.mxu0 %v1043
        %3353 = vmatprep.subr.bf16.mxu0 %v1052
        %3354 = vmatpush1.bf16.msra.mxu0 %v1051
        %3355 = vmatprep.subr.bf16.mxu0 %v1060
        %3356 = vmatpush1.bf16.msra.mxu0 %v1059
        %3357 = vmatprep.subr.bf16.mxu0 %v1068
        %3358 = vmatpush1.bf16.msra.mxu0 %v1067
        %3359 = vmatprep.subr.bf16.mxu0 %v1076
        %3360 = vmatpush1.bf16.msra.mxu0 %v1075
        %3361 = vmatprep.subr.bf16.mxu0 %v1084
        %3362 = vmatpush1.bf16.msra.mxu0 %v1083
        %3363 = vmatprep.subr.bf16.mxu0 %v1092
        %3364 = vmatpush1.bf16.msra.mxu0 %v1091
        %3365 = vmatprep.subr.bf16.mxu0 %v1100
        %3366 = vmatpush1.bf16.msra.mxu0 %v1099
        %3367 = vmatprep.subr.bf16.mxu0 %v1108
        %3368 = vmatpush1.bf16.msra.mxu0 %v1107
        %3369 = vmatprep.subr.bf16.mxu0 %v1116
        %3370 = vmatpush1.bf16.msra.mxu0 %v1115
        %3371 = vmatprep.subr.bf16.mxu0 %v1124
        %3372 = vmatpush1.bf16.msra.mxu0 %v1123
        %3373 = vmatprep.subr.bf16.mxu0 %v1132
        %3374 = vmatpush1.bf16.msra.mxu0 %v1131
        %3375 = vmatprep.subr.bf16.mxu0 %v1140
        %3376 = vmatpush1.bf16.msra.mxu0 %v1139
        %3377 = vmatprep.subr.bf16.mxu0 %v1148
        %3378 = vmatpush1.bf16.msra.mxu0 %v1147
        %3379 = vmatprep.subr.bf16.mxu0 %v1156
        %3380 = vmatpush1.bf16.msra.mxu0 %v1155
        %3381 = vmatprep.subr.bf16.mxu0 %v1164
        %3382 = vmatpush1.bf16.msra.mxu0 %v1163
        %3383 = vmatprep.mubr.bf16.mxu0 %v3224
        %3384 = vmatmul.mubr.bf16.gmra.mrb[0].mxu0 %v3223
        %v3385 = vpop.f32.mrb[0].mxu0
        %v3386 = vadd.f32 0.0, %v3385
        %v3387 = vpop.f32.mrb[0].mxu0
        %v3388 = vadd.f32 0.0, %v3387
        %v3389 = vpop.f32.mrb[0].mxu0
        %v3390 = vadd.f32 0.0, %v3389
        %v3391 = vpop.f32.mrb[0].mxu0
        %v3392 = vadd.f32 0.0, %v3391
        %3393 = vmatprep.mubr.bf16.mxu0 %v3226
        %3394 = vmatmul.mubr.bf16.gmra.mrb[0].mxu0 %v3225
        %v3395 = vpop.f32.mrb[0].mxu0
        %v3396 = vadd.f32 0.0, %v3395
        %v3397 = vpop.f32.mrb[0].mxu0
        %v3398 = vadd.f32 0.0, %v3397
        %v3399 = vpop.f32.mrb[0].mxu0
        %v3400 = vadd.f32 0.0, %v3399
        %v3401 = vpop.f32.mrb[0].mxu0
        %v3402 = vadd.f32 0.0, %v3401
        %3403 = vmatprep.mubr.bf16.mxu0 %v3228
        %3404 = vmatmul.mubr.bf16.gmra.mrb[0].mxu0 %v3227
        %v3405 = vpop.f32.mrb[0].mxu0
        %v3406 = vadd.f32 0.0, %v3405
        %v3407 = vpop.f32.mrb[0].mxu0
        %v3408 = vadd.f32 0.0, %v3407
        %v3409 = vpop.f32.mrb[0].mxu0
        %v3410 = vadd.f32 0.0, %v3409
        %v3411 = vpop.f32.mrb[0].mxu0
        %v3412 = vadd.f32 0.0, %v3411
        %3413 = vmatprep.mubr.bf16.mxu0 %v3230
        %3414 = vmatmul.mubr.bf16.gmra.mrb[0].mxu0 %v3229
        %v3415 = vpop.f32.mrb[0].mxu0
        %v3416 = vadd.f32 0.0, %v3415
        %v3417 = vpop.f32.mrb[0].mxu0
        %v3418 = vadd.f32 0.0, %v3417
        %v3419 = vpop.f32.mrb[0].mxu0
        %v3420 = vadd.f32 0.0, %v3419
        %v3421 = vpop.f32.mrb[0].mxu0
        %v3422 = vadd.f32 0.0, %v3421
        %3423 = vmatprep.mubr.bf16.mxu0 %v3232
        %3424 = vmatmul.mubr.bf16.gmra.mrb[0].mxu0 %v3231
        %v3425 = vpop.f32.mrb[0].mxu0
        %v3426 = vadd.f32 0.0, %v3425
        %v3427 = vpop.f32.mrb[0].mxu0
        %v3428 = vadd.f32 0.0, %v3427
        %v3429 = vpop.f32.mrb[0].mxu0
        %v3430 = vadd.f32 0.0, %v3429
        %v3431 = vpop.f32.mrb[0].mxu0
        %v3432 = vadd.f32 0.0, %v3431
        %3433 = vmatprep.mubr.bf16.mxu0 %v3234
        %3434 = vmatmul.mubr.bf16.gmra.mrb[0].mxu0 %v3233
        %v3435 = vpop.f32.mrb[0].mxu0
        %v3436 = vadd.f32 0.0, %v3435
        %v3437 = vpop.f32.mrb[0].mxu0
        %v3438 = vadd.f32 0.0, %v3437
        %v3439 = vpop.f32.mrb[0].mxu0
        %v3440 = vadd.f32 0.0, %v3439
        %v3441 = vpop.f32.mrb[0].mxu0
        %v3442 = vadd.f32 0.0, %v3441
        %3443 = vmatprep.mubr.bf16.mxu0 %v3236
        %3444 = vmatmul.mubr.bf16.gmra.mrb[0].mxu0 %v3235
        %v3445 = vpop.f32.mrb[0].mxu0
        %v3446 = vadd.f32 0.0, %v3445
        %v3447 = vpop.f32.mrb[0].mxu0
        %v3448 = vadd.f32 0.0, %v3447
        %v3449 = vpop.f32.mrb[0].mxu0
        %v3450 = vadd.f32 0.0, %v3449
        %v3451 = vpop.f32.mrb[0].mxu0
        %v3452 = vadd.f32 0.0, %v3451
        %3453 = vmatprep.mubr.bf16.mxu0 %v3238
        %3454 = vmatmul.mubr.bf16.gmra.mrb[0].mxu0 %v3237
        %v3455 = vpop.f32.mrb[0].mxu0
        %v3456 = vadd.f32 0.0, %v3455
        %v3457 = vpop.f32.mrb[0].mxu0
        %v3458 = vadd.f32 0.0, %v3457
        %v3459 = vpop.f32.mrb[0].mxu0
        %v3460 = vadd.f32 0.0, %v3459
        %v3461 = vpop.f32.mrb[0].mxu0
        %v3462 = vadd.f32 0.0, %v3461
        %3463 = vmatprep.mubr.bf16.mxu0 %v3240
        %3464 = vmatmul.mubr.bf16.gmra.mrb[0].mxu0 %v3239
        %v3465 = vpop.f32.mrb[0].mxu0
        %v3466 = vadd.f32 0.0, %v3465
        %v3467 = vpop.f32.mrb[0].mxu0
        %v3468 = vadd.f32 0.0, %v3467
        %v3469 = vpop.f32.mrb[0].mxu0
        %v3470 = vadd.f32 0.0, %v3469
        %v3471 = vpop.f32.mrb[0].mxu0
        %v3472 = vadd.f32 0.0, %v3471
        %3473 = vmatprep.mubr.bf16.mxu0 %v3242
        %3474 = vmatmul.mubr.bf16.gmra.mrb[0].mxu0 %v3241
        %v3475 = vpop.f32.mrb[0].mxu0
        %v3476 = vadd.f32 0.0, %v3475
        %v3477 = vpop.f32.mrb[0].mxu0
        %v3478 = vadd.f32 0.0, %v3477
        %v3479 = vpop.f32.mrb[0].mxu0
        %v3480 = vadd.f32 0.0, %v3479
        %v3481 = vpop.f32.mrb[0].mxu0
        %v3482 = vadd.f32 0.0, %v3481
        %3483 = vmatprep.mubr.bf16.mxu0 %v3244
        %3484 = vmatmul.mubr.bf16.gmra.mrb[0].mxu0 %v3243
        %v3485 = vpop.f32.mrb[0].mxu0
        %v3486 = vadd.f32 0.0, %v3485
        %v3487 = vpop.f32.mrb[0].mxu0
        %v3488 = vadd.f32 0.0, %v3487
        %v3489 = vpop.f32.mrb[0].mxu0
        %v3490 = vadd.f32 0.0, %v3489
        %v3491 = vpop.f32.mrb[0].mxu0
        %v3492 = vadd.f32 0.0, %v3491
        %3493 = vmatprep.mubr.bf16.mxu0 %v3246
        %3494 = vmatmul.mubr.bf16.gmra.mrb[0].mxu0 %v3245
        %v3495 = vpop.f32.mrb[0].mxu0
        %v3496 = vadd.f32 0.0, %v3495
        %v3497 = vpop.f32.mrb[0].mxu0
        %v3498 = vadd.f32 0.0, %v3497
        %v3499 = vpop.f32.mrb[0].mxu0
        %v3500 = vadd.f32 0.0, %v3499
        %v3501 = vpop.f32.mrb[0].mxu0
        %v3502 = vadd.f32 0.0, %v3501
        %3503 = vmatprep.mubr.bf16.mxu0 %v3248
        %3504 = vmatmul.mubr.bf16.gmra.mrb[0].mxu0 %v3247
        %v3505 = vpop.f32.mrb[0].mxu0
        %v3506 = vadd.f32 0.0, %v3505
        %v3507 = vpop.f32.mrb[0].mxu0
        %v3508 = vadd.f32 0.0, %v3507
        %v3509 = vpop.f32.mrb[0].mxu0
        %v3510 = vadd.f32 0.0, %v3509
        %v3511 = vpop.f32.mrb[0].mxu0
        %v3512 = vadd.f32 0.0, %v3511
        %3513 = vmatprep.mubr.bf16.mxu0 %v3250
        %3514 = vmatmul.mubr.bf16.gmra.mrb[0].mxu0 %v3249
        %v3515 = vpop.f32.mrb[0].mxu0
        %v3516 = vadd.f32 0.0, %v3515
        %v3517 = vpop.f32.mrb[0].mxu0
        %v3518 = vadd.f32 0.0, %v3517
        %v3519 = vpop.f32.mrb[0].mxu0
        %v3520 = vadd.f32 0.0, %v3519
        %v3521 = vpop.f32.mrb[0].mxu0
        %v3522 = vadd.f32 0.0, %v3521
        %3523 = vmatprep.mubr.bf16.mxu0 %v3252
        %3524 = vmatmul.mubr.bf16.gmra.mrb[0].mxu0 %v3251
        %v3525 = vpop.f32.mrb[0].mxu0
        %v3526 = vadd.f32 0.0, %v3525
        %v3527 = vpop.f32.mrb[0].mxu0
        %v3528 = vadd.f32 0.0, %v3527
        %v3529 = vpop.f32.mrb[0].mxu0
        %v3530 = vadd.f32 0.0, %v3529
        %v3531 = vpop.f32.mrb[0].mxu0
        %v3532 = vadd.f32 0.0, %v3531
        %3533 = vmatprep.mubr.bf16.mxu0 %v3254
        %3534 = vmatmul.mubr.bf16.gmra.mrb[0].mxu0 %v3253
        %v3535 = vpop.f32.mrb[0].mxu0
        %v3536 = vadd.f32 0.0, %v3535
        %v3537 = vpop.f32.mrb[0].mxu0
        %v3538 = vadd.f32 0.0, %v3537
        %v3539 = vpop.f32.mrb[0].mxu0
        %v3540 = vadd.f32 0.0, %v3539
        %v3541 = vpop.f32.mrb[0].mxu0
        %v3542 = vadd.f32 0.0, %v3541
        %3543 = vmatprep.mubr.bf16.mxu0 %v3256
        %3544 = vmatmul.mubr.bf16.gmra.mrb[0].mxu0 %v3255
        %v3545 = vpop.f32.mrb[0].mxu0
        %v3546 = vadd.f32 0.0, %v3545
        %v3547 = vpop.f32.mrb[0].mxu0
        %v3548 = vadd.f32 0.0, %v3547
        %v3549 = vpop.f32.mrb[0].mxu0
        %v3550 = vadd.f32 0.0, %v3549
        %v3551 = vpop.f32.mrb[0].mxu0
        %v3552 = vadd.f32 0.0, %v3551
        %3553 = vmatprep.mubr.bf16.mxu0 %v3258
        %3554 = vmatmul.mubr.bf16.gmra.mrb[0].mxu0 %v3257
        %v3555 = vpop.f32.mrb[0].mxu0
        %v3556 = vadd.f32 0.0, %v3555
        %v3557 = vpop.f32.mrb[0].mxu0
        %v3558 = vadd.f32 0.0, %v3557
        %v3559 = vpop.f32.mrb[0].mxu0
        %v3560 = vadd.f32 0.0, %v3559
        %v3561 = vpop.f32.mrb[0].mxu0
        %v3562 = vadd.f32 0.0, %v3561
        %3563 = vmatprep.mubr.bf16.mxu0 %v3260
        %3564 = vmatmul.mubr.bf16.gmra.mrb[0].mxu0 %v3259
        %v3565 = vpop.f32.mrb[0].mxu0
        %v3566 = vadd.f32 0.0, %v3565
        %v3567 = vpop.f32.mrb[0].mxu0
        %v3568 = vadd.f32 0.0, %v3567
        %v3569 = vpop.f32.mrb[0].mxu0
        %v3570 = vadd.f32 0.0, %v3569
        %v3571 = vpop.f32.mrb[0].mxu0
        %v3572 = vadd.f32 0.0, %v3571
        %3573 = vmatprep.mubr.bf16.mxu0 %v3262
        %3574 = vmatmul.mubr.bf16.gmra.mrb[0].mxu0 %v3261
        %v3575 = vpop.f32.mrb[0].mxu0
        %v3576 = vadd.f32 0.0, %v3575
        %v3577 = vpop.f32.mrb[0].mxu0
        %v3578 = vadd.f32 0.0, %v3577
        %v3579 = vpop.f32.mrb[0].mxu0
        %v3580 = vadd.f32 0.0, %v3579
        %v3581 = vpop.f32.mrb[0].mxu0
        %v3582 = vadd.f32 0.0, %v3581
        %3583 = vmatprep.mubr.bf16.mxu0 %v3264
        %3584 = vmatmul.mubr.bf16.gmra.mrb[0].mxu0 %v3263
        %v3585 = vpop.f32.mrb[0].mxu0
        %v3586 = vadd.f32 0.0, %v3585
        %v3587 = vpop.f32.mrb[0].mxu0
        %v3588 = vadd.f32 0.0, %v3587
        %v3589 = vpop.f32.mrb[0].mxu0
        %v3590 = vadd.f32 0.0, %v3589
        %v3591 = vpop.f32.mrb[0].mxu0
        %v3592 = vadd.f32 0.0, %v3591
        %3593 = vmatprep.mubr.bf16.mxu0 %v3266
        %3594 = vmatmul.mubr.bf16.gmra.mrb[0].mxu0 %v3265
        %v3595 = vpop.f32.mrb[0].mxu0
        %v3596 = vadd.f32 0.0, %v3595
        %v3597 = vpop.f32.mrb[0].mxu0
        %v3598 = vadd.f32 0.0, %v3597
        %v3599 = vpop.f32.mrb[0].mxu0
        %v3600 = vadd.f32 0.0, %v3599
        %v3601 = vpop.f32.mrb[0].mxu0
        %v3602 = vadd.f32 0.0, %v3601
        %3603 = vmatprep.mubr.bf16.mxu0 %v3268
        %3604 = vmatmul.mubr.bf16.gmra.mrb[0].mxu0 %v3267
        %v3605 = vpop.f32.mrb[0].mxu0
        %v3606 = vadd.f32 0.0, %v3605
        %v3607 = vpop.f32.mrb[0].mxu0
        %v3608 = vadd.f32 0.0, %v3607
        %v3609 = vpop.f32.mrb[0].mxu0
        %v3610 = vadd.f32 0.0, %v3609
        %v3611 = vpop.f32.mrb[0].mxu0
        %v3612 = vadd.f32 0.0, %v3611
        %3613 = vmatprep.mubr.bf16.mxu0 %v3270
        %3614 = vmatmul.mubr.bf16.gmra.mrb[0].mxu0 %v3269
        %v3615 = vpop.f32.mrb[0].mxu0
        %v3616 = vadd.f32 0.0, %v3615
        %v3617 = vpop.f32.mrb[0].mxu0
        %v3618 = vadd.f32 0.0, %v3617
        %v3619 = vpop.f32.mrb[0].mxu0
        %v3620 = vadd.f32 0.0, %v3619
        %v3621 = vpop.f32.mrb[0].mxu0
        %v3622 = vadd.f32 0.0, %v3621
        %3623 = vmatprep.mubr.bf16.mxu0 %v3272
        %3624 = vmatmul.mubr.bf16.gmra.mrb[0].mxu0 %v3271
        %v3625 = vpop.f32.mrb[0].mxu0
        %v3626 = vadd.f32 0.0, %v3625
        %v3627 = vpop.f32.mrb[0].mxu0
        %v3628 = vadd.f32 0.0, %v3627
        %v3629 = vpop.f32.mrb[0].mxu0
        %v3630 = vadd.f32 0.0, %v3629
        %v3631 = vpop.f32.mrb[0].mxu0
        %v3632 = vadd.f32 0.0, %v3631
        %3633 = vmatprep.mubr.bf16.mxu0 %v3274
        %3634 = vmatmul.mubr.bf16.gmra.mrb[0].mxu0 %v3273
        %v3635 = vpop.f32.mrb[0].mxu0
        %v3636 = vadd.f32 0.0, %v3635
        %v3637 = vpop.f32.mrb[0].mxu0
        %v3638 = vadd.f32 0.0, %v3637
        %v3639 = vpop.f32.mrb[0].mxu0
        %v3640 = vadd.f32 0.0, %v3639
        %v3641 = vpop.f32.mrb[0].mxu0
        %v3642 = vadd.f32 0.0, %v3641
        %3643 = vmatprep.mubr.bf16.mxu0 %v3276
        %3644 = vmatmul.mubr.bf16.gmra.mrb[0].mxu0 %v3275
        %v3645 = vpop.f32.mrb[0].mxu0
        %v3646 = vadd.f32 0.0, %v3645
        %v3647 = vpop.f32.mrb[0].mxu0
        %v3648 = vadd.f32 0.0, %v3647
        %v3649 = vpop.f32.mrb[0].mxu0
        %v3650 = vadd.f32 0.0, %v3649
        %v3651 = vpop.f32.mrb[0].mxu0
        %v3652 = vadd.f32 0.0, %v3651
        %3653 = vmatprep.mubr.bf16.mxu0 %v3278
        %3654 = vmatmul.mubr.bf16.gmra.mrb[0].mxu0 %v3277
        %v3655 = vpop.f32.mrb[0].mxu0
        %v3656 = vadd.f32 0.0, %v3655
        %v3657 = vpop.f32.mrb[0].mxu0
        %v3658 = vadd.f32 0.0, %v3657
        %v3659 = vpop.f32.mrb[0].mxu0
        %v3660 = vadd.f32 0.0, %v3659
        %v3661 = vpop.f32.mrb[0].mxu0
        %v3662 = vadd.f32 0.0, %v3661
        %3663 = vmatprep.mubr.bf16.mxu0 %v3280
        %3664 = vmatmul.mubr.bf16.gmra.mrb[0].mxu0 %v3279
        %v3665 = vpop.f32.mrb[0].mxu0
        %v3666 = vadd.f32 0.0, %v3665
        %v3667 = vpop.f32.mrb[0].mxu0
        %v3668 = vadd.f32 0.0, %v3667
        %v3669 = vpop.f32.mrb[0].mxu0
        %v3670 = vadd.f32 0.0, %v3669
        %v3671 = vpop.f32.mrb[0].mxu0
        %v3672 = vadd.f32 0.0, %v3671
        %3673 = vmatprep.mubr.bf16.mxu0 %v3282
        %3674 = vmatmul.mubr.bf16.gmra.mrb[0].mxu0 %v3281
        %v3675 = vpop.f32.mrb[0].mxu0
        %v3676 = vadd.f32 0.0, %v3675
        %v3677 = vpop.f32.mrb[0].mxu0
        %v3678 = vadd.f32 0.0, %v3677
        %v3679 = vpop.f32.mrb[0].mxu0
        %v3680 = vadd.f32 0.0, %v3679
        %v3681 = vpop.f32.mrb[0].mxu0
        %v3682 = vadd.f32 0.0, %v3681
        %3683 = vmatprep.mubr.bf16.mxu0 %v3284
        %3684 = vmatmul.mubr.bf16.gmra.mrb[0].mxu0 %v3283
        %v3685 = vpop.f32.mrb[0].mxu0
        %v3686 = vadd.f32 0.0, %v3685
        %v3687 = vpop.f32.mrb[0].mxu0
        %v3688 = vadd.f32 0.0, %v3687
        %v3689 = vpop.f32.mrb[0].mxu0
        %v3690 = vadd.f32 0.0, %v3689
        %v3691 = vpop.f32.mrb[0].mxu0
        %v3692 = vadd.f32 0.0, %v3691
        %3693 = vmatprep.mubr.bf16.mxu0 %v3286
        %3694 = vmatmul.mubr.bf16.gmra.mrb[0].mxu0 %v3285
        %v3695 = vpop.f32.mrb[0].mxu0
        %v3696 = vadd.f32 0.0, %v3695
        %v3697 = vpop.f32.mrb[0].mxu0
        %v3698 = vadd.f32 0.0, %v3697
        %v3699 = vpop.f32.mrb[0].mxu0
        %v3700 = vadd.f32 0.0, %v3699
        %v3701 = vpop.f32.mrb[0].mxu0
        %v3702 = vadd.f32 0.0, %v3701
        %3703 = vdwg.mxu0
        %3704 = vmatprep.subr.bf16.mxu0 %v1046
        %3705 = vmatpush1.bf16.msra.mxu0 %v1045
        %3706 = vmatprep.subr.bf16.mxu0 %v1054
        %3707 = vmatpush1.bf16.msra.mxu0 %v1053
        %3708 = vmatprep.subr.bf16.mxu0 %v1062
        %3709 = vmatpush1.bf16.msra.mxu0 %v1061
        %3710 = vmatprep.subr.bf16.mxu0 %v1070
        %3711 = vmatpush1.bf16.msra.mxu0 %v1069
        %3712 = vmatprep.subr.bf16.mxu0 %v1078
        %3713 = vmatpush1.bf16.msra.mxu0 %v1077
        %3714 = vmatprep.subr.bf16.mxu0 %v1086
        %3715 = vmatpush1.bf16.msra.mxu0 %v1085
        %3716 = vmatprep.subr.bf16.mxu0 %v1094
        %3717 = vmatpush1.bf16.msra.mxu0 %v1093
        %3718 = vmatprep.subr.bf16.mxu0 %v1102
        %3719 = vmatpush1.bf16.msra.mxu0 %v1101
        %3720 = vmatprep.subr.bf16.mxu0 %v1110
        %3721 = vmatpush1.bf16.msra.mxu0 %v1109
        %3722 = vmatprep.subr.bf16.mxu0 %v1118
        %3723 = vmatpush1.bf16.msra.mxu0 %v1117
        %3724 = vmatprep.subr.bf16.mxu0 %v1126
        %3725 = vmatpush1.bf16.msra.mxu0 %v1125
        %3726 = vmatprep.subr.bf16.mxu0 %v1134
        %3727 = vmatpush1.bf16.msra.mxu0 %v1133
        %3728 = vmatprep.subr.bf16.mxu0 %v1142
        %3729 = vmatpush1.bf16.msra.mxu0 %v1141
        %3730 = vmatprep.subr.bf16.mxu0 %v1150
        %3731 = vmatpush1.bf16.msra.mxu0 %v1149
        %3732 = vmatprep.subr.bf16.mxu0 %v1158
        %3733 = vmatpush1.bf16.msra.mxu0 %v1157
        %3734 = vmatprep.subr.bf16.mxu0 %v1166
        %3735 = vmatpush1.bf16.msra.mxu0 %v1165
        %3736 = vmatprep.mubr.bf16.mxu0 %v3224
        %3737 = vmatmul.mubr.bf16.gmra.mrb[0].mxu0 %v3223
        %v3738 = vpop.f32.mrb[0].mxu0
        %v3739 = vadd.f32 0.0, %v3738
        %v3740 = vpop.f32.mrb[0].mxu0
        %v3741 = vadd.f32 0.0, %v3740
        %v3742 = vpop.f32.mrb[0].mxu0
        %v3743 = vadd.f32 0.0, %v3742
        %v3744 = vpop.f32.mrb[0].mxu0
        %v3745 = vadd.f32 0.0, %v3744
        %3746 = vmatprep.mubr.bf16.mxu0 %v3226
        %3747 = vmatmul.mubr.bf16.gmra.mrb[0].mxu0 %v3225
        %v3748 = vpop.f32.mrb[0].mxu0
        %v3749 = vadd.f32 0.0, %v3748
        %v3750 = vpop.f32.mrb[0].mxu0
        %v3751 = vadd.f32 0.0, %v3750
        %v3752 = vpop.f32.mrb[0].mxu0
        %v3753 = vadd.f32 0.0, %v3752
        %v3754 = vpop.f32.mrb[0].mxu0
        %v3755 = vadd.f32 0.0, %v3754
        %3756 = vmatprep.mubr.bf16.mxu0 %v3228
        %3757 = vmatmul.mubr.bf16.gmra.mrb[0].mxu0 %v3227
        %v3758 = vpop.f32.mrb[0].mxu0
        %v3759 = vadd.f32 0.0, %v3758
        %v3760 = vpop.f32.mrb[0].mxu0
        %v3761 = vadd.f32 0.0, %v3760
        %v3762 = vpop.f32.mrb[0].mxu0
        %v3763 = vadd.f32 0.0, %v3762
        %v3764 = vpop.f32.mrb[0].mxu0
        %v3765 = vadd.f32 0.0, %v3764
        %3766 = vmatprep.mubr.bf16.mxu0 %v3230
        %3767 = vmatmul.mubr.bf16.gmra.mrb[0].mxu0 %v3229
        %v3768 = vpop.f32.mrb[0].mxu0
        %v3769 = vadd.f32 0.0, %v3768
        %v3770 = vpop.f32.mrb[0].mxu0
        %v3771 = vadd.f32 0.0, %v3770
        %v3772 = vpop.f32.mrb[0].mxu0
        %v3773 = vadd.f32 0.0, %v3772
        %v3774 = vpop.f32.mrb[0].mxu0
        %v3775 = vadd.f32 0.0, %v3774
        %3776 = vmatprep.mubr.bf16.mxu0 %v3232
        %3777 = vmatmul.mubr.bf16.gmra.mrb[0].mxu0 %v3231
        %v3778 = vpop.f32.mrb[0].mxu0
        %v3779 = vadd.f32 0.0, %v3778
        %v3780 = vpop.f32.mrb[0].mxu0
        %v3781 = vadd.f32 0.0, %v3780
        %v3782 = vpop.f32.mrb[0].mxu0
        %v3783 = vadd.f32 0.0, %v3782
        %v3784 = vpop.f32.mrb[0].mxu0
        %v3785 = vadd.f32 0.0, %v3784
        %3786 = vmatprep.mubr.bf16.mxu0 %v3234
        %3787 = vmatmul.mubr.bf16.gmra.mrb[0].mxu0 %v3233
        %v3788 = vpop.f32.mrb[0].mxu0
        %v3789 = vadd.f32 0.0, %v3788
        %v3790 = vpop.f32.mrb[0].mxu0
        %v3791 = vadd.f32 0.0, %v3790
        %v3792 = vpop.f32.mrb[0].mxu0
        %v3793 = vadd.f32 0.0, %v3792
        %v3794 = vpop.f32.mrb[0].mxu0
        %v3795 = vadd.f32 0.0, %v3794
        %3796 = vmatprep.mubr.bf16.mxu0 %v3236
        %3797 = vmatmul.mubr.bf16.gmra.mrb[0].mxu0 %v3235
        %v3798 = vpop.f32.mrb[0].mxu0
        %v3799 = vadd.f32 0.0, %v3798
        %v3800 = vpop.f32.mrb[0].mxu0
        %v3801 = vadd.f32 0.0, %v3800
        %v3802 = vpop.f32.mrb[0].mxu0
        %v3803 = vadd.f32 0.0, %v3802
        %v3804 = vpop.f32.mrb[0].mxu0
        %v3805 = vadd.f32 0.0, %v3804
        %3806 = vmatprep.mubr.bf16.mxu0 %v3238
        %3807 = vmatmul.mubr.bf16.gmra.mrb[0].mxu0 %v3237
        %v3808 = vpop.f32.mrb[0].mxu0
        %v3809 = vadd.f32 0.0, %v3808
        %v3810 = vpop.f32.mrb[0].mxu0
        %v3811 = vadd.f32 0.0, %v3810
        %v3812 = vpop.f32.mrb[0].mxu0
        %v3813 = vadd.f32 0.0, %v3812
        %v3814 = vpop.f32.mrb[0].mxu0
        %v3815 = vadd.f32 0.0, %v3814
        %3816 = vmatprep.mubr.bf16.mxu0 %v3240
        %3817 = vmatmul.mubr.bf16.gmra.mrb[0].mxu0 %v3239
        %v3818 = vpop.f32.mrb[0].mxu0
        %v3819 = vadd.f32 0.0, %v3818
        %v3820 = vpop.f32.mrb[0].mxu0
        %v3821 = vadd.f32 0.0, %v3820
        %v3822 = vpop.f32.mrb[0].mxu0
        %v3823 = vadd.f32 0.0, %v3822
        %v3824 = vpop.f32.mrb[0].mxu0
        %v3825 = vadd.f32 0.0, %v3824
        %3826 = vmatprep.mubr.bf16.mxu0 %v3242
        %3827 = vmatmul.mubr.bf16.gmra.mrb[0].mxu0 %v3241
        %v3828 = vpop.f32.mrb[0].mxu0
        %v3829 = vadd.f32 0.0, %v3828
        %v3830 = vpop.f32.mrb[0].mxu0
        %v3831 = vadd.f32 0.0, %v3830
        %v3832 = vpop.f32.mrb[0].mxu0
        %v3833 = vadd.f32 0.0, %v3832
        %v3834 = vpop.f32.mrb[0].mxu0
        %v3835 = vadd.f32 0.0, %v3834
        %3836 = vmatprep.mubr.bf16.mxu0 %v3244
        %3837 = vmatmul.mubr.bf16.gmra.mrb[0].mxu0 %v3243
        %v3838 = vpop.f32.mrb[0].mxu0
        %v3839 = vadd.f32 0.0, %v3838
        %v3840 = vpop.f32.mrb[0].mxu0
        %v3841 = vadd.f32 0.0, %v3840
        %v3842 = vpop.f32.mrb[0].mxu0
        %v3843 = vadd.f32 0.0, %v3842
        %v3844 = vpop.f32.mrb[0].mxu0
        %v3845 = vadd.f32 0.0, %v3844
        %3846 = vmatprep.mubr.bf16.mxu0 %v3246
        %3847 = vmatmul.mubr.bf16.gmra.mrb[0].mxu0 %v3245
        %v3848 = vpop.f32.mrb[0].mxu0
        %v3849 = vadd.f32 0.0, %v3848
        %v3850 = vpop.f32.mrb[0].mxu0
        %v3851 = vadd.f32 0.0, %v3850
        %v3852 = vpop.f32.mrb[0].mxu0
        %v3853 = vadd.f32 0.0, %v3852
        %v3854 = vpop.f32.mrb[0].mxu0
        %v3855 = vadd.f32 0.0, %v3854
        %3856 = vmatprep.mubr.bf16.mxu0 %v3248
        %3857 = vmatmul.mubr.bf16.gmra.mrb[0].mxu0 %v3247
        %v3858 = vpop.f32.mrb[0].mxu0
        %v3859 = vadd.f32 0.0, %v3858
        %v3860 = vpop.f32.mrb[0].mxu0
        %v3861 = vadd.f32 0.0, %v3860
        %v3862 = vpop.f32.mrb[0].mxu0
        %v3863 = vadd.f32 0.0, %v3862
        %v3864 = vpop.f32.mrb[0].mxu0
        %v3865 = vadd.f32 0.0, %v3864
        %3866 = vmatprep.mubr.bf16.mxu0 %v3250
        %3867 = vmatmul.mubr.bf16.gmra.mrb[0].mxu0 %v3249
        %v3868 = vpop.f32.mrb[0].mxu0
        %v3869 = vadd.f32 0.0, %v3868
        %v3870 = vpop.f32.mrb[0].mxu0
        %v3871 = vadd.f32 0.0, %v3870
        %v3872 = vpop.f32.mrb[0].mxu0
        %v3873 = vadd.f32 0.0, %v3872
        %v3874 = vpop.f32.mrb[0].mxu0
        %v3875 = vadd.f32 0.0, %v3874
        %3876 = vmatprep.mubr.bf16.mxu0 %v3252
        %3877 = vmatmul.mubr.bf16.gmra.mrb[0].mxu0 %v3251
        %v3878 = vpop.f32.mrb[0].mxu0
        %v3879 = vadd.f32 0.0, %v3878
        %v3880 = vpop.f32.mrb[0].mxu0
        %v3881 = vadd.f32 0.0, %v3880
        %v3882 = vpop.f32.mrb[0].mxu0
        %v3883 = vadd.f32 0.0, %v3882
        %v3884 = vpop.f32.mrb[0].mxu0
        %v3885 = vadd.f32 0.0, %v3884
        %3886 = vmatprep.mubr.bf16.mxu0 %v3254
        %3887 = vmatmul.mubr.bf16.gmra.mrb[0].mxu0 %v3253
        %v3888 = vpop.f32.mrb[0].mxu0
        %v3889 = vadd.f32 0.0, %v3888
        %v3890 = vpop.f32.mrb[0].mxu0
        %v3891 = vadd.f32 0.0, %v3890
        %v3892 = vpop.f32.mrb[0].mxu0
        %v3893 = vadd.f32 0.0, %v3892
        %v3894 = vpop.f32.mrb[0].mxu0
        %v3895 = vadd.f32 0.0, %v3894
        %3896 = vmatprep.mubr.bf16.mxu0 %v3256
        %3897 = vmatmul.mubr.bf16.gmra.mrb[0].mxu0 %v3255
        %v3898 = vpop.f32.mrb[0].mxu0
        %v3899 = vadd.f32 0.0, %v3898
        %v3900 = vpop.f32.mrb[0].mxu0
        %v3901 = vadd.f32 0.0, %v3900
        %v3902 = vpop.f32.mrb[0].mxu0
        %v3903 = vadd.f32 0.0, %v3902
        %v3904 = vpop.f32.mrb[0].mxu0
        %v3905 = vadd.f32 0.0, %v3904
        %3906 = vmatprep.mubr.bf16.mxu0 %v3258
        %3907 = vmatmul.mubr.bf16.gmra.mrb[0].mxu0 %v3257
        %v3908 = vpop.f32.mrb[0].mxu0
        %v3909 = vadd.f32 0.0, %v3908
        %v3910 = vpop.f32.mrb[0].mxu0
        %v3911 = vadd.f32 0.0, %v3910
        %v3912 = vpop.f32.mrb[0].mxu0
        %v3913 = vadd.f32 0.0, %v3912
        %v3914 = vpop.f32.mrb[0].mxu0
        %v3915 = vadd.f32 0.0, %v3914
        %3916 = vmatprep.mubr.bf16.mxu0 %v3260
        %3917 = vmatmul.mubr.bf16.gmra.mrb[0].mxu0 %v3259
        %v3918 = vpop.f32.mrb[0].mxu0
        %v3919 = vadd.f32 0.0, %v3918
        %v3920 = vpop.f32.mrb[0].mxu0
        %v3921 = vadd.f32 0.0, %v3920
        %v3922 = vpop.f32.mrb[0].mxu0
        %v3923 = vadd.f32 0.0, %v3922
        %v3924 = vpop.f32.mrb[0].mxu0
        %v3925 = vadd.f32 0.0, %v3924
        %3926 = vmatprep.mubr.bf16.mxu0 %v3262
        %3927 = vmatmul.mubr.bf16.gmra.mrb[0].mxu0 %v3261
        %v3928 = vpop.f32.mrb[0].mxu0
        %v3929 = vadd.f32 0.0, %v3928
        %v3930 = vpop.f32.mrb[0].mxu0
        %v3931 = vadd.f32 0.0, %v3930
        %v3932 = vpop.f32.mrb[0].mxu0
        %v3933 = vadd.f32 0.0, %v3932
        %v3934 = vpop.f32.mrb[0].mxu0
        %v3935 = vadd.f32 0.0, %v3934
        %3936 = vmatprep.mubr.bf16.mxu0 %v3264
        %3937 = vmatmul.mubr.bf16.gmra.mrb[0].mxu0 %v3263
        %v3938 = vpop.f32.mrb[0].mxu0
        %v3939 = vadd.f32 0.0, %v3938
        %v3940 = vpop.f32.mrb[0].mxu0
        %v3941 = vadd.f32 0.0, %v3940
        %v3942 = vpop.f32.mrb[0].mxu0
        %v3943 = vadd.f32 0.0, %v3942
        %v3944 = vpop.f32.mrb[0].mxu0
        %v3945 = vadd.f32 0.0, %v3944
        %3946 = vmatprep.mubr.bf16.mxu0 %v3266
        %3947 = vmatmul.mubr.bf16.gmra.mrb[0].mxu0 %v3265
        %v3948 = vpop.f32.mrb[0].mxu0
        %v3949 = vadd.f32 0.0, %v3948
        %v3950 = vpop.f32.mrb[0].mxu0
        %v3951 = vadd.f32 0.0, %v3950
        %v3952 = vpop.f32.mrb[0].mxu0
        %v3953 = vadd.f32 0.0, %v3952
        %v3954 = vpop.f32.mrb[0].mxu0
        %v3955 = vadd.f32 0.0, %v3954
        %3956 = vmatprep.mubr.bf16.mxu0 %v3268
        %3957 = vmatmul.mubr.bf16.gmra.mrb[0].mxu0 %v3267
        %v3958 = vpop.f32.mrb[0].mxu0
        %v3959 = vadd.f32 0.0, %v3958
        %v3960 = vpop.f32.mrb[0].mxu0
        %v3961 = vadd.f32 0.0, %v3960
        %v3962 = vpop.f32.mrb[0].mxu0
        %v3963 = vadd.f32 0.0, %v3962
        %v3964 = vpop.f32.mrb[0].mxu0
        %v3965 = vadd.f32 0.0, %v3964
        %3966 = vmatprep.mubr.bf16.mxu0 %v3270
        %3967 = vmatmul.mubr.bf16.gmra.mrb[0].mxu0 %v3269
        %v3968 = vpop.f32.mrb[0].mxu0
        %v3969 = vadd.f32 0.0, %v3968
        %v3970 = vpop.f32.mrb[0].mxu0
        %v3971 = vadd.f32 0.0, %v3970
        %v3972 = vpop.f32.mrb[0].mxu0
        %v3973 = vadd.f32 0.0, %v3972
        %v3974 = vpop.f32.mrb[0].mxu0
        %v3975 = vadd.f32 0.0, %v3974
        %3976 = vmatprep.mubr.bf16.mxu0 %v3272
        %3977 = vmatmul.mubr.bf16.gmra.mrb[0].mxu0 %v3271
        %v3978 = vpop.f32.mrb[0].mxu0
        %v3979 = vadd.f32 0.0, %v3978
        %v3980 = vpop.f32.mrb[0].mxu0
        %v3981 = vadd.f32 0.0, %v3980
        %v3982 = vpop.f32.mrb[0].mxu0
        %v3983 = vadd.f32 0.0, %v3982
        %v3984 = vpop.f32.mrb[0].mxu0
        %v3985 = vadd.f32 0.0, %v3984
        %3986 = vmatprep.mubr.bf16.mxu0 %v3274
        %3987 = vmatmul.mubr.bf16.gmra.mrb[0].mxu0 %v3273
        %v3988 = vpop.f32.mrb[0].mxu0
        %v3989 = vadd.f32 0.0, %v3988
        %v3990 = vpop.f32.mrb[0].mxu0
        %v3991 = vadd.f32 0.0, %v3990
        %v3992 = vpop.f32.mrb[0].mxu0
        %v3993 = vadd.f32 0.0, %v3992
        %v3994 = vpop.f32.mrb[0].mxu0
        %v3995 = vadd.f32 0.0, %v3994
        %3996 = vmatprep.mubr.bf16.mxu0 %v3276
        %3997 = vmatmul.mubr.bf16.gmra.mrb[0].mxu0 %v3275
        %v3998 = vpop.f32.mrb[0].mxu0
        %v3999 = vadd.f32 0.0, %v3998
        %v4000 = vpop.f32.mrb[0].mxu0
        %v4001 = vadd.f32 0.0, %v4000
        %v4002 = vpop.f32.mrb[0].mxu0
        %v4003 = vadd.f32 0.0, %v4002
        %v4004 = vpop.f32.mrb[0].mxu0
        %v4005 = vadd.f32 0.0, %v4004
        %4006 = vmatprep.mubr.bf16.mxu0 %v3278
        %4007 = vmatmul.mubr.bf16.gmra.mrb[0].mxu0 %v3277
        %v4008 = vpop.f32.mrb[0].mxu0
        %v4009 = vadd.f32 0.0, %v4008
        %v4010 = vpop.f32.mrb[0].mxu0
        %v4011 = vadd.f32 0.0, %v4010
        %v4012 = vpop.f32.mrb[0].mxu0
        %v4013 = vadd.f32 0.0, %v4012
        %v4014 = vpop.f32.mrb[0].mxu0
        %v4015 = vadd.f32 0.0, %v4014
        %4016 = vmatprep.mubr.bf16.mxu0 %v3280
        %4017 = vmatmul.mubr.bf16.gmra.mrb[0].mxu0 %v3279
        %v4018 = vpop.f32.mrb[0].mxu0
        %v4019 = vadd.f32 0.0, %v4018
        %v4020 = vpop.f32.mrb[0].mxu0
        %v4021 = vadd.f32 0.0, %v4020
        %v4022 = vpop.f32.mrb[0].mxu0
        %v4023 = vadd.f32 0.0, %v4022
        %v4024 = vpop.f32.mrb[0].mxu0
        %v4025 = vadd.f32 0.0, %v4024
        %4026 = vmatprep.mubr.bf16.mxu0 %v3282
        %4027 = vmatmul.mubr.bf16.gmra.mrb[0].mxu0 %v3281
        %v4028 = vpop.f32.mrb[0].mxu0
        %v4029 = vadd.f32 0.0, %v4028
        %v4030 = vpop.f32.mrb[0].mxu0
        %v4031 = vadd.f32 0.0, %v4030
        %v4032 = vpop.f32.mrb[0].mxu0
        %v4033 = vadd.f32 0.0, %v4032
        %v4034 = vpop.f32.mrb[0].mxu0
        %v4035 = vadd.f32 0.0, %v4034
        %4036 = vmatprep.mubr.bf16.mxu0 %v3284
        %4037 = vmatmul.mubr.bf16.gmra.mrb[0].mxu0 %v3283
        %v4038 = vpop.f32.mrb[0].mxu0
        %v4039 = vadd.f32 0.0, %v4038
        %v4040 = vpop.f32.mrb[0].mxu0
        %v4041 = vadd.f32 0.0, %v4040
        %v4042 = vpop.f32.mrb[0].mxu0
        %v4043 = vadd.f32 0.0, %v4042
        %v4044 = vpop.f32.mrb[0].mxu0
        %v4045 = vadd.f32 0.0, %v4044
        %4046 = vmatprep.mubr.bf16.mxu0 %v3286
        %4047 = vmatmul.mubr.bf16.gmra.mrb[0].mxu0 %v3285
        %v4048 = vpop.f32.mrb[0].mxu0
        %v4049 = vadd.f32 0.0, %v4048
        %v4050 = vpop.f32.mrb[0].mxu0
        %v4051 = vadd.f32 0.0, %v4050
        %v4052 = vpop.f32.mrb[0].mxu0
        %v4053 = vadd.f32 0.0, %v4052
        %v4054 = vpop.f32.mrb[0].mxu0
        %v4055 = vadd.f32 0.0, %v4054
        %4056 = vdwg.mxu0
        %4057 = vmatprep.subr.bf16.mxu0 %v1048
        %4058 = vmatpush1.bf16.msra.mxu0 %v1047
        %4059 = vmatprep.subr.bf16.mxu0 %v1056
        %4060 = vmatpush1.bf16.msra.mxu0 %v1055
        %4061 = vmatprep.subr.bf16.mxu0 %v1064
        %4062 = vmatpush1.bf16.msra.mxu0 %v1063
        %4063 = vmatprep.subr.bf16.mxu0 %v1072
        %4064 = vmatpush1.bf16.msra.mxu0 %v1071
        %4065 = vmatprep.subr.bf16.mxu0 %v1080
        %4066 = vmatpush1.bf16.msra.mxu0 %v1079
        %4067 = vmatprep.subr.bf16.mxu0 %v1088
        %4068 = vmatpush1.bf16.msra.mxu0 %v1087
        %4069 = vmatprep.subr.bf16.mxu0 %v1096
        %4070 = vmatpush1.bf16.msra.mxu0 %v1095
        %4071 = vmatprep.subr.bf16.mxu0 %v1104
        %4072 = vmatpush1.bf16.msra.mxu0 %v1103
        %4073 = vmatprep.subr.bf16.mxu0 %v1112
        %4074 = vmatpush1.bf16.msra.mxu0 %v1111
        %4075 = vmatprep.subr.bf16.mxu0 %v1120
        %4076 = vmatpush1.bf16.msra.mxu0 %v1119
        %4077 = vmatprep.subr.bf16.mxu0 %v1128
        %4078 = vmatpush1.bf16.msra.mxu0 %v1127
        %4079 = vmatprep.subr.bf16.mxu0 %v1136
        %4080 = vmatpush1.bf16.msra.mxu0 %v1135
        %4081 = vmatprep.subr.bf16.mxu0 %v1144
        %4082 = vmatpush1.bf16.msra.mxu0 %v1143
        %4083 = vmatprep.subr.bf16.mxu0 %v1152
        %4084 = vmatpush1.bf16.msra.mxu0 %v1151
        %4085 = vmatprep.subr.bf16.mxu0 %v1160
        %4086 = vmatpush1.bf16.msra.mxu0 %v1159
        %4087 = vmatprep.subr.bf16.mxu0 %v1168
        %4088 = vmatpush1.bf16.msra.mxu0 %v1167
        %4089 = vmatprep.mubr.bf16.mxu0 %v3224
        %4090 = vmatmul.mubr.bf16.gmra.mrb[0].mxu0 %v3223
        %v4091 = vpop.f32.mrb[0].mxu0
        %v4092 = vadd.f32 0.0, %v4091
        %v4093 = vpop.f32.mrb[0].mxu0
        %v4094 = vadd.f32 0.0, %v4093
        %v4095 = vpop.f32.mrb[0].mxu0
        %v4096 = vadd.f32 0.0, %v4095
        %v4097 = vpop.f32.mrb[0].mxu0
        %v4098 = vadd.f32 0.0, %v4097
        %4099 = vmatprep.mubr.bf16.mxu0 %v3226
        %4100 = vmatmul.mubr.bf16.gmra.mrb[0].mxu0 %v3225
        %v4101 = vpop.f32.mrb[0].mxu0
        %v4102 = vadd.f32 0.0, %v4101
        %v4103 = vpop.f32.mrb[0].mxu0
        %v4104 = vadd.f32 0.0, %v4103
        %v4105 = vpop.f32.mrb[0].mxu0
        %v4106 = vadd.f32 0.0, %v4105
        %v4107 = vpop.f32.mrb[0].mxu0
        %v4108 = vadd.f32 0.0, %v4107
        %4109 = vmatprep.mubr.bf16.mxu0 %v3228
        %4110 = vmatmul.mubr.bf16.gmra.mrb[0].mxu0 %v3227
        %v4111 = vpop.f32.mrb[0].mxu0
        %v4112 = vadd.f32 0.0, %v4111
        %v4113 = vpop.f32.mrb[0].mxu0
        %v4114 = vadd.f32 0.0, %v4113
        %v4115 = vpop.f32.mrb[0].mxu0
        %v4116 = vadd.f32 0.0, %v4115
        %v4117 = vpop.f32.mrb[0].mxu0
        %v4118 = vadd.f32 0.0, %v4117
        %4119 = vmatprep.mubr.bf16.mxu0 %v3230
        %4120 = vmatmul.mubr.bf16.gmra.mrb[0].mxu0 %v3229
        %v4121 = vpop.f32.mrb[0].mxu0
        %v4122 = vadd.f32 0.0, %v4121
        %v4123 = vpop.f32.mrb[0].mxu0
        %v4124 = vadd.f32 0.0, %v4123
        %v4125 = vpop.f32.mrb[0].mxu0
        %v4126 = vadd.f32 0.0, %v4125
        %v4127 = vpop.f32.mrb[0].mxu0
        %v4128 = vadd.f32 0.0, %v4127
        %4129 = vmatprep.mubr.bf16.mxu0 %v3232
        %4130 = vmatmul.mubr.bf16.gmra.mrb[0].mxu0 %v3231
        %v4131 = vpop.f32.mrb[0].mxu0
        %v4132 = vadd.f32 0.0, %v4131
        %v4133 = vpop.f32.mrb[0].mxu0
        %v4134 = vadd.f32 0.0, %v4133
        %v4135 = vpop.f32.mrb[0].mxu0
        %v4136 = vadd.f32 0.0, %v4135
        %v4137 = vpop.f32.mrb[0].mxu0
        %v4138 = vadd.f32 0.0, %v4137
        %4139 = vmatprep.mubr.bf16.mxu0 %v3234
        %4140 = vmatmul.mubr.bf16.gmra.mrb[0].mxu0 %v3233
        %v4141 = vpop.f32.mrb[0].mxu0
        %v4142 = vadd.f32 0.0, %v4141
        %v4143 = vpop.f32.mrb[0].mxu0
        %v4144 = vadd.f32 0.0, %v4143
        %v4145 = vpop.f32.mrb[0].mxu0
        %v4146 = vadd.f32 0.0, %v4145
        %v4147 = vpop.f32.mrb[0].mxu0
        %v4148 = vadd.f32 0.0, %v4147
        %4149 = vmatprep.mubr.bf16.mxu0 %v3236
        %4150 = vmatmul.mubr.bf16.gmra.mrb[0].mxu0 %v3235
        %v4151 = vpop.f32.mrb[0].mxu0
        %v4152 = vadd.f32 0.0, %v4151
        %v4153 = vpop.f32.mrb[0].mxu0
        %v4154 = vadd.f32 0.0, %v4153
        %v4155 = vpop.f32.mrb[0].mxu0
        %v4156 = vadd.f32 0.0, %v4155
        %v4157 = vpop.f32.mrb[0].mxu0
        %v4158 = vadd.f32 0.0, %v4157
        %4159 = vmatprep.mubr.bf16.mxu0 %v3238
        %4160 = vmatmul.mubr.bf16.gmra.mrb[0].mxu0 %v3237
        %v4161 = vpop.f32.mrb[0].mxu0
        %v4162 = vadd.f32 0.0, %v4161
        %v4163 = vpop.f32.mrb[0].mxu0
        %v4164 = vadd.f32 0.0, %v4163
        %v4165 = vpop.f32.mrb[0].mxu0
        %v4166 = vadd.f32 0.0, %v4165
        %v4167 = vpop.f32.mrb[0].mxu0
        %v4168 = vadd.f32 0.0, %v4167
        %4169 = vmatprep.mubr.bf16.mxu0 %v3240
        %4170 = vmatmul.mubr.bf16.gmra.mrb[0].mxu0 %v3239
        %v4171 = vpop.f32.mrb[0].mxu0
        %v4172 = vadd.f32 0.0, %v4171
        %v4173 = vpop.f32.mrb[0].mxu0
        %v4174 = vadd.f32 0.0, %v4173
        %v4175 = vpop.f32.mrb[0].mxu0
        %v4176 = vadd.f32 0.0, %v4175
        %v4177 = vpop.f32.mrb[0].mxu0
        %v4178 = vadd.f32 0.0, %v4177
        %4179 = vmatprep.mubr.bf16.mxu0 %v3242
        %4180 = vmatmul.mubr.bf16.gmra.mrb[0].mxu0 %v3241
        %v4181 = vpop.f32.mrb[0].mxu0
        %v4182 = vadd.f32 0.0, %v4181
        %v4183 = vpop.f32.mrb[0].mxu0
        %v4184 = vadd.f32 0.0, %v4183
        %v4185 = vpop.f32.mrb[0].mxu0
        %v4186 = vadd.f32 0.0, %v4185
        %v4187 = vpop.f32.mrb[0].mxu0
        %v4188 = vadd.f32 0.0, %v4187
        %4189 = vmatprep.mubr.bf16.mxu0 %v3244
        %4190 = vmatmul.mubr.bf16.gmra.mrb[0].mxu0 %v3243
        %v4191 = vpop.f32.mrb[0].mxu0
        %v4192 = vadd.f32 0.0, %v4191
        %v4193 = vpop.f32.mrb[0].mxu0
        %v4194 = vadd.f32 0.0, %v4193
        %v4195 = vpop.f32.mrb[0].mxu0
        %v4196 = vadd.f32 0.0, %v4195
        %v4197 = vpop.f32.mrb[0].mxu0
        %v4198 = vadd.f32 0.0, %v4197
        %4199 = vmatprep.mubr.bf16.mxu0 %v3246
        %4200 = vmatmul.mubr.bf16.gmra.mrb[0].mxu0 %v3245
        %v4201 = vpop.f32.mrb[0].mxu0
        %v4202 = vadd.f32 0.0, %v4201
        %v4203 = vpop.f32.mrb[0].mxu0
        %v4204 = vadd.f32 0.0, %v4203
        %v4205 = vpop.f32.mrb[0].mxu0
        %v4206 = vadd.f32 0.0, %v4205
        %v4207 = vpop.f32.mrb[0].mxu0
        %v4208 = vadd.f32 0.0, %v4207
        %4209 = vmatprep.mubr.bf16.mxu0 %v3248
        %4210 = vmatmul.mubr.bf16.gmra.mrb[0].mxu0 %v3247
        %v4211 = vpop.f32.mrb[0].mxu0
        %v4212 = vadd.f32 0.0, %v4211
        %v4213 = vpop.f32.mrb[0].mxu0
        %v4214 = vadd.f32 0.0, %v4213
        %v4215 = vpop.f32.mrb[0].mxu0
        %v4216 = vadd.f32 0.0, %v4215
        %v4217 = vpop.f32.mrb[0].mxu0
        %v4218 = vadd.f32 0.0, %v4217
        %4219 = vmatprep.mubr.bf16.mxu0 %v3250
        %4220 = vmatmul.mubr.bf16.gmra.mrb[0].mxu0 %v3249
        %v4221 = vpop.f32.mrb[0].mxu0
        %v4222 = vadd.f32 0.0, %v4221
        %v4223 = vpop.f32.mrb[0].mxu0
        %v4224 = vadd.f32 0.0, %v4223
        %v4225 = vpop.f32.mrb[0].mxu0
        %v4226 = vadd.f32 0.0, %v4225
        %v4227 = vpop.f32.mrb[0].mxu0
        %v4228 = vadd.f32 0.0, %v4227
        %4229 = vmatprep.mubr.bf16.mxu0 %v3252
        %4230 = vmatmul.mubr.bf16.gmra.mrb[0].mxu0 %v3251
        %v4231 = vpop.f32.mrb[0].mxu0
        %v4232 = vadd.f32 0.0, %v4231
        %v4233 = vpop.f32.mrb[0].mxu0
        %v4234 = vadd.f32 0.0, %v4233
        %v4235 = vpop.f32.mrb[0].mxu0
        %v4236 = vadd.f32 0.0, %v4235
        %v4237 = vpop.f32.mrb[0].mxu0
        %v4238 = vadd.f32 0.0, %v4237
        %4239 = vmatprep.mubr.bf16.mxu0 %v3254
        %4240 = vmatmul.mubr.bf16.gmra.mrb[0].mxu0 %v3253
        %v4241 = vpop.f32.mrb[0].mxu0
        %v4242 = vadd.f32 0.0, %v4241
        %v4243 = vpop.f32.mrb[0].mxu0
        %v4244 = vadd.f32 0.0, %v4243
        %v4245 = vpop.f32.mrb[0].mxu0
        %v4246 = vadd.f32 0.0, %v4245
        %v4247 = vpop.f32.mrb[0].mxu0
        %v4248 = vadd.f32 0.0, %v4247
        %4249 = vmatprep.mubr.bf16.mxu0 %v3256
        %4250 = vmatmul.mubr.bf16.gmra.mrb[0].mxu0 %v3255
        %v4251 = vpop.f32.mrb[0].mxu0
        %v4252 = vadd.f32 0.0, %v4251
        %v4253 = vpop.f32.mrb[0].mxu0
        %v4254 = vadd.f32 0.0, %v4253
        %v4255 = vpop.f32.mrb[0].mxu0
        %v4256 = vadd.f32 0.0, %v4255
        %v4257 = vpop.f32.mrb[0].mxu0
        %v4258 = vadd.f32 0.0, %v4257
        %4259 = vmatprep.mubr.bf16.mxu0 %v3258
        %4260 = vmatmul.mubr.bf16.gmra.mrb[0].mxu0 %v3257
        %v4261 = vpop.f32.mrb[0].mxu0
        %v4262 = vadd.f32 0.0, %v4261
        %v4263 = vpop.f32.mrb[0].mxu0
        %v4264 = vadd.f32 0.0, %v4263
        %v4265 = vpop.f32.mrb[0].mxu0
        %v4266 = vadd.f32 0.0, %v4265
        %v4267 = vpop.f32.mrb[0].mxu0
        %v4268 = vadd.f32 0.0, %v4267
        %4269 = vmatprep.mubr.bf16.mxu0 %v3260
        %4270 = vmatmul.mubr.bf16.gmra.mrb[0].mxu0 %v3259
        %v4271 = vpop.f32.mrb[0].mxu0
        %v4272 = vadd.f32 0.0, %v4271
        %v4273 = vpop.f32.mrb[0].mxu0
        %v4274 = vadd.f32 0.0, %v4273
        %v4275 = vpop.f32.mrb[0].mxu0
        %v4276 = vadd.f32 0.0, %v4275
        %v4277 = vpop.f32.mrb[0].mxu0
        %v4278 = vadd.f32 0.0, %v4277
        %4279 = vmatprep.mubr.bf16.mxu0 %v3262
        %4280 = vmatmul.mubr.bf16.gmra.mrb[0].mxu0 %v3261
        %v4281 = vpop.f32.mrb[0].mxu0
        %v4282 = vadd.f32 0.0, %v4281
        %v4283 = vpop.f32.mrb[0].mxu0
        %v4284 = vadd.f32 0.0, %v4283
        %v4285 = vpop.f32.mrb[0].mxu0
        %v4286 = vadd.f32 0.0, %v4285
        %v4287 = vpop.f32.mrb[0].mxu0
        %v4288 = vadd.f32 0.0, %v4287
        %4289 = vmatprep.mubr.bf16.mxu0 %v3264
        %4290 = vmatmul.mubr.bf16.gmra.mrb[0].mxu0 %v3263
        %v4291 = vpop.f32.mrb[0].mxu0
        %v4292 = vadd.f32 0.0, %v4291
        %v4293 = vpop.f32.mrb[0].mxu0
        %v4294 = vadd.f32 0.0, %v4293
        %v4295 = vpop.f32.mrb[0].mxu0
        %v4296 = vadd.f32 0.0, %v4295
        %v4297 = vpop.f32.mrb[0].mxu0
        %v4298 = vadd.f32 0.0, %v4297
        %4299 = vmatprep.mubr.bf16.mxu0 %v3266
        %4300 = vmatmul.mubr.bf16.gmra.mrb[0].mxu0 %v3265
        %v4301 = vpop.f32.mrb[0].mxu0
        %v4302 = vadd.f32 0.0, %v4301
        %v4303 = vpop.f32.mrb[0].mxu0
        %v4304 = vadd.f32 0.0, %v4303
        %v4305 = vpop.f32.mrb[0].mxu0
        %v4306 = vadd.f32 0.0, %v4305
        %v4307 = vpop.f32.mrb[0].mxu0
        %v4308 = vadd.f32 0.0, %v4307
        %4309 = vmatprep.mubr.bf16.mxu0 %v3268
        %4310 = vmatmul.mubr.bf16.gmra.mrb[0].mxu0 %v3267
        %v4311 = vpop.f32.mrb[0].mxu0
        %v4312 = vadd.f32 0.0, %v4311
        %v4313 = vpop.f32.mrb[0].mxu0
        %v4314 = vadd.f32 0.0, %v4313
        %v4315 = vpop.f32.mrb[0].mxu0
        %v4316 = vadd.f32 0.0, %v4315
        %v4317 = vpop.f32.mrb[0].mxu0
        %v4318 = vadd.f32 0.0, %v4317
        %4319 = vmatprep.mubr.bf16.mxu0 %v3270
        %4320 = vmatmul.mubr.bf16.gmra.mrb[0].mxu0 %v3269
        %v4321 = vpop.f32.mrb[0].mxu0
        %v4322 = vadd.f32 0.0, %v4321
        %v4323 = vpop.f32.mrb[0].mxu0
        %v4324 = vadd.f32 0.0, %v4323
        %v4325 = vpop.f32.mrb[0].mxu0
        %v4326 = vadd.f32 0.0, %v4325
        %v4327 = vpop.f32.mrb[0].mxu0
        %v4328 = vadd.f32 0.0, %v4327
        %4329 = vmatprep.mubr.bf16.mxu0 %v3272
        %4330 = vmatmul.mubr.bf16.gmra.mrb[0].mxu0 %v3271
        %v4331 = vpop.f32.mrb[0].mxu0
        %v4332 = vadd.f32 0.0, %v4331
        %v4333 = vpop.f32.mrb[0].mxu0
        %v4334 = vadd.f32 0.0, %v4333
        %v4335 = vpop.f32.mrb[0].mxu0
        %v4336 = vadd.f32 0.0, %v4335
        %v4337 = vpop.f32.mrb[0].mxu0
        %v4338 = vadd.f32 0.0, %v4337
        %4339 = vmatprep.mubr.bf16.mxu0 %v3274
        %4340 = vmatmul.mubr.bf16.gmra.mrb[0].mxu0 %v3273
        %v4341 = vpop.f32.mrb[0].mxu0
        %v4342 = vadd.f32 0.0, %v4341
        %v4343 = vpop.f32.mrb[0].mxu0
        %v4344 = vadd.f32 0.0, %v4343
        %v4345 = vpop.f32.mrb[0].mxu0
        %v4346 = vadd.f32 0.0, %v4345
        %v4347 = vpop.f32.mrb[0].mxu0
        %v4348 = vadd.f32 0.0, %v4347
        %4349 = vmatprep.mubr.bf16.mxu0 %v3276
        %4350 = vmatmul.mubr.bf16.gmra.mrb[0].mxu0 %v3275
        %v4351 = vpop.f32.mrb[0].mxu0
        %v4352 = vadd.f32 0.0, %v4351
        %v4353 = vpop.f32.mrb[0].mxu0
        %v4354 = vadd.f32 0.0, %v4353
        %v4355 = vpop.f32.mrb[0].mxu0
        %v4356 = vadd.f32 0.0, %v4355
        %v4357 = vpop.f32.mrb[0].mxu0
        %v4358 = vadd.f32 0.0, %v4357
        %4359 = vmatprep.mubr.bf16.mxu0 %v3278
        %4360 = vmatmul.mubr.bf16.gmra.mrb[0].mxu0 %v3277
        %v4361 = vpop.f32.mrb[0].mxu0
        %v4362 = vadd.f32 0.0, %v4361
        %v4363 = vpop.f32.mrb[0].mxu0
        %v4364 = vadd.f32 0.0, %v4363
        %v4365 = vpop.f32.mrb[0].mxu0
        %v4366 = vadd.f32 0.0, %v4365
        %v4367 = vpop.f32.mrb[0].mxu0
        %v4368 = vadd.f32 0.0, %v4367
        %4369 = vmatprep.mubr.bf16.mxu0 %v3280
        %4370 = vmatmul.mubr.bf16.gmra.mrb[0].mxu0 %v3279
        %v4371 = vpop.f32.mrb[0].mxu0
        %v4372 = vadd.f32 0.0, %v4371
        %v4373 = vpop.f32.mrb[0].mxu0
        %v4374 = vadd.f32 0.0, %v4373
        %v4375 = vpop.f32.mrb[0].mxu0
        %v4376 = vadd.f32 0.0, %v4375
        %v4377 = vpop.f32.mrb[0].mxu0
        %v4378 = vadd.f32 0.0, %v4377
        %4379 = vmatprep.mubr.bf16.mxu0 %v3282
        %4380 = vmatmul.mubr.bf16.gmra.mrb[0].mxu0 %v3281
        %v4381 = vpop.f32.mrb[0].mxu0
        %v4382 = vadd.f32 0.0, %v4381
        %v4383 = vpop.f32.mrb[0].mxu0
        %v4384 = vadd.f32 0.0, %v4383
        %v4385 = vpop.f32.mrb[0].mxu0
        %v4386 = vadd.f32 0.0, %v4385
        %v4387 = vpop.f32.mrb[0].mxu0
        %v4388 = vadd.f32 0.0, %v4387
        %4389 = vmatprep.mubr.bf16.mxu0 %v3284
        %4390 = vmatmul.mubr.bf16.gmra.mrb[0].mxu0 %v3283
        %v4391 = vpop.f32.mrb[0].mxu0
        %v4392 = vadd.f32 0.0, %v4391
        %v4393 = vpop.f32.mrb[0].mxu0
        %v4394 = vadd.f32 0.0, %v4393
        %v4395 = vpop.f32.mrb[0].mxu0
        %v4396 = vadd.f32 0.0, %v4395
        %v4397 = vpop.f32.mrb[0].mxu0
        %v4398 = vadd.f32 0.0, %v4397
        %4399 = vmatprep.mubr.bf16.mxu0 %v3286
        %4400 = vmatmul.mubr.bf16.gmra.mrb[0].mxu0 %v3285
        %v4401 = vpop.f32.mrb[0].mxu0
        %v4402 = vadd.f32 0.0, %v4401
        %v4403 = vpop.f32.mrb[0].mxu0
        %v4404 = vadd.f32 0.0, %v4403
        %v4405 = vpop.f32.mrb[0].mxu0
        %v4406 = vadd.f32 0.0, %v4405
        %v4407 = vpop.f32.mrb[0].mxu0
        %v4408 = vadd.f32 0.0, %v4407
        %4409 = vdwg.mxu0
        %4410 = vmatprep.subr.bf16.mxu0 %v1050
        %4411 = vmatpush1.bf16.msra.mxu0 %v1049
        %4412 = vmatprep.subr.bf16.mxu0 %v1058
        %4413 = vmatpush1.bf16.msra.mxu0 %v1057
        %4414 = vmatprep.subr.bf16.mxu0 %v1066
        %4415 = vmatpush1.bf16.msra.mxu0 %v1065
        %4416 = vmatprep.subr.bf16.mxu0 %v1074
        %4417 = vmatpush1.bf16.msra.mxu0 %v1073
        %4418 = vmatprep.subr.bf16.mxu0 %v1082
        %4419 = vmatpush1.bf16.msra.mxu0 %v1081
        %4420 = vmatprep.subr.bf16.mxu0 %v1090
        %4421 = vmatpush1.bf16.msra.mxu0 %v1089
        %4422 = vmatprep.subr.bf16.mxu0 %v1098
        %4423 = vmatpush1.bf16.msra.mxu0 %v1097
        %4424 = vmatprep.subr.bf16.mxu0 %v1106
        %4425 = vmatpush1.bf16.msra.mxu0 %v1105
        %4426 = vmatprep.subr.bf16.mxu0 %v1114
        %4427 = vmatpush1.bf16.msra.mxu0 %v1113
        %4428 = vmatprep.subr.bf16.mxu0 %v1122
        %4429 = vmatpush1.bf16.msra.mxu0 %v1121
        %4430 = vmatprep.subr.bf16.mxu0 %v1130
        %4431 = vmatpush1.bf16.msra.mxu0 %v1129
        %4432 = vmatprep.subr.bf16.mxu0 %v1138
        %4433 = vmatpush1.bf16.msra.mxu0 %v1137
        %4434 = vmatprep.subr.bf16.mxu0 %v1146
        %4435 = vmatpush1.bf16.msra.mxu0 %v1145
        %4436 = vmatprep.subr.bf16.mxu0 %v1154
        %4437 = vmatpush1.bf16.msra.mxu0 %v1153
        %4438 = vmatprep.subr.bf16.mxu0 %v1162
        %4439 = vmatpush1.bf16.msra.mxu0 %v1161
        %4440 = vmatprep.subr.bf16.mxu0 %v1170
        %4441 = vmatpush1.bf16.msra.mxu0 %v1169
        %4442 = vmatprep.mubr.bf16.mxu0 %v3224
        %4443 = vmatmul.mubr.bf16.gmra.mrb[0].mxu0 %v3223
        %v4444 = vpop.f32.mrb[0].mxu0
        %v4445 = vadd.f32 0.0, %v4444
        %v4446 = vpop.f32.mrb[0].mxu0
        %v4447 = vadd.f32 0.0, %v4446
        %v4448 = vpop.f32.mrb[0].mxu0
        %v4449 = vadd.f32 0.0, %v4448
        %v4450 = vpop.f32.mrb[0].mxu0
        %v4451 = vadd.f32 0.0, %v4450
        %4452 = vmatprep.mubr.bf16.mxu0 %v3226
        %4453 = vmatmul.mubr.bf16.gmra.mrb[0].mxu0 %v3225
        %v4454 = vpop.f32.mrb[0].mxu0
        %v4455 = vadd.f32 0.0, %v4454
        %v4456 = vpop.f32.mrb[0].mxu0
        %v4457 = vadd.f32 0.0, %v4456
        %v4458 = vpop.f32.mrb[0].mxu0
        %v4459 = vadd.f32 0.0, %v4458
        %v4460 = vpop.f32.mrb[0].mxu0
        %v4461 = vadd.f32 0.0, %v4460
        %4462 = vmatprep.mubr.bf16.mxu0 %v3228
        %4463 = vmatmul.mubr.bf16.gmra.mrb[0].mxu0 %v3227
        %v4464 = vpop.f32.mrb[0].mxu0
        %v4465 = vadd.f32 0.0, %v4464
        %v4466 = vpop.f32.mrb[0].mxu0
        %v4467 = vadd.f32 0.0, %v4466
        %v4468 = vpop.f32.mrb[0].mxu0
        %v4469 = vadd.f32 0.0, %v4468
        %v4470 = vpop.f32.mrb[0].mxu0
        %v4471 = vadd.f32 0.0, %v4470
        %4472 = vmatprep.mubr.bf16.mxu0 %v3230
        %4473 = vmatmul.mubr.bf16.gmra.mrb[0].mxu0 %v3229
        %v4474 = vpop.f32.mrb[0].mxu0
        %v4475 = vadd.f32 0.0, %v4474
        %v4476 = vpop.f32.mrb[0].mxu0
        %v4477 = vadd.f32 0.0, %v4476
        %v4478 = vpop.f32.mrb[0].mxu0
        %v4479 = vadd.f32 0.0, %v4478
        %v4480 = vpop.f32.mrb[0].mxu0
        %v4481 = vadd.f32 0.0, %v4480
        %4482 = vmatprep.mubr.bf16.mxu0 %v3232
        %4483 = vmatmul.mubr.bf16.gmra.mrb[0].mxu0 %v3231
        %v4484 = vpop.f32.mrb[0].mxu0
        %v4485 = vadd.f32 0.0, %v4484
        %v4486 = vpop.f32.mrb[0].mxu0
        %v4487 = vadd.f32 0.0, %v4486
        %v4488 = vpop.f32.mrb[0].mxu0
        %v4489 = vadd.f32 0.0, %v4488
        %v4490 = vpop.f32.mrb[0].mxu0
        %v4491 = vadd.f32 0.0, %v4490
        %4492 = vmatprep.mubr.bf16.mxu0 %v3234
        %4493 = vmatmul.mubr.bf16.gmra.mrb[0].mxu0 %v3233
        %v4494 = vpop.f32.mrb[0].mxu0
        %v4495 = vadd.f32 0.0, %v4494
        %v4496 = vpop.f32.mrb[0].mxu0
        %v4497 = vadd.f32 0.0, %v4496
        %v4498 = vpop.f32.mrb[0].mxu0
        %v4499 = vadd.f32 0.0, %v4498
        %v4500 = vpop.f32.mrb[0].mxu0
        %v4501 = vadd.f32 0.0, %v4500
        %4502 = vmatprep.mubr.bf16.mxu0 %v3236
        %4503 = vmatmul.mubr.bf16.gmra.mrb[0].mxu0 %v3235
        %v4504 = vpop.f32.mrb[0].mxu0
        %v4505 = vadd.f32 0.0, %v4504
        %v4506 = vpop.f32.mrb[0].mxu0
        %v4507 = vadd.f32 0.0, %v4506
        %v4508 = vpop.f32.mrb[0].mxu0
        %v4509 = vadd.f32 0.0, %v4508
        %v4510 = vpop.f32.mrb[0].mxu0
        %v4511 = vadd.f32 0.0, %v4510
        %4512 = vmatprep.mubr.bf16.mxu0 %v3238
        %4513 = vmatmul.mubr.bf16.gmra.mrb[0].mxu0 %v3237
        %v4514 = vpop.f32.mrb[0].mxu0
        %v4515 = vadd.f32 0.0, %v4514
        %v4516 = vpop.f32.mrb[0].mxu0
        %v4517 = vadd.f32 0.0, %v4516
        %v4518 = vpop.f32.mrb[0].mxu0
        %v4519 = vadd.f32 0.0, %v4518
        %v4520 = vpop.f32.mrb[0].mxu0
        %v4521 = vadd.f32 0.0, %v4520
        %4522 = vmatprep.mubr.bf16.mxu0 %v3240
        %4523 = vmatmul.mubr.bf16.gmra.mrb[0].mxu0 %v3239
        %v4524 = vpop.f32.mrb[0].mxu0
        %v4525 = vadd.f32 0.0, %v4524
        %v4526 = vpop.f32.mrb[0].mxu0
        %v4527 = vadd.f32 0.0, %v4526
        %v4528 = vpop.f32.mrb[0].mxu0
        %v4529 = vadd.f32 0.0, %v4528
        %v4530 = vpop.f32.mrb[0].mxu0
        %v4531 = vadd.f32 0.0, %v4530
        %4532 = vmatprep.mubr.bf16.mxu0 %v3242
        %4533 = vmatmul.mubr.bf16.gmra.mrb[0].mxu0 %v3241
        %v4534 = vpop.f32.mrb[0].mxu0
        %v4535 = vadd.f32 0.0, %v4534
        %v4536 = vpop.f32.mrb[0].mxu0
        %v4537 = vadd.f32 0.0, %v4536
        %v4538 = vpop.f32.mrb[0].mxu0
        %v4539 = vadd.f32 0.0, %v4538
        %v4540 = vpop.f32.mrb[0].mxu0
        %v4541 = vadd.f32 0.0, %v4540
        %4542 = vmatprep.mubr.bf16.mxu0 %v3244
        %4543 = vmatmul.mubr.bf16.gmra.mrb[0].mxu0 %v3243
        %v4544 = vpop.f32.mrb[0].mxu0
        %v4545 = vadd.f32 0.0, %v4544
        %v4546 = vpop.f32.mrb[0].mxu0
        %v4547 = vadd.f32 0.0, %v4546
        %v4548 = vpop.f32.mrb[0].mxu0
        %v4549 = vadd.f32 0.0, %v4548
        %v4550 = vpop.f32.mrb[0].mxu0
        %v4551 = vadd.f32 0.0, %v4550
        %4552 = vmatprep.mubr.bf16.mxu0 %v3246
        %4553 = vmatmul.mubr.bf16.gmra.mrb[0].mxu0 %v3245
        %v4554 = vpop.f32.mrb[0].mxu0
        %v4555 = vadd.f32 0.0, %v4554
        %v4556 = vpop.f32.mrb[0].mxu0
        %v4557 = vadd.f32 0.0, %v4556
        %v4558 = vpop.f32.mrb[0].mxu0
        %v4559 = vadd.f32 0.0, %v4558
        %v4560 = vpop.f32.mrb[0].mxu0
        %v4561 = vadd.f32 0.0, %v4560
        %4562 = vmatprep.mubr.bf16.mxu0 %v3248
        %4563 = vmatmul.mubr.bf16.gmra.mrb[0].mxu0 %v3247
        %v4564 = vpop.f32.mrb[0].mxu0
        %v4565 = vadd.f32 0.0, %v4564
        %v4566 = vpop.f32.mrb[0].mxu0
        %v4567 = vadd.f32 0.0, %v4566
        %v4568 = vpop.f32.mrb[0].mxu0
        %v4569 = vadd.f32 0.0, %v4568
        %v4570 = vpop.f32.mrb[0].mxu0
        %v4571 = vadd.f32 0.0, %v4570
        %4572 = vmatprep.mubr.bf16.mxu0 %v3250
        %4573 = vmatmul.mubr.bf16.gmra.mrb[0].mxu0 %v3249
        %v4574 = vpop.f32.mrb[0].mxu0
        %v4575 = vadd.f32 0.0, %v4574
        %v4576 = vpop.f32.mrb[0].mxu0
        %v4577 = vadd.f32 0.0, %v4576
        %v4578 = vpop.f32.mrb[0].mxu0
        %v4579 = vadd.f32 0.0, %v4578
        %v4580 = vpop.f32.mrb[0].mxu0
        %v4581 = vadd.f32 0.0, %v4580
        %4582 = vmatprep.mubr.bf16.mxu0 %v3252
        %4583 = vmatmul.mubr.bf16.gmra.mrb[0].mxu0 %v3251
        %v4584 = vpop.f32.mrb[0].mxu0
        %v4585 = vadd.f32 0.0, %v4584
        %v4586 = vpop.f32.mrb[0].mxu0
        %v4587 = vadd.f32 0.0, %v4586
        %v4588 = vpop.f32.mrb[0].mxu0
        %v4589 = vadd.f32 0.0, %v4588
        %v4590 = vpop.f32.mrb[0].mxu0
        %v4591 = vadd.f32 0.0, %v4590
        %4592 = vmatprep.mubr.bf16.mxu0 %v3254
        %4593 = vmatmul.mubr.bf16.gmra.mrb[0].mxu0 %v3253
        %v4594 = vpop.f32.mrb[0].mxu0
        %v4595 = vadd.f32 0.0, %v4594
        %v4596 = vpop.f32.mrb[0].mxu0
        %v4597 = vadd.f32 0.0, %v4596
        %v4598 = vpop.f32.mrb[0].mxu0
        %v4599 = vadd.f32 0.0, %v4598
        %v4600 = vpop.f32.mrb[0].mxu0
        %v4601 = vadd.f32 0.0, %v4600
        %4602 = vmatprep.mubr.bf16.mxu0 %v3256
        %4603 = vmatmul.mubr.bf16.gmra.mrb[0].mxu0 %v3255
        %v4604 = vpop.f32.mrb[0].mxu0
        %v4605 = vadd.f32 0.0, %v4604
        %v4606 = vpop.f32.mrb[0].mxu0
        %v4607 = vadd.f32 0.0, %v4606
        %v4608 = vpop.f32.mrb[0].mxu0
        %v4609 = vadd.f32 0.0, %v4608
        %v4610 = vpop.f32.mrb[0].mxu0
        %v4611 = vadd.f32 0.0, %v4610
        %4612 = vmatprep.mubr.bf16.mxu0 %v3258
        %4613 = vmatmul.mubr.bf16.gmra.mrb[0].mxu0 %v3257
        %v4614 = vpop.f32.mrb[0].mxu0
        %v4615 = vadd.f32 0.0, %v4614
        %v4616 = vpop.f32.mrb[0].mxu0
        %v4617 = vadd.f32 0.0, %v4616
        %v4618 = vpop.f32.mrb[0].mxu0
        %v4619 = vadd.f32 0.0, %v4618
        %v4620 = vpop.f32.mrb[0].mxu0
        %v4621 = vadd.f32 0.0, %v4620
        %4622 = vmatprep.mubr.bf16.mxu0 %v3260
        %4623 = vmatmul.mubr.bf16.gmra.mrb[0].mxu0 %v3259
        %v4624 = vpop.f32.mrb[0].mxu0
        %v4625 = vadd.f32 0.0, %v4624
        %v4626 = vpop.f32.mrb[0].mxu0
        %v4627 = vadd.f32 0.0, %v4626
        %v4628 = vpop.f32.mrb[0].mxu0
        %v4629 = vadd.f32 0.0, %v4628
        %v4630 = vpop.f32.mrb[0].mxu0
        %v4631 = vadd.f32 0.0, %v4630
        %4632 = vmatprep.mubr.bf16.mxu0 %v3262
        %4633 = vmatmul.mubr.bf16.gmra.mrb[0].mxu0 %v3261
        %v4634 = vpop.f32.mrb[0].mxu0
        %v4635 = vadd.f32 0.0, %v4634
        %v4636 = vpop.f32.mrb[0].mxu0
        %v4637 = vadd.f32 0.0, %v4636
        %v4638 = vpop.f32.mrb[0].mxu0
        %v4639 = vadd.f32 0.0, %v4638
        %v4640 = vpop.f32.mrb[0].mxu0
        %v4641 = vadd.f32 0.0, %v4640
        %4642 = vmatprep.mubr.bf16.mxu0 %v3264
        %4643 = vmatmul.mubr.bf16.gmra.mrb[0].mxu0 %v3263
        %v4644 = vpop.f32.mrb[0].mxu0
        %v4645 = vadd.f32 0.0, %v4644
        %v4646 = vpop.f32.mrb[0].mxu0
        %v4647 = vadd.f32 0.0, %v4646
        %v4648 = vpop.f32.mrb[0].mxu0
        %v4649 = vadd.f32 0.0, %v4648
        %v4650 = vpop.f32.mrb[0].mxu0
        %v4651 = vadd.f32 0.0, %v4650
        %4652 = vmatprep.mubr.bf16.mxu0 %v3266
        %4653 = vmatmul.mubr.bf16.gmra.mrb[0].mxu0 %v3265
        %v4654 = vpop.f32.mrb[0].mxu0
        %v4655 = vadd.f32 0.0, %v4654
        %v4656 = vpop.f32.mrb[0].mxu0
        %v4657 = vadd.f32 0.0, %v4656
        %v4658 = vpop.f32.mrb[0].mxu0
        %v4659 = vadd.f32 0.0, %v4658
        %v4660 = vpop.f32.mrb[0].mxu0
        %v4661 = vadd.f32 0.0, %v4660
        %4662 = vmatprep.mubr.bf16.mxu0 %v3268
        %4663 = vmatmul.mubr.bf16.gmra.mrb[0].mxu0 %v3267
        %v4664 = vpop.f32.mrb[0].mxu0
        %v4665 = vadd.f32 0.0, %v4664
        %v4666 = vpop.f32.mrb[0].mxu0
        %v4667 = vadd.f32 0.0, %v4666
        %v4668 = vpop.f32.mrb[0].mxu0
        %v4669 = vadd.f32 0.0, %v4668
        %v4670 = vpop.f32.mrb[0].mxu0
        %v4671 = vadd.f32 0.0, %v4670
        %4672 = vmatprep.mubr.bf16.mxu0 %v3270
        %4673 = vmatmul.mubr.bf16.gmra.mrb[0].mxu0 %v3269
        %v4674 = vpop.f32.mrb[0].mxu0
        %v4675 = vadd.f32 0.0, %v4674
        %v4676 = vpop.f32.mrb[0].mxu0
        %v4677 = vadd.f32 0.0, %v4676
        %v4678 = vpop.f32.mrb[0].mxu0
        %v4679 = vadd.f32 0.0, %v4678
        %v4680 = vpop.f32.mrb[0].mxu0
        %v4681 = vadd.f32 0.0, %v4680
        %4682 = vmatprep.mubr.bf16.mxu0 %v3272
        %4683 = vmatmul.mubr.bf16.gmra.mrb[0].mxu0 %v3271
        %v4684 = vpop.f32.mrb[0].mxu0
        %v4685 = vadd.f32 0.0, %v4684
        %v4686 = vpop.f32.mrb[0].mxu0
        %v4687 = vadd.f32 0.0, %v4686
        %v4688 = vpop.f32.mrb[0].mxu0
        %v4689 = vadd.f32 0.0, %v4688
        %v4690 = vpop.f32.mrb[0].mxu0
        %v4691 = vadd.f32 0.0, %v4690
        %4692 = vmatprep.mubr.bf16.mxu0 %v3274
        %4693 = vmatmul.mubr.bf16.gmra.mrb[0].mxu0 %v3273
        %v4694 = vpop.f32.mrb[0].mxu0
        %v4695 = vadd.f32 0.0, %v4694
        %v4696 = vpop.f32.mrb[0].mxu0
        %v4697 = vadd.f32 0.0, %v4696
        %v4698 = vpop.f32.mrb[0].mxu0
        %v4699 = vadd.f32 0.0, %v4698
        %v4700 = vpop.f32.mrb[0].mxu0
        %v4701 = vadd.f32 0.0, %v4700
        %4702 = vmatprep.mubr.bf16.mxu0 %v3276
        %4703 = vmatmul.mubr.bf16.gmra.mrb[0].mxu0 %v3275
        %v4704 = vpop.f32.mrb[0].mxu0
        %v4705 = vadd.f32 0.0, %v4704
        %v4706 = vpop.f32.mrb[0].mxu0
        %v4707 = vadd.f32 0.0, %v4706
        %v4708 = vpop.f32.mrb[0].mxu0
        %v4709 = vadd.f32 0.0, %v4708
        %v4710 = vpop.f32.mrb[0].mxu0
        %v4711 = vadd.f32 0.0, %v4710
        %4712 = vmatprep.mubr.bf16.mxu0 %v3278
        %4713 = vmatmul.mubr.bf16.gmra.mrb[0].mxu0 %v3277
        %v4714 = vpop.f32.mrb[0].mxu0
        %v4715 = vadd.f32 0.0, %v4714
        %v4716 = vpop.f32.mrb[0].mxu0
        %v4717 = vadd.f32 0.0, %v4716
        %v4718 = vpop.f32.mrb[0].mxu0
        %v4719 = vadd.f32 0.0, %v4718
        %v4720 = vpop.f32.mrb[0].mxu0
        %v4721 = vadd.f32 0.0, %v4720
        %4722 = vmatprep.mubr.bf16.mxu0 %v3280
        %4723 = vmatmul.mubr.bf16.gmra.mrb[0].mxu0 %v3279
        %v4724 = vpop.f32.mrb[0].mxu0
        %v4725 = vadd.f32 0.0, %v4724
        %v4726 = vpop.f32.mrb[0].mxu0
        %v4727 = vadd.f32 0.0, %v4726
        %v4728 = vpop.f32.mrb[0].mxu0
        %v4729 = vadd.f32 0.0, %v4728
        %v4730 = vpop.f32.mrb[0].mxu0
        %v4731 = vadd.f32 0.0, %v4730
        %4732 = vmatprep.mubr.bf16.mxu0 %v3282
        %4733 = vmatmul.mubr.bf16.gmra.mrb[0].mxu0 %v3281
        %v4734 = vpop.f32.mrb[0].mxu0
        %v4735 = vadd.f32 0.0, %v4734
        %v4736 = vpop.f32.mrb[0].mxu0
        %v4737 = vadd.f32 0.0, %v4736
        %v4738 = vpop.f32.mrb[0].mxu0
        %v4739 = vadd.f32 0.0, %v4738
        %v4740 = vpop.f32.mrb[0].mxu0
        %v4741 = vadd.f32 0.0, %v4740
        %4742 = vmatprep.mubr.bf16.mxu0 %v3284
        %4743 = vmatmul.mubr.bf16.gmra.mrb[0].mxu0 %v3283
        %v4744 = vpop.f32.mrb[0].mxu0
        %v4745 = vadd.f32 0.0, %v4744
        %v4746 = vpop.f32.mrb[0].mxu0
        %v4747 = vadd.f32 0.0, %v4746
        %v4748 = vpop.f32.mrb[0].mxu0
        %v4749 = vadd.f32 0.0, %v4748
        %v4750 = vpop.f32.mrb[0].mxu0
        %v4751 = vadd.f32 0.0, %v4750
        %4752 = vmatprep.mubr.bf16.mxu0 %v3286
        %4753 = vmatmul.mubr.bf16.gmra.mrb[0].mxu0 %v3285
        %v4754 = vpop.f32.mrb[0].mxu0
        %v4755 = vadd.f32 0.0, %v4754
        %v4756 = vpop.f32.mrb[0].mxu0
        %v4757 = vadd.f32 0.0, %v4756
        %v4758 = vpop.f32.mrb[0].mxu0
        %v4759 = vadd.f32 0.0, %v4758
        %v4760 = vpop.f32.mrb[0].mxu0
        %v4761 = vadd.f32 0.0, %v4760
        %4762 = vdwg.mxu0
        %v4763 = vmul.f32 %v1590, %v3386
        %v4764 = vmul.f32 %v1592, %v3388
        %v4765 = vmul.f32 %v1943, %v3739
        %v4766 = vmul.f32 %v1945, %v3741
        %v4767 = vmul.f32 %v2296, %v4092
        %v4768 = vmul.f32 %v2298, %v4094
        %v4769 = vmul.f32 %v2649, %v4445
        %v4770 = vmul.f32 %v2651, %v4447
        %v4771 = vmul.f32 %v1594, %v3390
        %v4772 = vmul.f32 %v1596, %v3392
        %v4773 = vmul.f32 %v1947, %v3743
        %v4774 = vmul.f32 %v1949, %v3745
        %v4775 = vmul.f32 %v2300, %v4096
        %v4776 = vmul.f32 %v2302, %v4098
        %v4777 = vmul.f32 %v2653, %v4449
        %v4778 = vmul.f32 %v2655, %v4451
        %v4779 = vmul.f32 %v1600, %v3396
        %v4780 = vmul.f32 %v1602, %v3398
        %v4781 = vmul.f32 %v1953, %v3749
        %v4782 = vmul.f32 %v1955, %v3751
        %v4783 = vmul.f32 %v2306, %v4102
        %v4784 = vmul.f32 %v2308, %v4104
        %v4785 = vmul.f32 %v2659, %v4455
        %v4786 = vmul.f32 %v2661, %v4457
        %v4787 = vmul.f32 %v1604, %v3400
        %v4788 = vmul.f32 %v1606, %v3402
        %v4789 = vmul.f32 %v1957, %v3753
        %v4790 = vmul.f32 %v1959, %v3755
        %v4791 = vmul.f32 %v2310, %v4106
        %v4792 = vmul.f32 %v2312, %v4108
        %v4793 = vmul.f32 %v2663, %v4459
        %v4794 = vmul.f32 %v2665, %v4461
        %v4795 = vmul.f32 %v1610, %v3406
        %v4796 = vmul.f32 %v1612, %v3408
        %v4797 = vmul.f32 %v1963, %v3759
        %v4798 = vmul.f32 %v1965, %v3761
        %v4799 = vmul.f32 %v2316, %v4112
        %v4800 = vmul.f32 %v2318, %v4114
        %v4801 = vmul.f32 %v2669, %v4465
        %v4802 = vmul.f32 %v2671, %v4467
        %v4803 = vmul.f32 %v1614, %v3410
        %v4804 = vmul.f32 %v1616, %v3412
        %v4805 = vmul.f32 %v1967, %v3763
        %v4806 = vmul.f32 %v1969, %v3765
        %v4807 = vmul.f32 %v2320, %v4116
        %v4808 = vmul.f32 %v2322, %v4118
        %v4809 = vmul.f32 %v2673, %v4469
        %v4810 = vmul.f32 %v2675, %v4471
        %v4811 = vmul.f32 %v1620, %v3416
        %v4812 = vmul.f32 %v1622, %v3418
        %v4813 = vmul.f32 %v1973, %v3769
        %v4814 = vmul.f32 %v1975, %v3771
        %v4815 = vmul.f32 %v2326, %v4122
        %v4816 = vmul.f32 %v2328, %v4124
        %v4817 = vmul.f32 %v2679, %v4475
        %v4818 = vmul.f32 %v2681, %v4477
        %v4819 = vmul.f32 %v1624, %v3420
        %v4820 = vmul.f32 %v1626, %v3422
        %v4821 = vmul.f32 %v1977, %v3773
        %v4822 = vmul.f32 %v1979, %v3775
        %v4823 = vmul.f32 %v2330, %v4126
        %v4824 = vmul.f32 %v2332, %v4128
        %v4825 = vmul.f32 %v2683, %v4479
        %v4826 = vmul.f32 %v2685, %v4481
        %v4827 = vmul.f32 %v1630, %v3426
        %v4828 = vmul.f32 %v1632, %v3428
        %v4829 = vmul.f32 %v1983, %v3779
        %v4830 = vmul.f32 %v1985, %v3781
        %v4831 = vmul.f32 %v2336, %v4132
        %v4832 = vmul.f32 %v2338, %v4134
        %v4833 = vmul.f32 %v2689, %v4485
        %v4834 = vmul.f32 %v2691, %v4487
        %v4835 = vmul.f32 %v1634, %v3430
        %v4836 = vmul.f32 %v1636, %v3432
        %v4837 = vmul.f32 %v1987, %v3783
        %v4838 = vmul.f32 %v1989, %v3785
        %v4839 = vmul.f32 %v2340, %v4136
        %v4840 = vmul.f32 %v2342, %v4138
        %v4841 = vmul.f32 %v2693, %v4489
        %v4842 = vmul.f32 %v2695, %v4491
        %v4843 = vmul.f32 %v1640, %v3436
        %v4844 = vmul.f32 %v1642, %v3438
        %v4845 = vmul.f32 %v1993, %v3789
        %v4846 = vmul.f32 %v1995, %v3791
        %v4847 = vmul.f32 %v2346, %v4142
        %v4848 = vmul.f32 %v2348, %v4144
        %v4849 = vmul.f32 %v2699, %v4495
        %v4850 = vmul.f32 %v2701, %v4497
        %v4851 = vmul.f32 %v1644, %v3440
        %v4852 = vmul.f32 %v1646, %v3442
        %v4853 = vmul.f32 %v1997, %v3793
        %v4854 = vmul.f32 %v1999, %v3795
        %v4855 = vmul.f32 %v2350, %v4146
        %v4856 = vmul.f32 %v2352, %v4148
        %v4857 = vmul.f32 %v2703, %v4499
        %v4858 = vmul.f32 %v2705, %v4501
        %v4859 = vmul.f32 %v1650, %v3446
        %v4860 = vmul.f32 %v1652, %v3448
        %v4861 = vmul.f32 %v2003, %v3799
        %v4862 = vmul.f32 %v2005, %v3801
        %v4863 = vmul.f32 %v2356, %v4152
        %v4864 = vmul.f32 %v2358, %v4154
        %v4865 = vmul.f32 %v2709, %v4505
        %v4866 = vmul.f32 %v2711, %v4507
        %v4867 = vmul.f32 %v1654, %v3450
        %v4868 = vmul.f32 %v1656, %v3452
        %v4869 = vmul.f32 %v2007, %v3803
        %v4870 = vmul.f32 %v2009, %v3805
        %v4871 = vmul.f32 %v2360, %v4156
        %v4872 = vmul.f32 %v2362, %v4158
        %v4873 = vmul.f32 %v2713, %v4509
        %v4874 = vmul.f32 %v2715, %v4511
        %v4875 = vmul.f32 %v1660, %v3456
        %v4876 = vmul.f32 %v1662, %v3458
        %v4877 = vmul.f32 %v2013, %v3809
        %v4878 = vmul.f32 %v2015, %v3811
        %v4879 = vmul.f32 %v2366, %v4162
        %v4880 = vmul.f32 %v2368, %v4164
        %v4881 = vmul.f32 %v2719, %v4515
        %v4882 = vmul.f32 %v2721, %v4517
        %v4883 = vmul.f32 %v1664, %v3460
        %v4884 = vmul.f32 %v1666, %v3462
        %v4885 = vmul.f32 %v2017, %v3813
        %v4886 = vmul.f32 %v2019, %v3815
        %v4887 = vmul.f32 %v2370, %v4166
        %v4888 = vmul.f32 %v2372, %v4168
        %v4889 = vmul.f32 %v2723, %v4519
        %v4890 = vmul.f32 %v2725, %v4521
        %v4891 = vmul.f32 %v1670, %v3466
        %v4892 = vmul.f32 %v1672, %v3468
        %v4893 = vmul.f32 %v2023, %v3819
        %v4894 = vmul.f32 %v2025, %v3821
        %v4895 = vmul.f32 %v2376, %v4172
        %v4896 = vmul.f32 %v2378, %v4174
        %v4897 = vmul.f32 %v2729, %v4525
        %v4898 = vmul.f32 %v2731, %v4527
        %v4899 = vmul.f32 %v1674, %v3470
        %v4900 = vmul.f32 %v1676, %v3472
        %v4901 = vmul.f32 %v2027, %v3823
        %v4902 = vmul.f32 %v2029, %v3825
        %v4903 = vmul.f32 %v2380, %v4176
        %v4904 = vmul.f32 %v2382, %v4178
        %v4905 = vmul.f32 %v2733, %v4529
        %v4906 = vmul.f32 %v2735, %v4531
        %v4907 = vmul.f32 %v1680, %v3476
        %v4908 = vmul.f32 %v1682, %v3478
        %v4909 = vmul.f32 %v2033, %v3829
        %v4910 = vmul.f32 %v2035, %v3831
        %v4911 = vmul.f32 %v2386, %v4182
        %v4912 = vmul.f32 %v2388, %v4184
        %v4913 = vmul.f32 %v2739, %v4535
        %v4914 = vmul.f32 %v2741, %v4537
        %v4915 = vmul.f32 %v1684, %v3480
        %v4916 = vmul.f32 %v1686, %v3482
        %v4917 = vmul.f32 %v2037, %v3833
        %v4918 = vmul.f32 %v2039, %v3835
        %v4919 = vmul.f32 %v2390, %v4186
        %v4920 = vmul.f32 %v2392, %v4188
        %v4921 = vmul.f32 %v2743, %v4539
        %v4922 = vmul.f32 %v2745, %v4541
        %v4923 = vmul.f32 %v1690, %v3486
        %v4924 = vmul.f32 %v1692, %v3488
        %v4925 = vmul.f32 %v2043, %v3839
        %v4926 = vmul.f32 %v2045, %v3841
        %v4927 = vmul.f32 %v2396, %v4192
        %v4928 = vmul.f32 %v2398, %v4194
        %v4929 = vmul.f32 %v2749, %v4545
        %v4930 = vmul.f32 %v2751, %v4547
        %v4931 = vmul.f32 %v1694, %v3490
        %v4932 = vmul.f32 %v1696, %v3492
        %v4933 = vmul.f32 %v2047, %v3843
        %v4934 = vmul.f32 %v2049, %v3845
        %v4935 = vmul.f32 %v2400, %v4196
        %v4936 = vmul.f32 %v2402, %v4198
        %v4937 = vmul.f32 %v2753, %v4549
        %v4938 = vmul.f32 %v2755, %v4551
        %v4939 = vmul.f32 %v1700, %v3496
        %v4940 = vmul.f32 %v1702, %v3498
        %v4941 = vmul.f32 %v2053, %v3849
        %v4942 = vmul.f32 %v2055, %v3851
        %v4943 = vmul.f32 %v2406, %v4202
        %v4944 = vmul.f32 %v2408, %v4204
        %v4945 = vmul.f32 %v2759, %v4555
        %v4946 = vmul.f32 %v2761, %v4557
        %v4947 = vmul.f32 %v1704, %v3500
        %v4948 = vmul.f32 %v1706, %v3502
        %v4949 = vmul.f32 %v2057, %v3853
        %v4950 = vmul.f32 %v2059, %v3855
        %v4951 = vmul.f32 %v2410, %v4206
        %v4952 = vmul.f32 %v2412, %v4208
        %v4953 = vmul.f32 %v2763, %v4559
        %v4954 = vmul.f32 %v2765, %v4561
        %v4955 = vmul.f32 %v1710, %v3506
        %v4956 = vmul.f32 %v1712, %v3508
        %v4957 = vmul.f32 %v2063, %v3859
        %v4958 = vmul.f32 %v2065, %v3861
        %v4959 = vmul.f32 %v2416, %v4212
        %v4960 = vmul.f32 %v2418, %v4214
        %v4961 = vmul.f32 %v2769, %v4565
        %v4962 = vmul.f32 %v2771, %v4567
        %v4963 = vmul.f32 %v1714, %v3510
        %v4964 = vmul.f32 %v1716, %v3512
        %v4965 = vmul.f32 %v2067, %v3863
        %v4966 = vmul.f32 %v2069, %v3865
        %v4967 = vmul.f32 %v2420, %v4216
        %v4968 = vmul.f32 %v2422, %v4218
        %v4969 = vmul.f32 %v2773, %v4569
        %v4970 = vmul.f32 %v2775, %v4571
        %v4971 = vmul.f32 %v1720, %v3516
        %v4972 = vmul.f32 %v1722, %v3518
        %v4973 = vmul.f32 %v2073, %v3869
        %v4974 = vmul.f32 %v2075, %v3871
        %v4975 = vmul.f32 %v2426, %v4222
        %v4976 = vmul.f32 %v2428, %v4224
        %v4977 = vmul.f32 %v2779, %v4575
        %v4978 = vmul.f32 %v2781, %v4577
        %v4979 = vmul.f32 %v1724, %v3520
        %v4980 = vmul.f32 %v1726, %v3522
        %v4981 = vmul.f32 %v2077, %v3873
        %v4982 = vmul.f32 %v2079, %v3875
        %v4983 = vmul.f32 %v2430, %v4226
        %v4984 = vmul.f32 %v2432, %v4228
        %v4985 = vmul.f32 %v2783, %v4579
        %v4986 = vmul.f32 %v2785, %v4581
        %v4987 = vmul.f32 %v1730, %v3526
        %v4988 = vmul.f32 %v1732, %v3528
        %v4989 = vmul.f32 %v2083, %v3879
        %v4990 = vmul.f32 %v2085, %v3881
        %v4991 = vmul.f32 %v2436, %v4232
        %v4992 = vmul.f32 %v2438, %v4234
        %v4993 = vmul.f32 %v2789, %v4585
        %v4994 = vmul.f32 %v2791, %v4587
        %v4995 = vmul.f32 %v1734, %v3530
        %v4996 = vmul.f32 %v1736, %v3532
        %v4997 = vmul.f32 %v2087, %v3883
        %v4998 = vmul.f32 %v2089, %v3885
        %v4999 = vmul.f32 %v2440, %v4236
        %v5000 = vmul.f32 %v2442, %v4238
        %v5001 = vmul.f32 %v2793, %v4589
        %v5002 = vmul.f32 %v2795, %v4591
        %v5003 = vmul.f32 %v1740, %v3536
        %v5004 = vmul.f32 %v1742, %v3538
        %v5005 = vmul.f32 %v2093, %v3889
        %v5006 = vmul.f32 %v2095, %v3891
        %v5007 = vmul.f32 %v2446, %v4242
        %v5008 = vmul.f32 %v2448, %v4244
        %v5009 = vmul.f32 %v2799, %v4595
        %v5010 = vmul.f32 %v2801, %v4597
        %v5011 = vmul.f32 %v1744, %v3540
        %v5012 = vmul.f32 %v1746, %v3542
        %v5013 = vmul.f32 %v2097, %v3893
        %v5014 = vmul.f32 %v2099, %v3895
        %v5015 = vmul.f32 %v2450, %v4246
        %v5016 = vmul.f32 %v2452, %v4248
        %v5017 = vmul.f32 %v2803, %v4599
        %v5018 = vmul.f32 %v2805, %v4601
        %v5019 = vmul.f32 %v1750, %v3546
        %v5020 = vmul.f32 %v1752, %v3548
        %v5021 = vmul.f32 %v2103, %v3899
        %v5022 = vmul.f32 %v2105, %v3901
        %v5023 = vmul.f32 %v2456, %v4252
        %v5024 = vmul.f32 %v2458, %v4254
        %v5025 = vmul.f32 %v2809, %v4605
        %v5026 = vmul.f32 %v2811, %v4607
        %v5027 = vmul.f32 %v1754, %v3550
        %v5028 = vmul.f32 %v1756, %v3552
        %v5029 = vmul.f32 %v2107, %v3903
        %v5030 = vmul.f32 %v2109, %v3905
        %v5031 = vmul.f32 %v2460, %v4256
        %v5032 = vmul.f32 %v2462, %v4258
        %v5033 = vmul.f32 %v2813, %v4609
        %v5034 = vmul.f32 %v2815, %v4611
        %v5035 = vmul.f32 %v1760, %v3556
        %v5036 = vmul.f32 %v1762, %v3558
        %v5037 = vmul.f32 %v2113, %v3909
        %v5038 = vmul.f32 %v2115, %v3911
        %v5039 = vmul.f32 %v2466, %v4262
        %v5040 = vmul.f32 %v2468, %v4264
        %v5041 = vmul.f32 %v2819, %v4615
        %v5042 = vmul.f32 %v2821, %v4617
        %v5043 = vmul.f32 %v1764, %v3560
        %v5044 = vmul.f32 %v1766, %v3562
        %v5045 = vmul.f32 %v2117, %v3913
        %v5046 = vmul.f32 %v2119, %v3915
        %v5047 = vmul.f32 %v2470, %v4266
        %v5048 = vmul.f32 %v2472, %v4268
        %v5049 = vmul.f32 %v2823, %v4619
        %v5050 = vmul.f32 %v2825, %v4621
        %v5051 = vmul.f32 %v1770, %v3566
        %v5052 = vmul.f32 %v1772, %v3568
        %v5053 = vmul.f32 %v2123, %v3919
        %v5054 = vmul.f32 %v2125, %v3921
        %v5055 = vmul.f32 %v2476, %v4272
        %v5056 = vmul.f32 %v2478, %v4274
        %v5057 = vmul.f32 %v2829, %v4625
        %v5058 = vmul.f32 %v2831, %v4627
        %v5059 = vmul.f32 %v1774, %v3570
        %v5060 = vmul.f32 %v1776, %v3572
        %v5061 = vmul.f32 %v2127, %v3923
        %v5062 = vmul.f32 %v2129, %v3925
        %v5063 = vmul.f32 %v2480, %v4276
        %v5064 = vmul.f32 %v2482, %v4278
        %v5065 = vmul.f32 %v2833, %v4629
        %v5066 = vmul.f32 %v2835, %v4631
        %v5067 = vmul.f32 %v1780, %v3576
        %v5068 = vmul.f32 %v1782, %v3578
        %v5069 = vmul.f32 %v2133, %v3929
        %v5070 = vmul.f32 %v2135, %v3931
        %v5071 = vmul.f32 %v2486, %v4282
        %v5072 = vmul.f32 %v2488, %v4284
        %v5073 = vmul.f32 %v2839, %v4635
        %v5074 = vmul.f32 %v2841, %v4637
        %v5075 = vmul.f32 %v1784, %v3580
        %v5076 = vmul.f32 %v1786, %v3582
        %v5077 = vmul.f32 %v2137, %v3933
        %v5078 = vmul.f32 %v2139, %v3935
        %v5079 = vmul.f32 %v2490, %v4286
        %v5080 = vmul.f32 %v2492, %v4288
        %v5081 = vmul.f32 %v2843, %v4639
        %v5082 = vmul.f32 %v2845, %v4641
        %v5083 = vmul.f32 %v1790, %v3586
        %v5084 = vmul.f32 %v1792, %v3588
        %v5085 = vmul.f32 %v2143, %v3939
        %v5086 = vmul.f32 %v2145, %v3941
        %v5087 = vmul.f32 %v2496, %v4292
        %v5088 = vmul.f32 %v2498, %v4294
        %v5089 = vmul.f32 %v2849, %v4645
        %v5090 = vmul.f32 %v2851, %v4647
        %v5091 = vmul.f32 %v1794, %v3590
        %v5092 = vmul.f32 %v1796, %v3592
        %v5093 = vmul.f32 %v2147, %v3943
        %v5094 = vmul.f32 %v2149, %v3945
        %v5095 = vmul.f32 %v2500, %v4296
        %v5096 = vmul.f32 %v2502, %v4298
        %v5097 = vmul.f32 %v2853, %v4649
        %v5098 = vmul.f32 %v2855, %v4651
        %v5099 = vmul.f32 %v1800, %v3596
        %v5100 = vmul.f32 %v1802, %v3598
        %v5101 = vmul.f32 %v2153, %v3949
        %v5102 = vmul.f32 %v2155, %v3951
        %v5103 = vmul.f32 %v2506, %v4302
        %v5104 = vmul.f32 %v2508, %v4304
        %v5105 = vmul.f32 %v2859, %v4655
        %v5106 = vmul.f32 %v2861, %v4657
        %v5107 = vmul.f32 %v1804, %v3600
        %v5108 = vmul.f32 %v1806, %v3602
        %v5109 = vmul.f32 %v2157, %v3953
        %v5110 = vmul.f32 %v2159, %v3955
        %v5111 = vmul.f32 %v2510, %v4306
        %v5112 = vmul.f32 %v2512, %v4308
        %v5113 = vmul.f32 %v2863, %v4659
        %v5114 = vmul.f32 %v2865, %v4661
        %v5115 = vmul.f32 %v1810, %v3606
        %v5116 = vmul.f32 %v1812, %v3608
        %v5117 = vmul.f32 %v2163, %v3959
        %v5118 = vmul.f32 %v2165, %v3961
        %v5119 = vmul.f32 %v2516, %v4312
        %v5120 = vmul.f32 %v2518, %v4314
        %v5121 = vmul.f32 %v2869, %v4665
        %v5122 = vmul.f32 %v2871, %v4667
        %v5123 = vmul.f32 %v1814, %v3610
        %v5124 = vmul.f32 %v1816, %v3612
        %v5125 = vmul.f32 %v2167, %v3963
        %v5126 = vmul.f32 %v2169, %v3965
        %v5127 = vmul.f32 %v2520, %v4316
        %v5128 = vmul.f32 %v2522, %v4318
        %v5129 = vmul.f32 %v2873, %v4669
        %v5130 = vmul.f32 %v2875, %v4671
        %v5131 = vmul.f32 %v1820, %v3616
        %v5132 = vmul.f32 %v1822, %v3618
        %v5133 = vmul.f32 %v2173, %v3969
        %v5134 = vmul.f32 %v2175, %v3971
        %v5135 = vmul.f32 %v2526, %v4322
        %v5136 = vmul.f32 %v2528, %v4324
        %v5137 = vmul.f32 %v2879, %v4675
        %v5138 = vmul.f32 %v2881, %v4677
        %v5139 = vmul.f32 %v1824, %v3620
        %v5140 = vmul.f32 %v1826, %v3622
        %v5141 = vmul.f32 %v2177, %v3973
        %v5142 = vmul.f32 %v2179, %v3975
        %v5143 = vmul.f32 %v2530, %v4326
        %v5144 = vmul.f32 %v2532, %v4328
        %v5145 = vmul.f32 %v2883, %v4679
        %v5146 = vmul.f32 %v2885, %v4681
        %v5147 = vmul.f32 %v1830, %v3626
        %v5148 = vmul.f32 %v1832, %v3628
        %v5149 = vmul.f32 %v2183, %v3979
        %v5150 = vmul.f32 %v2185, %v3981
        %v5151 = vmul.f32 %v2536, %v4332
        %v5152 = vmul.f32 %v2538, %v4334
        %v5153 = vmul.f32 %v2889, %v4685
        %v5154 = vmul.f32 %v2891, %v4687
        %v5155 = vmul.f32 %v1834, %v3630
        %v5156 = vmul.f32 %v1836, %v3632
        %v5157 = vmul.f32 %v2187, %v3983
        %v5158 = vmul.f32 %v2189, %v3985
        %v5159 = vmul.f32 %v2540, %v4336
        %v5160 = vmul.f32 %v2542, %v4338
        %v5161 = vmul.f32 %v2893, %v4689
        %v5162 = vmul.f32 %v2895, %v4691
        %v5163 = vmul.f32 %v1840, %v3636
        %v5164 = vmul.f32 %v1842, %v3638
        %v5165 = vmul.f32 %v2193, %v3989
        %v5166 = vmul.f32 %v2195, %v3991
        %v5167 = vmul.f32 %v2546, %v4342
        %v5168 = vmul.f32 %v2548, %v4344
        %v5169 = vmul.f32 %v2899, %v4695
        %v5170 = vmul.f32 %v2901, %v4697
        %v5171 = vmul.f32 %v1844, %v3640
        %v5172 = vmul.f32 %v1846, %v3642
        %v5173 = vmul.f32 %v2197, %v3993
        %v5174 = vmul.f32 %v2199, %v3995
        %v5175 = vmul.f32 %v2550, %v4346
        %v5176 = vmul.f32 %v2552, %v4348
        %v5177 = vmul.f32 %v2903, %v4699
        %v5178 = vmul.f32 %v2905, %v4701
        %v5179 = vmul.f32 %v1850, %v3646
        %v5180 = vmul.f32 %v1852, %v3648
        %v5181 = vmul.f32 %v2203, %v3999
        %v5182 = vmul.f32 %v2205, %v4001
        %v5183 = vmul.f32 %v2556, %v4352
        %v5184 = vmul.f32 %v2558, %v4354
        %v5185 = vmul.f32 %v2909, %v4705
        %v5186 = vmul.f32 %v2911, %v4707
        %v5187 = vmul.f32 %v1854, %v3650
        %v5188 = vmul.f32 %v1856, %v3652
        %v5189 = vmul.f32 %v2207, %v4003
        %v5190 = vmul.f32 %v2209, %v4005
        %v5191 = vmul.f32 %v2560, %v4356
        %v5192 = vmul.f32 %v2562, %v4358
        %v5193 = vmul.f32 %v2913, %v4709
        %v5194 = vmul.f32 %v2915, %v4711
        %v5195 = vmul.f32 %v1860, %v3656
        %v5196 = vmul.f32 %v1862, %v3658
        %v5197 = vmul.f32 %v2213, %v4009
        %v5198 = vmul.f32 %v2215, %v4011
        %v5199 = vmul.f32 %v2566, %v4362
        %v5200 = vmul.f32 %v2568, %v4364
        %v5201 = vmul.f32 %v2919, %v4715
        %v5202 = vmul.f32 %v2921, %v4717
        %v5203 = vmul.f32 %v1864, %v3660
        %v5204 = vmul.f32 %v1866, %v3662
        %v5205 = vmul.f32 %v2217, %v4013
        %v5206 = vmul.f32 %v2219, %v4015
        %v5207 = vmul.f32 %v2570, %v4366
        %v5208 = vmul.f32 %v2572, %v4368
        %v5209 = vmul.f32 %v2923, %v4719
        %v5210 = vmul.f32 %v2925, %v4721
        %v5211 = vmul.f32 %v1870, %v3666
        %v5212 = vmul.f32 %v1872, %v3668
        %v5213 = vmul.f32 %v2223, %v4019
        %v5214 = vmul.f32 %v2225, %v4021
        %v5215 = vmul.f32 %v2576, %v4372
        %v5216 = vmul.f32 %v2578, %v4374
        %v5217 = vmul.f32 %v2929, %v4725
        %v5218 = vmul.f32 %v2931, %v4727
        %v5219 = vmul.f32 %v1874, %v3670
        %v5220 = vmul.f32 %v1876, %v3672
        %v5221 = vmul.f32 %v2227, %v4023
        %v5222 = vmul.f32 %v2229, %v4025
        %v5223 = vmul.f32 %v2580, %v4376
        %v5224 = vmul.f32 %v2582, %v4378
        %v5225 = vmul.f32 %v2933, %v4729
        %v5226 = vmul.f32 %v2935, %v4731
        %v5227 = vmul.f32 %v1880, %v3676
        %v5228 = vmul.f32 %v1882, %v3678
        %v5229 = vmul.f32 %v2233, %v4029
        %v5230 = vmul.f32 %v2235, %v4031
        %v5231 = vmul.f32 %v2586, %v4382
        %v5232 = vmul.f32 %v2588, %v4384
        %v5233 = vmul.f32 %v2939, %v4735
        %v5234 = vmul.f32 %v2941, %v4737
        %v5235 = vmul.f32 %v1884, %v3680
        %v5236 = vmul.f32 %v1886, %v3682
        %v5237 = vmul.f32 %v2237, %v4033
        %v5238 = vmul.f32 %v2239, %v4035
        %v5239 = vmul.f32 %v2590, %v4386
        %v5240 = vmul.f32 %v2592, %v4388
        %v5241 = vmul.f32 %v2943, %v4739
        %v5242 = vmul.f32 %v2945, %v4741
        %v5243 = vmul.f32 %v1890, %v3686
        %v5244 = vmul.f32 %v1892, %v3688
        %v5245 = vmul.f32 %v2243, %v4039
        %v5246 = vmul.f32 %v2245, %v4041
        %v5247 = vmul.f32 %v2596, %v4392
        %v5248 = vmul.f32 %v2598, %v4394
        %v5249 = vmul.f32 %v2949, %v4745
        %v5250 = vmul.f32 %v2951, %v4747
        %v5251 = vmul.f32 %v1894, %v3690
        %v5252 = vmul.f32 %v1896, %v3692
        %v5253 = vmul.f32 %v2247, %v4043
        %v5254 = vmul.f32 %v2249, %v4045
        %v5255 = vmul.f32 %v2600, %v4396
        %v5256 = vmul.f32 %v2602, %v4398
        %v5257 = vmul.f32 %v2953, %v4749
        %v5258 = vmul.f32 %v2955, %v4751
        %v5259 = vmul.f32 %v1900, %v3696
        %v5260 = vmul.f32 %v1902, %v3698
        %v5261 = vmul.f32 %v2253, %v4049
        %v5262 = vmul.f32 %v2255, %v4051
        %v5263 = vmul.f32 %v2606, %v4402
        %v5264 = vmul.f32 %v2608, %v4404
        %v5265 = vmul.f32 %v2959, %v4755
        %v5266 = vmul.f32 %v2961, %v4757
        %v5267 = vmul.f32 %v1904, %v3700
        %v5268 = vmul.f32 %v1906, %v3702
        %v5269 = vmul.f32 %v2257, %v4053
        %v5270 = vmul.f32 %v2259, %v4055
        %v5271 = vmul.f32 %v2610, %v4406
        %v5272 = vmul.f32 %v2612, %v4408
        %v5273 = vmul.f32 %v2963, %v4759
        %v5274 = vmul.f32 %v2965, %v4761
        %v5275 = vsub.f32 %v4763, %v5019
        %v5276 = vsub.f32 %v4764, %v5020
        %v5277 = vsub.f32 %v4765, %v5021
        %v5278 = vsub.f32 %v4766, %v5022
        %v5279 = vsub.f32 %v4767, %v5023
        %v5280 = vsub.f32 %v4768, %v5024
        %v5281 = vsub.f32 %v4769, %v5025
        %v5282 = vsub.f32 %v4770, %v5026
        %v5283 = vsub.f32 %v4771, %v5027
        %v5284 = vsub.f32 %v4772, %v5028
        %v5285 = vsub.f32 %v4773, %v5029
        %v5286 = vsub.f32 %v4774, %v5030
        %v5287 = vsub.f32 %v4775, %v5031
        %v5288 = vsub.f32 %v4776, %v5032
        %v5289 = vsub.f32 %v4777, %v5033
        %v5290 = vsub.f32 %v4778, %v5034
        %v5291 = vsub.f32 %v4779, %v5035
        %v5292 = vsub.f32 %v4780, %v5036
        %v5293 = vsub.f32 %v4781, %v5037
        %v5294 = vsub.f32 %v4782, %v5038
        %v5295 = vsub.f32 %v4783, %v5039
        %v5296 = vsub.f32 %v4784, %v5040
        %v5297 = vsub.f32 %v4785, %v5041
        %v5298 = vsub.f32 %v4786, %v5042
        %v5299 = vsub.f32 %v4787, %v5043
        %v5300 = vsub.f32 %v4788, %v5044
        %v5301 = vsub.f32 %v4789, %v5045
        %v5302 = vsub.f32 %v4790, %v5046
        %v5303 = vsub.f32 %v4791, %v5047
        %v5304 = vsub.f32 %v4792, %v5048
        %v5305 = vsub.f32 %v4793, %v5049
        %v5306 = vsub.f32 %v4794, %v5050
        %v5307 = vsub.f32 %v4795, %v5051
        %v5308 = vsub.f32 %v4796, %v5052
        %v5309 = vsub.f32 %v4797, %v5053
        %v5310 = vsub.f32 %v4798, %v5054
        %v5311 = vsub.f32 %v4799, %v5055
        %v5312 = vsub.f32 %v4800, %v5056
        %v5313 = vsub.f32 %v4801, %v5057
        %v5314 = vsub.f32 %v4802, %v5058
        %v5315 = vsub.f32 %v4803, %v5059
        %v5316 = vsub.f32 %v4804, %v5060
        %v5317 = vsub.f32 %v4805, %v5061
        %v5318 = vsub.f32 %v4806, %v5062
        %v5319 = vsub.f32 %v4807, %v5063
        %v5320 = vsub.f32 %v4808, %v5064
        %v5321 = vsub.f32 %v4809, %v5065
        %v5322 = vsub.f32 %v4810, %v5066
        %v5323 = vsub.f32 %v4811, %v5067
        %v5324 = vsub.f32 %v4812, %v5068
        %v5325 = vsub.f32 %v4813, %v5069
        %v5326 = vsub.f32 %v4814, %v5070
        %v5327 = vsub.f32 %v4815, %v5071
        %v5328 = vsub.f32 %v4816, %v5072
        %v5329 = vsub.f32 %v4817, %v5073
        %v5330 = vsub.f32 %v4818, %v5074
        %v5331 = vsub.f32 %v4819, %v5075
        %v5332 = vsub.f32 %v4820, %v5076
        %v5333 = vsub.f32 %v4821, %v5077
        %v5334 = vsub.f32 %v4822, %v5078
        %v5335 = vsub.f32 %v4823, %v5079
        %v5336 = vsub.f32 %v4824, %v5080
        %v5337 = vsub.f32 %v4825, %v5081
        %v5338 = vsub.f32 %v4826, %v5082
        %v5339 = vsub.f32 %v4827, %v5083
        %v5340 = vsub.f32 %v4828, %v5084
        %v5341 = vsub.f32 %v4829, %v5085
        %v5342 = vsub.f32 %v4830, %v5086
        %v5343 = vsub.f32 %v4831, %v5087
        %v5344 = vsub.f32 %v4832, %v5088
        %v5345 = vsub.f32 %v4833, %v5089
        %v5346 = vsub.f32 %v4834, %v5090
        %v5347 = vsub.f32 %v4835, %v5091
        %v5348 = vsub.f32 %v4836, %v5092
        %v5349 = vsub.f32 %v4837, %v5093
        %v5350 = vsub.f32 %v4838, %v5094
        %v5351 = vsub.f32 %v4839, %v5095
        %v5352 = vsub.f32 %v4840, %v5096
        %v5353 = vsub.f32 %v4841, %v5097
        %v5354 = vsub.f32 %v4842, %v5098
        %v5355 = vsub.f32 %v4843, %v5099
        %v5356 = vsub.f32 %v4844, %v5100
        %v5357 = vsub.f32 %v4845, %v5101
        %v5358 = vsub.f32 %v4846, %v5102
        %v5359 = vsub.f32 %v4847, %v5103
        %v5360 = vsub.f32 %v4848, %v5104
        %v5361 = vsub.f32 %v4849, %v5105
        %v5362 = vsub.f32 %v4850, %v5106
        %v5363 = vsub.f32 %v4851, %v5107
        %v5364 = vsub.f32 %v4852, %v5108
        %v5365 = vsub.f32 %v4853, %v5109
        %v5366 = vsub.f32 %v4854, %v5110
        %v5367 = vsub.f32 %v4855, %v5111
        %v5368 = vsub.f32 %v4856, %v5112
        %v5369 = vsub.f32 %v4857, %v5113
        %v5370 = vsub.f32 %v4858, %v5114
        %v5371 = vsub.f32 %v4859, %v5115
        %v5372 = vsub.f32 %v4860, %v5116
        %v5373 = vsub.f32 %v4861, %v5117
        %v5374 = vsub.f32 %v4862, %v5118
        %v5375 = vsub.f32 %v4863, %v5119
        %v5376 = vsub.f32 %v4864, %v5120
        %v5377 = vsub.f32 %v4865, %v5121
        %v5378 = vsub.f32 %v4866, %v5122
        %v5379 = vsub.f32 %v4867, %v5123
        %v5380 = vsub.f32 %v4868, %v5124
        %v5381 = vsub.f32 %v4869, %v5125
        %v5382 = vsub.f32 %v4870, %v5126
        %v5383 = vsub.f32 %v4871, %v5127
        %v5384 = vsub.f32 %v4872, %v5128
        %v5385 = vsub.f32 %v4873, %v5129
        %v5386 = vsub.f32 %v4874, %v5130
        %v5387 = vsub.f32 %v4875, %v5131
        %v5388 = vsub.f32 %v4876, %v5132
        %v5389 = vsub.f32 %v4877, %v5133
        %v5390 = vsub.f32 %v4878, %v5134
        %v5391 = vsub.f32 %v4879, %v5135
        %v5392 = vsub.f32 %v4880, %v5136
        %v5393 = vsub.f32 %v4881, %v5137
        %v5394 = vsub.f32 %v4882, %v5138
        %v5395 = vsub.f32 %v4883, %v5139
        %v5396 = vsub.f32 %v4884, %v5140
        %v5397 = vsub.f32 %v4885, %v5141
        %v5398 = vsub.f32 %v4886, %v5142
        %v5399 = vsub.f32 %v4887, %v5143
        %v5400 = vsub.f32 %v4888, %v5144
        %v5401 = vsub.f32 %v4889, %v5145
        %v5402 = vsub.f32 %v4890, %v5146
        %v5403 = vsub.f32 %v4891, %v5147
        %v5404 = vsub.f32 %v4892, %v5148
        %v5405 = vsub.f32 %v4893, %v5149
        %v5406 = vsub.f32 %v4894, %v5150
        %v5407 = vsub.f32 %v4895, %v5151
        %v5408 = vsub.f32 %v4896, %v5152
        %v5409 = vsub.f32 %v4897, %v5153
        %v5410 = vsub.f32 %v4898, %v5154
        %v5411 = vsub.f32 %v4899, %v5155
        %v5412 = vsub.f32 %v4900, %v5156
        %v5413 = vsub.f32 %v4901, %v5157
        %v5414 = vsub.f32 %v4902, %v5158
        %v5415 = vsub.f32 %v4903, %v5159
        %v5416 = vsub.f32 %v4904, %v5160
        %v5417 = vsub.f32 %v4905, %v5161
        %v5418 = vsub.f32 %v4906, %v5162
        %v5419 = vsub.f32 %v4907, %v5163
        %v5420 = vsub.f32 %v4908, %v5164
        %v5421 = vsub.f32 %v4909, %v5165
        %v5422 = vsub.f32 %v4910, %v5166
        %v5423 = vsub.f32 %v4911, %v5167
        %v5424 = vsub.f32 %v4912, %v5168
        %v5425 = vsub.f32 %v4913, %v5169
        %v5426 = vsub.f32 %v4914, %v5170
        %v5427 = vsub.f32 %v4915, %v5171
        %v5428 = vsub.f32 %v4916, %v5172
        %v5429 = vsub.f32 %v4917, %v5173
        %v5430 = vsub.f32 %v4918, %v5174
        %v5431 = vsub.f32 %v4919, %v5175
        %v5432 = vsub.f32 %v4920, %v5176
        %v5433 = vsub.f32 %v4921, %v5177
        %v5434 = vsub.f32 %v4922, %v5178
        %v5435 = vsub.f32 %v4923, %v5179
        %v5436 = vsub.f32 %v4924, %v5180
        %v5437 = vsub.f32 %v4925, %v5181
        %v5438 = vsub.f32 %v4926, %v5182
        %v5439 = vsub.f32 %v4927, %v5183
        %v5440 = vsub.f32 %v4928, %v5184
        %v5441 = vsub.f32 %v4929, %v5185
        %v5442 = vsub.f32 %v4930, %v5186
        %v5443 = vsub.f32 %v4931, %v5187
        %v5444 = vsub.f32 %v4932, %v5188
        %v5445 = vsub.f32 %v4933, %v5189
        %v5446 = vsub.f32 %v4934, %v5190
        %v5447 = vsub.f32 %v4935, %v5191
        %v5448 = vsub.f32 %v4936, %v5192
        %v5449 = vsub.f32 %v4937, %v5193
        %v5450 = vsub.f32 %v4938, %v5194
        %v5451 = vsub.f32 %v4939, %v5195
        %v5452 = vsub.f32 %v4940, %v5196
        %v5453 = vsub.f32 %v4941, %v5197
        %v5454 = vsub.f32 %v4942, %v5198
        %v5455 = vsub.f32 %v4943, %v5199
        %v5456 = vsub.f32 %v4944, %v5200
        %v5457 = vsub.f32 %v4945, %v5201
        %v5458 = vsub.f32 %v4946, %v5202
        %v5459 = vsub.f32 %v4947, %v5203
        %v5460 = vsub.f32 %v4948, %v5204
        %v5461 = vsub.f32 %v4949, %v5205
        %v5462 = vsub.f32 %v4950, %v5206
        %v5463 = vsub.f32 %v4951, %v5207
        %v5464 = vsub.f32 %v4952, %v5208
        %v5465 = vsub.f32 %v4953, %v5209
        %v5466 = vsub.f32 %v4954, %v5210
        %v5467 = vsub.f32 %v4955, %v5211
        %v5468 = vsub.f32 %v4956, %v5212
        %v5469 = vsub.f32 %v4957, %v5213
        %v5470 = vsub.f32 %v4958, %v5214
        %v5471 = vsub.f32 %v4959, %v5215
        %v5472 = vsub.f32 %v4960, %v5216
        %v5473 = vsub.f32 %v4961, %v5217
        %v5474 = vsub.f32 %v4962, %v5218
        %v5475 = vsub.f32 %v4963, %v5219
        %v5476 = vsub.f32 %v4964, %v5220
        %v5477 = vsub.f32 %v4965, %v5221
        %v5478 = vsub.f32 %v4966, %v5222
        %v5479 = vsub.f32 %v4967, %v5223
        %v5480 = vsub.f32 %v4968, %v5224
        %v5481 = vsub.f32 %v4969, %v5225
        %v5482 = vsub.f32 %v4970, %v5226
        %v5483 = vsub.f32 %v4971, %v5227
        %v5484 = vsub.f32 %v4972, %v5228
        %v5485 = vsub.f32 %v4973, %v5229
        %v5486 = vsub.f32 %v4974, %v5230
        %v5487 = vsub.f32 %v4975, %v5231
        %v5488 = vsub.f32 %v4976, %v5232
        %v5489 = vsub.f32 %v4977, %v5233
        %v5490 = vsub.f32 %v4978, %v5234
        %v5491 = vsub.f32 %v4979, %v5235
        %v5492 = vsub.f32 %v4980, %v5236
        %v5493 = vsub.f32 %v4981, %v5237
        %v5494 = vsub.f32 %v4982, %v5238
        %v5495 = vsub.f32 %v4983, %v5239
        %v5496 = vsub.f32 %v4984, %v5240
        %v5497 = vsub.f32 %v4985, %v5241
        %v5498 = vsub.f32 %v4986, %v5242
        %v5499 = vsub.f32 %v4987, %v5243
        %v5500 = vsub.f32 %v4988, %v5244
        %v5501 = vsub.f32 %v4989, %v5245
        %v5502 = vsub.f32 %v4990, %v5246
        %v5503 = vsub.f32 %v4991, %v5247
        %v5504 = vsub.f32 %v4992, %v5248
        %v5505 = vsub.f32 %v4993, %v5249
        %v5506 = vsub.f32 %v4994, %v5250
        %v5507 = vsub.f32 %v4995, %v5251
        %v5508 = vsub.f32 %v4996, %v5252
        %v5509 = vsub.f32 %v4997, %v5253
        %v5510 = vsub.f32 %v4998, %v5254
        %v5511 = vsub.f32 %v4999, %v5255
        %v5512 = vsub.f32 %v5000, %v5256
        %v5513 = vsub.f32 %v5001, %v5257
        %v5514 = vsub.f32 %v5002, %v5258
        %v5515 = vsub.f32 %v5003, %v5259
        %v5516 = vsub.f32 %v5004, %v5260
        %v5517 = vsub.f32 %v5005, %v5261
        %v5518 = vsub.f32 %v5006, %v5262
        %v5519 = vsub.f32 %v5007, %v5263
        %v5520 = vsub.f32 %v5008, %v5264
        %v5521 = vsub.f32 %v5009, %v5265
        %v5522 = vsub.f32 %v5010, %v5266
        %v5523 = vsub.f32 %v5011, %v5267
        %v5524 = vsub.f32 %v5012, %v5268
        %v5525 = vsub.f32 %v5013, %v5269
        %v5526 = vsub.f32 %v5014, %v5270
        %v5527 = vsub.f32 %v5015, %v5271
        %v5528 = vsub.f32 %v5016, %v5272
        %v5529 = vsub.f32 %v5017, %v5273
        %v5530 = vsub.f32 %v5018, %v5274
        %v5531 = vmul.f32 %v1590, %v3546
        %v5532 = vmul.f32 %v1592, %v3548
        %v5533 = vmul.f32 %v1943, %v3899
        %v5534 = vmul.f32 %v1945, %v3901
        %v5535 = vmul.f32 %v2296, %v4252
        %v5536 = vmul.f32 %v2298, %v4254
        %v5537 = vmul.f32 %v2649, %v4605
        %v5538 = vmul.f32 %v2651, %v4607
        %v5539 = vmul.f32 %v1594, %v3550
        %v5540 = vmul.f32 %v1596, %v3552
        %v5541 = vmul.f32 %v1947, %v3903
        %v5542 = vmul.f32 %v1949, %v3905
        %v5543 = vmul.f32 %v2300, %v4256
        %v5544 = vmul.f32 %v2302, %v4258
        %v5545 = vmul.f32 %v2653, %v4609
        %v5546 = vmul.f32 %v2655, %v4611
        %v5547 = vmul.f32 %v1600, %v3556
        %v5548 = vmul.f32 %v1602, %v3558
        %v5549 = vmul.f32 %v1953, %v3909
        %v5550 = vmul.f32 %v1955, %v3911
        %v5551 = vmul.f32 %v2306, %v4262
        %v5552 = vmul.f32 %v2308, %v4264
        %v5553 = vmul.f32 %v2659, %v4615
        %v5554 = vmul.f32 %v2661, %v4617
        %v5555 = vmul.f32 %v1604, %v3560
        %v5556 = vmul.f32 %v1606, %v3562
        %v5557 = vmul.f32 %v1957, %v3913
        %v5558 = vmul.f32 %v1959, %v3915
        %v5559 = vmul.f32 %v2310, %v4266
        %v5560 = vmul.f32 %v2312, %v4268
        %v5561 = vmul.f32 %v2663, %v4619
        %v5562 = vmul.f32 %v2665, %v4621
        %v5563 = vmul.f32 %v1610, %v3566
        %v5564 = vmul.f32 %v1612, %v3568
        %v5565 = vmul.f32 %v1963, %v3919
        %v5566 = vmul.f32 %v1965, %v3921
        %v5567 = vmul.f32 %v2316, %v4272
        %v5568 = vmul.f32 %v2318, %v4274
        %v5569 = vmul.f32 %v2669, %v4625
        %v5570 = vmul.f32 %v2671, %v4627
        %v5571 = vmul.f32 %v1614, %v3570
        %v5572 = vmul.f32 %v1616, %v3572
        %v5573 = vmul.f32 %v1967, %v3923
        %v5574 = vmul.f32 %v1969, %v3925
        %v5575 = vmul.f32 %v2320, %v4276
        %v5576 = vmul.f32 %v2322, %v4278
        %v5577 = vmul.f32 %v2673, %v4629
        %v5578 = vmul.f32 %v2675, %v4631
        %v5579 = vmul.f32 %v1620, %v3576
        %v5580 = vmul.f32 %v1622, %v3578
        %v5581 = vmul.f32 %v1973, %v3929
        %v5582 = vmul.f32 %v1975, %v3931
        %v5583 = vmul.f32 %v2326, %v4282
        %v5584 = vmul.f32 %v2328, %v4284
        %v5585 = vmul.f32 %v2679, %v4635
        %v5586 = vmul.f32 %v2681, %v4637
        %v5587 = vmul.f32 %v1624, %v3580
        %v5588 = vmul.f32 %v1626, %v3582
        %v5589 = vmul.f32 %v1977, %v3933
        %v5590 = vmul.f32 %v1979, %v3935
        %v5591 = vmul.f32 %v2330, %v4286
        %v5592 = vmul.f32 %v2332, %v4288
        %v5593 = vmul.f32 %v2683, %v4639
        %v5594 = vmul.f32 %v2685, %v4641
        %v5595 = vmul.f32 %v1630, %v3586
        %v5596 = vmul.f32 %v1632, %v3588
        %v5597 = vmul.f32 %v1983, %v3939
        %v5598 = vmul.f32 %v1985, %v3941
        %v5599 = vmul.f32 %v2336, %v4292
        %v5600 = vmul.f32 %v2338, %v4294
        %v5601 = vmul.f32 %v2689, %v4645
        %v5602 = vmul.f32 %v2691, %v4647
        %v5603 = vmul.f32 %v1634, %v3590
        %v5604 = vmul.f32 %v1636, %v3592
        %v5605 = vmul.f32 %v1987, %v3943
        %v5606 = vmul.f32 %v1989, %v3945
        %v5607 = vmul.f32 %v2340, %v4296
        %v5608 = vmul.f32 %v2342, %v4298
        %v5609 = vmul.f32 %v2693, %v4649
        %v5610 = vmul.f32 %v2695, %v4651
        %v5611 = vmul.f32 %v1640, %v3596
        %v5612 = vmul.f32 %v1642, %v3598
        %v5613 = vmul.f32 %v1993, %v3949
        %v5614 = vmul.f32 %v1995, %v3951
        %v5615 = vmul.f32 %v2346, %v4302
        %v5616 = vmul.f32 %v2348, %v4304
        %v5617 = vmul.f32 %v2699, %v4655
        %v5618 = vmul.f32 %v2701, %v4657
        %v5619 = vmul.f32 %v1644, %v3600
        %v5620 = vmul.f32 %v1646, %v3602
        %v5621 = vmul.f32 %v1997, %v3953
        %v5622 = vmul.f32 %v1999, %v3955
        %v5623 = vmul.f32 %v2350, %v4306
        %v5624 = vmul.f32 %v2352, %v4308
        %v5625 = vmul.f32 %v2703, %v4659
        %v5626 = vmul.f32 %v2705, %v4661
        %v5627 = vmul.f32 %v1650, %v3606
        %v5628 = vmul.f32 %v1652, %v3608
        %v5629 = vmul.f32 %v2003, %v3959
        %v5630 = vmul.f32 %v2005, %v3961
        %v5631 = vmul.f32 %v2356, %v4312
        %v5632 = vmul.f32 %v2358, %v4314
        %v5633 = vmul.f32 %v2709, %v4665
        %v5634 = vmul.f32 %v2711, %v4667
        %v5635 = vmul.f32 %v1654, %v3610
        %v5636 = vmul.f32 %v1656, %v3612
        %v5637 = vmul.f32 %v2007, %v3963
        %v5638 = vmul.f32 %v2009, %v3965
        %v5639 = vmul.f32 %v2360, %v4316
        %v5640 = vmul.f32 %v2362, %v4318
        %v5641 = vmul.f32 %v2713, %v4669
        %v5642 = vmul.f32 %v2715, %v4671
        %v5643 = vmul.f32 %v1660, %v3616
        %v5644 = vmul.f32 %v1662, %v3618
        %v5645 = vmul.f32 %v2013, %v3969
        %v5646 = vmul.f32 %v2015, %v3971
        %v5647 = vmul.f32 %v2366, %v4322
        %v5648 = vmul.f32 %v2368, %v4324
        %v5649 = vmul.f32 %v2719, %v4675
        %v5650 = vmul.f32 %v2721, %v4677
        %v5651 = vmul.f32 %v1664, %v3620
        %v5652 = vmul.f32 %v1666, %v3622
        %v5653 = vmul.f32 %v2017, %v3973
        %v5654 = vmul.f32 %v2019, %v3975
        %v5655 = vmul.f32 %v2370, %v4326
        %v5656 = vmul.f32 %v2372, %v4328
        %v5657 = vmul.f32 %v2723, %v4679
        %v5658 = vmul.f32 %v2725, %v4681
        %v5659 = vmul.f32 %v1670, %v3626
        %v5660 = vmul.f32 %v1672, %v3628
        %v5661 = vmul.f32 %v2023, %v3979
        %v5662 = vmul.f32 %v2025, %v3981
        %v5663 = vmul.f32 %v2376, %v4332
        %v5664 = vmul.f32 %v2378, %v4334
        %v5665 = vmul.f32 %v2729, %v4685
        %v5666 = vmul.f32 %v2731, %v4687
        %v5667 = vmul.f32 %v1674, %v3630
        %v5668 = vmul.f32 %v1676, %v3632
        %v5669 = vmul.f32 %v2027, %v3983
        %v5670 = vmul.f32 %v2029, %v3985
        %v5671 = vmul.f32 %v2380, %v4336
        %v5672 = vmul.f32 %v2382, %v4338
        %v5673 = vmul.f32 %v2733, %v4689
        %v5674 = vmul.f32 %v2735, %v4691
        %v5675 = vmul.f32 %v1680, %v3636
        %v5676 = vmul.f32 %v1682, %v3638
        %v5677 = vmul.f32 %v2033, %v3989
        %v5678 = vmul.f32 %v2035, %v3991
        %v5679 = vmul.f32 %v2386, %v4342
        %v5680 = vmul.f32 %v2388, %v4344
        %v5681 = vmul.f32 %v2739, %v4695
        %v5682 = vmul.f32 %v2741, %v4697
        %v5683 = vmul.f32 %v1684, %v3640
        %v5684 = vmul.f32 %v1686, %v3642
        %v5685 = vmul.f32 %v2037, %v3993
        %v5686 = vmul.f32 %v2039, %v3995
        %v5687 = vmul.f32 %v2390, %v4346
        %v5688 = vmul.f32 %v2392, %v4348
        %v5689 = vmul.f32 %v2743, %v4699
        %v5690 = vmul.f32 %v2745, %v4701
        %v5691 = vmul.f32 %v1690, %v3646
        %v5692 = vmul.f32 %v1692, %v3648
        %v5693 = vmul.f32 %v2043, %v3999
        %v5694 = vmul.f32 %v2045, %v4001
        %v5695 = vmul.f32 %v2396, %v4352
        %v5696 = vmul.f32 %v2398, %v4354
        %v5697 = vmul.f32 %v2749, %v4705
        %v5698 = vmul.f32 %v2751, %v4707
        %v5699 = vmul.f32 %v1694, %v3650
        %v5700 = vmul.f32 %v1696, %v3652
        %v5701 = vmul.f32 %v2047, %v4003
        %v5702 = vmul.f32 %v2049, %v4005
        %v5703 = vmul.f32 %v2400, %v4356
        %v5704 = vmul.f32 %v2402, %v4358
        %v5705 = vmul.f32 %v2753, %v4709
        %v5706 = vmul.f32 %v2755, %v4711
        %v5707 = vmul.f32 %v1700, %v3656
        %v5708 = vmul.f32 %v1702, %v3658
        %v5709 = vmul.f32 %v2053, %v4009
        %v5710 = vmul.f32 %v2055, %v4011
        %v5711 = vmul.f32 %v2406, %v4362
        %v5712 = vmul.f32 %v2408, %v4364
        %v5713 = vmul.f32 %v2759, %v4715
        %v5714 = vmul.f32 %v2761, %v4717
        %v5715 = vmul.f32 %v1704, %v3660
        %v5716 = vmul.f32 %v1706, %v3662
        %v5717 = vmul.f32 %v2057, %v4013
        %v5718 = vmul.f32 %v2059, %v4015
        %v5719 = vmul.f32 %v2410, %v4366
        %v5720 = vmul.f32 %v2412, %v4368
        %v5721 = vmul.f32 %v2763, %v4719
        %v5722 = vmul.f32 %v2765, %v4721
        %v5723 = vmul.f32 %v1710, %v3666
        %v5724 = vmul.f32 %v1712, %v3668
        %v5725 = vmul.f32 %v2063, %v4019
        %v5726 = vmul.f32 %v2065, %v4021
        %v5727 = vmul.f32 %v2416, %v4372
        %v5728 = vmul.f32 %v2418, %v4374
        %v5729 = vmul.f32 %v2769, %v4725
        %v5730 = vmul.f32 %v2771, %v4727
        %v5731 = vmul.f32 %v1714, %v3670
        %v5732 = vmul.f32 %v1716, %v3672
        %v5733 = vmul.f32 %v2067, %v4023
        %v5734 = vmul.f32 %v2069, %v4025
        %v5735 = vmul.f32 %v2420, %v4376
        %v5736 = vmul.f32 %v2422, %v4378
        %v5737 = vmul.f32 %v2773, %v4729
        %v5738 = vmul.f32 %v2775, %v4731
        %v5739 = vmul.f32 %v1720, %v3676
        %v5740 = vmul.f32 %v1722, %v3678
        %v5741 = vmul.f32 %v2073, %v4029
        %v5742 = vmul.f32 %v2075, %v4031
        %v5743 = vmul.f32 %v2426, %v4382
        %v5744 = vmul.f32 %v2428, %v4384
        %v5745 = vmul.f32 %v2779, %v4735
        %v5746 = vmul.f32 %v2781, %v4737
        %v5747 = vmul.f32 %v1724, %v3680
        %v5748 = vmul.f32 %v1726, %v3682
        %v5749 = vmul.f32 %v2077, %v4033
        %v5750 = vmul.f32 %v2079, %v4035
        %v5751 = vmul.f32 %v2430, %v4386
        %v5752 = vmul.f32 %v2432, %v4388
        %v5753 = vmul.f32 %v2783, %v4739
        %v5754 = vmul.f32 %v2785, %v4741
        %v5755 = vmul.f32 %v1730, %v3686
        %v5756 = vmul.f32 %v1732, %v3688
        %v5757 = vmul.f32 %v2083, %v4039
        %v5758 = vmul.f32 %v2085, %v4041
        %v5759 = vmul.f32 %v2436, %v4392
        %v5760 = vmul.f32 %v2438, %v4394
        %v5761 = vmul.f32 %v2789, %v4745
        %v5762 = vmul.f32 %v2791, %v4747
        %v5763 = vmul.f32 %v1734, %v3690
        %v5764 = vmul.f32 %v1736, %v3692
        %v5765 = vmul.f32 %v2087, %v4043
        %v5766 = vmul.f32 %v2089, %v4045
        %v5767 = vmul.f32 %v2440, %v4396
        %v5768 = vmul.f32 %v2442, %v4398
        %v5769 = vmul.f32 %v2793, %v4749
        %v5770 = vmul.f32 %v2795, %v4751
        %v5771 = vmul.f32 %v1740, %v3696
        %v5772 = vmul.f32 %v1742, %v3698
        %v5773 = vmul.f32 %v2093, %v4049
        %v5774 = vmul.f32 %v2095, %v4051
        %v5775 = vmul.f32 %v2446, %v4402
        %v5776 = vmul.f32 %v2448, %v4404
        %v5777 = vmul.f32 %v2799, %v4755
        %v5778 = vmul.f32 %v2801, %v4757
        %v5779 = vmul.f32 %v1744, %v3700
        %v5780 = vmul.f32 %v1746, %v3702
        %v5781 = vmul.f32 %v2097, %v4053
        %v5782 = vmul.f32 %v2099, %v4055
        %v5783 = vmul.f32 %v2450, %v4406
        %v5784 = vmul.f32 %v2452, %v4408
        %v5785 = vmul.f32 %v2803, %v4759
        %v5786 = vmul.f32 %v2805, %v4761
        %v5787 = vmul.f32 %v1750, %v3386
        %v5788 = vmul.f32 %v1752, %v3388
        %v5789 = vmul.f32 %v2103, %v3739
        %v5790 = vmul.f32 %v2105, %v3741
        %v5791 = vmul.f32 %v2456, %v4092
        %v5792 = vmul.f32 %v2458, %v4094
        %v5793 = vmul.f32 %v2809, %v4445
        %v5794 = vmul.f32 %v2811, %v4447
        %v5795 = vmul.f32 %v1754, %v3390
        %v5796 = vmul.f32 %v1756, %v3392
        %v5797 = vmul.f32 %v2107, %v3743
        %v5798 = vmul.f32 %v2109, %v3745
        %v5799 = vmul.f32 %v2460, %v4096
        %v5800 = vmul.f32 %v2462, %v4098
        %v5801 = vmul.f32 %v2813, %v4449
        %v5802 = vmul.f32 %v2815, %v4451
        %v5803 = vmul.f32 %v1760, %v3396
        %v5804 = vmul.f32 %v1762, %v3398
        %v5805 = vmul.f32 %v2113, %v3749
        %v5806 = vmul.f32 %v2115, %v3751
        %v5807 = vmul.f32 %v2466, %v4102
        %v5808 = vmul.f32 %v2468, %v4104
        %v5809 = vmul.f32 %v2819, %v4455
        %v5810 = vmul.f32 %v2821, %v4457
        %v5811 = vmul.f32 %v1764, %v3400
        %v5812 = vmul.f32 %v1766, %v3402
        %v5813 = vmul.f32 %v2117, %v3753
        %v5814 = vmul.f32 %v2119, %v3755
        %v5815 = vmul.f32 %v2470, %v4106
        %v5816 = vmul.f32 %v2472, %v4108
        %v5817 = vmul.f32 %v2823, %v4459
        %v5818 = vmul.f32 %v2825, %v4461
        %v5819 = vmul.f32 %v1770, %v3406
        %v5820 = vmul.f32 %v1772, %v3408
        %v5821 = vmul.f32 %v2123, %v3759
        %v5822 = vmul.f32 %v2125, %v3761
        %v5823 = vmul.f32 %v2476, %v4112
        %v5824 = vmul.f32 %v2478, %v4114
        %v5825 = vmul.f32 %v2829, %v4465
        %v5826 = vmul.f32 %v2831, %v4467
        %v5827 = vmul.f32 %v1774, %v3410
        %v5828 = vmul.f32 %v1776, %v3412
        %v5829 = vmul.f32 %v2127, %v3763
        %v5830 = vmul.f32 %v2129, %v3765
        %v5831 = vmul.f32 %v2480, %v4116
        %v5832 = vmul.f32 %v2482, %v4118
        %v5833 = vmul.f32 %v2833, %v4469
        %v5834 = vmul.f32 %v2835, %v4471
        %v5835 = vmul.f32 %v1780, %v3416
        %v5836 = vmul.f32 %v1782, %v3418
        %v5837 = vmul.f32 %v2133, %v3769
        %v5838 = vmul.f32 %v2135, %v3771
        %v5839 = vmul.f32 %v2486, %v4122
        %v5840 = vmul.f32 %v2488, %v4124
        %v5841 = vmul.f32 %v2839, %v4475
        %v5842 = vmul.f32 %v2841, %v4477
        %v5843 = vmul.f32 %v1784, %v3420
        %v5844 = vmul.f32 %v1786, %v3422
        %v5845 = vmul.f32 %v2137, %v3773
        %v5846 = vmul.f32 %v2139, %v3775
        %v5847 = vmul.f32 %v2490, %v4126
        %v5848 = vmul.f32 %v2492, %v4128
        %v5849 = vmul.f32 %v2843, %v4479
        %v5850 = vmul.f32 %v2845, %v4481
        %v5851 = vmul.f32 %v1790, %v3426
        %v5852 = vmul.f32 %v1792, %v3428
        %v5853 = vmul.f32 %v2143, %v3779
        %v5854 = vmul.f32 %v2145, %v3781
        %v5855 = vmul.f32 %v2496, %v4132
        %v5856 = vmul.f32 %v2498, %v4134
        %v5857 = vmul.f32 %v2849, %v4485
        %v5858 = vmul.f32 %v2851, %v4487
        %v5859 = vmul.f32 %v1794, %v3430
        %v5860 = vmul.f32 %v1796, %v3432
        %v5861 = vmul.f32 %v2147, %v3783
        %v5862 = vmul.f32 %v2149, %v3785
        %v5863 = vmul.f32 %v2500, %v4136
        %v5864 = vmul.f32 %v2502, %v4138
        %v5865 = vmul.f32 %v2853, %v4489
        %v5866 = vmul.f32 %v2855, %v4491
        %v5867 = vmul.f32 %v1800, %v3436
        %v5868 = vmul.f32 %v1802, %v3438
        %v5869 = vmul.f32 %v2153, %v3789
        %v5870 = vmul.f32 %v2155, %v3791
        %v5871 = vmul.f32 %v2506, %v4142
        %v5872 = vmul.f32 %v2508, %v4144
        %v5873 = vmul.f32 %v2859, %v4495
        %v5874 = vmul.f32 %v2861, %v4497
        %v5875 = vmul.f32 %v1804, %v3440
        %v5876 = vmul.f32 %v1806, %v3442
        %v5877 = vmul.f32 %v2157, %v3793
        %v5878 = vmul.f32 %v2159, %v3795
        %v5879 = vmul.f32 %v2510, %v4146
        %v5880 = vmul.f32 %v2512, %v4148
        %v5881 = vmul.f32 %v2863, %v4499
        %v5882 = vmul.f32 %v2865, %v4501
        %v5883 = vmul.f32 %v1810, %v3446
        %v5884 = vmul.f32 %v1812, %v3448
        %v5885 = vmul.f32 %v2163, %v3799
        %v5886 = vmul.f32 %v2165, %v3801
        %v5887 = vmul.f32 %v2516, %v4152
        %v5888 = vmul.f32 %v2518, %v4154
        %v5889 = vmul.f32 %v2869, %v4505
        %v5890 = vmul.f32 %v2871, %v4507
        %v5891 = vmul.f32 %v1814, %v3450
        %v5892 = vmul.f32 %v1816, %v3452
        %v5893 = vmul.f32 %v2167, %v3803
        %v5894 = vmul.f32 %v2169, %v3805
        %v5895 = vmul.f32 %v2520, %v4156
        %v5896 = vmul.f32 %v2522, %v4158
        %v5897 = vmul.f32 %v2873, %v4509
        %v5898 = vmul.f32 %v2875, %v4511
        %v5899 = vmul.f32 %v1820, %v3456
        %v5900 = vmul.f32 %v1822, %v3458
        %v5901 = vmul.f32 %v2173, %v3809
        %v5902 = vmul.f32 %v2175, %v3811
        %v5903 = vmul.f32 %v2526, %v4162
        %v5904 = vmul.f32 %v2528, %v4164
        %v5905 = vmul.f32 %v2879, %v4515
        %v5906 = vmul.f32 %v2881, %v4517
        %v5907 = vmul.f32 %v1824, %v3460
        %v5908 = vmul.f32 %v1826, %v3462
        %v5909 = vmul.f32 %v2177, %v3813
        %v5910 = vmul.f32 %v2179, %v3815
        %v5911 = vmul.f32 %v2530, %v4166
        %v5912 = vmul.f32 %v2532, %v4168
        %v5913 = vmul.f32 %v2883, %v4519
        %v5914 = vmul.f32 %v2885, %v4521
        %v5915 = vmul.f32 %v1830, %v3466
        %v5916 = vmul.f32 %v1832, %v3468
        %v5917 = vmul.f32 %v2183, %v3819
        %v5918 = vmul.f32 %v2185, %v3821
        %v5919 = vmul.f32 %v2536, %v4172
        %v5920 = vmul.f32 %v2538, %v4174
        %v5921 = vmul.f32 %v2889, %v4525
        %v5922 = vmul.f32 %v2891, %v4527
        %v5923 = vmul.f32 %v1834, %v3470
        %v5924 = vmul.f32 %v1836, %v3472
        %v5925 = vmul.f32 %v2187, %v3823
        %v5926 = vmul.f32 %v2189, %v3825
        %v5927 = vmul.f32 %v2540, %v4176
        %v5928 = vmul.f32 %v2542, %v4178
        %v5929 = vmul.f32 %v2893, %v4529
        %v5930 = vmul.f32 %v2895, %v4531
        %v5931 = vmul.f32 %v1840, %v3476
        %v5932 = vmul.f32 %v1842, %v3478
        %v5933 = vmul.f32 %v2193, %v3829
        %v5934 = vmul.f32 %v2195, %v3831
        %v5935 = vmul.f32 %v2546, %v4182
        %v5936 = vmul.f32 %v2548, %v4184
        %v5937 = vmul.f32 %v2899, %v4535
        %v5938 = vmul.f32 %v2901, %v4537
        %v5939 = vmul.f32 %v1844, %v3480
        %v5940 = vmul.f32 %v1846, %v3482
        %v5941 = vmul.f32 %v2197, %v3833
        %v5942 = vmul.f32 %v2199, %v3835
        %v5943 = vmul.f32 %v2550, %v4186
        %v5944 = vmul.f32 %v2552, %v4188
        %v5945 = vmul.f32 %v2903, %v4539
        %v5946 = vmul.f32 %v2905, %v4541
        %v5947 = vmul.f32 %v1850, %v3486
        %v5948 = vmul.f32 %v1852, %v3488
        %v5949 = vmul.f32 %v2203, %v3839
        %v5950 = vmul.f32 %v2205, %v3841
        %v5951 = vmul.f32 %v2556, %v4192
        %v5952 = vmul.f32 %v2558, %v4194
        %v5953 = vmul.f32 %v2909, %v4545
        %v5954 = vmul.f32 %v2911, %v4547
        %v5955 = vmul.f32 %v1854, %v3490
        %v5956 = vmul.f32 %v1856, %v3492
        %v5957 = vmul.f32 %v2207, %v3843
        %v5958 = vmul.f32 %v2209, %v3845
        %v5959 = vmul.f32 %v2560, %v4196
        %v5960 = vmul.f32 %v2562, %v4198
        %v5961 = vmul.f32 %v2913, %v4549
        %v5962 = vmul.f32 %v2915, %v4551
        %v5963 = vmul.f32 %v1860, %v3496
        %v5964 = vmul.f32 %v1862, %v3498
        %v5965 = vmul.f32 %v2213, %v3849
        %v5966 = vmul.f32 %v2215, %v3851
        %v5967 = vmul.f32 %v2566, %v4202
        %v5968 = vmul.f32 %v2568, %v4204
        %v5969 = vmul.f32 %v2919, %v4555
        %v5970 = vmul.f32 %v2921, %v4557
        %v5971 = vmul.f32 %v1864, %v3500
        %v5972 = vmul.f32 %v1866, %v3502
        %v5973 = vmul.f32 %v2217, %v3853
        %v5974 = vmul.f32 %v2219, %v3855
        %v5975 = vmul.f32 %v2570, %v4206
        %v5976 = vmul.f32 %v2572, %v4208
        %v5977 = vmul.f32 %v2923, %v4559
        %v5978 = vmul.f32 %v2925, %v4561
        %v5979 = vmul.f32 %v1870, %v3506
        %v5980 = vmul.f32 %v1872, %v3508
        %v5981 = vmul.f32 %v2223, %v3859
        %v5982 = vmul.f32 %v2225, %v3861
        %v5983 = vmul.f32 %v2576, %v4212
        %v5984 = vmul.f32 %v2578, %v4214
        %v5985 = vmul.f32 %v2929, %v4565
        %v5986 = vmul.f32 %v2931, %v4567
        %v5987 = vmul.f32 %v1874, %v3510
        %v5988 = vmul.f32 %v1876, %v3512
        %v5989 = vmul.f32 %v2227, %v3863
        %v5990 = vmul.f32 %v2229, %v3865
        %v5991 = vmul.f32 %v2580, %v4216
        %v5992 = vmul.f32 %v2582, %v4218
        %v5993 = vmul.f32 %v2933, %v4569
        %v5994 = vmul.f32 %v2935, %v4571
        %v5995 = vmul.f32 %v1880, %v3516
        %v5996 = vmul.f32 %v1882, %v3518
        %v5997 = vmul.f32 %v2233, %v3869
        %v5998 = vmul.f32 %v2235, %v3871
        %v5999 = vmul.f32 %v2586, %v4222
        %v6000 = vmul.f32 %v2588, %v4224
        %v6001 = vmul.f32 %v2939, %v4575
        %v6002 = vmul.f32 %v2941, %v4577
        %v6003 = vmul.f32 %v1884, %v3520
        %v6004 = vmul.f32 %v1886, %v3522
        %v6005 = vmul.f32 %v2237, %v3873
        %v6006 = vmul.f32 %v2239, %v3875
        %v6007 = vmul.f32 %v2590, %v4226
        %v6008 = vmul.f32 %v2592, %v4228
        %v6009 = vmul.f32 %v2943, %v4579
        %v6010 = vmul.f32 %v2945, %v4581
        %v6011 = vmul.f32 %v1890, %v3526
        %v6012 = vmul.f32 %v1892, %v3528
        %v6013 = vmul.f32 %v2243, %v3879
        %v6014 = vmul.f32 %v2245, %v3881
        %v6015 = vmul.f32 %v2596, %v4232
        %v6016 = vmul.f32 %v2598, %v4234
        %v6017 = vmul.f32 %v2949, %v4585
        %v6018 = vmul.f32 %v2951, %v4587
        %v6019 = vmul.f32 %v1894, %v3530
        %v6020 = vmul.f32 %v1896, %v3532
        %v6021 = vmul.f32 %v2247, %v3883
        %v6022 = vmul.f32 %v2249, %v3885
        %v6023 = vmul.f32 %v2600, %v4236
        %v6024 = vmul.f32 %v2602, %v4238
        %v6025 = vmul.f32 %v2953, %v4589
        %v6026 = vmul.f32 %v2955, %v4591
        %v6027 = vmul.f32 %v1900, %v3536
        %v6028 = vmul.f32 %v1902, %v3538
        %v6029 = vmul.f32 %v2253, %v3889
        %v6030 = vmul.f32 %v2255, %v3891
        %v6031 = vmul.f32 %v2606, %v4242
        %v6032 = vmul.f32 %v2608, %v4244
        %v6033 = vmul.f32 %v2959, %v4595
        %v6034 = vmul.f32 %v2961, %v4597
        %v6035 = vmul.f32 %v1904, %v3540
        %v6036 = vmul.f32 %v1906, %v3542
        %v6037 = vmul.f32 %v2257, %v3893
        %v6038 = vmul.f32 %v2259, %v3895
        %v6039 = vmul.f32 %v2610, %v4246
        %v6040 = vmul.f32 %v2612, %v4248
        %v6041 = vmul.f32 %v2963, %v4599
        %v6042 = vmul.f32 %v2965, %v4601
        %v6043 = vadd.f32 %v5531, %v5787
        %v6044 = vadd.f32 %v5532, %v5788
        %v6045 = vadd.f32 %v5533, %v5789
        %v6046 = vadd.f32 %v5534, %v5790
        %v6047 = vadd.f32 %v5535, %v5791
        %v6048 = vadd.f32 %v5536, %v5792
        %v6049 = vadd.f32 %v5537, %v5793
        %v6050 = vadd.f32 %v5538, %v5794
        %v6051 = vadd.f32 %v5539, %v5795
        %v6052 = vadd.f32 %v5540, %v5796
        %v6053 = vadd.f32 %v5541, %v5797
        %v6054 = vadd.f32 %v5542, %v5798
        %v6055 = vadd.f32 %v5543, %v5799
        %v6056 = vadd.f32 %v5544, %v5800
        %v6057 = vadd.f32 %v5545, %v5801
        %v6058 = vadd.f32 %v5546, %v5802
        %v6059 = vadd.f32 %v5547, %v5803
        %v6060 = vadd.f32 %v5548, %v5804
        %v6061 = vadd.f32 %v5549, %v5805
        %v6062 = vadd.f32 %v5550, %v5806
        %v6063 = vadd.f32 %v5551, %v5807
        %v6064 = vadd.f32 %v5552, %v5808
        %v6065 = vadd.f32 %v5553, %v5809
        %v6066 = vadd.f32 %v5554, %v5810
        %v6067 = vadd.f32 %v5555, %v5811
        %v6068 = vadd.f32 %v5556, %v5812
        %v6069 = vadd.f32 %v5557, %v5813
        %v6070 = vadd.f32 %v5558, %v5814
        %v6071 = vadd.f32 %v5559, %v5815
        %v6072 = vadd.f32 %v5560, %v5816
        %v6073 = vadd.f32 %v5561, %v5817
        %v6074 = vadd.f32 %v5562, %v5818
        %v6075 = vadd.f32 %v5563, %v5819
        %v6076 = vadd.f32 %v5564, %v5820
        %v6077 = vadd.f32 %v5565, %v5821
        %v6078 = vadd.f32 %v5566, %v5822
        %v6079 = vadd.f32 %v5567, %v5823
        %v6080 = vadd.f32 %v5568, %v5824
        %v6081 = vadd.f32 %v5569, %v5825
        %v6082 = vadd.f32 %v5570, %v5826
        %v6083 = vadd.f32 %v5571, %v5827
        %v6084 = vadd.f32 %v5572, %v5828
        %v6085 = vadd.f32 %v5573, %v5829
        %v6086 = vadd.f32 %v5574, %v5830
        %v6087 = vadd.f32 %v5575, %v5831
        %v6088 = vadd.f32 %v5576, %v5832
        %v6089 = vadd.f32 %v5577, %v5833
        %v6090 = vadd.f32 %v5578, %v5834
        %v6091 = vadd.f32 %v5579, %v5835
        %v6092 = vadd.f32 %v5580, %v5836
        %v6093 = vadd.f32 %v5581, %v5837
        %v6094 = vadd.f32 %v5582, %v5838
        %v6095 = vadd.f32 %v5583, %v5839
        %v6096 = vadd.f32 %v5584, %v5840
        %v6097 = vadd.f32 %v5585, %v5841
        %v6098 = vadd.f32 %v5586, %v5842
        %v6099 = vadd.f32 %v5587, %v5843
        %v6100 = vadd.f32 %v5588, %v5844
        %v6101 = vadd.f32 %v5589, %v5845
        %v6102 = vadd.f32 %v5590, %v5846
        %v6103 = vadd.f32 %v5591, %v5847
        %v6104 = vadd.f32 %v5592, %v5848
        %v6105 = vadd.f32 %v5593, %v5849
        %v6106 = vadd.f32 %v5594, %v5850
        %v6107 = vadd.f32 %v5595, %v5851
        %v6108 = vadd.f32 %v5596, %v5852
        %v6109 = vadd.f32 %v5597, %v5853
        %v6110 = vadd.f32 %v5598, %v5854
        %v6111 = vadd.f32 %v5599, %v5855
        %v6112 = vadd.f32 %v5600, %v5856
        %v6113 = vadd.f32 %v5601, %v5857
        %v6114 = vadd.f32 %v5602, %v5858
        %v6115 = vadd.f32 %v5603, %v5859
        %v6116 = vadd.f32 %v5604, %v5860
        %v6117 = vadd.f32 %v5605, %v5861
        %v6118 = vadd.f32 %v5606, %v5862
        %v6119 = vadd.f32 %v5607, %v5863
        %v6120 = vadd.f32 %v5608, %v5864
        %v6121 = vadd.f32 %v5609, %v5865
        %v6122 = vadd.f32 %v5610, %v5866
        %v6123 = vadd.f32 %v5611, %v5867
        %v6124 = vadd.f32 %v5612, %v5868
        %v6125 = vadd.f32 %v5613, %v5869
        %v6126 = vadd.f32 %v5614, %v5870
        %v6127 = vadd.f32 %v5615, %v5871
        %v6128 = vadd.f32 %v5616, %v5872
        %v6129 = vadd.f32 %v5617, %v5873
        %v6130 = vadd.f32 %v5618, %v5874
        %v6131 = vadd.f32 %v5619, %v5875
        %v6132 = vadd.f32 %v5620, %v5876
        %v6133 = vadd.f32 %v5621, %v5877
        %v6134 = vadd.f32 %v5622, %v5878
        %v6135 = vadd.f32 %v5623, %v5879
        %v6136 = vadd.f32 %v5624, %v5880
        %v6137 = vadd.f32 %v5625, %v5881
        %v6138 = vadd.f32 %v5626, %v5882
        %v6139 = vadd.f32 %v5627, %v5883
        %v6140 = vadd.f32 %v5628, %v5884
        %v6141 = vadd.f32 %v5629, %v5885
        %v6142 = vadd.f32 %v5630, %v5886
        %v6143 = vadd.f32 %v5631, %v5887
        %v6144 = vadd.f32 %v5632, %v5888
        %v6145 = vadd.f32 %v5633, %v5889
        %v6146 = vadd.f32 %v5634, %v5890
        %v6147 = vadd.f32 %v5635, %v5891
        %v6148 = vadd.f32 %v5636, %v5892
        %v6149 = vadd.f32 %v5637, %v5893
        %v6150 = vadd.f32 %v5638, %v5894
        %v6151 = vadd.f32 %v5639, %v5895
        %v6152 = vadd.f32 %v5640, %v5896
        %v6153 = vadd.f32 %v5641, %v5897
        %v6154 = vadd.f32 %v5642, %v5898
        %v6155 = vadd.f32 %v5643, %v5899
        %v6156 = vadd.f32 %v5644, %v5900
        %v6157 = vadd.f32 %v5645, %v5901
        %v6158 = vadd.f32 %v5646, %v5902
        %v6159 = vadd.f32 %v5647, %v5903
        %v6160 = vadd.f32 %v5648, %v5904
        %v6161 = vadd.f32 %v5649, %v5905
        %v6162 = vadd.f32 %v5650, %v5906
        %v6163 = vadd.f32 %v5651, %v5907
        %v6164 = vadd.f32 %v5652, %v5908
        %v6165 = vadd.f32 %v5653, %v5909
        %v6166 = vadd.f32 %v5654, %v5910
        %v6167 = vadd.f32 %v5655, %v5911
        %v6168 = vadd.f32 %v5656, %v5912
        %v6169 = vadd.f32 %v5657, %v5913
        %v6170 = vadd.f32 %v5658, %v5914
        %v6171 = vadd.f32 %v5659, %v5915
        %v6172 = vadd.f32 %v5660, %v5916
        %v6173 = vadd.f32 %v5661, %v5917
        %v6174 = vadd.f32 %v5662, %v5918
        %v6175 = vadd.f32 %v5663, %v5919
        %v6176 = vadd.f32 %v5664, %v5920
        %v6177 = vadd.f32 %v5665, %v5921
        %v6178 = vadd.f32 %v5666, %v5922
        %v6179 = vadd.f32 %v5667, %v5923
        %v6180 = vadd.f32 %v5668, %v5924
        %v6181 = vadd.f32 %v5669, %v5925
        %v6182 = vadd.f32 %v5670, %v5926
        %v6183 = vadd.f32 %v5671, %v5927
        %v6184 = vadd.f32 %v5672, %v5928
        %v6185 = vadd.f32 %v5673, %v5929
        %v6186 = vadd.f32 %v5674, %v5930
        %v6187 = vadd.f32 %v5675, %v5931
        %v6188 = vadd.f32 %v5676, %v5932
        %v6189 = vadd.f32 %v5677, %v5933
        %v6190 = vadd.f32 %v5678, %v5934
        %v6191 = vadd.f32 %v5679, %v5935
        %v6192 = vadd.f32 %v5680, %v5936
        %v6193 = vadd.f32 %v5681, %v5937
        %v6194 = vadd.f32 %v5682, %v5938
        %v6195 = vadd.f32 %v5683, %v5939
        %v6196 = vadd.f32 %v5684, %v5940
        %v6197 = vadd.f32 %v5685, %v5941
        %v6198 = vadd.f32 %v5686, %v5942
        %v6199 = vadd.f32 %v5687, %v5943
        %v6200 = vadd.f32 %v5688, %v5944
        %v6201 = vadd.f32 %v5689, %v5945
        %v6202 = vadd.f32 %v5690, %v5946
        %v6203 = vadd.f32 %v5691, %v5947
        %v6204 = vadd.f32 %v5692, %v5948
        %v6205 = vadd.f32 %v5693, %v5949
        %v6206 = vadd.f32 %v5694, %v5950
        %v6207 = vadd.f32 %v5695, %v5951
        %v6208 = vadd.f32 %v5696, %v5952
        %v6209 = vadd.f32 %v5697, %v5953
        %v6210 = vadd.f32 %v5698, %v5954
        %v6211 = vadd.f32 %v5699, %v5955
        %v6212 = vadd.f32 %v5700, %v5956
        %v6213 = vadd.f32 %v5701, %v5957
        %v6214 = vadd.f32 %v5702, %v5958
        %v6215 = vadd.f32 %v5703, %v5959
        %v6216 = vadd.f32 %v5704, %v5960
        %v6217 = vadd.f32 %v5705, %v5961
        %v6218 = vadd.f32 %v5706, %v5962
        %v6219 = vadd.f32 %v5707, %v5963
        %v6220 = vadd.f32 %v5708, %v5964
        %v6221 = vadd.f32 %v5709, %v5965
        %v6222 = vadd.f32 %v5710, %v5966
        %v6223 = vadd.f32 %v5711, %v5967
        %v6224 = vadd.f32 %v5712, %v5968
        %v6225 = vadd.f32 %v5713, %v5969
        %v6226 = vadd.f32 %v5714, %v5970
        %v6227 = vadd.f32 %v5715, %v5971
        %v6228 = vadd.f32 %v5716, %v5972
        %v6229 = vadd.f32 %v5717, %v5973
        %v6230 = vadd.f32 %v5718, %v5974
        %v6231 = vadd.f32 %v5719, %v5975
        %v6232 = vadd.f32 %v5720, %v5976
        %v6233 = vadd.f32 %v5721, %v5977
        %v6234 = vadd.f32 %v5722, %v5978
        %v6235 = vadd.f32 %v5723, %v5979
        %v6236 = vadd.f32 %v5724, %v5980
        %v6237 = vadd.f32 %v5725, %v5981
        %v6238 = vadd.f32 %v5726, %v5982
        %v6239 = vadd.f32 %v5727, %v5983
        %v6240 = vadd.f32 %v5728, %v5984
        %v6241 = vadd.f32 %v5729, %v5985
        %v6242 = vadd.f32 %v5730, %v5986
        %v6243 = vadd.f32 %v5731, %v5987
        %v6244 = vadd.f32 %v5732, %v5988
        %v6245 = vadd.f32 %v5733, %v5989
        %v6246 = vadd.f32 %v5734, %v5990
        %v6247 = vadd.f32 %v5735, %v5991
        %v6248 = vadd.f32 %v5736, %v5992
        %v6249 = vadd.f32 %v5737, %v5993
        %v6250 = vadd.f32 %v5738, %v5994
        %v6251 = vadd.f32 %v5739, %v5995
        %v6252 = vadd.f32 %v5740, %v5996
        %v6253 = vadd.f32 %v5741, %v5997
        %v6254 = vadd.f32 %v5742, %v5998
        %v6255 = vadd.f32 %v5743, %v5999
        %v6256 = vadd.f32 %v5744, %v6000
        %v6257 = vadd.f32 %v5745, %v6001
        %v6258 = vadd.f32 %v5746, %v6002
        %v6259 = vadd.f32 %v5747, %v6003
        %v6260 = vadd.f32 %v5748, %v6004
        %v6261 = vadd.f32 %v5749, %v6005
        %v6262 = vadd.f32 %v5750, %v6006
        %v6263 = vadd.f32 %v5751, %v6007
        %v6264 = vadd.f32 %v5752, %v6008
        %v6265 = vadd.f32 %v5753, %v6009
        %v6266 = vadd.f32 %v5754, %v6010
        %v6267 = vadd.f32 %v5755, %v6011
        %v6268 = vadd.f32 %v5756, %v6012
        %v6269 = vadd.f32 %v5757, %v6013
        %v6270 = vadd.f32 %v5758, %v6014
        %v6271 = vadd.f32 %v5759, %v6015
        %v6272 = vadd.f32 %v5760, %v6016
        %v6273 = vadd.f32 %v5761, %v6017
        %v6274 = vadd.f32 %v5762, %v6018
        %v6275 = vadd.f32 %v5763, %v6019
        %v6276 = vadd.f32 %v5764, %v6020
        %v6277 = vadd.f32 %v5765, %v6021
        %v6278 = vadd.f32 %v5766, %v6022
        %v6279 = vadd.f32 %v5767, %v6023
        %v6280 = vadd.f32 %v5768, %v6024
        %v6281 = vadd.f32 %v5769, %v6025
        %v6282 = vadd.f32 %v5770, %v6026
        %v6283 = vadd.f32 %v5771, %v6027
        %v6284 = vadd.f32 %v5772, %v6028
        %v6285 = vadd.f32 %v5773, %v6029
        %v6286 = vadd.f32 %v5774, %v6030
        %v6287 = vadd.f32 %v5775, %v6031
        %v6288 = vadd.f32 %v5776, %v6032
        %v6289 = vadd.f32 %v5777, %v6033
        %v6290 = vadd.f32 %v5778, %v6034
        %v6291 = vadd.f32 %v5779, %v6035
        %v6292 = vadd.f32 %v5780, %v6036
        %v6293 = vadd.f32 %v5781, %v6037
        %v6294 = vadd.f32 %v5782, %v6038
        %v6295 = vadd.f32 %v5783, %v6039
        %v6296 = vadd.f32 %v5784, %v6040
        %v6297 = vadd.f32 %v5785, %v6041
        %v6298 = vadd.f32 %v5786, %v6042
        %v6299 = vsub.f32 0.0, %v6043
        %v6300 = vsub.f32 0.0, %v6044
        %v6301 = vsub.f32 0.0, %v6045
        %v6302 = vsub.f32 0.0, %v6046
        %v6303 = vsub.f32 0.0, %v6047
        %v6304 = vsub.f32 0.0, %v6048
        %v6305 = vsub.f32 0.0, %v6049
        %v6306 = vsub.f32 0.0, %v6050
        %v6307 = vsub.f32 0.0, %v6051
        %v6308 = vsub.f32 0.0, %v6052
        %v6309 = vsub.f32 0.0, %v6053
        %v6310 = vsub.f32 0.0, %v6054
        %v6311 = vsub.f32 0.0, %v6055
        %v6312 = vsub.f32 0.0, %v6056
        %v6313 = vsub.f32 0.0, %v6057
        %v6314 = vsub.f32 0.0, %v6058
        %v6315 = vsub.f32 0.0, %v6059
        %v6316 = vsub.f32 0.0, %v6060
        %v6317 = vsub.f32 0.0, %v6061
        %v6318 = vsub.f32 0.0, %v6062
        %v6319 = vsub.f32 0.0, %v6063
        %v6320 = vsub.f32 0.0, %v6064
        %v6321 = vsub.f32 0.0, %v6065
        %v6322 = vsub.f32 0.0, %v6066
        %v6323 = vsub.f32 0.0, %v6067
        %v6324 = vsub.f32 0.0, %v6068
        %v6325 = vsub.f32 0.0, %v6069
        %v6326 = vsub.f32 0.0, %v6070
        %v6327 = vsub.f32 0.0, %v6071
        %v6328 = vsub.f32 0.0, %v6072
        %v6329 = vsub.f32 0.0, %v6073
        %v6330 = vsub.f32 0.0, %v6074
        %v6331 = vsub.f32 0.0, %v6075
        %v6332 = vsub.f32 0.0, %v6076
        %v6333 = vsub.f32 0.0, %v6077
        %v6334 = vsub.f32 0.0, %v6078
        %v6335 = vsub.f32 0.0, %v6079
        %v6336 = vsub.f32 0.0, %v6080
        %v6337 = vsub.f32 0.0, %v6081
        %v6338 = vsub.f32 0.0, %v6082
        %v6339 = vsub.f32 0.0, %v6083
        %v6340 = vsub.f32 0.0, %v6084
        %v6341 = vsub.f32 0.0, %v6085
        %v6342 = vsub.f32 0.0, %v6086
        %v6343 = vsub.f32 0.0, %v6087
        %v6344 = vsub.f32 0.0, %v6088
        %v6345 = vsub.f32 0.0, %v6089
        %v6346 = vsub.f32 0.0, %v6090
        %v6347 = vsub.f32 0.0, %v6091
        %v6348 = vsub.f32 0.0, %v6092
        %v6349 = vsub.f32 0.0, %v6093
        %v6350 = vsub.f32 0.0, %v6094
        %v6351 = vsub.f32 0.0, %v6095
        %v6352 = vsub.f32 0.0, %v6096
        %v6353 = vsub.f32 0.0, %v6097
        %v6354 = vsub.f32 0.0, %v6098
        %v6355 = vsub.f32 0.0, %v6099
        %v6356 = vsub.f32 0.0, %v6100
        %v6357 = vsub.f32 0.0, %v6101
        %v6358 = vsub.f32 0.0, %v6102
        %v6359 = vsub.f32 0.0, %v6103
        %v6360 = vsub.f32 0.0, %v6104
        %v6361 = vsub.f32 0.0, %v6105
        %v6362 = vsub.f32 0.0, %v6106
        %v6363 = vsub.f32 0.0, %v6107
        %v6364 = vsub.f32 0.0, %v6108
        %v6365 = vsub.f32 0.0, %v6109
        %v6366 = vsub.f32 0.0, %v6110
        %v6367 = vsub.f32 0.0, %v6111
        %v6368 = vsub.f32 0.0, %v6112
        %v6369 = vsub.f32 0.0, %v6113
        %v6370 = vsub.f32 0.0, %v6114
        %v6371 = vsub.f32 0.0, %v6115
        %v6372 = vsub.f32 0.0, %v6116
        %v6373 = vsub.f32 0.0, %v6117
        %v6374 = vsub.f32 0.0, %v6118
        %v6375 = vsub.f32 0.0, %v6119
        %v6376 = vsub.f32 0.0, %v6120
        %v6377 = vsub.f32 0.0, %v6121
        %v6378 = vsub.f32 0.0, %v6122
        %v6379 = vsub.f32 0.0, %v6123
        %v6380 = vsub.f32 0.0, %v6124
        %v6381 = vsub.f32 0.0, %v6125
        %v6382 = vsub.f32 0.0, %v6126
        %v6383 = vsub.f32 0.0, %v6127
        %v6384 = vsub.f32 0.0, %v6128
        %v6385 = vsub.f32 0.0, %v6129
        %v6386 = vsub.f32 0.0, %v6130
        %v6387 = vsub.f32 0.0, %v6131
        %v6388 = vsub.f32 0.0, %v6132
        %v6389 = vsub.f32 0.0, %v6133
        %v6390 = vsub.f32 0.0, %v6134
        %v6391 = vsub.f32 0.0, %v6135
        %v6392 = vsub.f32 0.0, %v6136
        %v6393 = vsub.f32 0.0, %v6137
        %v6394 = vsub.f32 0.0, %v6138
        %v6395 = vsub.f32 0.0, %v6139
        %v6396 = vsub.f32 0.0, %v6140
        %v6397 = vsub.f32 0.0, %v6141
        %v6398 = vsub.f32 0.0, %v6142
        %v6399 = vsub.f32 0.0, %v6143
        %v6400 = vsub.f32 0.0, %v6144
        %v6401 = vsub.f32 0.0, %v6145
        %v6402 = vsub.f32 0.0, %v6146
        %v6403 = vsub.f32 0.0, %v6147
        %v6404 = vsub.f32 0.0, %v6148
        %v6405 = vsub.f32 0.0, %v6149
        %v6406 = vsub.f32 0.0, %v6150
        %v6407 = vsub.f32 0.0, %v6151
        %v6408 = vsub.f32 0.0, %v6152
        %v6409 = vsub.f32 0.0, %v6153
        %v6410 = vsub.f32 0.0, %v6154
        %v6411 = vsub.f32 0.0, %v6155
        %v6412 = vsub.f32 0.0, %v6156
        %v6413 = vsub.f32 0.0, %v6157
        %v6414 = vsub.f32 0.0, %v6158
        %v6415 = vsub.f32 0.0, %v6159
        %v6416 = vsub.f32 0.0, %v6160
        %v6417 = vsub.f32 0.0, %v6161
        %v6418 = vsub.f32 0.0, %v6162
        %v6419 = vsub.f32 0.0, %v6163
        %v6420 = vsub.f32 0.0, %v6164
        %v6421 = vsub.f32 0.0, %v6165
        %v6422 = vsub.f32 0.0, %v6166
        %v6423 = vsub.f32 0.0, %v6167
        %v6424 = vsub.f32 0.0, %v6168
        %v6425 = vsub.f32 0.0, %v6169
        %v6426 = vsub.f32 0.0, %v6170
        %v6427 = vsub.f32 0.0, %v6171
        %v6428 = vsub.f32 0.0, %v6172
        %v6429 = vsub.f32 0.0, %v6173
        %v6430 = vsub.f32 0.0, %v6174
        %v6431 = vsub.f32 0.0, %v6175
        %v6432 = vsub.f32 0.0, %v6176
        %v6433 = vsub.f32 0.0, %v6177
        %v6434 = vsub.f32 0.0, %v6178
        %v6435 = vsub.f32 0.0, %v6179
        %v6436 = vsub.f32 0.0, %v6180
        %v6437 = vsub.f32 0.0, %v6181
        %v6438 = vsub.f32 0.0, %v6182
        %v6439 = vsub.f32 0.0, %v6183
        %v6440 = vsub.f32 0.0, %v6184
        %v6441 = vsub.f32 0.0, %v6185
        %v6442 = vsub.f32 0.0, %v6186
        %v6443 = vsub.f32 0.0, %v6187
        %v6444 = vsub.f32 0.0, %v6188
        %v6445 = vsub.f32 0.0, %v6189
        %v6446 = vsub.f32 0.0, %v6190
        %v6447 = vsub.f32 0.0, %v6191
        %v6448 = vsub.f32 0.0, %v6192
        %v6449 = vsub.f32 0.0, %v6193
        %v6450 = vsub.f32 0.0, %v6194
        %v6451 = vsub.f32 0.0, %v6195
        %v6452 = vsub.f32 0.0, %v6196
        %v6453 = vsub.f32 0.0, %v6197
        %v6454 = vsub.f32 0.0, %v6198
        %v6455 = vsub.f32 0.0, %v6199
        %v6456 = vsub.f32 0.0, %v6200
        %v6457 = vsub.f32 0.0, %v6201
        %v6458 = vsub.f32 0.0, %v6202
        %v6459 = vsub.f32 0.0, %v6203
        %v6460 = vsub.f32 0.0, %v6204
        %v6461 = vsub.f32 0.0, %v6205
        %v6462 = vsub.f32 0.0, %v6206
        %v6463 = vsub.f32 0.0, %v6207
        %v6464 = vsub.f32 0.0, %v6208
        %v6465 = vsub.f32 0.0, %v6209
        %v6466 = vsub.f32 0.0, %v6210
        %v6467 = vsub.f32 0.0, %v6211
        %v6468 = vsub.f32 0.0, %v6212
        %v6469 = vsub.f32 0.0, %v6213
        %v6470 = vsub.f32 0.0, %v6214
        %v6471 = vsub.f32 0.0, %v6215
        %v6472 = vsub.f32 0.0, %v6216
        %v6473 = vsub.f32 0.0, %v6217
        %v6474 = vsub.f32 0.0, %v6218
        %v6475 = vsub.f32 0.0, %v6219
        %v6476 = vsub.f32 0.0, %v6220
        %v6477 = vsub.f32 0.0, %v6221
        %v6478 = vsub.f32 0.0, %v6222
        %v6479 = vsub.f32 0.0, %v6223
        %v6480 = vsub.f32 0.0, %v6224
        %v6481 = vsub.f32 0.0, %v6225
        %v6482 = vsub.f32 0.0, %v6226
        %v6483 = vsub.f32 0.0, %v6227
        %v6484 = vsub.f32 0.0, %v6228
        %v6485 = vsub.f32 0.0, %v6229
        %v6486 = vsub.f32 0.0, %v6230
        %v6487 = vsub.f32 0.0, %v6231
        %v6488 = vsub.f32 0.0, %v6232
        %v6489 = vsub.f32 0.0, %v6233
        %v6490 = vsub.f32 0.0, %v6234
        %v6491 = vsub.f32 0.0, %v6235
        %v6492 = vsub.f32 0.0, %v6236
        %v6493 = vsub.f32 0.0, %v6237
        %v6494 = vsub.f32 0.0, %v6238
        %v6495 = vsub.f32 0.0, %v6239
        %v6496 = vsub.f32 0.0, %v6240
        %v6497 = vsub.f32 0.0, %v6241
        %v6498 = vsub.f32 0.0, %v6242
        %v6499 = vsub.f32 0.0, %v6243
        %v6500 = vsub.f32 0.0, %v6244
        %v6501 = vsub.f32 0.0, %v6245
        %v6502 = vsub.f32 0.0, %v6246
        %v6503 = vsub.f32 0.0, %v6247
        %v6504 = vsub.f32 0.0, %v6248
        %v6505 = vsub.f32 0.0, %v6249
        %v6506 = vsub.f32 0.0, %v6250
        %v6507 = vsub.f32 0.0, %v6251
        %v6508 = vsub.f32 0.0, %v6252
        %v6509 = vsub.f32 0.0, %v6253
        %v6510 = vsub.f32 0.0, %v6254
        %v6511 = vsub.f32 0.0, %v6255
        %v6512 = vsub.f32 0.0, %v6256
        %v6513 = vsub.f32 0.0, %v6257
        %v6514 = vsub.f32 0.0, %v6258
        %v6515 = vsub.f32 0.0, %v6259
        %v6516 = vsub.f32 0.0, %v6260
        %v6517 = vsub.f32 0.0, %v6261
        %v6518 = vsub.f32 0.0, %v6262
        %v6519 = vsub.f32 0.0, %v6263
        %v6520 = vsub.f32 0.0, %v6264
        %v6521 = vsub.f32 0.0, %v6265
        %v6522 = vsub.f32 0.0, %v6266
        %v6523 = vsub.f32 0.0, %v6267
        %v6524 = vsub.f32 0.0, %v6268
        %v6525 = vsub.f32 0.0, %v6269
        %v6526 = vsub.f32 0.0, %v6270
        %v6527 = vsub.f32 0.0, %v6271
        %v6528 = vsub.f32 0.0, %v6272
        %v6529 = vsub.f32 0.0, %v6273
        %v6530 = vsub.f32 0.0, %v6274
        %v6531 = vsub.f32 0.0, %v6275
        %v6532 = vsub.f32 0.0, %v6276
        %v6533 = vsub.f32 0.0, %v6277
        %v6534 = vsub.f32 0.0, %v6278
        %v6535 = vsub.f32 0.0, %v6279
        %v6536 = vsub.f32 0.0, %v6280
        %v6537 = vsub.f32 0.0, %v6281
        %v6538 = vsub.f32 0.0, %v6282
        %v6539 = vsub.f32 0.0, %v6283
        %v6540 = vsub.f32 0.0, %v6284
        %v6541 = vsub.f32 0.0, %v6285
        %v6542 = vsub.f32 0.0, %v6286
        %v6543 = vsub.f32 0.0, %v6287
        %v6544 = vsub.f32 0.0, %v6288
        %v6545 = vsub.f32 0.0, %v6289
        %v6546 = vsub.f32 0.0, %v6290
        %v6547 = vsub.f32 0.0, %v6291
        %v6548 = vsub.f32 0.0, %v6292
        %v6549 = vsub.f32 0.0, %v6293
        %v6550 = vsub.f32 0.0, %v6294
        %v6551 = vsub.f32 0.0, %v6295
        %v6552 = vsub.f32 0.0, %v6296
        %v6553 = vsub.f32 0.0, %v6297
        %v6554 = vsub.f32 0.0, %v6298
        %v6555 = vld [vmem:[%s333] sm:$0xff]
        %v6556 = vld [vmem:[%s333 + $0x8] sm:$0xff]
        %v6557 = vld [vmem:[%s333 + $0x10] sm:$0xff]
        %v6558 = vld [vmem:[%s333 + $0x18] sm:$0xff]
        %v6559 = vld [vmem:[%s333 + $0x20] sm:$0xff]
        %v6560 = vld [vmem:[%s333 + $0x28] sm:$0xff]
        %v6561 = vld [vmem:[%s333 + $0x30] sm:$0xff]
        %v6562 = vld [vmem:[%s333 + $0x38] sm:$0xff]
        %v6563 = vld [vmem:[%s333 + $0x40] sm:$0xff]
        %v6564 = vld [vmem:[%s333 + $0x48] sm:$0xff]
        %v6565 = vld [vmem:[%s333 + $0x50] sm:$0xff]
        %v6566 = vld [vmem:[%s333 + $0x58] sm:$0xff]
        %v6567 = vld [vmem:[%s333 + $0x60] sm:$0xff]
        %v6568 = vld [vmem:[%s333 + $0x68] sm:$0xff]
        %v6569 = vld [vmem:[%s333 + $0x70] sm:$0xff]
        %v6570 = vld [vmem:[%s333 + $0x78] sm:$0xff]
        %v6571 = vld [vmem:[%s333 + $0x80] sm:$0xff]
        %v6572 = vld [vmem:[%s333 + $0x88] sm:$0xff]
        %v6573 = vld [vmem:[%s333 + $0x90] sm:$0xff]
        %v6574 = vld [vmem:[%s333 + $0x98] sm:$0xff]
        %v6575 = vld [vmem:[%s333 + $0xa0] sm:$0xff]
        %v6576 = vld [vmem:[%s333 + $0xa8] sm:$0xff]
        %v6577 = vld [vmem:[%s333 + $0xb0] sm:$0xff]
        %v6578 = vld [vmem:[%s333 + $0xb8] sm:$0xff]
        %v6579 = vld [vmem:[%s333 + $0xc0] sm:$0xff]
        %v6580 = vld [vmem:[%s333 + $0xc8] sm:$0xff]
        %v6581 = vld [vmem:[%s333 + $0xd0] sm:$0xff]
        %v6582 = vld [vmem:[%s333 + $0xd8] sm:$0xff]
        %v6583 = vld [vmem:[%s333 + $0xe0] sm:$0xff]
        %v6584 = vld [vmem:[%s333 + $0xe8] sm:$0xff]
        %v6585 = vld [vmem:[%s333 + $0xf0] sm:$0xff]
        %v6586 = vld [vmem:[%s333 + $0xf8] sm:$0xff]
        %v6587 = vadd.f32 %v5275, %v5276
        %v6588 = vadd.f32 %v6587, %v5277
        %v6589 = vadd.f32 %v6588, %v5278
        %v6590 = vadd.f32 %v6589, %v5279
        %v6591 = vadd.f32 %v6590, %v5280
        %v6592 = vadd.f32 %v6591, %v5281
        %v6593 = vadd.f32 %v6592, %v5282
        %6594 = vadd.xlane.f32.xlu0 %v6593
        %v6595 = vpop.xlane.xlu0 %6594
        %v6596 = vadd.f32 %v5283, %v5284
        %v6597 = vadd.f32 %v6596, %v5285
        %v6598 = vadd.f32 %v6597, %v5286
        %v6599 = vadd.f32 %v6598, %v5287
        %v6600 = vadd.f32 %v6599, %v5288
        %v6601 = vadd.f32 %v6600, %v5289
        %v6602 = vadd.f32 %v6601, %v5290
        %6603 = vadd.xlane.f32.xlu0 %v6602
        %v6604 = vpop.xlane.xlu0 %6603
        %v6605 = vadd.f32 %v5291, %v5292
        %v6606 = vadd.f32 %v6605, %v5293
        %v6607 = vadd.f32 %v6606, %v5294
        %v6608 = vadd.f32 %v6607, %v5295
        %v6609 = vadd.f32 %v6608, %v5296
        %v6610 = vadd.f32 %v6609, %v5297
        %v6611 = vadd.f32 %v6610, %v5298
        %6612 = vadd.xlane.f32.xlu0 %v6611
        %v6613 = vpop.xlane.xlu0 %6612
        %v6614 = vadd.f32 %v5299, %v5300
        %v6615 = vadd.f32 %v6614, %v5301
        %v6616 = vadd.f32 %v6615, %v5302
        %v6617 = vadd.f32 %v6616, %v5303
        %v6618 = vadd.f32 %v6617, %v5304
        %v6619 = vadd.f32 %v6618, %v5305
        %v6620 = vadd.f32 %v6619, %v5306
        %6621 = vadd.xlane.f32.xlu0 %v6620
        %v6622 = vpop.xlane.xlu0 %6621
        %v6623 = vadd.f32 %v5307, %v5308
        %v6624 = vadd.f32 %v6623, %v5309
        %v6625 = vadd.f32 %v6624, %v5310
        %v6626 = vadd.f32 %v6625, %v5311
        %v6627 = vadd.f32 %v6626, %v5312
        %v6628 = vadd.f32 %v6627, %v5313
        %v6629 = vadd.f32 %v6628, %v5314
        %6630 = vadd.xlane.f32.xlu0 %v6629
        %v6631 = vpop.xlane.xlu0 %6630
        %v6632 = vadd.f32 %v5315, %v5316
        %v6633 = vadd.f32 %v6632, %v5317
        %v6634 = vadd.f32 %v6633, %v5318
        %v6635 = vadd.f32 %v6634, %v5319
        %v6636 = vadd.f32 %v6635, %v5320
        %v6637 = vadd.f32 %v6636, %v5321
        %v6638 = vadd.f32 %v6637, %v5322
        %6639 = vadd.xlane.f32.xlu0 %v6638
        %v6640 = vpop.xlane.xlu0 %6639
        %v6641 = vadd.f32 %v5323, %v5324
        %v6642 = vadd.f32 %v6641, %v5325
        %v6643 = vadd.f32 %v6642, %v5326
        %v6644 = vadd.f32 %v6643, %v5327
        %v6645 = vadd.f32 %v6644, %v5328
        %v6646 = vadd.f32 %v6645, %v5329
        %v6647 = vadd.f32 %v6646, %v5330
        %6648 = vadd.xlane.f32.xlu0 %v6647
        %v6649 = vpop.xlane.xlu0 %6648
        %v6650 = vadd.f32 %v5331, %v5332
        %v6651 = vadd.f32 %v6650, %v5333
        %v6652 = vadd.f32 %v6651, %v5334
        %v6653 = vadd.f32 %v6652, %v5335
        %v6654 = vadd.f32 %v6653, %v5336
        %v6655 = vadd.f32 %v6654, %v5337
        %v6656 = vadd.f32 %v6655, %v5338
        %6657 = vadd.xlane.f32.xlu0 %v6656
        %v6658 = vpop.xlane.xlu0 %6657
        %v6659 = vadd.f32 %v5339, %v5340
        %v6660 = vadd.f32 %v6659, %v5341
        %v6661 = vadd.f32 %v6660, %v5342
        %v6662 = vadd.f32 %v6661, %v5343
        %v6663 = vadd.f32 %v6662, %v5344
        %v6664 = vadd.f32 %v6663, %v5345
        %v6665 = vadd.f32 %v6664, %v5346
        %6666 = vadd.xlane.f32.xlu0 %v6665
        %v6667 = vpop.xlane.xlu0 %6666
        %v6668 = vadd.f32 %v5347, %v5348
        %v6669 = vadd.f32 %v6668, %v5349
        %v6670 = vadd.f32 %v6669, %v5350
        %v6671 = vadd.f32 %v6670, %v5351
        %v6672 = vadd.f32 %v6671, %v5352
        %v6673 = vadd.f32 %v6672, %v5353
        %v6674 = vadd.f32 %v6673, %v5354
        %6675 = vadd.xlane.f32.xlu0 %v6674
        %v6676 = vpop.xlane.xlu0 %6675
        %v6677 = vadd.f32 %v5355, %v5356
        %v6678 = vadd.f32 %v6677, %v5357
        %v6679 = vadd.f32 %v6678, %v5358
        %v6680 = vadd.f32 %v6679, %v5359
        %v6681 = vadd.f32 %v6680, %v5360
        %v6682 = vadd.f32 %v6681, %v5361
        %v6683 = vadd.f32 %v6682, %v5362
        %6684 = vadd.xlane.f32.xlu0 %v6683
        %v6685 = vpop.xlane.xlu0 %6684
        %v6686 = vadd.f32 %v5363, %v5364
        %v6687 = vadd.f32 %v6686, %v5365
        %v6688 = vadd.f32 %v6687, %v5366
        %v6689 = vadd.f32 %v6688, %v5367
        %v6690 = vadd.f32 %v6689, %v5368
        %v6691 = vadd.f32 %v6690, %v5369
        %v6692 = vadd.f32 %v6691, %v5370
        %6693 = vadd.xlane.f32.xlu0 %v6692
        %v6694 = vpop.xlane.xlu0 %6693
        %v6695 = vadd.f32 %v5371, %v5372
        %v6696 = vadd.f32 %v6695, %v5373
        %v6697 = vadd.f32 %v6696, %v5374
        %v6698 = vadd.f32 %v6697, %v5375
        %v6699 = vadd.f32 %v6698, %v5376
        %v6700 = vadd.f32 %v6699, %v5377
        %v6701 = vadd.f32 %v6700, %v5378
        %6702 = vadd.xlane.f32.xlu0 %v6701
        %v6703 = vpop.xlane.xlu0 %6702
        %v6704 = vadd.f32 %v5379, %v5380
        %v6705 = vadd.f32 %v6704, %v5381
        %v6706 = vadd.f32 %v6705, %v5382
        %v6707 = vadd.f32 %v6706, %v5383
        %v6708 = vadd.f32 %v6707, %v5384
        %v6709 = vadd.f32 %v6708, %v5385
        %v6710 = vadd.f32 %v6709, %v5386
        %6711 = vadd.xlane.f32.xlu0 %v6710
        %v6712 = vpop.xlane.xlu0 %6711
        %v6713 = vadd.f32 %v5387, %v5388
        %v6714 = vadd.f32 %v6713, %v5389
        %v6715 = vadd.f32 %v6714, %v5390
        %v6716 = vadd.f32 %v6715, %v5391
        %v6717 = vadd.f32 %v6716, %v5392
        %v6718 = vadd.f32 %v6717, %v5393
        %v6719 = vadd.f32 %v6718, %v5394
        %6720 = vadd.xlane.f32.xlu0 %v6719
        %v6721 = vpop.xlane.xlu0 %6720
        %v6722 = vadd.f32 %v5395, %v5396
        %v6723 = vadd.f32 %v6722, %v5397
        %v6724 = vadd.f32 %v6723, %v5398
        %v6725 = vadd.f32 %v6724, %v5399
        %v6726 = vadd.f32 %v6725, %v5400
        %v6727 = vadd.f32 %v6726, %v5401
        %v6728 = vadd.f32 %v6727, %v5402
        %6729 = vadd.xlane.f32.xlu0 %v6728
        %v6730 = vpop.xlane.xlu0 %6729
        %v6731 = vadd.f32 %v5403, %v5404
        %v6732 = vadd.f32 %v6731, %v5405
        %v6733 = vadd.f32 %v6732, %v5406
        %v6734 = vadd.f32 %v6733, %v5407
        %v6735 = vadd.f32 %v6734, %v5408
        %v6736 = vadd.f32 %v6735, %v5409
        %v6737 = vadd.f32 %v6736, %v5410
        %6738 = vadd.xlane.f32.xlu0 %v6737
        %v6739 = vpop.xlane.xlu0 %6738
        %v6740 = vadd.f32 %v5411, %v5412
        %v6741 = vadd.f32 %v6740, %v5413
        %v6742 = vadd.f32 %v6741, %v5414
        %v6743 = vadd.f32 %v6742, %v5415
        %v6744 = vadd.f32 %v6743, %v5416
        %v6745 = vadd.f32 %v6744, %v5417
        %v6746 = vadd.f32 %v6745, %v5418
        %6747 = vadd.xlane.f32.xlu0 %v6746
        %v6748 = vpop.xlane.xlu0 %6747
        %v6749 = vadd.f32 %v5419, %v5420
        %v6750 = vadd.f32 %v6749, %v5421
        %v6751 = vadd.f32 %v6750, %v5422
        %v6752 = vadd.f32 %v6751, %v5423
        %v6753 = vadd.f32 %v6752, %v5424
        %v6754 = vadd.f32 %v6753, %v5425
        %v6755 = vadd.f32 %v6754, %v5426
        %6756 = vadd.xlane.f32.xlu0 %v6755
        %v6757 = vpop.xlane.xlu0 %6756
        %v6758 = vadd.f32 %v5427, %v5428
        %v6759 = vadd.f32 %v6758, %v5429
        %v6760 = vadd.f32 %v6759, %v5430
        %v6761 = vadd.f32 %v6760, %v5431
        %v6762 = vadd.f32 %v6761, %v5432
        %v6763 = vadd.f32 %v6762, %v5433
        %v6764 = vadd.f32 %v6763, %v5434
        %6765 = vadd.xlane.f32.xlu0 %v6764
        %v6766 = vpop.xlane.xlu0 %6765
        %v6767 = vadd.f32 %v5435, %v5436
        %v6768 = vadd.f32 %v6767, %v5437
        %v6769 = vadd.f32 %v6768, %v5438
        %v6770 = vadd.f32 %v6769, %v5439
        %v6771 = vadd.f32 %v6770, %v5440
        %v6772 = vadd.f32 %v6771, %v5441
        %v6773 = vadd.f32 %v6772, %v5442
        %6774 = vadd.xlane.f32.xlu0 %v6773
        %v6775 = vpop.xlane.xlu0 %6774
        %v6776 = vadd.f32 %v5443, %v5444
        %v6777 = vadd.f32 %v6776, %v5445
        %v6778 = vadd.f32 %v6777, %v5446
        %v6779 = vadd.f32 %v6778, %v5447
        %v6780 = vadd.f32 %v6779, %v5448
        %v6781 = vadd.f32 %v6780, %v5449
        %v6782 = vadd.f32 %v6781, %v5450
        %6783 = vadd.xlane.f32.xlu0 %v6782
        %v6784 = vpop.xlane.xlu0 %6783
        %v6785 = vadd.f32 %v5451, %v5452
        %v6786 = vadd.f32 %v6785, %v5453
        %v6787 = vadd.f32 %v6786, %v5454
        %v6788 = vadd.f32 %v6787, %v5455
        %v6789 = vadd.f32 %v6788, %v5456
        %v6790 = vadd.f32 %v6789, %v5457
        %v6791 = vadd.f32 %v6790, %v5458
        %6792 = vadd.xlane.f32.xlu0 %v6791
        %v6793 = vpop.xlane.xlu0 %6792
        %v6794 = vadd.f32 %v5459, %v5460
        %v6795 = vadd.f32 %v6794, %v5461
        %v6796 = vadd.f32 %v6795, %v5462
        %v6797 = vadd.f32 %v6796, %v5463
        %v6798 = vadd.f32 %v6797, %v5464
        %v6799 = vadd.f32 %v6798, %v5465
        %v6800 = vadd.f32 %v6799, %v5466
        %6801 = vadd.xlane.f32.xlu0 %v6800
        %v6802 = vpop.xlane.xlu0 %6801
        %v6803 = vadd.f32 %v5467, %v5468
        %v6804 = vadd.f32 %v6803, %v5469
        %v6805 = vadd.f32 %v6804, %v5470
        %v6806 = vadd.f32 %v6805, %v5471
        %v6807 = vadd.f32 %v6806, %v5472
        %v6808 = vadd.f32 %v6807, %v5473
        %v6809 = vadd.f32 %v6808, %v5474
        %6810 = vadd.xlane.f32.xlu0 %v6809
        %v6811 = vpop.xlane.xlu0 %6810
        %v6812 = vadd.f32 %v5475, %v5476
        %v6813 = vadd.f32 %v6812, %v5477
        %v6814 = vadd.f32 %v6813, %v5478
        %v6815 = vadd.f32 %v6814, %v5479
        %v6816 = vadd.f32 %v6815, %v5480
        %v6817 = vadd.f32 %v6816, %v5481
        %v6818 = vadd.f32 %v6817, %v5482
        %6819 = vadd.xlane.f32.xlu0 %v6818
        %v6820 = vpop.xlane.xlu0 %6819
        %v6821 = vadd.f32 %v5483, %v5484
        %v6822 = vadd.f32 %v6821, %v5485
        %v6823 = vadd.f32 %v6822, %v5486
        %v6824 = vadd.f32 %v6823, %v5487
        %v6825 = vadd.f32 %v6824, %v5488
        %v6826 = vadd.f32 %v6825, %v5489
        %v6827 = vadd.f32 %v6826, %v5490
        %6828 = vadd.xlane.f32.xlu0 %v6827
        %v6829 = vpop.xlane.xlu0 %6828
        %v6830 = vadd.f32 %v5491, %v5492
        %v6831 = vadd.f32 %v6830, %v5493
        %v6832 = vadd.f32 %v6831, %v5494
        %v6833 = vadd.f32 %v6832, %v5495
        %v6834 = vadd.f32 %v6833, %v5496
        %v6835 = vadd.f32 %v6834, %v5497
        %v6836 = vadd.f32 %v6835, %v5498
        %6837 = vadd.xlane.f32.xlu0 %v6836
        %v6838 = vpop.xlane.xlu0 %6837
        %v6839 = vadd.f32 %v5499, %v5500
        %v6840 = vadd.f32 %v6839, %v5501
        %v6841 = vadd.f32 %v6840, %v5502
        %v6842 = vadd.f32 %v6841, %v5503
        %v6843 = vadd.f32 %v6842, %v5504
        %v6844 = vadd.f32 %v6843, %v5505
        %v6845 = vadd.f32 %v6844, %v5506
        %6846 = vadd.xlane.f32.xlu0 %v6845
        %v6847 = vpop.xlane.xlu0 %6846
        %v6848 = vadd.f32 %v5507, %v5508
        %v6849 = vadd.f32 %v6848, %v5509
        %v6850 = vadd.f32 %v6849, %v5510
        %v6851 = vadd.f32 %v6850, %v5511
        %v6852 = vadd.f32 %v6851, %v5512
        %v6853 = vadd.f32 %v6852, %v5513
        %v6854 = vadd.f32 %v6853, %v5514
        %6855 = vadd.xlane.f32.xlu0 %v6854
        %v6856 = vpop.xlane.xlu0 %6855
        %v6857 = vadd.f32 %v5515, %v5516
        %v6858 = vadd.f32 %v6857, %v5517
        %v6859 = vadd.f32 %v6858, %v5518
        %v6860 = vadd.f32 %v6859, %v5519
        %v6861 = vadd.f32 %v6860, %v5520
        %v6862 = vadd.f32 %v6861, %v5521
        %v6863 = vadd.f32 %v6862, %v5522
        %6864 = vadd.xlane.f32.xlu0 %v6863
        %v6865 = vpop.xlane.xlu0 %6864
        %v6866 = vadd.f32 %v5523, %v5524
        %v6867 = vadd.f32 %v6866, %v5525
        %v6868 = vadd.f32 %v6867, %v5526
        %v6869 = vadd.f32 %v6868, %v5527
        %v6870 = vadd.f32 %v6869, %v5528
        %v6871 = vadd.f32 %v6870, %v5529
        %v6872 = vadd.f32 %v6871, %v5530
        %6873 = vadd.xlane.f32.xlu0 %v6872
        %v6874 = vpop.xlane.xlu0 %6873
        %v6875 = vadd.f32 %v6555, %v6595
        %v6876 = vadd.f32 %v6556, %v6604
        %v6877 = vadd.f32 %v6557, %v6613
        %v6878 = vadd.f32 %v6558, %v6622
        %v6879 = vadd.f32 %v6559, %v6631
        %v6880 = vadd.f32 %v6560, %v6640
        %v6881 = vadd.f32 %v6561, %v6649
        %v6882 = vadd.f32 %v6562, %v6658
        %v6883 = vadd.f32 %v6563, %v6667
        %v6884 = vadd.f32 %v6564, %v6676
        %v6885 = vadd.f32 %v6565, %v6685
        %v6886 = vadd.f32 %v6566, %v6694
        %v6887 = vadd.f32 %v6567, %v6703
        %v6888 = vadd.f32 %v6568, %v6712
        %v6889 = vadd.f32 %v6569, %v6721
        %v6890 = vadd.f32 %v6570, %v6730
        %v6891 = vadd.f32 %v6571, %v6739
        %v6892 = vadd.f32 %v6572, %v6748
        %v6893 = vadd.f32 %v6573, %v6757
        %v6894 = vadd.f32 %v6574, %v6766
        %v6895 = vadd.f32 %v6575, %v6775
        %v6896 = vadd.f32 %v6576, %v6784
        %v6897 = vadd.f32 %v6577, %v6793
        %v6898 = vadd.f32 %v6578, %v6802
        %v6899 = vadd.f32 %v6579, %v6811
        %v6900 = vadd.f32 %v6580, %v6820
        %v6901 = vadd.f32 %v6581, %v6829
        %v6902 = vadd.f32 %v6582, %v6838
        %v6903 = vadd.f32 %v6583, %v6847
        %v6904 = vadd.f32 %v6584, %v6856
        %v6905 = vadd.f32 %v6585, %v6865
        %v6906 = vadd.f32 %v6586, %v6874
        %vm6907 = vcmask 7168
        %6908 = vst.msk [vmem:[%s333] sm:$0xff] %vm6907, %v6875
        %6909 = vst.msk [vmem:[%s333 + $0x8] sm:$0xff] %vm6907, %v6876
        %6910 = vst.msk [vmem:[%s333 + $0x10] sm:$0xff] %vm6907, %v6877
        %6911 = vst.msk [vmem:[%s333 + $0x18] sm:$0xff] %vm6907, %v6878
        %6912 = vst.msk [vmem:[%s333 + $0x20] sm:$0xff] %vm6907, %v6879
        %6913 = vst.msk [vmem:[%s333 + $0x28] sm:$0xff] %vm6907, %v6880
        %6914 = vst.msk [vmem:[%s333 + $0x30] sm:$0xff] %vm6907, %v6881
        %6915 = vst.msk [vmem:[%s333 + $0x38] sm:$0xff] %vm6907, %v6882
        %6916 = vst.msk [vmem:[%s333 + $0x40] sm:$0xff] %vm6907, %v6883
        %6917 = vst.msk [vmem:[%s333 + $0x48] sm:$0xff] %vm6907, %v6884
        %6918 = vst.msk [vmem:[%s333 + $0x50] sm:$0xff] %vm6907, %v6885
        %6919 = vst.msk [vmem:[%s333 + $0x58] sm:$0xff] %vm6907, %v6886
        %6920 = vst.msk [vmem:[%s333 + $0x60] sm:$0xff] %vm6907, %v6887
        %6921 = vst.msk [vmem:[%s333 + $0x68] sm:$0xff] %vm6907, %v6888
        %6922 = vst.msk [vmem:[%s333 + $0x70] sm:$0xff] %vm6907, %v6889
        %6923 = vst.msk [vmem:[%s333 + $0x78] sm:$0xff] %vm6907, %v6890
        %6924 = vst.msk [vmem:[%s333 + $0x80] sm:$0xff] %vm6907, %v6891
        %6925 = vst.msk [vmem:[%s333 + $0x88] sm:$0xff] %vm6907, %v6892
        %6926 = vst.msk [vmem:[%s333 + $0x90] sm:$0xff] %vm6907, %v6893
        %6927 = vst.msk [vmem:[%s333 + $0x98] sm:$0xff] %vm6907, %v6894
        %6928 = vst.msk [vmem:[%s333 + $0xa0] sm:$0xff] %vm6907, %v6895
        %6929 = vst.msk [vmem:[%s333 + $0xa8] sm:$0xff] %vm6907, %v6896
        %6930 = vst.msk [vmem:[%s333 + $0xb0] sm:$0xff] %vm6907, %v6897
        %6931 = vst.msk [vmem:[%s333 + $0xb8] sm:$0xff] %vm6907, %v6898
        %6932 = vst.msk [vmem:[%s333 + $0xc0] sm:$0xff] %vm6907, %v6899
        %6933 = vst.msk [vmem:[%s333 + $0xc8] sm:$0xff] %vm6907, %v6900
        %6934 = vst.msk [vmem:[%s333 + $0xd0] sm:$0xff] %vm6907, %v6901
        %6935 = vst.msk [vmem:[%s333 + $0xd8] sm:$0xff] %vm6907, %v6902
        %6936 = vst.msk [vmem:[%s333 + $0xe0] sm:$0xff] %vm6907, %v6903
        %6937 = vst.msk [vmem:[%s333 + $0xe8] sm:$0xff] %vm6907, %v6904
        %6938 = vst.msk [vmem:[%s333 + $0xf0] sm:$0xff] %vm6907, %v6905
        %6939 = vst.msk [vmem:[%s333 + $0xf8] sm:$0xff] %vm6907, %v6906
        %v6940 = vld [vmem:[%s333 + $0x100] sm:$0xff]
        %v6941 = vld [vmem:[%s333 + $0x108] sm:$0xff]
        %v6942 = vld [vmem:[%s333 + $0x110] sm:$0xff]
        %v6943 = vld [vmem:[%s333 + $0x118] sm:$0xff]
        %v6944 = vld [vmem:[%s333 + $0x120] sm:$0xff]
        %v6945 = vld [vmem:[%s333 + $0x128] sm:$0xff]
        %v6946 = vld [vmem:[%s333 + $0x130] sm:$0xff]
        %v6947 = vld [vmem:[%s333 + $0x138] sm:$0xff]
        %v6948 = vld [vmem:[%s333 + $0x140] sm:$0xff]
        %v6949 = vld [vmem:[%s333 + $0x148] sm:$0xff]
        %v6950 = vld [vmem:[%s333 + $0x150] sm:$0xff]
        %v6951 = vld [vmem:[%s333 + $0x158] sm:$0xff]
        %v6952 = vld [vmem:[%s333 + $0x160] sm:$0xff]
        %v6953 = vld [vmem:[%s333 + $0x168] sm:$0xff]
        %v6954 = vld [vmem:[%s333 + $0x170] sm:$0xff]
        %v6955 = vld [vmem:[%s333 + $0x178] sm:$0xff]
        %v6956 = vld [vmem:[%s333 + $0x180] sm:$0xff]
        %v6957 = vld [vmem:[%s333 + $0x188] sm:$0xff]
        %v6958 = vld [vmem:[%s333 + $0x190] sm:$0xff]
        %v6959 = vld [vmem:[%s333 + $0x198] sm:$0xff]
        %v6960 = vld [vmem:[%s333 + $0x1a0] sm:$0xff]
        %v6961 = vld [vmem:[%s333 + $0x1a8] sm:$0xff]
        %v6962 = vld [vmem:[%s333 + $0x1b0] sm:$0xff]
        %v6963 = vld [vmem:[%s333 + $0x1b8] sm:$0xff]
        %v6964 = vld [vmem:[%s333 + $0x1c0] sm:$0xff]
        %v6965 = vld [vmem:[%s333 + $0x1c8] sm:$0xff]
        %v6966 = vld [vmem:[%s333 + $0x1d0] sm:$0xff]
        %v6967 = vld [vmem:[%s333 + $0x1d8] sm:$0xff]
        %v6968 = vld [vmem:[%s333 + $0x1e0] sm:$0xff]
        %v6969 = vld [vmem:[%s333 + $0x1e8] sm:$0xff]
        %v6970 = vld [vmem:[%s333 + $0x1f0] sm:$0xff]
        %v6971 = vld [vmem:[%s333 + $0x1f8] sm:$0xff]
        %v6972 = vadd.f32 %v6299, %v6300
        %v6973 = vadd.f32 %v6972, %v6301
        %v6974 = vadd.f32 %v6973, %v6302
        %v6975 = vadd.f32 %v6974, %v6303
        %v6976 = vadd.f32 %v6975, %v6304
        %v6977 = vadd.f32 %v6976, %v6305
        %v6978 = vadd.f32 %v6977, %v6306
        %6979 = vadd.xlane.f32.xlu0 %v6978
        %v6980 = vpop.xlane.xlu0 %6979
        %v6981 = vadd.f32 %v6307, %v6308
        %v6982 = vadd.f32 %v6981, %v6309
        %v6983 = vadd.f32 %v6982, %v6310
        %v6984 = vadd.f32 %v6983, %v6311
        %v6985 = vadd.f32 %v6984, %v6312
        %v6986 = vadd.f32 %v6985, %v6313
        %v6987 = vadd.f32 %v6986, %v6314
        %6988 = vadd.xlane.f32.xlu0 %v6987
        %v6989 = vpop.xlane.xlu0 %6988
        %v6990 = vadd.f32 %v6315, %v6316
        %v6991 = vadd.f32 %v6990, %v6317
        %v6992 = vadd.f32 %v6991, %v6318
        %v6993 = vadd.f32 %v6992, %v6319
        %v6994 = vadd.f32 %v6993, %v6320
        %v6995 = vadd.f32 %v6994, %v6321
        %v6996 = vadd.f32 %v6995, %v6322
        %6997 = vadd.xlane.f32.xlu0 %v6996
        %v6998 = vpop.xlane.xlu0 %6997
        %v6999 = vadd.f32 %v6323, %v6324
        %v7000 = vadd.f32 %v6999, %v6325
        %v7001 = vadd.f32 %v7000, %v6326
        %v7002 = vadd.f32 %v7001, %v6327
        %v7003 = vadd.f32 %v7002, %v6328
        %v7004 = vadd.f32 %v7003, %v6329
        %v7005 = vadd.f32 %v7004, %v6330
        %7006 = vadd.xlane.f32.xlu0 %v7005
        %v7007 = vpop.xlane.xlu0 %7006
        %v7008 = vadd.f32 %v6331, %v6332
        %v7009 = vadd.f32 %v7008, %v6333
        %v7010 = vadd.f32 %v7009, %v6334
        %v7011 = vadd.f32 %v7010, %v6335
        %v7012 = vadd.f32 %v7011, %v6336
        %v7013 = vadd.f32 %v7012, %v6337
        %v7014 = vadd.f32 %v7013, %v6338
        %7015 = vadd.xlane.f32.xlu0 %v7014
        %v7016 = vpop.xlane.xlu0 %7015
        %v7017 = vadd.f32 %v6339, %v6340
        %v7018 = vadd.f32 %v7017, %v6341
        %v7019 = vadd.f32 %v7018, %v6342
        %v7020 = vadd.f32 %v7019, %v6343
        %v7021 = vadd.f32 %v7020, %v6344
        %v7022 = vadd.f32 %v7021, %v6345
        %v7023 = vadd.f32 %v7022, %v6346
        %7024 = vadd.xlane.f32.xlu0 %v7023
        %v7025 = vpop.xlane.xlu0 %7024
        %v7026 = vadd.f32 %v6347, %v6348
        %v7027 = vadd.f32 %v7026, %v6349
        %v7028 = vadd.f32 %v7027, %v6350
        %v7029 = vadd.f32 %v7028, %v6351
        %v7030 = vadd.f32 %v7029, %v6352
        %v7031 = vadd.f32 %v7030, %v6353
        %v7032 = vadd.f32 %v7031, %v6354
        %7033 = vadd.xlane.f32.xlu0 %v7032
        %v7034 = vpop.xlane.xlu0 %7033
        %v7035 = vadd.f32 %v6355, %v6356
        %v7036 = vadd.f32 %v7035, %v6357
        %v7037 = vadd.f32 %v7036, %v6358
        %v7038 = vadd.f32 %v7037, %v6359
        %v7039 = vadd.f32 %v7038, %v6360
        %v7040 = vadd.f32 %v7039, %v6361
        %v7041 = vadd.f32 %v7040, %v6362
        %7042 = vadd.xlane.f32.xlu0 %v7041
        %v7043 = vpop.xlane.xlu0 %7042
        %v7044 = vadd.f32 %v6363, %v6364
        %v7045 = vadd.f32 %v7044, %v6365
        %v7046 = vadd.f32 %v7045, %v6366
        %v7047 = vadd.f32 %v7046, %v6367
        %v7048 = vadd.f32 %v7047, %v6368
        %v7049 = vadd.f32 %v7048, %v6369
        %v7050 = vadd.f32 %v7049, %v6370
        %7051 = vadd.xlane.f32.xlu0 %v7050
        %v7052 = vpop.xlane.xlu0 %7051
        %v7053 = vadd.f32 %v6371, %v6372
        %v7054 = vadd.f32 %v7053, %v6373
        %v7055 = vadd.f32 %v7054, %v6374
        %v7056 = vadd.f32 %v7055, %v6375
        %v7057 = vadd.f32 %v7056, %v6376
        %v7058 = vadd.f32 %v7057, %v6377
        %v7059 = vadd.f32 %v7058, %v6378
        %7060 = vadd.xlane.f32.xlu0 %v7059
        %v7061 = vpop.xlane.xlu0 %7060
        %v7062 = vadd.f32 %v6379, %v6380
        %v7063 = vadd.f32 %v7062, %v6381
        %v7064 = vadd.f32 %v7063, %v6382
        %v7065 = vadd.f32 %v7064, %v6383
        %v7066 = vadd.f32 %v7065, %v6384
        %v7067 = vadd.f32 %v7066, %v6385
        %v7068 = vadd.f32 %v7067, %v6386
        %7069 = vadd.xlane.f32.xlu0 %v7068
        %v7070 = vpop.xlane.xlu0 %7069
        %v7071 = vadd.f32 %v6387, %v6388
        %v7072 = vadd.f32 %v7071, %v6389
        %v7073 = vadd.f32 %v7072, %v6390
        %v7074 = vadd.f32 %v7073, %v6391
        %v7075 = vadd.f32 %v7074, %v6392
        %v7076 = vadd.f32 %v7075, %v6393
        %v7077 = vadd.f32 %v7076, %v6394
        %7078 = vadd.xlane.f32.xlu0 %v7077
        %v7079 = vpop.xlane.xlu0 %7078
        %v7080 = vadd.f32 %v6395, %v6396
        %v7081 = vadd.f32 %v7080, %v6397
        %v7082 = vadd.f32 %v7081, %v6398
        %v7083 = vadd.f32 %v7082, %v6399
        %v7084 = vadd.f32 %v7083, %v6400
        %v7085 = vadd.f32 %v7084, %v6401
        %v7086 = vadd.f32 %v7085, %v6402
        %7087 = vadd.xlane.f32.xlu0 %v7086
        %v7088 = vpop.xlane.xlu0 %7087
        %v7089 = vadd.f32 %v6403, %v6404
        %v7090 = vadd.f32 %v7089, %v6405
        %v7091 = vadd.f32 %v7090, %v6406
        %v7092 = vadd.f32 %v7091, %v6407
        %v7093 = vadd.f32 %v7092, %v6408
        %v7094 = vadd.f32 %v7093, %v6409
        %v7095 = vadd.f32 %v7094, %v6410
        %7096 = vadd.xlane.f32.xlu0 %v7095
        %v7097 = vpop.xlane.xlu0 %7096
        %v7098 = vadd.f32 %v6411, %v6412
        %v7099 = vadd.f32 %v7098, %v6413
        %v7100 = vadd.f32 %v7099, %v6414
        %v7101 = vadd.f32 %v7100, %v6415
        %v7102 = vadd.f32 %v7101, %v6416
        %v7103 = vadd.f32 %v7102, %v6417
        %v7104 = vadd.f32 %v7103, %v6418
        %7105 = vadd.xlane.f32.xlu0 %v7104
        %v7106 = vpop.xlane.xlu0 %7105
        %v7107 = vadd.f32 %v6419, %v6420
        %v7108 = vadd.f32 %v7107, %v6421
        %v7109 = vadd.f32 %v7108, %v6422
        %v7110 = vadd.f32 %v7109, %v6423
        %v7111 = vadd.f32 %v7110, %v6424
        %v7112 = vadd.f32 %v7111, %v6425
        %v7113 = vadd.f32 %v7112, %v6426
        %7114 = vadd.xlane.f32.xlu0 %v7113
        %v7115 = vpop.xlane.xlu0 %7114
        %v7116 = vadd.f32 %v6427, %v6428
        %v7117 = vadd.f32 %v7116, %v6429
        %v7118 = vadd.f32 %v7117, %v6430
        %v7119 = vadd.f32 %v7118, %v6431
        %v7120 = vadd.f32 %v7119, %v6432
        %v7121 = vadd.f32 %v7120, %v6433
        %v7122 = vadd.f32 %v7121, %v6434
        %7123 = vadd.xlane.f32.xlu0 %v7122
        %v7124 = vpop.xlane.xlu0 %7123
        %v7125 = vadd.f32 %v6435, %v6436
        %v7126 = vadd.f32 %v7125, %v6437
        %v7127 = vadd.f32 %v7126, %v6438
        %v7128 = vadd.f32 %v7127, %v6439
        %v7129 = vadd.f32 %v7128, %v6440
        %v7130 = vadd.f32 %v7129, %v6441
        %v7131 = vadd.f32 %v7130, %v6442
        %7132 = vadd.xlane.f32.xlu0 %v7131
        %v7133 = vpop.xlane.xlu0 %7132
        %v7134 = vadd.f32 %v6443, %v6444
        %v7135 = vadd.f32 %v7134, %v6445
        %v7136 = vadd.f32 %v7135, %v6446
        %v7137 = vadd.f32 %v7136, %v6447
        %v7138 = vadd.f32 %v7137, %v6448
        %v7139 = vadd.f32 %v7138, %v6449
        %v7140 = vadd.f32 %v7139, %v6450
        %7141 = vadd.xlane.f32.xlu0 %v7140
        %v7142 = vpop.xlane.xlu0 %7141
        %v7143 = vadd.f32 %v6451, %v6452
        %v7144 = vadd.f32 %v7143, %v6453
        %v7145 = vadd.f32 %v7144, %v6454
        %v7146 = vadd.f32 %v7145, %v6455
        %v7147 = vadd.f32 %v7146, %v6456
        %v7148 = vadd.f32 %v7147, %v6457
        %v7149 = vadd.f32 %v7148, %v6458
        %7150 = vadd.xlane.f32.xlu0 %v7149
        %v7151 = vpop.xlane.xlu0 %7150
        %v7152 = vadd.f32 %v6459, %v6460
        %v7153 = vadd.f32 %v7152, %v6461
        %v7154 = vadd.f32 %v7153, %v6462
        %v7155 = vadd.f32 %v7154, %v6463
        %v7156 = vadd.f32 %v7155, %v6464
        %v7157 = vadd.f32 %v7156, %v6465
        %v7158 = vadd.f32 %v7157, %v6466
        %7159 = vadd.xlane.f32.xlu0 %v7158
        %v7160 = vpop.xlane.xlu0 %7159
        %v7161 = vadd.f32 %v6467, %v6468
        %v7162 = vadd.f32 %v7161, %v6469
        %v7163 = vadd.f32 %v7162, %v6470
        %v7164 = vadd.f32 %v7163, %v6471
        %v7165 = vadd.f32 %v7164, %v6472
        %v7166 = vadd.f32 %v7165, %v6473
        %v7167 = vadd.f32 %v7166, %v6474
        %7168 = vadd.xlane.f32.xlu0 %v7167
        %v7169 = vpop.xlane.xlu0 %7168
        %v7170 = vadd.f32 %v6475, %v6476
        %v7171 = vadd.f32 %v7170, %v6477
        %v7172 = vadd.f32 %v7171, %v6478
        %v7173 = vadd.f32 %v7172, %v6479
        %v7174 = vadd.f32 %v7173, %v6480
        %v7175 = vadd.f32 %v7174, %v6481
        %v7176 = vadd.f32 %v7175, %v6482
        %7177 = vadd.xlane.f32.xlu0 %v7176
        %v7178 = vpop.xlane.xlu0 %7177
        %v7179 = vadd.f32 %v6483, %v6484
        %v7180 = vadd.f32 %v7179, %v6485
        %v7181 = vadd.f32 %v7180, %v6486
        %v7182 = vadd.f32 %v7181, %v6487
        %v7183 = vadd.f32 %v7182, %v6488
        %v7184 = vadd.f32 %v7183, %v6489
        %v7185 = vadd.f32 %v7184, %v6490
        %7186 = vadd.xlane.f32.xlu0 %v7185
        %v7187 = vpop.xlane.xlu0 %7186
        %v7188 = vadd.f32 %v6491, %v6492
        %v7189 = vadd.f32 %v7188, %v6493
        %v7190 = vadd.f32 %v7189, %v6494
        %v7191 = vadd.f32 %v7190, %v6495
        %v7192 = vadd.f32 %v7191, %v6496
        %v7193 = vadd.f32 %v7192, %v6497
        %v7194 = vadd.f32 %v7193, %v6498
        %7195 = vadd.xlane.f32.xlu0 %v7194
        %v7196 = vpop.xlane.xlu0 %7195
        %v7197 = vadd.f32 %v6499, %v6500
        %v7198 = vadd.f32 %v7197, %v6501
        %v7199 = vadd.f32 %v7198, %v6502
        %v7200 = vadd.f32 %v7199, %v6503
        %v7201 = vadd.f32 %v7200, %v6504
        %v7202 = vadd.f32 %v7201, %v6505
        %v7203 = vadd.f32 %v7202, %v6506
        %7204 = vadd.xlane.f32.xlu0 %v7203
        %v7205 = vpop.xlane.xlu0 %7204
        %v7206 = vadd.f32 %v6507, %v6508
        %v7207 = vadd.f32 %v7206, %v6509
        %v7208 = vadd.f32 %v7207, %v6510
        %v7209 = vadd.f32 %v7208, %v6511
        %v7210 = vadd.f32 %v7209, %v6512
        %v7211 = vadd.f32 %v7210, %v6513
        %v7212 = vadd.f32 %v7211, %v6514
        %7213 = vadd.xlane.f32.xlu0 %v7212
        %v7214 = vpop.xlane.xlu0 %7213
        %v7215 = vadd.f32 %v6515, %v6516
        %v7216 = vadd.f32 %v7215, %v6517
        %v7217 = vadd.f32 %v7216, %v6518
        %v7218 = vadd.f32 %v7217, %v6519
        %v7219 = vadd.f32 %v7218, %v6520
        %v7220 = vadd.f32 %v7219, %v6521
        %v7221 = vadd.f32 %v7220, %v6522
        %7222 = vadd.xlane.f32.xlu0 %v7221
        %v7223 = vpop.xlane.xlu0 %7222
        %v7224 = vadd.f32 %v6523, %v6524
        %v7225 = vadd.f32 %v7224, %v6525
        %v7226 = vadd.f32 %v7225, %v6526
        %v7227 = vadd.f32 %v7226, %v6527
        %v7228 = vadd.f32 %v7227, %v6528
        %v7229 = vadd.f32 %v7228, %v6529
        %v7230 = vadd.f32 %v7229, %v6530
        %7231 = vadd.xlane.f32.xlu0 %v7230
        %v7232 = vpop.xlane.xlu0 %7231
        %v7233 = vadd.f32 %v6531, %v6532
        %v7234 = vadd.f32 %v7233, %v6533
        %v7235 = vadd.f32 %v7234, %v6534
        %v7236 = vadd.f32 %v7235, %v6535
        %v7237 = vadd.f32 %v7236, %v6536
        %v7238 = vadd.f32 %v7237, %v6537
        %v7239 = vadd.f32 %v7238, %v6538
        %7240 = vadd.xlane.f32.xlu0 %v7239
        %v7241 = vpop.xlane.xlu0 %7240
        %v7242 = vadd.f32 %v6539, %v6540
        %v7243 = vadd.f32 %v7242, %v6541
        %v7244 = vadd.f32 %v7243, %v6542
        %v7245 = vadd.f32 %v7244, %v6543
        %v7246 = vadd.f32 %v7245, %v6544
        %v7247 = vadd.f32 %v7246, %v6545
        %v7248 = vadd.f32 %v7247, %v6546
        %7249 = vadd.xlane.f32.xlu0 %v7248
        %v7250 = vpop.xlane.xlu0 %7249
        %v7251 = vadd.f32 %v6547, %v6548
        %v7252 = vadd.f32 %v7251, %v6549
        %v7253 = vadd.f32 %v7252, %v6550
        %v7254 = vadd.f32 %v7253, %v6551
        %v7255 = vadd.f32 %v7254, %v6552
        %v7256 = vadd.f32 %v7255, %v6553
        %v7257 = vadd.f32 %v7256, %v6554
        %7258 = vadd.xlane.f32.xlu0 %v7257
        %v7259 = vpop.xlane.xlu0 %7258
        %v7260 = vadd.f32 %v6940, %v6980
        %v7261 = vadd.f32 %v6941, %v6989
        %v7262 = vadd.f32 %v6942, %v6998
        %v7263 = vadd.f32 %v6943, %v7007
        %v7264 = vadd.f32 %v6944, %v7016
        %v7265 = vadd.f32 %v6945, %v7025
        %v7266 = vadd.f32 %v6946, %v7034
        %v7267 = vadd.f32 %v6947, %v7043
        %v7268 = vadd.f32 %v6948, %v7052
        %v7269 = vadd.f32 %v6949, %v7061
        %v7270 = vadd.f32 %v6950, %v7070
        %v7271 = vadd.f32 %v6951, %v7079
        %v7272 = vadd.f32 %v6952, %v7088
        %v7273 = vadd.f32 %v6953, %v7097
        %v7274 = vadd.f32 %v6954, %v7106
        %v7275 = vadd.f32 %v6955, %v7115
        %v7276 = vadd.f32 %v6956, %v7124
        %v7277 = vadd.f32 %v6957, %v7133
        %v7278 = vadd.f32 %v6958, %v7142
        %v7279 = vadd.f32 %v6959, %v7151
        %v7280 = vadd.f32 %v6960, %v7160
        %v7281 = vadd.f32 %v6961, %v7169
        %v7282 = vadd.f32 %v6962, %v7178
        %v7283 = vadd.f32 %v6963, %v7187
        %v7284 = vadd.f32 %v6964, %v7196
        %v7285 = vadd.f32 %v6965, %v7205
        %v7286 = vadd.f32 %v6966, %v7214
        %v7287 = vadd.f32 %v6967, %v7223
        %v7288 = vadd.f32 %v6968, %v7232
        %v7289 = vadd.f32 %v6969, %v7241
        %v7290 = vadd.f32 %v6970, %v7250
        %v7291 = vadd.f32 %v6971, %v7259
        %7292 = vst.msk [vmem:[%s333 + $0x100] sm:$0xff] %vm6907, %v7260
        %7293 = vst.msk [vmem:[%s333 + $0x108] sm:$0xff] %vm6907, %v7261
        %7294 = vst.msk [vmem:[%s333 + $0x110] sm:$0xff] %vm6907, %v7262
        %7295 = vst.msk [vmem:[%s333 + $0x118] sm:$0xff] %vm6907, %v7263
        %7296 = vst.msk [vmem:[%s333 + $0x120] sm:$0xff] %vm6907, %v7264
        %7297 = vst.msk [vmem:[%s333 + $0x128] sm:$0xff] %vm6907, %v7265
        %7298 = vst.msk [vmem:[%s333 + $0x130] sm:$0xff] %vm6907, %v7266
        %7299 = vst.msk [vmem:[%s333 + $0x138] sm:$0xff] %vm6907, %v7267
        %7300 = vst.msk [vmem:[%s333 + $0x140] sm:$0xff] %vm6907, %v7268
        %7301 = vst.msk [vmem:[%s333 + $0x148] sm:$0xff] %vm6907, %v7269
        %7302 = vst.msk [vmem:[%s333 + $0x150] sm:$0xff] %vm6907, %v7270
        %7303 = vst.msk [vmem:[%s333 + $0x158] sm:$0xff] %vm6907, %v7271
        %7304 = vst.msk [vmem:[%s333 + $0x160] sm:$0xff] %vm6907, %v7272
        %7305 = vst.msk [vmem:[%s333 + $0x168] sm:$0xff] %vm6907, %v7273
        %7306 = vst.msk [vmem:[%s333 + $0x170] sm:$0xff] %vm6907, %v7274
        %7307 = vst.msk [vmem:[%s333 + $0x178] sm:$0xff] %vm6907, %v7275
        %7308 = vst.msk [vmem:[%s333 + $0x180] sm:$0xff] %vm6907, %v7276
        %7309 = vst.msk [vmem:[%s333 + $0x188] sm:$0xff] %vm6907, %v7277
        %7310 = vst.msk [vmem:[%s333 + $0x190] sm:$0xff] %vm6907, %v7278
        %7311 = vst.msk [vmem:[%s333 + $0x198] sm:$0xff] %vm6907, %v7279
        %7312 = vst.msk [vmem:[%s333 + $0x1a0] sm:$0xff] %vm6907, %v7280
        %7313 = vst.msk [vmem:[%s333 + $0x1a8] sm:$0xff] %vm6907, %v7281
        %7314 = vst.msk [vmem:[%s333 + $0x1b0] sm:$0xff] %vm6907, %v7282
        %7315 = vst.msk [vmem:[%s333 + $0x1b8] sm:$0xff] %vm6907, %v7283
        %7316 = vst.msk [vmem:[%s333 + $0x1c0] sm:$0xff] %vm6907, %v7284
        %7317 = vst.msk [vmem:[%s333 + $0x1c8] sm:$0xff] %vm6907, %v7285
        %7318 = vst.msk [vmem:[%s333 + $0x1d0] sm:$0xff] %vm6907, %v7286
        %7319 = vst.msk [vmem:[%s333 + $0x1d8] sm:$0xff] %vm6907, %v7287
        %7320 = vst.msk [vmem:[%s333 + $0x1e0] sm:$0xff] %vm6907, %v7288
        %7321 = vst.msk [vmem:[%s333 + $0x1e8] sm:$0xff] %vm6907, %v7289
        %7322 = vst.msk [vmem:[%s333 + $0x1f0] sm:$0xff] %vm6907, %v7290
        %7323 = vst.msk [vmem:[%s333 + $0x1f8] sm:$0xff] %vm6907, %v7291
        %p7324 = scmp.lt.s32.totalorder %s27, 0
        %s7325 = scalar_select %p7324, %s27, 0
        %p7326 = scmp.lt.s32.totalorder %s28, 1
        %s7327 = scalar_select %p7326, %s28, 1
        %s7328 = smul.addr %s7327, 64
        %s7329 = smul.addr %s7325, 128
        %s7330 = sadd.s32 %s7328, %s7329
        %s7331 = smul.addr %s7330, 8
        %s7332 = scalar_lea.vmem %s4, %s7331
        // Predicated region
        $region57: #{tpu_custom_call.1} parent=35 // pred_check
          %p7333 = pneg %p163
        $region58: #{tpu_custom_call.1} parent=35 // pred_check_branch
          %7335 = sbr.rel (%p7333) target = $region60
        $region59: #{tpu_custom_call.1} parent=35 // pred_region
          _
        $region60: #{tpu_custom_call.1} parent=35 // pred_fallthru
          _
      $region36: #{tpu_custom_call.1} parent=5 // pred_fallthru
        _
      %p7336 = scmp.le.s32.totalorder 2, %s17
      // Predicated region
      $region61: #{tpu_custom_call.1} parent=5 // pred_check
        %p7337 = pneg %p7336
      $region62: #{tpu_custom_call.1} parent=5 // pred_check_branch
        %7339 = sbr.rel (%p7337) target = $region64
      $region63: #{tpu_custom_call.1} parent=5 // pred_region
        %s7340 = ssub.s32 %s17, 2
        // Predicated region
        $region65: #{tpu_custom_call.1} parent=63 // pred_check
          %p7341 = pneg %p169
        $region66: #{tpu_custom_call.1} parent=63 // pred_check_branch
          %7343 = sbr.rel (%p7341) target = $region68
        $region67: #{tpu_custom_call.1} parent=63 // pred_region
          %p7344 = scmp.lt.s32.totalorder %s30, 0
          %s7345 = scalar_select %p7344, %s30, 0
          %p7346 = scmp.lt.s32.totalorder %s31, 1
          %s7347 = scalar_select %p7346, %s31, 1
          %s7348 = smul.addr %s7347, 64
          %s7349 = smul.addr %s7345, 128
          %s7350 = sadd.s32 %s7348, %s7349
          %s7351 = smul.addr %s7350, 8
          %s7352 = scalar_lea.vmem %s4, %s7351
        $region68: #{tpu_custom_call.1} parent=63 // pred_fallthru
          _
      $region64: #{tpu_custom_call.1} parent=5 // pred_fallthru
        _
    $region6: #{tpu_custom_call.1} parent=1 // loop_footer
      %s21 = sadd.s32 1, %s17
    $region7: #{tpu_custom_call.1} parent=1 // loop_footer_branch
      %16 = sbr.rel target = $region3
    $region8: #{tpu_custom_call.1} parent=1 // loop_exit
      _
    %7353 = vsyncpa [#allocation3], 1
    %s7354 = scalar_lea.sflag [#allocation3], 1
    %7355 = vsyncpa %s7354, 1
    %7356 = vsyncpa [#allocation5], 1
    %s7357 = scalar_lea.sflag [#allocation5], 1
    %7358 = vsyncpa %s7357, 1
    %7359 = vsyncpa [#allocation8], 1

</llo_original>
